<compile_context>
chip_gen: v7x
topology: tpu7x:2x2x1
jax: 0.10.0
libtpu: 0.0.40
codegen_flags: <defaults>
</compile_context>

<pallas_src>
import jax
import jax.numpy as jnp
import numpy as np
from jax.experimental import pallas as pl
from jax.experimental.pallas import tpu as pltpu

_PREC = jax.lax.Precision.HIGHEST


def easpp_forward(x, w_down, b_down, w_a1, w_a2, w_up, b_up,
                  gamma, beta, running_mean, running_var, dilation,
                  eps=1e-5):
    """Fused eASPP forward.

    x       : (B, Cin, H, W) float32
    w_down  : (Ct, Cin, 1, 1), b_down : (Ct,)
    w_a1/2  : (Ct, Ct, K, K)   (K = 3 if dilation > 1 else 1, no bias)
    w_up    : (Cout, Ct, 1, 1), b_up : (Cout,)
    gamma/beta/running_mean/running_var : (Cout,)   (BatchNorm2d, eval mode)
    """
    B, Cin, H, W = x.shape
    Ct = w_down.shape[0]
    Cout = w_up.shape[0]
    K = w_a1.shape[-1]
    HW = H * W
    T = K * K
    center = T // 2                 # (0,0) tap: 4 for K=3, 0 for K=1

    # Static tap offsets (dy, dx) of the (possibly dilated) KxK kernel.
    c = K // 2
    offsets = [((ky - c) * dilation, (kx - c) * dilation)
               for ky in range(K) for kx in range(K)]

    # ---- parameter prep (wrapper-side, traced once) -------------------------
    wd = w_down.reshape(Ct, Cin).astype(jnp.float32)
    bd = b_down.reshape(Ct, 1).astype(jnp.float32)
    # per-tap (Ct, Ct) matrices, tap index t = ky*K + kx
    wa1 = jnp.transpose(w_a1, (2, 3, 0, 1)).reshape(T, Ct, Ct).astype(jnp.float32)
    wa2 = jnp.transpose(w_a2, (2, 3, 0, 1)).reshape(T, Ct, Ct).astype(jnp.float32)
    # Fold eval-mode BatchNorm (and the up-conv bias) into the 1x1 up conv.
    bn_scale = gamma / jnp.sqrt(running_var + eps)
    wu = (bn_scale[:, None] * w_up.reshape(Cout, Ct)).astype(jnp.float32)
    bu = (bn_scale * b_up + beta - bn_scale * running_mean).reshape(Cout, 1)
    bu = bu.astype(jnp.float32)

    # Per-tap validity masks over the flattened spatial axis (zero where the
    # shifted read would fall outside the HxW image / wrap across a row).
    row = jnp.arange(H, dtype=jnp.int32)[:, None]
    col = jnp.arange(W, dtype=jnp.int32)[None, :]
    mask_list = []
    for dy, dx in offsets:
        m = ((row + dy >= 0) & (row + dy < H) &
             (col + dx >= 0) & (col + dx < W))
        mask_list.append(m.reshape(1, HW).astype(jnp.float32))
    masks = jnp.stack(mask_list, axis=0)                      # (T, 1, HW)

    xf = x.reshape(B, Cin, HW).astype(jnp.float32)

    # ---- kernel -------------------------------------------------------------
    def kernel(x_ref, wd_ref, bd_ref, wa1_ref, wa2_ref, masks_ref,
               wu_ref, bu_ref, o_ref):
        xb = x_ref[...]                                        # (Cin, HW)

        # conv1x1_down + bias  (MXU, lane-dense N = HW)
        t = jnp.dot(wd_ref[...], xb,
                    preferred_element_type=jnp.float32,
                    precision=_PREC) + bd_ref[...]             # (Ct, HW)

        def dilated_conv(t_in, wa_ref):
            # Seed the accumulator with the centre tap: no roll, no mask.
            acc = jnp.dot(wa_ref[center], t_in,
                          preferred_element_type=jnp.float32,
                          precision=_PREC)
            for tap, (dy, dx) in enumerate(offsets):
                if tap == center:
                    continue
                off = dy * W + dx                              # static, != 0
                # s[i] = t_in[(i + off) mod HW]; wrap-around killed by mask.
                s = pltpu.roll(t_in, shift=(-off) % HW, axis=1)
                s = s * masks_ref[tap]                         # (1, HW) bcast
                acc = acc + jnp.dot(wa_ref[tap], s,
                                    preferred_element_type=jnp.float32,
                                    precision=_PREC)
            return acc

        t = dilated_conv(t, wa1_ref)                           # atrous conv 1
        t = dilated_conv(t, wa2_ref)                           # atrous conv 2

        # conv1x1_up with BN scale/shift folded in, then ReLU.
        y = jnp.dot(wu_ref[...], t,
                    preferred_element_type=jnp.float32,
                    precision=_PREC) + bu_ref[...]             # (Cout, HW)
        o_ref[...] = jnp.maximum(y, 0.0).astype(o_ref.dtype)

    out = pl.pallas_call(
        kernel,
        out_shape=jax.ShapeDtypeStruct((B, Cout, HW), jnp.float32),
        grid=(B,),
        in_specs=[
            pl.BlockSpec((None, Cin, HW), lambda b: (b, 0, 0)),   # x (squeezed B)
            pl.BlockSpec((Ct, Cin), lambda b: (0, 0)),            # w_down
            pl.BlockSpec((Ct, 1), lambda b: (0, 0)),              # b_down
            pl.BlockSpec((T, Ct, Ct), lambda b: (0, 0, 0)),       # atrous 1 taps
            pl.BlockSpec((T, Ct, Ct), lambda b: (0, 0, 0)),       # atrous 2 taps
            pl.BlockSpec((T, 1, HW), lambda b: (0, 0, 0)),        # tap masks
            pl.BlockSpec((Cout, Ct), lambda b: (0, 0)),           # w_up (BN folded)
            pl.BlockSpec((Cout, 1), lambda b: (0, 0)),            # b_up (BN folded)
        ],
        out_specs=pl.BlockSpec((None, Cout, HW), lambda b: (b, 0, 0)),
        compiler_params=pltpu.CompilerParams(
            dimension_semantics=("parallel",),      # batch axis -> both TCs on v7x
            vmem_limit_bytes=48 * 1024 * 1024),
    )(xf, wd, bd, wa1, wa2, masks, wu, bu)

    return out.reshape(B, Cout, H, W)


# ---- pure-JAX reference matching the PyTorch module (BN in eval mode) -------
def easpp_reference(x, w_down, b_down, w_a1, w_a2, w_up, b_up,
                    gamma, beta, running_mean, running_var, dilation,
                    eps=1e-5):
    dn = ("NCHW", "OIHW", "NCHW")
    K = w_a1.shape[-1]
    pad = dilation if K == 3 else 0

    t = jax.lax.conv_general_dilated(x, w_down, (1, 1), "VALID",
                                     dimension_numbers=dn, precision=_PREC)
    t = t + b_down[None, :, None, None]
    t = jax.lax.conv_general_dilated(t, w_a1, (1, 1), [(pad, pad), (pad, pad)],
                                     rhs_dilation=(dilation, dilation),
                                     dimension_numbers=dn, precision=_PREC)
    t = jax.lax.conv_general_dilated(t, w_a2, (1, 1), [(pad, pad), (pad, pad)],
                                     rhs_dilation=(dilation, dilation),
                                     dimension_numbers=dn, precision=_PREC)
    t = jax.lax.conv_general_dilated(t, w_up, (1, 1), "VALID",
                                     dimension_numbers=dn, precision=_PREC)
    t = t + b_up[None, :, None, None]
    t = (t - running_mean[None, :, None, None]) / jnp.sqrt(
        running_var[None, :, None, None] + eps)
    t = t * gamma[None, :, None, None] + beta[None, :, None, None]
    return jnp.maximum(t, 0.0)


def _make_params(key, Cin, Cout, K):
    Ct = Cout // 4
    ks = jax.random.split(key, 10)
    w_down = jax.random.normal(ks[0], (Ct, Cin, 1, 1), jnp.float32) * 0.1
    b_down = jax.random.normal(ks[1], (Ct,), jnp.float32) * 0.1
    w_a1 = jax.random.normal(ks[2], (Ct, Ct, K, K), jnp.float32) * 0.2
    w_a2 = jax.random.normal(ks[3], (Ct, Ct, K, K), jnp.float32) * 0.2
    w_up = jax.random.normal(ks[4], (Cout, Ct, 1, 1), jnp.float32) * 0.1
    b_up = jax.random.normal(ks[5], (Cout,), jnp.float32) * 0.1
    gamma = jnp.abs(jax.random.normal(ks[6], (Cout,), jnp.float32)) + 0.5
    beta = jax.random.normal(ks[7], (Cout,), jnp.float32) * 0.1
    mean = jax.random.normal(ks[8], (Cout,), jnp.float32) * 0.1
    var = jnp.abs(jax.random.normal(ks[9], (Cout,), jnp.float32)) + 0.5
    return (w_down, b_down, w_a1, w_a2, w_up, b_up, gamma, beta, mean, var)


if __name__ == "__main__":
    # Small config consistent with the module (inplanes=2048, planes=256 scaled
    # down): inplanes=32, planes=16 -> tmp_channel=4;  H=W=16 so H*W=256 is a
    # multiple of 128 (lane-dense).
    B, Cin, Cout, H, W = 2, 32, 16, 16, 16
    key = jax.random.PRNGKey(0)
    kx, kp1, kp2 = jax.random.split(key, 3)
    x = jax.random.normal(kx, (B, Cin, H, W), dtype=jnp.float32)

    # --- dilation > 1 path (3x3 atrous convs, padding = dilation) ------------
    dilation = 2
    params = _make_params(kp1, Cin, Cout, K=3)
    out = easpp_forward(x, *params, dilation)
    out = jax.block_until_ready(out)
    ref = easpp_reference(x, *params, dilation)
    assert out.shape == (B, Cout, H, W)
    np.testing.assert_allclose(np.asarray(out), np.asarray(ref),
                               rtol=1e-2, atol=1e-2)

    # --- dilation == 1 path (1x1 "atrous" convs, padding = 0) ----------------
    dilation = 1
    params1 = _make_params(kp2, Cin, Cout, K=1)
    out1 = easpp_forward(x, *params1, dilation)
    out1 = jax.block_until_ready(out1)
    ref1 = easpp_reference(x, *params1, dilation)
    np.testing.assert_allclose(np.asarray(out1), np.asarray(ref1),
                               rtol=1e-2, atol=1e-2)

    print("KERNEL_OK")
</pallas_src>

<mosaic_0001>
module attributes {stable_mosaic.version = 11 : i64} {
  func.func @kernel(%arg0: i32, %arg1: memref<1x32x256xf32, #tpu.memory_space<vmem>>, %arg2: memref<4x32xf32, #tpu.memory_space<vmem>>, %arg3: memref<4x1xf32, #tpu.memory_space<vmem>>, %arg4: memref<9x4x4xf32, #tpu.memory_space<vmem>>, %arg5: memref<9x4x4xf32, #tpu.memory_space<vmem>>, %arg6: memref<9x1x256xf32, #tpu.memory_space<vmem>>, %arg7: memref<16x4xf32, #tpu.memory_space<vmem>>, %arg8: memref<16x1xf32, #tpu.memory_space<vmem>>, %arg9: memref<1x16x256xf32, #tpu.memory_space<vmem>>) attributes {dimension_semantics = [#tpu.dimension_semantics<parallel>], iteration_bounds = array<i64: 2>, scalar_prefetch = 0 : i64, scratch_operands = 0 : i64, tpu.core_type = #tpu.core_type<tc>, window_params = [{transform_indices = @transform_0, window_bounds = array<i64: 1, 32, 256>}, {pipeline_mode = #tpu.pipeline_mode<synchronous>, transform_indices = @transform_1, window_bounds = array<i64: 4, 32>}, {pipeline_mode = #tpu.pipeline_mode<synchronous>, transform_indices = @transform_2, window_bounds = array<i64: 4, 1>}, {pipeline_mode = #tpu.pipeline_mode<synchronous>, transform_indices = @transform_3, window_bounds = array<i64: 9, 4, 4>}, {pipeline_mode = #tpu.pipeline_mode<synchronous>, transform_indices = @transform_4, window_bounds = array<i64: 9, 4, 4>}, {pipeline_mode = #tpu.pipeline_mode<synchronous>, transform_indices = @transform_5, window_bounds = array<i64: 9, 1, 256>}, {pipeline_mode = #tpu.pipeline_mode<synchronous>, transform_indices = @transform_6, window_bounds = array<i64: 16, 4>}, {pipeline_mode = #tpu.pipeline_mode<synchronous>, transform_indices = @transform_7, window_bounds = array<i64: 16, 1>}, {transform_indices = @transform_8, window_bounds = array<i64: 1, 16, 256>}]} {
    %c0 = arith.constant 0 : index
    %c0_0 = arith.constant 0 : index
    %c0_1 = arith.constant 0 : index
    %0 = vector.load %arg1[%c0, %c0_0, %c0_1] : memref<1x32x256xf32, #tpu.memory_space<vmem>>, vector<1x32x256xf32>
    %1 = vector.shape_cast %0 : vector<1x32x256xf32> to vector<32x256xf32>
    %c0_2 = arith.constant 0 : index
    %c0_3 = arith.constant 0 : index
    %2 = vector.load %arg2[%c0_2, %c0_3] : memref<4x32xf32, #tpu.memory_space<vmem>>, vector<4x32xf32>
    %cst = arith.constant dense<0.000000e+00> : vector<4x256xf32>
    %3 = tpu.matmul %2, %1, %cst {dimension_numbers = #tpu.dot_dimension_numbers<[1], [0], [0], [1], [0, 0, 1, 1], [], []>, precision = #tpu.contract_precision<fp32>} : vector<4x32xf32>, vector<32x256xf32>, vector<4x256xf32> -> vector<4x256xf32>
    %c0_4 = arith.constant 0 : index
    %c0_5 = arith.constant 0 : index
    %4 = vector.load %arg3[%c0_4, %c0_5] : memref<4x1xf32, #tpu.memory_space<vmem>>, vector<4x1xf32>
    %5 = vector.broadcast %4 : vector<4x1xf32> to vector<4x256xf32>
    %6 = arith.addf %3, %5 : vector<4x256xf32>
    %c4 = arith.constant 4 : index
    %c0_6 = arith.constant 0 : index
    %c0_7 = arith.constant 0 : index
    %7 = vector.load %arg4[%c4, %c0_6, %c0_7] : memref<9x4x4xf32, #tpu.memory_space<vmem>>, vector<1x4x4xf32>
    %8 = vector.shape_cast %7 : vector<1x4x4xf32> to vector<4x4xf32>
    %cst_8 = arith.constant dense<0.000000e+00> : vector<4x256xf32>
    %9 = tpu.matmul %8, %6, %cst_8 {dimension_numbers = #tpu.dot_dimension_numbers<[1], [0], [0], [1], [0, 0, 1, 1], [], []>, precision = #tpu.contract_precision<fp32>} : vector<4x4xf32>, vector<4x256xf32>, vector<4x256xf32> -> vector<4x256xf32>
    %c34_i32 = arith.constant 34 : i32
    %10 = tpu.dynamic_rotate %6 by %c34_i32 dim 1 : vector<4x256xf32>, i32 -> vector<4x256xf32>
    %c0_9 = arith.constant 0 : index
    %c0_10 = arith.constant 0 : index
    %c0_11 = arith.constant 0 : index
    %11 = vector.load %arg6[%c0_9, %c0_10, %c0_11] : memref<9x1x256xf32, #tpu.memory_space<vmem>>, vector<1x1x256xf32>
    %12 = vector.shape_cast %11 : vector<1x1x256xf32> to vector<1x256xf32>
    %13 = vector.broadcast %12 : vector<1x256xf32> to vector<4x256xf32>
    %14 = arith.mulf %10, %13 : vector<4x256xf32>
    %c0_12 = arith.constant 0 : index
    %c0_13 = arith.constant 0 : index
    %c0_14 = arith.constant 0 : index
    %15 = vector.load %arg4[%c0_12, %c0_13, %c0_14] : memref<9x4x4xf32, #tpu.memory_space<vmem>>, vector<1x4x4xf32>
    %16 = vector.shape_cast %15 : vector<1x4x4xf32> to vector<4x4xf32>
    %cst_15 = arith.constant dense<0.000000e+00> : vector<4x256xf32>
    %17 = tpu.matmul %16, %14, %cst_15 {dimension_numbers = #tpu.dot_dimension_numbers<[1], [0], [0], [1], [0, 0, 1, 1], [], []>, precision = #tpu.contract_precision<fp32>} : vector<4x4xf32>, vector<4x256xf32>, vector<4x256xf32> -> vector<4x256xf32>
    %18 = arith.addf %9, %17 : vector<4x256xf32>
    %c32_i32 = arith.constant 32 : i32
    %19 = tpu.dynamic_rotate %6 by %c32_i32 dim 1 : vector<4x256xf32>, i32 -> vector<4x256xf32>
    %c1 = arith.constant 1 : index
    %c0_16 = arith.constant 0 : index
    %c0_17 = arith.constant 0 : index
    %20 = vector.load %arg6[%c1, %c0_16, %c0_17] : memref<9x1x256xf32, #tpu.memory_space<vmem>>, vector<1x1x256xf32>
    %21 = vector.shape_cast %20 : vector<1x1x256xf32> to vector<1x256xf32>
    %22 = vector.broadcast %21 : vector<1x256xf32> to vector<4x256xf32>
    %23 = arith.mulf %19, %22 : vector<4x256xf32>
    %c1_18 = arith.constant 1 : index
    %c0_19 = arith.constant 0 : index
    %c0_20 = arith.constant 0 : index
    %24 = vector.load %arg4[%c1_18, %c0_19, %c0_20] : memref<9x4x4xf32, #tpu.memory_space<vmem>>, vector<1x4x4xf32>
    %25 = vector.shape_cast %24 : vector<1x4x4xf32> to vector<4x4xf32>
    %cst_21 = arith.constant dense<0.000000e+00> : vector<4x256xf32>
    %26 = tpu.matmul %25, %23, %cst_21 {dimension_numbers = #tpu.dot_dimension_numbers<[1], [0], [0], [1], [0, 0, 1, 1], [], []>, precision = #tpu.contract_precision<fp32>} : vector<4x4xf32>, vector<4x256xf32>, vector<4x256xf32> -> vector<4x256xf32>
    %27 = arith.addf %18, %26 : vector<4x256xf32>
    %c30_i32 = arith.constant 30 : i32
    %28 = tpu.dynamic_rotate %6 by %c30_i32 dim 1 : vector<4x256xf32>, i32 -> vector<4x256xf32>
    %c2 = arith.constant 2 : index
    %c0_22 = arith.constant 0 : index
    %c0_23 = arith.constant 0 : index
    %29 = vector.load %arg6[%c2, %c0_22, %c0_23] : memref<9x1x256xf32, #tpu.memory_space<vmem>>, vector<1x1x256xf32>
    %30 = vector.shape_cast %29 : vector<1x1x256xf32> to vector<1x256xf32>
    %31 = vector.broadcast %30 : vector<1x256xf32> to vector<4x256xf32>
    %32 = arith.mulf %28, %31 : vector<4x256xf32>
    %c2_24 = arith.constant 2 : index
    %c0_25 = arith.constant 0 : index
    %c0_26 = arith.constant 0 : index
    %33 = vector.load %arg4[%c2_24, %c0_25, %c0_26] : memref<9x4x4xf32, #tpu.memory_space<vmem>>, vector<1x4x4xf32>
    %34 = vector.shape_cast %33 : vector<1x4x4xf32> to vector<4x4xf32>
    %cst_27 = arith.constant dense<0.000000e+00> : vector<4x256xf32>
    %35 = tpu.matmul %34, %32, %cst_27 {dimension_numbers = #tpu.dot_dimension_numbers<[1], [0], [0], [1], [0, 0, 1, 1], [], []>, precision = #tpu.contract_precision<fp32>} : vector<4x4xf32>, vector<4x256xf32>, vector<4x256xf32> -> vector<4x256xf32>
    %36 = arith.addf %27, %35 : vector<4x256xf32>
    %c2_i32 = arith.constant 2 : i32
    %37 = tpu.dynamic_rotate %6 by %c2_i32 dim 1 : vector<4x256xf32>, i32 -> vector<4x256xf32>
    %c3 = arith.constant 3 : index
    %c0_28 = arith.constant 0 : index
    %c0_29 = arith.constant 0 : index
    %38 = vector.load %arg6[%c3, %c0_28, %c0_29] : memref<9x1x256xf32, #tpu.memory_space<vmem>>, vector<1x1x256xf32>
    %39 = vector.shape_cast %38 : vector<1x1x256xf32> to vector<1x256xf32>
    %40 = vector.broadcast %39 : vector<1x256xf32> to vector<4x256xf32>
    %41 = arith.mulf %37, %40 : vector<4x256xf32>
    %c3_30 = arith.constant 3 : index
    %c0_31 = arith.constant 0 : index
    %c0_32 = arith.constant 0 : index
    %42 = vector.load %arg4[%c3_30, %c0_31, %c0_32] : memref<9x4x4xf32, #tpu.memory_space<vmem>>, vector<1x4x4xf32>
    %43 = vector.shape_cast %42 : vector<1x4x4xf32> to vector<4x4xf32>
    %cst_33 = arith.constant dense<0.000000e+00> : vector<4x256xf32>
    %44 = tpu.matmul %43, %41, %cst_33 {dimension_numbers = #tpu.dot_dimension_numbers<[1], [0], [0], [1], [0, 0, 1, 1], [], []>, precision = #tpu.contract_precision<fp32>} : vector<4x4xf32>, vector<4x256xf32>, vector<4x256xf32> -> vector<4x256xf32>
    %45 = arith.addf %36, %44 : vector<4x256xf32>
    %c254_i32 = arith.constant 254 : i32
    %46 = tpu.dynamic_rotate %6 by %c254_i32 dim 1 : vector<4x256xf32>, i32 -> vector<4x256xf32>
    %c5 = arith.constant 5 : index
    %c0_34 = arith.constant 0 : index
    %c0_35 = arith.constant 0 : index
    %47 = vector.load %arg6[%c5, %c0_34, %c0_35] : memref<9x1x256xf32, #tpu.memory_space<vmem>>, vector<1x1x256xf32>
    %48 = vector.shape_cast %47 : vector<1x1x256xf32> to vector<1x256xf32>
    %49 = vector.broadcast %48 : vector<1x256xf32> to vector<4x256xf32>
    %50 = arith.mulf %46, %49 : vector<4x256xf32>
    %c5_36 = arith.constant 5 : index
    %c0_37 = arith.constant 0 : index
    %c0_38 = arith.constant 0 : index
    %51 = vector.load %arg4[%c5_36, %c0_37, %c0_38] : memref<9x4x4xf32, #tpu.memory_space<vmem>>, vector<1x4x4xf32>
    %52 = vector.shape_cast %51 : vector<1x4x4xf32> to vector<4x4xf32>
    %cst_39 = arith.constant dense<0.000000e+00> : vector<4x256xf32>
    %53 = tpu.matmul %52, %50, %cst_39 {dimension_numbers = #tpu.dot_dimension_numbers<[1], [0], [0], [1], [0, 0, 1, 1], [], []>, precision = #tpu.contract_precision<fp32>} : vector<4x4xf32>, vector<4x256xf32>, vector<4x256xf32> -> vector<4x256xf32>
    %54 = arith.addf %45, %53 : vector<4x256xf32>
    %c226_i32 = arith.constant 226 : i32
    %55 = tpu.dynamic_rotate %6 by %c226_i32 dim 1 : vector<4x256xf32>, i32 -> vector<4x256xf32>
    %c6 = arith.constant 6 : index
    %c0_40 = arith.constant 0 : index
    %c0_41 = arith.constant 0 : index
    %56 = vector.load %arg6[%c6, %c0_40, %c0_41] : memref<9x1x256xf32, #tpu.memory_space<vmem>>, vector<1x1x256xf32>
    %57 = vector.shape_cast %56 : vector<1x1x256xf32> to vector<1x256xf32>
    %58 = vector.broadcast %57 : vector<1x256xf32> to vector<4x256xf32>
    %59 = arith.mulf %55, %58 : vector<4x256xf32>
    %c6_42 = arith.constant 6 : index
    %c0_43 = arith.constant 0 : index
    %c0_44 = arith.constant 0 : index
    %60 = vector.load %arg4[%c6_42, %c0_43, %c0_44] : memref<9x4x4xf32, #tpu.memory_space<vmem>>, vector<1x4x4xf32>
    %61 = vector.shape_cast %60 : vector<1x4x4xf32> to vector<4x4xf32>
    %cst_45 = arith.constant dense<0.000000e+00> : vector<4x256xf32>
    %62 = tpu.matmul %61, %59, %cst_45 {dimension_numbers = #tpu.dot_dimension_numbers<[1], [0], [0], [1], [0, 0, 1, 1], [], []>, precision = #tpu.contract_precision<fp32>} : vector<4x4xf32>, vector<4x256xf32>, vector<4x256xf32> -> vector<4x256xf32>
    %63 = arith.addf %54, %62 : vector<4x256xf32>
    %c224_i32 = arith.constant 224 : i32
    %64 = tpu.dynamic_rotate %6 by %c224_i32 dim 1 : vector<4x256xf32>, i32 -> vector<4x256xf32>
    %c7 = arith.constant 7 : index
    %c0_46 = arith.constant 0 : index
    %c0_47 = arith.constant 0 : index
    %65 = vector.load %arg6[%c7, %c0_46, %c0_47] : memref<9x1x256xf32, #tpu.memory_space<vmem>>, vector<1x1x256xf32>
    %66 = vector.shape_cast %65 : vector<1x1x256xf32> to vector<1x256xf32>
    %67 = vector.broadcast %66 : vector<1x256xf32> to vector<4x256xf32>
    %68 = arith.mulf %64, %67 : vector<4x256xf32>
    %c7_48 = arith.constant 7 : index
    %c0_49 = arith.constant 0 : index
    %c0_50 = arith.constant 0 : index
    %69 = vector.load %arg4[%c7_48, %c0_49, %c0_50] : memref<9x4x4xf32, #tpu.memory_space<vmem>>, vector<1x4x4xf32>
    %70 = vector.shape_cast %69 : vector<1x4x4xf32> to vector<4x4xf32>
    %cst_51 = arith.constant dense<0.000000e+00> : vector<4x256xf32>
    %71 = tpu.matmul %70, %68, %cst_51 {dimension_numbers = #tpu.dot_dimension_numbers<[1], [0], [0], [1], [0, 0, 1, 1], [], []>, precision = #tpu.contract_precision<fp32>} : vector<4x4xf32>, vector<4x256xf32>, vector<4x256xf32> -> vector<4x256xf32>
    %72 = arith.addf %63, %71 : vector<4x256xf32>
    %c222_i32 = arith.constant 222 : i32
    %73 = tpu.dynamic_rotate %6 by %c222_i32 dim 1 : vector<4x256xf32>, i32 -> vector<4x256xf32>
    %c8 = arith.constant 8 : index
    %c0_52 = arith.constant 0 : index
    %c0_53 = arith.constant 0 : index
    %74 = vector.load %arg6[%c8, %c0_52, %c0_53] : memref<9x1x256xf32, #tpu.memory_space<vmem>>, vector<1x1x256xf32>
    %75 = vector.shape_cast %74 : vector<1x1x256xf32> to vector<1x256xf32>
    %76 = vector.broadcast %75 : vector<1x256xf32> to vector<4x256xf32>
    %77 = arith.mulf %73, %76 : vector<4x256xf32>
    %c8_54 = arith.constant 8 : index
    %c0_55 = arith.constant 0 : index
    %c0_56 = arith.constant 0 : index
    %78 = vector.load %arg4[%c8_54, %c0_55, %c0_56] : memref<9x4x4xf32, #tpu.memory_space<vmem>>, vector<1x4x4xf32>
    %79 = vector.shape_cast %78 : vector<1x4x4xf32> to vector<4x4xf32>
    %cst_57 = arith.constant dense<0.000000e+00> : vector<4x256xf32>
    %80 = tpu.matmul %79, %77, %cst_57 {dimension_numbers = #tpu.dot_dimension_numbers<[1], [0], [0], [1], [0, 0, 1, 1], [], []>, precision = #tpu.contract_precision<fp32>} : vector<4x4xf32>, vector<4x256xf32>, vector<4x256xf32> -> vector<4x256xf32>
    %81 = arith.addf %72, %80 : vector<4x256xf32>
    %c4_58 = arith.constant 4 : index
    %c0_59 = arith.constant 0 : index
    %c0_60 = arith.constant 0 : index
    %82 = vector.load %arg5[%c4_58, %c0_59, %c0_60] : memref<9x4x4xf32, #tpu.memory_space<vmem>>, vector<1x4x4xf32>
    %83 = vector.shape_cast %82 : vector<1x4x4xf32> to vector<4x4xf32>
    %cst_61 = arith.constant dense<0.000000e+00> : vector<4x256xf32>
    %84 = tpu.matmul %83, %81, %cst_61 {dimension_numbers = #tpu.dot_dimension_numbers<[1], [0], [0], [1], [0, 0, 1, 1], [], []>, precision = #tpu.contract_precision<fp32>} : vector<4x4xf32>, vector<4x256xf32>, vector<4x256xf32> -> vector<4x256xf32>
    %c34_i32_62 = arith.constant 34 : i32
    %85 = tpu.dynamic_rotate %81 by %c34_i32_62 dim 1 : vector<4x256xf32>, i32 -> vector<4x256xf32>
    %c0_63 = arith.constant 0 : index
    %c0_64 = arith.constant 0 : index
    %c0_65 = arith.constant 0 : index
    %86 = vector.load %arg6[%c0_63, %c0_64, %c0_65] : memref<9x1x256xf32, #tpu.memory_space<vmem>>, vector<1x1x256xf32>
    %87 = vector.shape_cast %86 : vector<1x1x256xf32> to vector<1x256xf32>
    %88 = vector.broadcast %87 : vector<1x256xf32> to vector<4x256xf32>
    %89 = arith.mulf %85, %88 : vector<4x256xf32>
    %c0_66 = arith.constant 0 : index
    %c0_67 = arith.constant 0 : index
    %c0_68 = arith.constant 0 : index
    %90 = vector.load %arg5[%c0_66, %c0_67, %c0_68] : memref<9x4x4xf32, #tpu.memory_space<vmem>>, vector<1x4x4xf32>
    %91 = vector.shape_cast %90 : vector<1x4x4xf32> to vector<4x4xf32>
    %cst_69 = arith.constant dense<0.000000e+00> : vector<4x256xf32>
    %92 = tpu.matmul %91, %89, %cst_69 {dimension_numbers = #tpu.dot_dimension_numbers<[1], [0], [0], [1], [0, 0, 1, 1], [], []>, precision = #tpu.contract_precision<fp32>} : vector<4x4xf32>, vector<4x256xf32>, vector<4x256xf32> -> vector<4x256xf32>
    %93 = arith.addf %84, %92 : vector<4x256xf32>
    %c32_i32_70 = arith.constant 32 : i32
    %94 = tpu.dynamic_rotate %81 by %c32_i32_70 dim 1 : vector<4x256xf32>, i32 -> vector<4x256xf32>
    %c1_71 = arith.constant 1 : index
    %c0_72 = arith.constant 0 : index
    %c0_73 = arith.constant 0 : index
    %95 = vector.load %arg6[%c1_71, %c0_72, %c0_73] : memref<9x1x256xf32, #tpu.memory_space<vmem>>, vector<1x1x256xf32>
    %96 = vector.shape_cast %95 : vector<1x1x256xf32> to vector<1x256xf32>
    %97 = vector.broadcast %96 : vector<1x256xf32> to vector<4x256xf32>
    %98 = arith.mulf %94, %97 : vector<4x256xf32>
    %c1_74 = arith.constant 1 : index
    %c0_75 = arith.constant 0 : index
    %c0_76 = arith.constant 0 : index
    %99 = vector.load %arg5[%c1_74, %c0_75, %c0_76] : memref<9x4x4xf32, #tpu.memory_space<vmem>>, vector<1x4x4xf32>
    %100 = vector.shape_cast %99 : vector<1x4x4xf32> to vector<4x4xf32>
    %cst_77 = arith.constant dense<0.000000e+00> : vector<4x256xf32>
    %101 = tpu.matmul %100, %98, %cst_77 {dimension_numbers = #tpu.dot_dimension_numbers<[1], [0], [0], [1], [0, 0, 1, 1], [], []>, precision = #tpu.contract_precision<fp32>} : vector<4x4xf32>, vector<4x256xf32>, vector<4x256xf32> -> vector<4x256xf32>
    %102 = arith.addf %93, %101 : vector<4x256xf32>
    %c30_i32_78 = arith.constant 30 : i32
    %103 = tpu.dynamic_rotate %81 by %c30_i32_78 dim 1 : vector<4x256xf32>, i32 -> vector<4x256xf32>
    %c2_79 = arith.constant 2 : index
    %c0_80 = arith.constant 0 : index
    %c0_81 = arith.constant 0 : index
    %104 = vector.load %arg6[%c2_79, %c0_80, %c0_81] : memref<9x1x256xf32, #tpu.memory_space<vmem>>, vector<1x1x256xf32>
    %105 = vector.shape_cast %104 : vector<1x1x256xf32> to vector<1x256xf32>
    %106 = vector.broadcast %105 : vector<1x256xf32> to vector<4x256xf32>
    %107 = arith.mulf %103, %106 : vector<4x256xf32>
    %c2_82 = arith.constant 2 : index
    %c0_83 = arith.constant 0 : index
    %c0_84 = arith.constant 0 : index
    %108 = vector.load %arg5[%c2_82, %c0_83, %c0_84] : memref<9x4x4xf32, #tpu.memory_space<vmem>>, vector<1x4x4xf32>
    %109 = vector.shape_cast %108 : vector<1x4x4xf32> to vector<4x4xf32>
    %cst_85 = arith.constant dense<0.000000e+00> : vector<4x256xf32>
    %110 = tpu.matmul %109, %107, %cst_85 {dimension_numbers = #tpu.dot_dimension_numbers<[1], [0], [0], [1], [0, 0, 1, 1], [], []>, precision = #tpu.contract_precision<fp32>} : vector<4x4xf32>, vector<4x256xf32>, vector<4x256xf32> -> vector<4x256xf32>
    %111 = arith.addf %102, %110 : vector<4x256xf32>
    %c2_i32_86 = arith.constant 2 : i32
    %112 = tpu.dynamic_rotate %81 by %c2_i32_86 dim 1 : vector<4x256xf32>, i32 -> vector<4x256xf32>
    %c3_87 = arith.constant 3 : index
    %c0_88 = arith.constant 0 : index
    %c0_89 = arith.constant 0 : index
    %113 = vector.load %arg6[%c3_87, %c0_88, %c0_89] : memref<9x1x256xf32, #tpu.memory_space<vmem>>, vector<1x1x256xf32>
    %114 = vector.shape_cast %113 : vector<1x1x256xf32> to vector<1x256xf32>
    %115 = vector.broadcast %114 : vector<1x256xf32> to vector<4x256xf32>
    %116 = arith.mulf %112, %115 : vector<4x256xf32>
    %c3_90 = arith.constant 3 : index
    %c0_91 = arith.constant 0 : index
    %c0_92 = arith.constant 0 : index
    %117 = vector.load %arg5[%c3_90, %c0_91, %c0_92] : memref<9x4x4xf32, #tpu.memory_space<vmem>>, vector<1x4x4xf32>
    %118 = vector.shape_cast %117 : vector<1x4x4xf32> to vector<4x4xf32>
    %cst_93 = arith.constant dense<0.000000e+00> : vector<4x256xf32>
    %119 = tpu.matmul %118, %116, %cst_93 {dimension_numbers = #tpu.dot_dimension_numbers<[1], [0], [0], [1], [0, 0, 1, 1], [], []>, precision = #tpu.contract_precision<fp32>} : vector<4x4xf32>, vector<4x256xf32>, vector<4x256xf32> -> vector<4x256xf32>
    %120 = arith.addf %111, %119 : vector<4x256xf32>
    %c254_i32_94 = arith.constant 254 : i32
    %121 = tpu.dynamic_rotate %81 by %c254_i32_94 dim 1 : vector<4x256xf32>, i32 -> vector<4x256xf32>
    %c5_95 = arith.constant 5 : index
    %c0_96 = arith.constant 0 : index
    %c0_97 = arith.constant 0 : index
    %122 = vector.load %arg6[%c5_95, %c0_96, %c0_97] : memref<9x1x256xf32, #tpu.memory_space<vmem>>, vector<1x1x256xf32>
    %123 = vector.shape_cast %122 : vector<1x1x256xf32> to vector<1x256xf32>
    %124 = vector.broadcast %123 : vector<1x256xf32> to vector<4x256xf32>
    %125 = arith.mulf %121, %124 : vector<4x256xf32>
    %c5_98 = arith.constant 5 : index
    %c0_99 = arith.constant 0 : index
    %c0_100 = arith.constant 0 : index
    %126 = vector.load %arg5[%c5_98, %c0_99, %c0_100] : memref<9x4x4xf32, #tpu.memory_space<vmem>>, vector<1x4x4xf32>
    %127 = vector.shape_cast %126 : vector<1x4x4xf32> to vector<4x4xf32>
    %cst_101 = arith.constant dense<0.000000e+00> : vector<4x256xf32>
    %128 = tpu.matmul %127, %125, %cst_101 {dimension_numbers = #tpu.dot_dimension_numbers<[1], [0], [0], [1], [0, 0, 1, 1], [], []>, precision = #tpu.contract_precision<fp32>} : vector<4x4xf32>, vector<4x256xf32>, vector<4x256xf32> -> vector<4x256xf32>
    %129 = arith.addf %120, %128 : vector<4x256xf32>
    %c226_i32_102 = arith.constant 226 : i32
    %130 = tpu.dynamic_rotate %81 by %c226_i32_102 dim 1 : vector<4x256xf32>, i32 -> vector<4x256xf32>
    %c6_103 = arith.constant 6 : index
    %c0_104 = arith.constant 0 : index
    %c0_105 = arith.constant 0 : index
    %131 = vector.load %arg6[%c6_103, %c0_104, %c0_105] : memref<9x1x256xf32, #tpu.memory_space<vmem>>, vector<1x1x256xf32>
    %132 = vector.shape_cast %131 : vector<1x1x256xf32> to vector<1x256xf32>
    %133 = vector.broadcast %132 : vector<1x256xf32> to vector<4x256xf32>
    %134 = arith.mulf %130, %133 : vector<4x256xf32>
    %c6_106 = arith.constant 6 : index
    %c0_107 = arith.constant 0 : index
    %c0_108 = arith.constant 0 : index
    %135 = vector.load %arg5[%c6_106, %c0_107, %c0_108] : memref<9x4x4xf32, #tpu.memory_space<vmem>>, vector<1x4x4xf32>
    %136 = vector.shape_cast %135 : vector<1x4x4xf32> to vector<4x4xf32>
    %cst_109 = arith.constant dense<0.000000e+00> : vector<4x256xf32>
    %137 = tpu.matmul %136, %134, %cst_109 {dimension_numbers = #tpu.dot_dimension_numbers<[1], [0], [0], [1], [0, 0, 1, 1], [], []>, precision = #tpu.contract_precision<fp32>} : vector<4x4xf32>, vector<4x256xf32>, vector<4x256xf32> -> vector<4x256xf32>
    %138 = arith.addf %129, %137 : vector<4x256xf32>
    %c224_i32_110 = arith.constant 224 : i32
    %139 = tpu.dynamic_rotate %81 by %c224_i32_110 dim 1 : vector<4x256xf32>, i32 -> vector<4x256xf32>
    %c7_111 = arith.constant 7 : index
    %c0_112 = arith.constant 0 : index
    %c0_113 = arith.constant 0 : index
    %140 = vector.load %arg6[%c7_111, %c0_112, %c0_113] : memref<9x1x256xf32, #tpu.memory_space<vmem>>, vector<1x1x256xf32>
    %141 = vector.shape_cast %140 : vector<1x1x256xf32> to vector<1x256xf32>
    %142 = vector.broadcast %141 : vector<1x256xf32> to vector<4x256xf32>
    %143 = arith.mulf %139, %142 : vector<4x256xf32>
    %c7_114 = arith.constant 7 : index
    %c0_115 = arith.constant 0 : index
    %c0_116 = arith.constant 0 : index
    %144 = vector.load %arg5[%c7_114, %c0_115, %c0_116] : memref<9x4x4xf32, #tpu.memory_space<vmem>>, vector<1x4x4xf32>
    %145 = vector.shape_cast %144 : vector<1x4x4xf32> to vector<4x4xf32>
    %cst_117 = arith.constant dense<0.000000e+00> : vector<4x256xf32>
    %146 = tpu.matmul %145, %143, %cst_117 {dimension_numbers = #tpu.dot_dimension_numbers<[1], [0], [0], [1], [0, 0, 1, 1], [], []>, precision = #tpu.contract_precision<fp32>} : vector<4x4xf32>, vector<4x256xf32>, vector<4x256xf32> -> vector<4x256xf32>
    %147 = arith.addf %138, %146 : vector<4x256xf32>
    %c222_i32_118 = arith.constant 222 : i32
    %148 = tpu.dynamic_rotate %81 by %c222_i32_118 dim 1 : vector<4x256xf32>, i32 -> vector<4x256xf32>
    %c8_119 = arith.constant 8 : index
    %c0_120 = arith.constant 0 : index
    %c0_121 = arith.constant 0 : index
    %149 = vector.load %arg6[%c8_119, %c0_120, %c0_121] : memref<9x1x256xf32, #tpu.memory_space<vmem>>, vector<1x1x256xf32>
    %150 = vector.shape_cast %149 : vector<1x1x256xf32> to vector<1x256xf32>
    %151 = vector.broadcast %150 : vector<1x256xf32> to vector<4x256xf32>
    %152 = arith.mulf %148, %151 : vector<4x256xf32>
    %c8_122 = arith.constant 8 : index
    %c0_123 = arith.constant 0 : index
    %c0_124 = arith.constant 0 : index
    %153 = vector.load %arg5[%c8_122, %c0_123, %c0_124] : memref<9x4x4xf32, #tpu.memory_space<vmem>>, vector<1x4x4xf32>
    %154 = vector.shape_cast %153 : vector<1x4x4xf32> to vector<4x4xf32>
    %cst_125 = arith.constant dense<0.000000e+00> : vector<4x256xf32>
    %155 = tpu.matmul %154, %152, %cst_125 {dimension_numbers = #tpu.dot_dimension_numbers<[1], [0], [0], [1], [0, 0, 1, 1], [], []>, precision = #tpu.contract_precision<fp32>} : vector<4x4xf32>, vector<4x256xf32>, vector<4x256xf32> -> vector<4x256xf32>
    %156 = arith.addf %147, %155 : vector<4x256xf32>
    %c0_126 = arith.constant 0 : index
    %c0_127 = arith.constant 0 : index
    %157 = vector.load %arg7[%c0_126, %c0_127] : memref<16x4xf32, #tpu.memory_space<vmem>>, vector<16x4xf32>
    %cst_128 = arith.constant dense<0.000000e+00> : vector<16x256xf32>
    %158 = tpu.matmul %157, %156, %cst_128 {dimension_numbers = #tpu.dot_dimension_numbers<[1], [0], [0], [1], [0, 0, 1, 1], [], []>, precision = #tpu.contract_precision<fp32>} : vector<16x4xf32>, vector<4x256xf32>, vector<16x256xf32> -> vector<16x256xf32>
    %c0_129 = arith.constant 0 : index
    %c0_130 = arith.constant 0 : index
    %159 = vector.load %arg8[%c0_129, %c0_130] : memref<16x1xf32, #tpu.memory_space<vmem>>, vector<16x1xf32>
    %160 = vector.broadcast %159 : vector<16x1xf32> to vector<16x256xf32>
    %161 = arith.addf %158, %160 : vector<16x256xf32>
    %cst_131 = arith.constant 0.000000e+00 : f32
    %162 = vector.broadcast %cst_131 : f32 to vector<16x256xf32>
    %163 = arith.maximumf %161, %162 : vector<16x256xf32>
    %c0_132 = arith.constant 0 : index
    %c0_133 = arith.constant 0 : index
    %c0_134 = arith.constant 0 : index
    %164 = vector.load %arg9[%c0_132, %c0_133, %c0_134] : memref<1x16x256xf32, #tpu.memory_space<vmem>>, vector<1x16x256xf32>
    %165 = vector.shape_cast %164 : vector<1x16x256xf32> to vector<16x256xf32>
    %166 = vector.shape_cast %163 : vector<16x256xf32> to vector<1x16x256xf32>
    tpu.vector_store %arg9[%c0_132, %c0_133, %c0_134], %166 {strides = array<i32>} : memref<1x16x256xf32, #tpu.memory_space<vmem>>, vector<1x16x256xf32>,
    return
  }
  func.func @transform_0(%arg0: i32) -> (i32, i32, i32) {
    %c0_i32 = arith.constant 0 : i32
    %c0_i32_0 = arith.constant 0 : i32
    %c0_i32_1 = arith.constant 0 : i32
    return %arg0, %c0_i32, %c0_i32_0 : i32, i32, i32
  }
  func.func @transform_1(%arg0: i32) -> (i32, i32) {
    %c0_i32 = arith.constant 0 : i32
    %c0_i32_0 = arith.constant 0 : i32
    %c0_i32_1 = arith.constant 0 : i32
    return %c0_i32, %c0_i32_0 : i32, i32
  }
  func.func @transform_2(%arg0: i32) -> (i32, i32) {
    %c0_i32 = arith.constant 0 : i32
    %c0_i32_0 = arith.constant 0 : i32
    %c0_i32_1 = arith.constant 0 : i32
    return %c0_i32, %c0_i32_0 : i32, i32
  }
  func.func @transform_3(%arg0: i32) -> (i32, i32, i32) {
    %c0_i32 = arith.constant 0 : i32
    %c0_i32_0 = arith.constant 0 : i32
    %c0_i32_1 = arith.constant 0 : i32
    %c0_i32_2 = arith.constant 0 : i32
    return %c0_i32, %c0_i32_0, %c0_i32_1 : i32, i32, i32
  }
  func.func @transform_4(%arg0: i32) -> (i32, i32, i32) {
    %c0_i32 = arith.constant 0 : i32
    %c0_i32_0 = arith.constant 0 : i32
    %c0_i32_1 = arith.constant 0 : i32
    %c0_i32_2 = arith.constant 0 : i32
    return %c0_i32, %c0_i32_0, %c0_i32_1 : i32, i32, i32
  }
  func.func @transform_5(%arg0: i32) -> (i32, i32, i32) {
    %c0_i32 = arith.constant 0 : i32
    %c0_i32_0 = arith.constant 0 : i32
    %c0_i32_1 = arith.constant 0 : i32
    %c0_i32_2 = arith.constant 0 : i32
    return %c0_i32, %c0_i32_0, %c0_i32_1 : i32, i32, i32
  }
  func.func @transform_6(%arg0: i32) -> (i32, i32) {
    %c0_i32 = arith.constant 0 : i32
    %c0_i32_0 = arith.constant 0 : i32
    %c0_i32_1 = arith.constant 0 : i32
    return %c0_i32, %c0_i32_0 : i32, i32
  }
  func.func @transform_7(%arg0: i32) -> (i32, i32) {
    %c0_i32 = arith.constant 0 : i32
    %c0_i32_0 = arith.constant 0 : i32
    %c0_i32_1 = arith.constant 0 : i32
    return %c0_i32, %c0_i32_0 : i32, i32
  }
  func.func @transform_8(%arg0: i32) -> (i32, i32, i32) {
    %c0_i32 = arith.constant 0 : i32
    %c0_i32_0 = arith.constant 0 : i32
    %c0_i32_1 = arith.constant 0 : i32
    return %arg0, %c0_i32, %c0_i32_0 : i32, i32, i32
  }
}

</mosaic_0001>

<llo_original>
// kernel: tpu_custom_call.1
$region0: #{tpu_custom_call.1}
  #allocation0 [shape = 'u32[]', space=smem, size = 0x4, offset = 0x4, fixed_abs, tag = 'smem constant byte address 0x4 - core index']
  #allocation1 [shape = 'u32[144,128]{1,0:T(1,128)}', space=vmem, size = 0x12000, scoped, tag = 'internal scratch']
  %s0 = inlined_call_operand.vmem [shape: f32[2,32,256], index: 0, kind: input, shape index: {}]
  %s1 = inlined_call_operand.hbm [shape: f32[4,32], index: 1, kind: input, shape index: {}]
  %s2 = inlined_call_operand.vmem [shape: f32[4,1], index: 2, kind: input, shape index: {}]
  %s3 = inlined_call_operand.vmem [shape: f32[9,4,4], index: 3, kind: input, shape index: {}]
  %s4 = inlined_call_operand.vmem [shape: f32[9,4,4], index: 4, kind: input, shape index: {}]
  %s5 = inlined_call_operand.vmem [shape: f32[9,1,256], index: 5, kind: input, shape index: {}]
  %s6 = inlined_call_operand.vmem [shape: f32[16,4], index: 6, kind: input, shape index: {}]
  %s7 = inlined_call_operand.vmem [shape: f32[16,1], index: 7, kind: input, shape index: {}]
  %s8 = inlined_call_operand.hbm [shape: f32[2,16,256], index: 8, kind: output, shape index: {}]
  %s9 = sld [smem:[#allocation0]]
  $region69: #{tpu_custom_call.1} parent=0
    _
  %s11 = ssub.s32 1, %s9
  %s12 = scalar_select 0, %s11, %s9
  $region1: #{tpu_custom_call.1} parent=0
    #allocation2 [shape = 'u8[2048]{0}', space=vmem, size = 0x800, scoped, tag = 'input window, operand 1, single buffered']
    #allocation3 [shape = 's32[2]{0}', space=sflag, size = 0x8, scoped, tag = 'scoped memory for tpu_custom_call.1']
    #allocation4 [shape = 's32[2]{0}', space=sflag, size = 0x8, scoped, tag = 'scoped memory for tpu_custom_call.1']
    #allocation5 [shape = 'u8[32768]{0}', space=vmem, size = 0x8000, scoped, tag = 'output window, operand 0']
    %13 = vsyncpa [#allocation3], 0
    %14 = vsyncpa [#allocation4], 0
    %s15 = scalar_lea.sflag [#allocation4], 1
    %16 = vsyncpa %s15, 0
    loop: start=0, step=1, limit=4
    $region2: #{tpu_custom_call.1} parent=1 // loop_pre_header
      _
    $region3: #{tpu_custom_call.1} parent=1 // loop_header
      %s18 = sphi 0, %s22
      %p19 = scmp.ge.s32.totalorder %s18, 4
      %s28 = sphi 0, %s30
      %s31 = sphi 0, %s28
      %s32 = sphi 0, %s31
      %s48 = sphi 0, %s32
      %s52 = sphi 0, %s52
      %s54 = sphi 0, %s52
      %s55 = sphi 0, %s54
      %s69 = sphi 0, %s55
      %s73 = sphi 0, %s73
      %s75 = sphi 0, %s73
      %s76 = sphi 0, %s75
      %s90 = sphi 0, %s76
      %s94 = sphi 0, %s94
      %s96 = sphi 0, %s94
      %s97 = sphi 0, %s96
      %s111 = sphi 0, %s97
      %s115 = sphi 0, %s115
      %s117 = sphi 0, %s115
      %s118 = sphi 0, %s117
      %s132 = sphi 0, %s118
      %s136 = sphi 0, %s136
      %s138 = sphi 0, %s136
      %s139 = sphi 0, %s138
      %s153 = sphi 0, %s139
      %s157 = sphi 0, %s157
      %s159 = sphi 0, %s157
      %s160 = sphi 0, %s159
      %s174 = sphi 0, %s160
      %s178 = sphi 0, %s178
      %s180 = sphi 0, %s178
      %s181 = sphi 0, %s180
      %s195 = sphi 0, %s181
      %s201 = sphi 0, %s203
      %s204 = sphi 0, %s201
      %s205 = sphi 0, %s204
      %s221 = sphi 0, %s205
    $region4: #{tpu_custom_call.1} parent=1 // loop_header_branch
      %21 = sbr.rel (%p19) target = $region8
    $region5: #{tpu_custom_call.1} parent=1 // loop_body
      %s23 = ssub.s32 %s18, 1
      %s24 = ssub.s32 %s18, 2
      %s25 = sadd.s32 %s18, 1
      %s26 = ssub.s32 %s18, %s25
      %p27 = scmp.eq.s32.totalorder %s26, 0
      %s29 = sadd.s32 %s28, 1
      %s30 = scalar_select %p27, %s28, %s29
      %p33 = pneg %p27
      %p34 = scmp.eq.s32.totalorder %s18, 1
      %p35 = por %p33, %p34
      %p36 = scmp.ne.s32.totalorder %s28, %s31
      %p37 = scmp.eq.s32.totalorder %s18, 0
      %p38 = por %p36, %p37
      %p39 = scmp.ne.s32.totalorder %s28, %s31
      %p40 = scmp.eq.s32.totalorder %s23, 1
      %p41 = por %p39, %p40
      %p42 = scmp.ne.s32.totalorder %s31, %s32
      %p43 = scmp.eq.s32.totalorder %s23, 0
      %p44 = por %p42, %p43
      %p45 = scmp.ne.s32.totalorder %s31, %s32
      %p46 = scmp.eq.s32.totalorder %s24, 1
      %p47 = por %p45, %p46
      %p49 = scmp.ne.s32.totalorder %s32, %s48
      %p50 = scmp.eq.s32.totalorder %s24, 0
      %p51 = por %p49, %p50
      %s53 = sadd.s32 %s52, 1
      %p56 = scmp.eq.s32.totalorder %s18, 1
      %p57 = scmp.ne.s32.totalorder %s52, %s54
      %p58 = scmp.eq.s32.totalorder %s18, 0
      %p59 = por %p57, %p58
      %p60 = scmp.ne.s32.totalorder %s52, %s54
      %p61 = scmp.eq.s32.totalorder %s23, 1
      %p62 = por %p60, %p61
      %p63 = scmp.ne.s32.totalorder %s54, %s55
      %p64 = scmp.eq.s32.totalorder %s23, 0
      %p65 = por %p63, %p64
      %p66 = scmp.ne.s32.totalorder %s54, %s55
      %p67 = scmp.eq.s32.totalorder %s24, 1
      %p68 = por %p66, %p67
      %p70 = scmp.ne.s32.totalorder %s55, %s69
      %p71 = scmp.eq.s32.totalorder %s24, 0
      %p72 = por %p70, %p71
      %s74 = sadd.s32 %s73, 1
      %p77 = scmp.eq.s32.totalorder %s18, 1
      %p78 = scmp.ne.s32.totalorder %s73, %s75
      %p79 = scmp.eq.s32.totalorder %s18, 0
      %p80 = por %p78, %p79
      %p81 = scmp.ne.s32.totalorder %s73, %s75
      %p82 = scmp.eq.s32.totalorder %s23, 1
      %p83 = por %p81, %p82
      %p84 = scmp.ne.s32.totalorder %s75, %s76
      %p85 = scmp.eq.s32.totalorder %s23, 0
      %p86 = por %p84, %p85
      %p87 = scmp.ne.s32.totalorder %s75, %s76
      %p88 = scmp.eq.s32.totalorder %s24, 1
      %p89 = por %p87, %p88
      %p91 = scmp.ne.s32.totalorder %s76, %s90
      %p92 = scmp.eq.s32.totalorder %s24, 0
      %p93 = por %p91, %p92
      %s95 = sadd.s32 %s94, 1
      %p98 = scmp.eq.s32.totalorder %s18, 1
      %p99 = scmp.ne.s32.totalorder %s94, %s96
      %p100 = scmp.eq.s32.totalorder %s18, 0
      %p101 = por %p99, %p100
      %p102 = scmp.ne.s32.totalorder %s94, %s96
      %p103 = scmp.eq.s32.totalorder %s23, 1
      %p104 = por %p102, %p103
      %p105 = scmp.ne.s32.totalorder %s96, %s97
      %p106 = scmp.eq.s32.totalorder %s23, 0
      %p107 = por %p105, %p106
      %p108 = scmp.ne.s32.totalorder %s96, %s97
      %p109 = scmp.eq.s32.totalorder %s24, 1
      %p110 = por %p108, %p109
      %p112 = scmp.ne.s32.totalorder %s97, %s111
      %p113 = scmp.eq.s32.totalorder %s24, 0
      %p114 = por %p112, %p113
      %s116 = sadd.s32 %s115, 1
      %p119 = scmp.eq.s32.totalorder %s18, 1
      %p120 = scmp.ne.s32.totalorder %s115, %s117
      %p121 = scmp.eq.s32.totalorder %s18, 0
      %p122 = por %p120, %p121
      %p123 = scmp.ne.s32.totalorder %s115, %s117
      %p124 = scmp.eq.s32.totalorder %s23, 1
      %p125 = por %p123, %p124
      %p126 = scmp.ne.s32.totalorder %s117, %s118
      %p127 = scmp.eq.s32.totalorder %s23, 0
      %p128 = por %p126, %p127
      %p129 = scmp.ne.s32.totalorder %s117, %s118
      %p130 = scmp.eq.s32.totalorder %s24, 1
      %p131 = por %p129, %p130
      %p133 = scmp.ne.s32.totalorder %s118, %s132
      %p134 = scmp.eq.s32.totalorder %s24, 0
      %p135 = por %p133, %p134
      %s137 = sadd.s32 %s136, 1
      %p140 = scmp.eq.s32.totalorder %s18, 1
      %p141 = scmp.ne.s32.totalorder %s136, %s138
      %p142 = scmp.eq.s32.totalorder %s18, 0
      %p143 = por %p141, %p142
      %p144 = scmp.ne.s32.totalorder %s136, %s138
      %p145 = scmp.eq.s32.totalorder %s23, 1
      %p146 = por %p144, %p145
      %p147 = scmp.ne.s32.totalorder %s138, %s139
      %p148 = scmp.eq.s32.totalorder %s23, 0
      %p149 = por %p147, %p148
      %p150 = scmp.ne.s32.totalorder %s138, %s139
      %p151 = scmp.eq.s32.totalorder %s24, 1
      %p152 = por %p150, %p151
      %p154 = scmp.ne.s32.totalorder %s139, %s153
      %p155 = scmp.eq.s32.totalorder %s24, 0
      %p156 = por %p154, %p155
      %s158 = sadd.s32 %s157, 1
      %p161 = scmp.eq.s32.totalorder %s18, 1
      %p162 = scmp.ne.s32.totalorder %s157, %s159
      %p163 = scmp.eq.s32.totalorder %s18, 0
      %p164 = por %p162, %p163
      %p165 = scmp.ne.s32.totalorder %s157, %s159
      %p166 = scmp.eq.s32.totalorder %s23, 1
      %p167 = por %p165, %p166
      %p168 = scmp.ne.s32.totalorder %s159, %s160
      %p169 = scmp.eq.s32.totalorder %s23, 0
      %p170 = por %p168, %p169
      %p171 = scmp.ne.s32.totalorder %s159, %s160
      %p172 = scmp.eq.s32.totalorder %s24, 1
      %p173 = por %p171, %p172
      %p175 = scmp.ne.s32.totalorder %s160, %s174
      %p176 = scmp.eq.s32.totalorder %s24, 0
      %p177 = por %p175, %p176
      %s179 = sadd.s32 %s178, 1
      %p182 = scmp.eq.s32.totalorder %s18, 1
      %p183 = scmp.ne.s32.totalorder %s178, %s180
      %p184 = scmp.eq.s32.totalorder %s18, 0
      %p185 = por %p183, %p184
      %p186 = scmp.ne.s32.totalorder %s178, %s180
      %p187 = scmp.eq.s32.totalorder %s23, 1
      %p188 = por %p186, %p187
      %p189 = scmp.ne.s32.totalorder %s180, %s181
      %p190 = scmp.eq.s32.totalorder %s23, 0
      %p191 = por %p189, %p190
      %p192 = scmp.ne.s32.totalorder %s180, %s181
      %p193 = scmp.eq.s32.totalorder %s24, 1
      %p194 = por %p192, %p193
      %p196 = scmp.ne.s32.totalorder %s181, %s195
      %p197 = scmp.eq.s32.totalorder %s24, 0
      %p198 = por %p196, %p197
      %s199 = ssub.s32 %s18, %s25
      %p200 = scmp.eq.s32.totalorder %s199, 0
      %s202 = sadd.s32 %s201, 1
      %s203 = scalar_select %p200, %s201, %s202
      %p206 = pneg %p200
      %p207 = scmp.eq.s32.totalorder %s18, 1
      %p208 = por %p206, %p207
      %p209 = scmp.ne.s32.totalorder %s201, %s204
      %p210 = scmp.eq.s32.totalorder %s18, 0
      %p211 = por %p209, %p210
      %p212 = scmp.ne.s32.totalorder %s201, %s204
      %p213 = scmp.eq.s32.totalorder %s23, 1
      %p214 = por %p212, %p213
      %p215 = scmp.ne.s32.totalorder %s204, %s205
      %p216 = scmp.eq.s32.totalorder %s23, 0
      %p217 = por %p215, %p216
      %p218 = scmp.ne.s32.totalorder %s204, %s205
      %p219 = scmp.eq.s32.totalorder %s24, 1
      %p220 = por %p218, %p219
      %p222 = scmp.ne.s32.totalorder %s205, %s221
      %p223 = scmp.eq.s32.totalorder %s24, 0
      %p224 = por %p222, %p223
      %p225 = scmp.le.s32.totalorder 1, %s18
      %p226 = scmp.lt.s32.totalorder %s18, 3
      %p227 = pnand %p225, %p226
      %p228 = pneg %p227
      // Predicated region
      $region9: #{tpu_custom_call.1} parent=5 // pred_check
        _
      $region10: #{tpu_custom_call.1} parent=5 // pred_check_branch
        %230 = sbr.rel (%p227) target = $region12
      $region11: #{tpu_custom_call.1} parent=5 // pred_region
        %s231 = ssub.s32 %s18, 1
        // Predicated region
        $region13: #{tpu_custom_call.1} parent=11 // pred_check
          %p232 = pneg %p65
        $region14: #{tpu_custom_call.1} parent=11 // pred_check_branch
          %234 = sbr.rel (%p232) target = $region16
        $region15: #{tpu_custom_call.1} parent=11 // pred_region
          %s236 = ssub.s32 64, 64
          %237 = vsyncadd [#allocation3], %s236
          %s239 = sshll.u32 [#allocation2], 4
          %s240 = int_to_ptr.vmem [resolvable:$true] %s239
          %242 = dma.hbm_to_vmem [thread:$0]  %s1, 64, %s240, [#allocation3]
        $region16: #{tpu_custom_call.1} parent=11 // pred_fallthru
          _
        // Predicated region
        $region17: #{tpu_custom_call.1} parent=11 // pred_check
          %p243 = pneg %p86
        $region18: #{tpu_custom_call.1} parent=11 // pred_check_branch
          %245 = sbr.rel (%p243) target = $region20
        $region19: #{tpu_custom_call.1} parent=11 // pred_region
          _
        $region20: #{tpu_custom_call.1} parent=11 // pred_fallthru
          _
        // Predicated region
        $region21: #{tpu_custom_call.1} parent=11 // pred_check
          %p246 = pneg %p107
        $region22: #{tpu_custom_call.1} parent=11 // pred_check_branch
          %248 = sbr.rel (%p246) target = $region24
        $region23: #{tpu_custom_call.1} parent=11 // pred_region
          _
        $region24: #{tpu_custom_call.1} parent=11 // pred_fallthru
          _
        // Predicated region
        $region25: #{tpu_custom_call.1} parent=11 // pred_check
          %p249 = pneg %p128
        $region26: #{tpu_custom_call.1} parent=11 // pred_check_branch
          %251 = sbr.rel (%p249) target = $region28
        $region27: #{tpu_custom_call.1} parent=11 // pred_region
          _
        $region28: #{tpu_custom_call.1} parent=11 // pred_fallthru
          _
        // Predicated region
        $region29: #{tpu_custom_call.1} parent=11 // pred_check
          %p252 = pneg %p149
        $region30: #{tpu_custom_call.1} parent=11 // pred_check_branch
          %254 = sbr.rel (%p252) target = $region32
        $region31: #{tpu_custom_call.1} parent=11 // pred_region
          _
        $region32: #{tpu_custom_call.1} parent=11 // pred_fallthru
          _
        // Predicated region
        $region33: #{tpu_custom_call.1} parent=11 // pred_check
          %p255 = pneg %p170
        $region34: #{tpu_custom_call.1} parent=11 // pred_check_branch
          %257 = sbr.rel (%p255) target = $region36
        $region35: #{tpu_custom_call.1} parent=11 // pred_region
          _
        $region36: #{tpu_custom_call.1} parent=11 // pred_fallthru
          _
        // Predicated region
        $region37: #{tpu_custom_call.1} parent=11 // pred_check
          %p258 = pneg %p191
        $region38: #{tpu_custom_call.1} parent=11 // pred_check_branch
          %260 = sbr.rel (%p258) target = $region40
        $region39: #{tpu_custom_call.1} parent=11 // pred_region
          _
        $region40: #{tpu_custom_call.1} parent=11 // pred_fallthru
          _
      $region12: #{tpu_custom_call.1} parent=5 // pred_fallthru
        _
      %p261 = scmp.lt.s32.totalorder %s18, 2
      // Predicated region
      $region41: #{tpu_custom_call.1} parent=5 // pred_check
        %p262 = pneg %p261
      $region42: #{tpu_custom_call.1} parent=5 // pred_check_branch
        %264 = sbr.rel (%p262) target = $region44
      $region43: #{tpu_custom_call.1} parent=5 // pred_region
        // Predicated region
        $region45: #{tpu_custom_call.1} parent=43 // pred_check
          %p265 = pneg %p38
        $region46: #{tpu_custom_call.1} parent=43 // pred_check_branch
          %267 = sbr.rel (%p265) target = $region48
        $region47: #{tpu_custom_call.1} parent=43 // pred_region
          %p268 = scmp.lt.s32.totalorder %s18, 1
          %s269 = scalar_select %p268, %s18, 1
          %s270 = smul.addr %s269, 8
          %s271 = smul.addr %s270, 8
          %s272 = scalar_lea.vmem %s0, %s271
        $region48: #{tpu_custom_call.1} parent=43 // pred_fallthru
          _
      $region44: #{tpu_custom_call.1} parent=5 // pred_fallthru
        _
      %p273 = scmp.le.s32.totalorder 1, %s18
      %p274 = scmp.lt.s32.totalorder %s18, 3
      %p275 = pnand %p273, %p274
      %p276 = pneg %p275
      // Predicated region
      $region49: #{tpu_custom_call.1} parent=5 // pred_check
        _
      $region50: #{tpu_custom_call.1} parent=5 // pred_check_branch
        %278 = sbr.rel (%p275) target = $region52
      $region51: #{tpu_custom_call.1} parent=5 // pred_region
        %s279 = ssub.s32 %s18, 1
        // Predicated region
        $region53: #{tpu_custom_call.1} parent=51 // pred_check
          %p280 = pneg %p65
        $region54: #{tpu_custom_call.1} parent=51 // pred_check_branch
          %282 = sbr.rel (%p280) target = $region56
        $region55: #{tpu_custom_call.1} parent=51 // pred_region
          %283 = dma.done [#allocation3], 64
        $region56: #{tpu_custom_call.1} parent=51 // pred_fallthru
          _
        %p284 = scmp.lt.s32.totalorder %s23, 1
        %s285 = scalar_select %p284, %s23, 1
        %s286 = smul.addr %s285, 8
        %s287 = smul.addr %s286, 8
        %s288 = scalar_lea.vmem %s0, %s287
        %p289 = pneg %p44
        %p290 = pneg %p41
        %p291 = pneg %p65
        %p292 = pneg %p62
        %p293 = pneg %p86
        %p294 = pneg %p83
        %p295 = pneg %p107
        %p296 = pneg %p104
        %p297 = pneg %p128
        %p298 = pneg %p125
        %p299 = pneg %p149
        %p300 = pneg %p146
        %p301 = pneg %p170
        %p302 = pneg %p167
        %p303 = pneg %p191
        %p304 = pneg %p188
        %p305 = pneg %p217
        %p306 = pneg %p214
        %s307 = sand.u32 %s204, 1
        %s308 = scalar_lea.sflag [#allocation4], %s307
        %s309 = sand.u32 %s204, 1
        %s310 = smul.addr %s309, 32
        %s311 = scalar_lea.vmem [#allocation5], %s310
        %p312 = scmp.lt.s32.totalorder %s23, 1
        %s313 = scalar_select %p312, %s23, 1
        %s314 = smul.addr %s313, 8
        %s315 = smul.addr %s314, 8
        %s316 = scalar_lea.vmem %s0, %s315
        %v317 = vld [vmem:[%s316] sm:$0xff]
        %v318 = vld [vmem:[%s316 + $0x8] sm:$0xff]
        %v319 = vld [vmem:[%s316 + $0x10] sm:$0xff]
        %v320 = vld [vmem:[%s316 + $0x18] sm:$0xff]
        %v321 = vld [vmem:[%s316 + $0x20] sm:$0xff]
        %v322 = vld [vmem:[%s316 + $0x28] sm:$0xff]
        %v323 = vld [vmem:[%s316 + $0x30] sm:$0xff]
        %v324 = vld [vmem:[%s316 + $0x38] sm:$0xff]
        %v325 = vld [vmem:[#allocation2] sm:$0xf]
        %v326 = vld [vmem:[%s2] sm:$0xf]
        %328 = vset.pattern.permute.xlu0 0
        %329 = vperm.xlu0 %328, %v326
        %v330 = vpop.permute.xlu0 %329
        %vm332 = vcmask 261120
        %v334 = vsel %vm332, %v325, 0
        %v336 = vand.u32 %v318, 4294901760
        %337 = vmatprep.subr.mxu0 %v336
        %v338 = vand.u32 %v317, 4294901760
        %339 = vmatpush1.msra.mxu0 %v338
        %v340 = vand.u32 %v320, 4294901760
        %341 = vmatprep.subr.mxu0 %v340
        %v342 = vand.u32 %v319, 4294901760
        %343 = vmatpush1.msra.mxu0 %v342
        %v344 = vand.u32 %v322, 4294901760
        %345 = vmatprep.subr.mxu0 %v344
        %v346 = vand.u32 %v321, 4294901760
        %347 = vmatpush1.msra.mxu0 %v346
        %v348 = vand.u32 %v324, 4294901760
        %349 = vmatprep.subr.mxu0 %v348
        %v350 = vand.u32 %v323, 4294901760
        %351 = vmatpush1.msra.mxu0 %v350
        %352 = vmatprep.subr.mxu0 0.0
        %353 = vmatpush1.msra.mxu0 0.0
        %354 = vmatprep.subr.mxu0 0.0
        %355 = vmatpush1.msra.mxu0 0.0
        %356 = vmatprep.subr.mxu0 0.0
        %357 = vmatpush1.msra.mxu0 0.0
        %358 = vmatprep.subr.mxu0 0.0
        %359 = vmatpush1.msra.mxu0 0.0
        %360 = vmatprep.subr.mxu0 0.0
        %361 = vmatpush1.msra.mxu0 0.0
        %362 = vmatprep.subr.mxu0 0.0
        %363 = vmatpush1.msra.mxu0 0.0
        %364 = vmatprep.subr.mxu0 0.0
        %365 = vmatpush1.msra.mxu0 0.0
        %366 = vmatprep.subr.mxu0 0.0
        %367 = vmatpush1.msra.mxu0 0.0
        %368 = vmatprep.subr.mxu0 0.0
        %369 = vmatpush1.msra.mxu0 0.0
        %370 = vmatprep.subr.mxu0 0.0
        %371 = vmatpush1.msra.mxu0 0.0
        %372 = vmatprep.subr.mxu0 0.0
        %373 = vmatpush1.msra.mxu0 0.0
        %374 = vmatprep.subr.mxu0 0.0
        %375 = vmatpush1.msra.mxu0 0.0
        %376 = vmatprep.subr.mxu0 0.0
        %377 = vmatpush1.msra.mxu0 0.0
        %378 = vmatprep.subr.mxu0 0.0
        %379 = vmatpush1.msra.mxu0 0.0
        %380 = vmatprep.subr.mxu0 0.0
        %381 = vmatpush1.msra.mxu0 0.0
        %382 = vmatprep.subr.mxu0 0.0
        %383 = vmatpush1.msra.mxu0 0.0
        %384 = vmatprep.subr.mxu0 0.0
        %385 = vmatpush1.msra.mxu0 0.0
        %386 = vmatprep.subr.mxu0 0.0
        %387 = vmatpush1.msra.mxu0 0.0
        %388 = vmatprep.subr.mxu0 0.0
        %389 = vmatpush1.msra.mxu0 0.0
        %390 = vmatprep.subr.mxu0 0.0
        %391 = vmatpush1.msra.mxu0 0.0
        %392 = vmatprep.subr.mxu0 0.0
        %393 = vmatpush1.msra.mxu0 0.0
        %394 = vmatprep.subr.mxu0 0.0
        %395 = vmatpush1.msra.mxu0 0.0
        %396 = vmatprep.subr.mxu0 0.0
        %397 = vmatpush1.msra.mxu0 0.0
        %398 = vmatprep.subr.mxu0 0.0
        %399 = vmatpush1.msra.mxu0 0.0
        %400 = vmatprep.subr.mxu0 0.0
        %401 = vmatpush1.msra.mxu0 0.0
        %402 = vmatprep.subr.mxu0 0.0
        %403 = vmatpush1.msra.mxu0 0.0
        %404 = vmatprep.subr.mxu0 0.0
        %405 = vmatpush1.msra.mxu0 0.0
        %406 = vmatprep.subr.mxu0 0.0
        %407 = vmatpush1.msra.mxu0 0.0
        %408 = vmatprep.mubr.f32.mxu0 0.0
        %v409 = vand.u32 %v334, 4294901760
        %v410 = vsub.f32 %v334, %v409
        %v411 = vand.u32 %v410, 4294901760
        %v412 = vsub.f32 %v410, %v411
        %v413 = vand.u32 %v412, 4294901760
        %414 = vmatmul.mubr.f32.gmra.mrb[0].mxu0 %v413
        %v415 = vpop.f32.mrb[0].mxu0
        %v416 = vadd.f32 %v330, %v415
        %v417 = vpop.f32.mrb[0].mxu0
        %v418 = vadd.f32 %v330, %v417
        %419 = vdwg.mxu0
        %v420 = vand.u32 %v318, 4294901760
        %v421 = vsub.f32 %v318, %v420
        %v422 = vand.u32 %v421, 4294901760
        %v423 = vsub.f32 %v421, %v422
        %v424 = vand.u32 %v423, 4294901760
        %425 = vmatprep.subr.mxu0 %v424
        %v426 = vand.u32 %v317, 4294901760
        %v427 = vsub.f32 %v317, %v426
        %v428 = vand.u32 %v427, 4294901760
        %v429 = vsub.f32 %v427, %v428
        %v430 = vand.u32 %v429, 4294901760
        %431 = vmatpush1.msra.mxu0 %v430
        %v432 = vand.u32 %v320, 4294901760
        %v433 = vsub.f32 %v320, %v432
        %v434 = vand.u32 %v433, 4294901760
        %v435 = vsub.f32 %v433, %v434
        %v436 = vand.u32 %v435, 4294901760
        %437 = vmatprep.subr.mxu0 %v436
        %v438 = vand.u32 %v319, 4294901760
        %v439 = vsub.f32 %v319, %v438
        %v440 = vand.u32 %v439, 4294901760
        %v441 = vsub.f32 %v439, %v440
        %v442 = vand.u32 %v441, 4294901760
        %443 = vmatpush1.msra.mxu0 %v442
        %v444 = vand.u32 %v322, 4294901760
        %v445 = vsub.f32 %v322, %v444
        %v446 = vand.u32 %v445, 4294901760
        %v447 = vsub.f32 %v445, %v446
        %v448 = vand.u32 %v447, 4294901760
        %449 = vmatprep.subr.mxu0 %v448
        %v450 = vand.u32 %v321, 4294901760
        %v451 = vsub.f32 %v321, %v450
        %v452 = vand.u32 %v451, 4294901760
        %v453 = vsub.f32 %v451, %v452
        %v454 = vand.u32 %v453, 4294901760
        %455 = vmatpush1.msra.mxu0 %v454
        %v456 = vand.u32 %v324, 4294901760
        %v457 = vsub.f32 %v324, %v456
        %v458 = vand.u32 %v457, 4294901760
        %v459 = vsub.f32 %v457, %v458
        %v460 = vand.u32 %v459, 4294901760
        %461 = vmatprep.subr.mxu0 %v460
        %v462 = vand.u32 %v323, 4294901760
        %v463 = vsub.f32 %v323, %v462
        %v464 = vand.u32 %v463, 4294901760
        %v465 = vsub.f32 %v463, %v464
        %v466 = vand.u32 %v465, 4294901760
        %467 = vmatpush1.msra.mxu0 %v466
        %468 = vmatprep.subr.mxu0 0.0
        %469 = vmatpush1.msra.mxu0 0.0
        %470 = vmatprep.subr.mxu0 0.0
        %471 = vmatpush1.msra.mxu0 0.0
        %472 = vmatprep.subr.mxu0 0.0
        %473 = vmatpush1.msra.mxu0 0.0
        %474 = vmatprep.subr.mxu0 0.0
        %475 = vmatpush1.msra.mxu0 0.0
        %476 = vmatprep.subr.mxu0 0.0
        %477 = vmatpush1.msra.mxu0 0.0
        %478 = vmatprep.subr.mxu0 0.0
        %479 = vmatpush1.msra.mxu0 0.0
        %480 = vmatprep.subr.mxu0 0.0
        %481 = vmatpush1.msra.mxu0 0.0
        %482 = vmatprep.subr.mxu0 0.0
        %483 = vmatpush1.msra.mxu0 0.0
        %484 = vmatprep.subr.mxu0 0.0
        %485 = vmatpush1.msra.mxu0 0.0
        %486 = vmatprep.subr.mxu0 0.0
        %487 = vmatpush1.msra.mxu0 0.0
        %488 = vmatprep.subr.mxu0 0.0
        %489 = vmatpush1.msra.mxu0 0.0
        %490 = vmatprep.subr.mxu0 0.0
        %491 = vmatpush1.msra.mxu0 0.0
        %492 = vmatprep.subr.mxu0 0.0
        %493 = vmatpush1.msra.mxu0 0.0
        %494 = vmatprep.subr.mxu0 0.0
        %495 = vmatpush1.msra.mxu0 0.0
        %496 = vmatprep.subr.mxu0 0.0
        %497 = vmatpush1.msra.mxu0 0.0
        %498 = vmatprep.subr.mxu0 0.0
        %499 = vmatpush1.msra.mxu0 0.0
        %500 = vmatprep.subr.mxu0 0.0
        %501 = vmatpush1.msra.mxu0 0.0
        %502 = vmatprep.subr.mxu0 0.0
        %503 = vmatpush1.msra.mxu0 0.0
        %504 = vmatprep.subr.mxu0 0.0
        %505 = vmatpush1.msra.mxu0 0.0
        %506 = vmatprep.subr.mxu0 0.0
        %507 = vmatpush1.msra.mxu0 0.0
        %508 = vmatprep.subr.mxu0 0.0
        %509 = vmatpush1.msra.mxu0 0.0
        %510 = vmatprep.subr.mxu0 0.0
        %511 = vmatpush1.msra.mxu0 0.0
        %512 = vmatprep.subr.mxu0 0.0
        %513 = vmatpush1.msra.mxu0 0.0
        %514 = vmatprep.subr.mxu0 0.0
        %515 = vmatpush1.msra.mxu0 0.0
        %516 = vmatprep.subr.mxu0 0.0
        %517 = vmatpush1.msra.mxu0 0.0
        %518 = vmatprep.subr.mxu0 0.0
        %519 = vmatpush1.msra.mxu0 0.0
        %520 = vmatprep.subr.mxu0 0.0
        %521 = vmatpush1.msra.mxu0 0.0
        %522 = vmatprep.subr.mxu0 0.0
        %523 = vmatpush1.msra.mxu0 0.0
        %524 = vmatprep.mubr.f32.mxu0 0.0
        %v525 = vand.u32 %v334, 4294901760
        %526 = vmatmul.mubr.f32.gmra.mrb[0].mxu0 %v525
        %v527 = vpop.f32.mrb[0].mxu0
        %v528 = vadd.f32 %v416, %v527
        %v529 = vpop.f32.mrb[0].mxu0
        %v530 = vadd.f32 %v418, %v529
        %531 = vdwg.mxu0
        %v532 = vand.u32 %v318, 4294901760
        %v533 = vsub.f32 %v318, %v532
        %534 = vmatprep.subr.mxu0 %v533
        %v535 = vand.u32 %v317, 4294901760
        %v536 = vsub.f32 %v317, %v535
        %537 = vmatpush1.msra.mxu0 %v536
        %v538 = vand.u32 %v320, 4294901760
        %v539 = vsub.f32 %v320, %v538
        %540 = vmatprep.subr.mxu0 %v539
        %v541 = vand.u32 %v319, 4294901760
        %v542 = vsub.f32 %v319, %v541
        %543 = vmatpush1.msra.mxu0 %v542
        %v544 = vand.u32 %v322, 4294901760
        %v545 = vsub.f32 %v322, %v544
        %546 = vmatprep.subr.mxu0 %v545
        %v547 = vand.u32 %v321, 4294901760
        %v548 = vsub.f32 %v321, %v547
        %549 = vmatpush1.msra.mxu0 %v548
        %v550 = vand.u32 %v324, 4294901760
        %v551 = vsub.f32 %v324, %v550
        %552 = vmatprep.subr.mxu0 %v551
        %v553 = vand.u32 %v323, 4294901760
        %v554 = vsub.f32 %v323, %v553
        %555 = vmatpush1.msra.mxu0 %v554
        %556 = vmatprep.subr.mxu0 0.0
        %557 = vmatpush1.msra.mxu0 0.0
        %558 = vmatprep.subr.mxu0 0.0
        %559 = vmatpush1.msra.mxu0 0.0
        %560 = vmatprep.subr.mxu0 0.0
        %561 = vmatpush1.msra.mxu0 0.0
        %562 = vmatprep.subr.mxu0 0.0
        %563 = vmatpush1.msra.mxu0 0.0
        %564 = vmatprep.subr.mxu0 0.0
        %565 = vmatpush1.msra.mxu0 0.0
        %566 = vmatprep.subr.mxu0 0.0
        %567 = vmatpush1.msra.mxu0 0.0
        %568 = vmatprep.subr.mxu0 0.0
        %569 = vmatpush1.msra.mxu0 0.0
        %570 = vmatprep.subr.mxu0 0.0
        %571 = vmatpush1.msra.mxu0 0.0
        %572 = vmatprep.subr.mxu0 0.0
        %573 = vmatpush1.msra.mxu0 0.0
        %574 = vmatprep.subr.mxu0 0.0
        %575 = vmatpush1.msra.mxu0 0.0
        %576 = vmatprep.subr.mxu0 0.0
        %577 = vmatpush1.msra.mxu0 0.0
        %578 = vmatprep.subr.mxu0 0.0
        %579 = vmatpush1.msra.mxu0 0.0
        %580 = vmatprep.subr.mxu0 0.0
        %581 = vmatpush1.msra.mxu0 0.0
        %582 = vmatprep.subr.mxu0 0.0
        %583 = vmatpush1.msra.mxu0 0.0
        %584 = vmatprep.subr.mxu0 0.0
        %585 = vmatpush1.msra.mxu0 0.0
        %586 = vmatprep.subr.mxu0 0.0
        %587 = vmatpush1.msra.mxu0 0.0
        %588 = vmatprep.subr.mxu0 0.0
        %589 = vmatpush1.msra.mxu0 0.0
        %590 = vmatprep.subr.mxu0 0.0
        %591 = vmatpush1.msra.mxu0 0.0
        %592 = vmatprep.subr.mxu0 0.0
        %593 = vmatpush1.msra.mxu0 0.0
        %594 = vmatprep.subr.mxu0 0.0
        %595 = vmatpush1.msra.mxu0 0.0
        %596 = vmatprep.subr.mxu0 0.0
        %597 = vmatpush1.msra.mxu0 0.0
        %598 = vmatprep.subr.mxu0 0.0
        %599 = vmatpush1.msra.mxu0 0.0
        %600 = vmatprep.subr.mxu0 0.0
        %601 = vmatpush1.msra.mxu0 0.0
        %602 = vmatprep.subr.mxu0 0.0
        %603 = vmatpush1.msra.mxu0 0.0
        %604 = vmatprep.subr.mxu0 0.0
        %605 = vmatpush1.msra.mxu0 0.0
        %606 = vmatprep.subr.mxu0 0.0
        %607 = vmatpush1.msra.mxu0 0.0
        %608 = vmatprep.subr.mxu0 0.0
        %609 = vmatpush1.msra.mxu0 0.0
        %610 = vmatprep.subr.mxu0 0.0
        %611 = vmatpush1.msra.mxu0 0.0
        %612 = vmatprep.mubr.f32.mxu0 0.0
        %v613 = vand.u32 %v334, 4294901760
        %v614 = vsub.f32 %v334, %v613
        %615 = vmatmul.mubr.f32.gmra.mrb[0].mxu0 %v614
        %v616 = vpop.f32.mrb[0].mxu0
        %v617 = vadd.f32 %v528, %v616
        %v618 = vpop.f32.mrb[0].mxu0
        %v619 = vadd.f32 %v530, %v618
        %620 = vdwg.mxu0
        %v621 = vand.u32 %v318, 4294901760
        %622 = vmatprep.subr.mxu0 %v621
        %v623 = vand.u32 %v317, 4294901760
        %624 = vmatpush1.msra.mxu0 %v623
        %v625 = vand.u32 %v320, 4294901760
        %626 = vmatprep.subr.mxu0 %v625
        %v627 = vand.u32 %v319, 4294901760
        %628 = vmatpush1.msra.mxu0 %v627
        %v629 = vand.u32 %v322, 4294901760
        %630 = vmatprep.subr.mxu0 %v629
        %v631 = vand.u32 %v321, 4294901760
        %632 = vmatpush1.msra.mxu0 %v631
        %v633 = vand.u32 %v324, 4294901760
        %634 = vmatprep.subr.mxu0 %v633
        %v635 = vand.u32 %v323, 4294901760
        %636 = vmatpush1.msra.mxu0 %v635
        %637 = vmatprep.subr.mxu0 0.0
        %638 = vmatpush1.msra.mxu0 0.0
        %639 = vmatprep.subr.mxu0 0.0
        %640 = vmatpush1.msra.mxu0 0.0
        %641 = vmatprep.subr.mxu0 0.0
        %642 = vmatpush1.msra.mxu0 0.0
        %643 = vmatprep.subr.mxu0 0.0
        %644 = vmatpush1.msra.mxu0 0.0
        %645 = vmatprep.subr.mxu0 0.0
        %646 = vmatpush1.msra.mxu0 0.0
        %647 = vmatprep.subr.mxu0 0.0
        %648 = vmatpush1.msra.mxu0 0.0
        %649 = vmatprep.subr.mxu0 0.0
        %650 = vmatpush1.msra.mxu0 0.0
        %651 = vmatprep.subr.mxu0 0.0
        %652 = vmatpush1.msra.mxu0 0.0
        %653 = vmatprep.subr.mxu0 0.0
        %654 = vmatpush1.msra.mxu0 0.0
        %655 = vmatprep.subr.mxu0 0.0
        %656 = vmatpush1.msra.mxu0 0.0
        %657 = vmatprep.subr.mxu0 0.0
        %658 = vmatpush1.msra.mxu0 0.0
        %659 = vmatprep.subr.mxu0 0.0
        %660 = vmatpush1.msra.mxu0 0.0
        %661 = vmatprep.subr.mxu0 0.0
        %662 = vmatpush1.msra.mxu0 0.0
        %663 = vmatprep.subr.mxu0 0.0
        %664 = vmatpush1.msra.mxu0 0.0
        %665 = vmatprep.subr.mxu0 0.0
        %666 = vmatpush1.msra.mxu0 0.0
        %667 = vmatprep.subr.mxu0 0.0
        %668 = vmatpush1.msra.mxu0 0.0
        %669 = vmatprep.subr.mxu0 0.0
        %670 = vmatpush1.msra.mxu0 0.0
        %671 = vmatprep.subr.mxu0 0.0
        %672 = vmatpush1.msra.mxu0 0.0
        %673 = vmatprep.subr.mxu0 0.0
        %674 = vmatpush1.msra.mxu0 0.0
        %675 = vmatprep.subr.mxu0 0.0
        %676 = vmatpush1.msra.mxu0 0.0
        %677 = vmatprep.subr.mxu0 0.0
        %678 = vmatpush1.msra.mxu0 0.0
        %679 = vmatprep.subr.mxu0 0.0
        %680 = vmatpush1.msra.mxu0 0.0
        %681 = vmatprep.subr.mxu0 0.0
        %682 = vmatpush1.msra.mxu0 0.0
        %683 = vmatprep.subr.mxu0 0.0
        %684 = vmatpush1.msra.mxu0 0.0
        %685 = vmatprep.subr.mxu0 0.0
        %686 = vmatpush1.msra.mxu0 0.0
        %687 = vmatprep.subr.mxu0 0.0
        %688 = vmatpush1.msra.mxu0 0.0
        %689 = vmatprep.subr.mxu0 0.0
        %690 = vmatpush1.msra.mxu0 0.0
        %691 = vmatprep.subr.mxu0 0.0
        %692 = vmatpush1.msra.mxu0 0.0
        %693 = vmatprep.mubr.f32.mxu0 0.0
        %v694 = vand.u32 %v334, 4294901760
        %v695 = vsub.f32 %v334, %v694
        %v696 = vand.u32 %v695, 4294901760
        %697 = vmatmul.mubr.f32.gmra.mrb[0].mxu0 %v696
        %v698 = vpop.f32.mrb[0].mxu0
        %v699 = vadd.f32 %v617, %v698
        %v700 = vpop.f32.mrb[0].mxu0
        %v701 = vadd.f32 %v619, %v700
        %702 = vdwg.mxu0
        %v703 = vand.u32 %v318, 4294901760
        %v704 = vsub.f32 %v318, %v703
        %v705 = vand.u32 %v704, 4294901760
        %706 = vmatprep.subr.mxu0 %v705
        %v707 = vand.u32 %v317, 4294901760
        %v708 = vsub.f32 %v317, %v707
        %v709 = vand.u32 %v708, 4294901760
        %710 = vmatpush1.msra.mxu0 %v709
        %v711 = vand.u32 %v320, 4294901760
        %v712 = vsub.f32 %v320, %v711
        %v713 = vand.u32 %v712, 4294901760
        %714 = vmatprep.subr.mxu0 %v713
        %v715 = vand.u32 %v319, 4294901760
        %v716 = vsub.f32 %v319, %v715
        %v717 = vand.u32 %v716, 4294901760
        %718 = vmatpush1.msra.mxu0 %v717
        %v719 = vand.u32 %v322, 4294901760
        %v720 = vsub.f32 %v322, %v719
        %v721 = vand.u32 %v720, 4294901760
        %722 = vmatprep.subr.mxu0 %v721
        %v723 = vand.u32 %v321, 4294901760
        %v724 = vsub.f32 %v321, %v723
        %v725 = vand.u32 %v724, 4294901760
        %726 = vmatpush1.msra.mxu0 %v725
        %v727 = vand.u32 %v324, 4294901760
        %v728 = vsub.f32 %v324, %v727
        %v729 = vand.u32 %v728, 4294901760
        %730 = vmatprep.subr.mxu0 %v729
        %v731 = vand.u32 %v323, 4294901760
        %v732 = vsub.f32 %v323, %v731
        %v733 = vand.u32 %v732, 4294901760
        %734 = vmatpush1.msra.mxu0 %v733
        %735 = vmatprep.subr.mxu0 0.0
        %736 = vmatpush1.msra.mxu0 0.0
        %737 = vmatprep.subr.mxu0 0.0
        %738 = vmatpush1.msra.mxu0 0.0
        %739 = vmatprep.subr.mxu0 0.0
        %740 = vmatpush1.msra.mxu0 0.0
        %741 = vmatprep.subr.mxu0 0.0
        %742 = vmatpush1.msra.mxu0 0.0
        %743 = vmatprep.subr.mxu0 0.0
        %744 = vmatpush1.msra.mxu0 0.0
        %745 = vmatprep.subr.mxu0 0.0
        %746 = vmatpush1.msra.mxu0 0.0
        %747 = vmatprep.subr.mxu0 0.0
        %748 = vmatpush1.msra.mxu0 0.0
        %749 = vmatprep.subr.mxu0 0.0
        %750 = vmatpush1.msra.mxu0 0.0
        %751 = vmatprep.subr.mxu0 0.0
        %752 = vmatpush1.msra.mxu0 0.0
        %753 = vmatprep.subr.mxu0 0.0
        %754 = vmatpush1.msra.mxu0 0.0
        %755 = vmatprep.subr.mxu0 0.0
        %756 = vmatpush1.msra.mxu0 0.0
        %757 = vmatprep.subr.mxu0 0.0
        %758 = vmatpush1.msra.mxu0 0.0
        %759 = vmatprep.subr.mxu0 0.0
        %760 = vmatpush1.msra.mxu0 0.0
        %761 = vmatprep.subr.mxu0 0.0
        %762 = vmatpush1.msra.mxu0 0.0
        %763 = vmatprep.subr.mxu0 0.0
        %764 = vmatpush1.msra.mxu0 0.0
        %765 = vmatprep.subr.mxu0 0.0
        %766 = vmatpush1.msra.mxu0 0.0
        %767 = vmatprep.subr.mxu0 0.0
        %768 = vmatpush1.msra.mxu0 0.0
        %769 = vmatprep.subr.mxu0 0.0
        %770 = vmatpush1.msra.mxu0 0.0
        %771 = vmatprep.subr.mxu0 0.0
        %772 = vmatpush1.msra.mxu0 0.0
        %773 = vmatprep.subr.mxu0 0.0
        %774 = vmatpush1.msra.mxu0 0.0
        %775 = vmatprep.subr.mxu0 0.0
        %776 = vmatpush1.msra.mxu0 0.0
        %777 = vmatprep.subr.mxu0 0.0
        %778 = vmatpush1.msra.mxu0 0.0
        %779 = vmatprep.subr.mxu0 0.0
        %780 = vmatpush1.msra.mxu0 0.0
        %781 = vmatprep.subr.mxu0 0.0
        %782 = vmatpush1.msra.mxu0 0.0
        %783 = vmatprep.subr.mxu0 0.0
        %784 = vmatpush1.msra.mxu0 0.0
        %785 = vmatprep.subr.mxu0 0.0
        %786 = vmatpush1.msra.mxu0 0.0
        %787 = vmatprep.subr.mxu0 0.0
        %788 = vmatpush1.msra.mxu0 0.0
        %789 = vmatprep.subr.mxu0 0.0
        %790 = vmatpush1.msra.mxu0 0.0
        %791 = vmatprep.mubr.f32.mxu0 0.0
        %v792 = vand.u32 %v334, 4294901760
        %793 = vmatmul.mubr.f32.gmra.mrb[0].mxu0 %v792
        %v794 = vpop.f32.mrb[0].mxu0
        %v795 = vadd.f32 %v699, %v794
        %v796 = vpop.f32.mrb[0].mxu0
        %v797 = vadd.f32 %v701, %v796
        %798 = vdwg.mxu0
        %v799 = vand.u32 %v318, 4294901760
        %800 = vmatprep.subr.mxu0 %v799
        %v801 = vand.u32 %v317, 4294901760
        %802 = vmatpush1.msra.mxu0 %v801
        %v803 = vand.u32 %v320, 4294901760
        %804 = vmatprep.subr.mxu0 %v803
        %v805 = vand.u32 %v319, 4294901760
        %806 = vmatpush1.msra.mxu0 %v805
        %v807 = vand.u32 %v322, 4294901760
        %808 = vmatprep.subr.mxu0 %v807
        %v809 = vand.u32 %v321, 4294901760
        %810 = vmatpush1.msra.mxu0 %v809
        %v811 = vand.u32 %v324, 4294901760
        %812 = vmatprep.subr.mxu0 %v811
        %v813 = vand.u32 %v323, 4294901760
        %814 = vmatpush1.msra.mxu0 %v813
        %815 = vmatprep.subr.mxu0 0.0
        %816 = vmatpush1.msra.mxu0 0.0
        %817 = vmatprep.subr.mxu0 0.0
        %818 = vmatpush1.msra.mxu0 0.0
        %819 = vmatprep.subr.mxu0 0.0
        %820 = vmatpush1.msra.mxu0 0.0
        %821 = vmatprep.subr.mxu0 0.0
        %822 = vmatpush1.msra.mxu0 0.0
        %823 = vmatprep.subr.mxu0 0.0
        %824 = vmatpush1.msra.mxu0 0.0
        %825 = vmatprep.subr.mxu0 0.0
        %826 = vmatpush1.msra.mxu0 0.0
        %827 = vmatprep.subr.mxu0 0.0
        %828 = vmatpush1.msra.mxu0 0.0
        %829 = vmatprep.subr.mxu0 0.0
        %830 = vmatpush1.msra.mxu0 0.0
        %831 = vmatprep.subr.mxu0 0.0
        %832 = vmatpush1.msra.mxu0 0.0
        %833 = vmatprep.subr.mxu0 0.0
        %834 = vmatpush1.msra.mxu0 0.0
        %835 = vmatprep.subr.mxu0 0.0
        %836 = vmatpush1.msra.mxu0 0.0
        %837 = vmatprep.subr.mxu0 0.0
        %838 = vmatpush1.msra.mxu0 0.0
        %839 = vmatprep.subr.mxu0 0.0
        %840 = vmatpush1.msra.mxu0 0.0
        %841 = vmatprep.subr.mxu0 0.0
        %842 = vmatpush1.msra.mxu0 0.0
        %843 = vmatprep.subr.mxu0 0.0
        %844 = vmatpush1.msra.mxu0 0.0
        %845 = vmatprep.subr.mxu0 0.0
        %846 = vmatpush1.msra.mxu0 0.0
        %847 = vmatprep.subr.mxu0 0.0
        %848 = vmatpush1.msra.mxu0 0.0
        %849 = vmatprep.subr.mxu0 0.0
        %850 = vmatpush1.msra.mxu0 0.0
        %851 = vmatprep.subr.mxu0 0.0
        %852 = vmatpush1.msra.mxu0 0.0
        %853 = vmatprep.subr.mxu0 0.0
        %854 = vmatpush1.msra.mxu0 0.0
        %855 = vmatprep.subr.mxu0 0.0
        %856 = vmatpush1.msra.mxu0 0.0
        %857 = vmatprep.subr.mxu0 0.0
        %858 = vmatpush1.msra.mxu0 0.0
        %859 = vmatprep.subr.mxu0 0.0
        %860 = vmatpush1.msra.mxu0 0.0
        %861 = vmatprep.subr.mxu0 0.0
        %862 = vmatpush1.msra.mxu0 0.0
        %863 = vmatprep.subr.mxu0 0.0
        %864 = vmatpush1.msra.mxu0 0.0
        %865 = vmatprep.subr.mxu0 0.0
        %866 = vmatpush1.msra.mxu0 0.0
        %867 = vmatprep.subr.mxu0 0.0
        %868 = vmatpush1.msra.mxu0 0.0
        %869 = vmatprep.subr.mxu0 0.0
        %870 = vmatpush1.msra.mxu0 0.0
        %871 = vmatprep.mubr.f32.mxu0 0.0
        %v872 = vand.u32 %v334, 4294901760
        %873 = vmatmul.mubr.f32.gmra.mrb[0].mxu0 %v872
        %v874 = vpop.f32.mrb[0].mxu0
        %v875 = vadd.f32 %v795, %v874
        %v876 = vpop.f32.mrb[0].mxu0
        %v877 = vadd.f32 %v797, %v876
        %878 = vdwg.mxu0
        %s879 = scalar_lea.vmem %s3, 16
        %v880 = vld [vmem:[%s879] sm:$0xf]
        %881 = vrot.lane.b32.xlu0 %v875, 34
        %v882 = vpop.permute.xlu0 %881
        %883 = vrot.lane.b32.xlu0 %v877, 34
        %v884 = vpop.permute.xlu0 %883
        %v885 = vlaneseq
        %v886 = vand.u32 %v885, 127
        %vm887 = vcmp.lt.s32.totalorder %v886, 34
        %v888 = vsel %vm887, %v882, %v884
        %v889 = vsel %vm887, %v884, %v882
        %v890 = vld [vmem:[%s5] sm:$0x3]
        %v892 = vlaneseq
        %v893 = vshrl.u32 %v892, 7
        %v894 = vsub.s32 0, %v893
        %v895 = vrot.slane %v890, %v894
        %v896 = vlaneseq
        %v897 = vshrl.u32 %v896, 7
        %v898 = vsub.s32 1, %v897
        %v899 = vrot.slane %v890, %v898
        %v902 = vmul.f32 %v889, %v895
        %v903 = vmul.f32 %v888, %v899
        %v904 = vld [vmem:[%s3] sm:$0xf]
        %vm905 = vcmask 31744
        %v907 = vsel %vm905, %v904, 0
        %vm909 = vcmask 1043456
        %v911 = vsel %vm909, %v902, 0
        %v914 = vsel %vm909, %v903, 0
        %v916 = vand.u32 %v914, 4294901760
        %917 = vmatprep.subr.mxu0 %v916
        %v918 = vand.u32 %v911, 4294901760
        %919 = vmatpush1.msra.mxu0 %v918
        %920 = vmatprep.subr.mxu0 0.0
        %921 = vmatpush1.msra.mxu0 0.0
        %922 = vmatprep.subr.mxu0 0.0
        %923 = vmatpush1.msra.mxu0 0.0
        %924 = vmatprep.subr.mxu0 0.0
        %925 = vmatpush1.msra.mxu0 0.0
        %926 = vmatprep.subr.mxu0 0.0
        %927 = vmatpush1.msra.mxu0 0.0
        %928 = vmatprep.subr.mxu0 0.0
        %929 = vmatpush1.msra.mxu0 0.0
        %930 = vmatprep.subr.mxu0 0.0
        %931 = vmatpush1.msra.mxu0 0.0
        %932 = vmatprep.subr.mxu0 0.0
        %933 = vmatpush1.msra.mxu0 0.0
        %934 = vmatprep.subr.mxu0 0.0
        %935 = vmatpush1.msra.mxu0 0.0
        %936 = vmatprep.subr.mxu0 0.0
        %937 = vmatpush1.msra.mxu0 0.0
        %938 = vmatprep.subr.mxu0 0.0
        %939 = vmatpush1.msra.mxu0 0.0
        %940 = vmatprep.subr.mxu0 0.0
        %941 = vmatpush1.msra.mxu0 0.0
        %942 = vmatprep.subr.mxu0 0.0
        %943 = vmatpush1.msra.mxu0 0.0
        %944 = vmatprep.subr.mxu0 0.0
        %945 = vmatpush1.msra.mxu0 0.0
        %946 = vmatprep.subr.mxu0 0.0
        %947 = vmatpush1.msra.mxu0 0.0
        %948 = vmatprep.subr.mxu0 0.0
        %949 = vmatpush1.msra.mxu0 0.0
        %950 = vmatprep.subr.mxu0 0.0
        %951 = vmatpush1.msra.mxu0 0.0
        %952 = vmatprep.subr.mxu0 0.0
        %953 = vmatpush1.msra.mxu0 0.0
        %954 = vmatprep.subr.mxu0 0.0
        %955 = vmatpush1.msra.mxu0 0.0
        %956 = vmatprep.subr.mxu0 0.0
        %957 = vmatpush1.msra.mxu0 0.0
        %958 = vmatprep.subr.mxu0 0.0
        %959 = vmatpush1.msra.mxu0 0.0
        %960 = vmatprep.subr.mxu0 0.0
        %961 = vmatpush1.msra.mxu0 0.0
        %962 = vmatprep.subr.mxu0 0.0
        %963 = vmatpush1.msra.mxu0 0.0
        %964 = vmatprep.subr.mxu0 0.0
        %965 = vmatpush1.msra.mxu0 0.0
        %966 = vmatprep.subr.mxu0 0.0
        %967 = vmatpush1.msra.mxu0 0.0
        %968 = vmatprep.subr.mxu0 0.0
        %969 = vmatpush1.msra.mxu0 0.0
        %970 = vmatprep.subr.mxu0 0.0
        %971 = vmatpush1.msra.mxu0 0.0
        %972 = vmatprep.subr.mxu0 0.0
        %973 = vmatpush1.msra.mxu0 0.0
        %974 = vmatprep.subr.mxu0 0.0
        %975 = vmatpush1.msra.mxu0 0.0
        %976 = vmatprep.subr.mxu0 0.0
        %977 = vmatpush1.msra.mxu0 0.0
        %978 = vmatprep.subr.mxu0 0.0
        %979 = vmatpush1.msra.mxu0 0.0
        %980 = vmatprep.subr.mxu0 0.0
        %981 = vmatpush1.msra.mxu0 0.0
        %982 = vmatprep.mubr.f32.mxu0 0.0
        %v983 = vand.u32 %v907, 4294901760
        %v984 = vsub.f32 %v907, %v983
        %v985 = vand.u32 %v984, 4294901760
        %v986 = vsub.f32 %v984, %v985
        %v987 = vand.u32 %v986, 4294901760
        %988 = vmatmul.mubr.f32.gmra.mrb[0].mxu0 %v987
        %v989 = vpop.f32.mrb[0].mxu0
        %v990 = vadd.f32 0.0, %v989
        %v991 = vpop.f32.mrb[0].mxu0
        %v992 = vadd.f32 0.0, %v991
        %993 = vdwg.mxu0
        %v994 = vand.u32 %v914, 4294901760
        %v995 = vsub.f32 %v914, %v994
        %v996 = vand.u32 %v995, 4294901760
        %v997 = vsub.f32 %v995, %v996
        %v998 = vand.u32 %v997, 4294901760
        %999 = vmatprep.subr.mxu0 %v998
        %v1000 = vand.u32 %v911, 4294901760
        %v1001 = vsub.f32 %v911, %v1000
        %v1002 = vand.u32 %v1001, 4294901760
        %v1003 = vsub.f32 %v1001, %v1002
        %v1004 = vand.u32 %v1003, 4294901760
        %1005 = vmatpush1.msra.mxu0 %v1004
        %1006 = vmatprep.subr.mxu0 0.0
        %1007 = vmatpush1.msra.mxu0 0.0
        %1008 = vmatprep.subr.mxu0 0.0
        %1009 = vmatpush1.msra.mxu0 0.0
        %1010 = vmatprep.subr.mxu0 0.0
        %1011 = vmatpush1.msra.mxu0 0.0
        %1012 = vmatprep.subr.mxu0 0.0
        %1013 = vmatpush1.msra.mxu0 0.0
        %1014 = vmatprep.subr.mxu0 0.0
        %1015 = vmatpush1.msra.mxu0 0.0
        %1016 = vmatprep.subr.mxu0 0.0
        %1017 = vmatpush1.msra.mxu0 0.0
        %1018 = vmatprep.subr.mxu0 0.0
        %1019 = vmatpush1.msra.mxu0 0.0
        %1020 = vmatprep.subr.mxu0 0.0
        %1021 = vmatpush1.msra.mxu0 0.0
        %1022 = vmatprep.subr.mxu0 0.0
        %1023 = vmatpush1.msra.mxu0 0.0
        %1024 = vmatprep.subr.mxu0 0.0
        %1025 = vmatpush1.msra.mxu0 0.0
        %1026 = vmatprep.subr.mxu0 0.0
        %1027 = vmatpush1.msra.mxu0 0.0
        %1028 = vmatprep.subr.mxu0 0.0
        %1029 = vmatpush1.msra.mxu0 0.0
        %1030 = vmatprep.subr.mxu0 0.0
        %1031 = vmatpush1.msra.mxu0 0.0
        %1032 = vmatprep.subr.mxu0 0.0
        %1033 = vmatpush1.msra.mxu0 0.0
        %1034 = vmatprep.subr.mxu0 0.0
        %1035 = vmatpush1.msra.mxu0 0.0
        %1036 = vmatprep.subr.mxu0 0.0
        %1037 = vmatpush1.msra.mxu0 0.0
        %1038 = vmatprep.subr.mxu0 0.0
        %1039 = vmatpush1.msra.mxu0 0.0
        %1040 = vmatprep.subr.mxu0 0.0
        %1041 = vmatpush1.msra.mxu0 0.0
        %1042 = vmatprep.subr.mxu0 0.0
        %1043 = vmatpush1.msra.mxu0 0.0
        %1044 = vmatprep.subr.mxu0 0.0
        %1045 = vmatpush1.msra.mxu0 0.0
        %1046 = vmatprep.subr.mxu0 0.0
        %1047 = vmatpush1.msra.mxu0 0.0
        %1048 = vmatprep.subr.mxu0 0.0
        %1049 = vmatpush1.msra.mxu0 0.0
        %1050 = vmatprep.subr.mxu0 0.0
        %1051 = vmatpush1.msra.mxu0 0.0
        %1052 = vmatprep.subr.mxu0 0.0
        %1053 = vmatpush1.msra.mxu0 0.0
        %1054 = vmatprep.subr.mxu0 0.0
        %1055 = vmatpush1.msra.mxu0 0.0
        %1056 = vmatprep.subr.mxu0 0.0
        %1057 = vmatpush1.msra.mxu0 0.0
        %1058 = vmatprep.subr.mxu0 0.0
        %1059 = vmatpush1.msra.mxu0 0.0
        %1060 = vmatprep.subr.mxu0 0.0
        %1061 = vmatpush1.msra.mxu0 0.0
        %1062 = vmatprep.subr.mxu0 0.0
        %1063 = vmatpush1.msra.mxu0 0.0
        %1064 = vmatprep.subr.mxu0 0.0
        %1065 = vmatpush1.msra.mxu0 0.0
        %1066 = vmatprep.subr.mxu0 0.0
        %1067 = vmatpush1.msra.mxu0 0.0
        %1068 = vmatprep.mubr.f32.mxu0 0.0
        %v1069 = vand.u32 %v907, 4294901760
        %1070 = vmatmul.mubr.f32.gmra.mrb[0].mxu0 %v1069
        %v1071 = vpop.f32.mrb[0].mxu0
        %v1072 = vadd.f32 %v990, %v1071
        %v1073 = vpop.f32.mrb[0].mxu0
        %v1074 = vadd.f32 %v992, %v1073
        %1075 = vdwg.mxu0
        %v1076 = vand.u32 %v914, 4294901760
        %v1077 = vsub.f32 %v914, %v1076
        %1078 = vmatprep.subr.mxu0 %v1077
        %v1079 = vand.u32 %v911, 4294901760
        %v1080 = vsub.f32 %v911, %v1079
        %1081 = vmatpush1.msra.mxu0 %v1080
        %1082 = vmatprep.subr.mxu0 0.0
        %1083 = vmatpush1.msra.mxu0 0.0
        %1084 = vmatprep.subr.mxu0 0.0
        %1085 = vmatpush1.msra.mxu0 0.0
        %1086 = vmatprep.subr.mxu0 0.0
        %1087 = vmatpush1.msra.mxu0 0.0
        %1088 = vmatprep.subr.mxu0 0.0
        %1089 = vmatpush1.msra.mxu0 0.0
        %1090 = vmatprep.subr.mxu0 0.0
        %1091 = vmatpush1.msra.mxu0 0.0
        %1092 = vmatprep.subr.mxu0 0.0
        %1093 = vmatpush1.msra.mxu0 0.0
        %1094 = vmatprep.subr.mxu0 0.0
        %1095 = vmatpush1.msra.mxu0 0.0
        %1096 = vmatprep.subr.mxu0 0.0
        %1097 = vmatpush1.msra.mxu0 0.0
        %1098 = vmatprep.subr.mxu0 0.0
        %1099 = vmatpush1.msra.mxu0 0.0
        %1100 = vmatprep.subr.mxu0 0.0
        %1101 = vmatpush1.msra.mxu0 0.0
        %1102 = vmatprep.subr.mxu0 0.0
        %1103 = vmatpush1.msra.mxu0 0.0
        %1104 = vmatprep.subr.mxu0 0.0
        %1105 = vmatpush1.msra.mxu0 0.0
        %1106 = vmatprep.subr.mxu0 0.0
        %1107 = vmatpush1.msra.mxu0 0.0
        %1108 = vmatprep.subr.mxu0 0.0
        %1109 = vmatpush1.msra.mxu0 0.0
        %1110 = vmatprep.subr.mxu0 0.0
        %1111 = vmatpush1.msra.mxu0 0.0
        %1112 = vmatprep.subr.mxu0 0.0
        %1113 = vmatpush1.msra.mxu0 0.0
        %1114 = vmatprep.subr.mxu0 0.0
        %1115 = vmatpush1.msra.mxu0 0.0
        %1116 = vmatprep.subr.mxu0 0.0
        %1117 = vmatpush1.msra.mxu0 0.0
        %1118 = vmatprep.subr.mxu0 0.0
        %1119 = vmatpush1.msra.mxu0 0.0
        %1120 = vmatprep.subr.mxu0 0.0
        %1121 = vmatpush1.msra.mxu0 0.0
        %1122 = vmatprep.subr.mxu0 0.0
        %1123 = vmatpush1.msra.mxu0 0.0
        %1124 = vmatprep.subr.mxu0 0.0
        %1125 = vmatpush1.msra.mxu0 0.0
        %1126 = vmatprep.subr.mxu0 0.0
        %1127 = vmatpush1.msra.mxu0 0.0
        %1128 = vmatprep.subr.mxu0 0.0
        %1129 = vmatpush1.msra.mxu0 0.0
        %1130 = vmatprep.subr.mxu0 0.0
        %1131 = vmatpush1.msra.mxu0 0.0
        %1132 = vmatprep.subr.mxu0 0.0
        %1133 = vmatpush1.msra.mxu0 0.0
        %1134 = vmatprep.subr.mxu0 0.0
        %1135 = vmatpush1.msra.mxu0 0.0
        %1136 = vmatprep.subr.mxu0 0.0
        %1137 = vmatpush1.msra.mxu0 0.0
        %1138 = vmatprep.subr.mxu0 0.0
        %1139 = vmatpush1.msra.mxu0 0.0
        %1140 = vmatprep.subr.mxu0 0.0
        %1141 = vmatpush1.msra.mxu0 0.0
        %1142 = vmatprep.subr.mxu0 0.0
        %1143 = vmatpush1.msra.mxu0 0.0
        %1144 = vmatprep.mubr.f32.mxu0 0.0
        %v1145 = vand.u32 %v907, 4294901760
        %v1146 = vsub.f32 %v907, %v1145
        %1147 = vmatmul.mubr.f32.gmra.mrb[0].mxu0 %v1146
        %v1148 = vpop.f32.mrb[0].mxu0
        %v1149 = vadd.f32 %v1072, %v1148
        %v1150 = vpop.f32.mrb[0].mxu0
        %v1151 = vadd.f32 %v1074, %v1150
        %1152 = vdwg.mxu0
        %v1153 = vand.u32 %v914, 4294901760
        %1154 = vmatprep.subr.mxu0 %v1153
        %v1155 = vand.u32 %v911, 4294901760
        %1156 = vmatpush1.msra.mxu0 %v1155
        %1157 = vmatprep.subr.mxu0 0.0
        %1158 = vmatpush1.msra.mxu0 0.0
        %1159 = vmatprep.subr.mxu0 0.0
        %1160 = vmatpush1.msra.mxu0 0.0
        %1161 = vmatprep.subr.mxu0 0.0
        %1162 = vmatpush1.msra.mxu0 0.0
        %1163 = vmatprep.subr.mxu0 0.0
        %1164 = vmatpush1.msra.mxu0 0.0
        %1165 = vmatprep.subr.mxu0 0.0
        %1166 = vmatpush1.msra.mxu0 0.0
        %1167 = vmatprep.subr.mxu0 0.0
        %1168 = vmatpush1.msra.mxu0 0.0
        %1169 = vmatprep.subr.mxu0 0.0
        %1170 = vmatpush1.msra.mxu0 0.0
        %1171 = vmatprep.subr.mxu0 0.0
        %1172 = vmatpush1.msra.mxu0 0.0
        %1173 = vmatprep.subr.mxu0 0.0
        %1174 = vmatpush1.msra.mxu0 0.0
        %1175 = vmatprep.subr.mxu0 0.0
        %1176 = vmatpush1.msra.mxu0 0.0
        %1177 = vmatprep.subr.mxu0 0.0
        %1178 = vmatpush1.msra.mxu0 0.0
        %1179 = vmatprep.subr.mxu0 0.0
        %1180 = vmatpush1.msra.mxu0 0.0
        %1181 = vmatprep.subr.mxu0 0.0
        %1182 = vmatpush1.msra.mxu0 0.0
        %1183 = vmatprep.subr.mxu0 0.0
        %1184 = vmatpush1.msra.mxu0 0.0
        %1185 = vmatprep.subr.mxu0 0.0
        %1186 = vmatpush1.msra.mxu0 0.0
        %1187 = vmatprep.subr.mxu0 0.0
        %1188 = vmatpush1.msra.mxu0 0.0
        %1189 = vmatprep.subr.mxu0 0.0
        %1190 = vmatpush1.msra.mxu0 0.0
        %1191 = vmatprep.subr.mxu0 0.0
        %1192 = vmatpush1.msra.mxu0 0.0
        %1193 = vmatprep.subr.mxu0 0.0
        %1194 = vmatpush1.msra.mxu0 0.0
        %1195 = vmatprep.subr.mxu0 0.0
        %1196 = vmatpush1.msra.mxu0 0.0
        %1197 = vmatprep.subr.mxu0 0.0
        %1198 = vmatpush1.msra.mxu0 0.0
        %1199 = vmatprep.subr.mxu0 0.0
        %1200 = vmatpush1.msra.mxu0 0.0
        %1201 = vmatprep.subr.mxu0 0.0
        %1202 = vmatpush1.msra.mxu0 0.0
        %1203 = vmatprep.subr.mxu0 0.0
        %1204 = vmatpush1.msra.mxu0 0.0
        %1205 = vmatprep.subr.mxu0 0.0
        %1206 = vmatpush1.msra.mxu0 0.0
        %1207 = vmatprep.subr.mxu0 0.0
        %1208 = vmatpush1.msra.mxu0 0.0
        %1209 = vmatprep.subr.mxu0 0.0
        %1210 = vmatpush1.msra.mxu0 0.0
        %1211 = vmatprep.subr.mxu0 0.0
        %1212 = vmatpush1.msra.mxu0 0.0
        %1213 = vmatprep.subr.mxu0 0.0
        %1214 = vmatpush1.msra.mxu0 0.0
        %1215 = vmatprep.subr.mxu0 0.0
        %1216 = vmatpush1.msra.mxu0 0.0
        %1217 = vmatprep.subr.mxu0 0.0
        %1218 = vmatpush1.msra.mxu0 0.0
        %1219 = vmatprep.mubr.f32.mxu0 0.0
        %v1220 = vand.u32 %v907, 4294901760
        %v1221 = vsub.f32 %v907, %v1220
        %v1222 = vand.u32 %v1221, 4294901760
        %1223 = vmatmul.mubr.f32.gmra.mrb[0].mxu0 %v1222
        %v1224 = vpop.f32.mrb[0].mxu0
        %v1225 = vadd.f32 %v1149, %v1224
        %v1226 = vpop.f32.mrb[0].mxu0
        %v1227 = vadd.f32 %v1151, %v1226
        %1228 = vdwg.mxu0
        %v1229 = vand.u32 %v914, 4294901760
        %v1230 = vsub.f32 %v914, %v1229
        %v1231 = vand.u32 %v1230, 4294901760
        %1232 = vmatprep.subr.mxu0 %v1231
        %v1233 = vand.u32 %v911, 4294901760
        %v1234 = vsub.f32 %v911, %v1233
        %v1235 = vand.u32 %v1234, 4294901760
        %1236 = vmatpush1.msra.mxu0 %v1235
        %1237 = vmatprep.subr.mxu0 0.0
        %1238 = vmatpush1.msra.mxu0 0.0
        %1239 = vmatprep.subr.mxu0 0.0
        %1240 = vmatpush1.msra.mxu0 0.0
        %1241 = vmatprep.subr.mxu0 0.0
        %1242 = vmatpush1.msra.mxu0 0.0
        %1243 = vmatprep.subr.mxu0 0.0
        %1244 = vmatpush1.msra.mxu0 0.0
        %1245 = vmatprep.subr.mxu0 0.0
        %1246 = vmatpush1.msra.mxu0 0.0
        %1247 = vmatprep.subr.mxu0 0.0
        %1248 = vmatpush1.msra.mxu0 0.0
        %1249 = vmatprep.subr.mxu0 0.0
        %1250 = vmatpush1.msra.mxu0 0.0
        %1251 = vmatprep.subr.mxu0 0.0
        %1252 = vmatpush1.msra.mxu0 0.0
        %1253 = vmatprep.subr.mxu0 0.0
        %1254 = vmatpush1.msra.mxu0 0.0
        %1255 = vmatprep.subr.mxu0 0.0
        %1256 = vmatpush1.msra.mxu0 0.0
        %1257 = vmatprep.subr.mxu0 0.0
        %1258 = vmatpush1.msra.mxu0 0.0
        %1259 = vmatprep.subr.mxu0 0.0
        %1260 = vmatpush1.msra.mxu0 0.0
        %1261 = vmatprep.subr.mxu0 0.0
        %1262 = vmatpush1.msra.mxu0 0.0
        %1263 = vmatprep.subr.mxu0 0.0
        %1264 = vmatpush1.msra.mxu0 0.0
        %1265 = vmatprep.subr.mxu0 0.0
        %1266 = vmatpush1.msra.mxu0 0.0
        %1267 = vmatprep.subr.mxu0 0.0
        %1268 = vmatpush1.msra.mxu0 0.0
        %1269 = vmatprep.subr.mxu0 0.0
        %1270 = vmatpush1.msra.mxu0 0.0
        %1271 = vmatprep.subr.mxu0 0.0
        %1272 = vmatpush1.msra.mxu0 0.0
        %1273 = vmatprep.subr.mxu0 0.0
        %1274 = vmatpush1.msra.mxu0 0.0
        %1275 = vmatprep.subr.mxu0 0.0
        %1276 = vmatpush1.msra.mxu0 0.0
        %1277 = vmatprep.subr.mxu0 0.0
        %1278 = vmatpush1.msra.mxu0 0.0
        %1279 = vmatprep.subr.mxu0 0.0
        %1280 = vmatpush1.msra.mxu0 0.0
        %1281 = vmatprep.subr.mxu0 0.0
        %1282 = vmatpush1.msra.mxu0 0.0
        %1283 = vmatprep.subr.mxu0 0.0
        %1284 = vmatpush1.msra.mxu0 0.0
        %1285 = vmatprep.subr.mxu0 0.0
        %1286 = vmatpush1.msra.mxu0 0.0
        %1287 = vmatprep.subr.mxu0 0.0
        %1288 = vmatpush1.msra.mxu0 0.0
        %1289 = vmatprep.subr.mxu0 0.0
        %1290 = vmatpush1.msra.mxu0 0.0
        %1291 = vmatprep.subr.mxu0 0.0
        %1292 = vmatpush1.msra.mxu0 0.0
        %1293 = vmatprep.subr.mxu0 0.0
        %1294 = vmatpush1.msra.mxu0 0.0
        %1295 = vmatprep.subr.mxu0 0.0
        %1296 = vmatpush1.msra.mxu0 0.0
        %1297 = vmatprep.subr.mxu0 0.0
        %1298 = vmatpush1.msra.mxu0 0.0
        %1299 = vmatprep.mubr.f32.mxu0 0.0
        %v1300 = vand.u32 %v907, 4294901760
        %1301 = vmatmul.mubr.f32.gmra.mrb[0].mxu0 %v1300
        %v1302 = vpop.f32.mrb[0].mxu0
        %v1303 = vadd.f32 %v1225, %v1302
        %v1304 = vpop.f32.mrb[0].mxu0
        %v1305 = vadd.f32 %v1227, %v1304
        %1306 = vdwg.mxu0
        %v1307 = vand.u32 %v914, 4294901760
        %1308 = vmatprep.subr.mxu0 %v1307
        %v1309 = vand.u32 %v911, 4294901760
        %1310 = vmatpush1.msra.mxu0 %v1309
        %1311 = vmatprep.subr.mxu0 0.0
        %1312 = vmatpush1.msra.mxu0 0.0
        %1313 = vmatprep.subr.mxu0 0.0
        %1314 = vmatpush1.msra.mxu0 0.0
        %1315 = vmatprep.subr.mxu0 0.0
        %1316 = vmatpush1.msra.mxu0 0.0
        %1317 = vmatprep.subr.mxu0 0.0
        %1318 = vmatpush1.msra.mxu0 0.0
        %1319 = vmatprep.subr.mxu0 0.0
        %1320 = vmatpush1.msra.mxu0 0.0
        %1321 = vmatprep.subr.mxu0 0.0
        %1322 = vmatpush1.msra.mxu0 0.0
        %1323 = vmatprep.subr.mxu0 0.0
        %1324 = vmatpush1.msra.mxu0 0.0
        %1325 = vmatprep.subr.mxu0 0.0
        %1326 = vmatpush1.msra.mxu0 0.0
        %1327 = vmatprep.subr.mxu0 0.0
        %1328 = vmatpush1.msra.mxu0 0.0
        %1329 = vmatprep.subr.mxu0 0.0
        %1330 = vmatpush1.msra.mxu0 0.0
        %1331 = vmatprep.subr.mxu0 0.0
        %1332 = vmatpush1.msra.mxu0 0.0
        %1333 = vmatprep.subr.mxu0 0.0
        %1334 = vmatpush1.msra.mxu0 0.0
        %1335 = vmatprep.subr.mxu0 0.0
        %1336 = vmatpush1.msra.mxu0 0.0
        %1337 = vmatprep.subr.mxu0 0.0
        %1338 = vmatpush1.msra.mxu0 0.0
        %1339 = vmatprep.subr.mxu0 0.0
        %1340 = vmatpush1.msra.mxu0 0.0
        %1341 = vmatprep.subr.mxu0 0.0
        %1342 = vmatpush1.msra.mxu0 0.0
        %1343 = vmatprep.subr.mxu0 0.0
        %1344 = vmatpush1.msra.mxu0 0.0
        %1345 = vmatprep.subr.mxu0 0.0
        %1346 = vmatpush1.msra.mxu0 0.0
        %1347 = vmatprep.subr.mxu0 0.0
        %1348 = vmatpush1.msra.mxu0 0.0
        %1349 = vmatprep.subr.mxu0 0.0
        %1350 = vmatpush1.msra.mxu0 0.0
        %1351 = vmatprep.subr.mxu0 0.0
        %1352 = vmatpush1.msra.mxu0 0.0
        %1353 = vmatprep.subr.mxu0 0.0
        %1354 = vmatpush1.msra.mxu0 0.0
        %1355 = vmatprep.subr.mxu0 0.0
        %1356 = vmatpush1.msra.mxu0 0.0
        %1357 = vmatprep.subr.mxu0 0.0
        %1358 = vmatpush1.msra.mxu0 0.0
        %1359 = vmatprep.subr.mxu0 0.0
        %1360 = vmatpush1.msra.mxu0 0.0
        %1361 = vmatprep.subr.mxu0 0.0
        %1362 = vmatpush1.msra.mxu0 0.0
        %1363 = vmatprep.subr.mxu0 0.0
        %1364 = vmatpush1.msra.mxu0 0.0
        %1365 = vmatprep.subr.mxu0 0.0
        %1366 = vmatpush1.msra.mxu0 0.0
        %1367 = vmatprep.subr.mxu0 0.0
        %1368 = vmatpush1.msra.mxu0 0.0
        %1369 = vmatprep.subr.mxu0 0.0
        %1370 = vmatpush1.msra.mxu0 0.0
        %1371 = vmatprep.subr.mxu0 0.0
        %1372 = vmatpush1.msra.mxu0 0.0
        %1373 = vmatprep.mubr.f32.mxu0 0.0
        %v1374 = vand.u32 %v907, 4294901760
        %1375 = vmatmul.mubr.f32.gmra.mrb[0].mxu0 %v1374
        %v1376 = vpop.f32.mrb[0].mxu0
        %v1377 = vadd.f32 %v1303, %v1376
        %v1378 = vpop.f32.mrb[0].mxu0
        %v1379 = vadd.f32 %v1305, %v1378
        %1380 = vdwg.mxu0
        %v1382 = vsel %vm905, %v880, 0
        %v1385 = vsel %vm909, %v875, 0
        %v1388 = vsel %vm909, %v877, 0
        %v1390 = vand.u32 %v1388, 4294901760
        %1391 = vmatprep.subr.mxu0 %v1390
        %v1392 = vand.u32 %v1385, 4294901760
        %1393 = vmatpush1.msra.mxu0 %v1392
        %1394 = vmatprep.subr.mxu0 0.0
        %1395 = vmatpush1.msra.mxu0 0.0
        %1396 = vmatprep.subr.mxu0 0.0
        %1397 = vmatpush1.msra.mxu0 0.0
        %1398 = vmatprep.subr.mxu0 0.0
        %1399 = vmatpush1.msra.mxu0 0.0
        %1400 = vmatprep.subr.mxu0 0.0
        %1401 = vmatpush1.msra.mxu0 0.0
        %1402 = vmatprep.subr.mxu0 0.0
        %1403 = vmatpush1.msra.mxu0 0.0
        %1404 = vmatprep.subr.mxu0 0.0
        %1405 = vmatpush1.msra.mxu0 0.0
        %1406 = vmatprep.subr.mxu0 0.0
        %1407 = vmatpush1.msra.mxu0 0.0
        %1408 = vmatprep.subr.mxu0 0.0
        %1409 = vmatpush1.msra.mxu0 0.0
        %1410 = vmatprep.subr.mxu0 0.0
        %1411 = vmatpush1.msra.mxu0 0.0
        %1412 = vmatprep.subr.mxu0 0.0
        %1413 = vmatpush1.msra.mxu0 0.0
        %1414 = vmatprep.subr.mxu0 0.0
        %1415 = vmatpush1.msra.mxu0 0.0
        %1416 = vmatprep.subr.mxu0 0.0
        %1417 = vmatpush1.msra.mxu0 0.0
        %1418 = vmatprep.subr.mxu0 0.0
        %1419 = vmatpush1.msra.mxu0 0.0
        %1420 = vmatprep.subr.mxu0 0.0
        %1421 = vmatpush1.msra.mxu0 0.0
        %1422 = vmatprep.subr.mxu0 0.0
        %1423 = vmatpush1.msra.mxu0 0.0
        %1424 = vmatprep.subr.mxu0 0.0
        %1425 = vmatpush1.msra.mxu0 0.0
        %1426 = vmatprep.subr.mxu0 0.0
        %1427 = vmatpush1.msra.mxu0 0.0
        %1428 = vmatprep.subr.mxu0 0.0
        %1429 = vmatpush1.msra.mxu0 0.0
        %1430 = vmatprep.subr.mxu0 0.0
        %1431 = vmatpush1.msra.mxu0 0.0
        %1432 = vmatprep.subr.mxu0 0.0
        %1433 = vmatpush1.msra.mxu0 0.0
        %1434 = vmatprep.subr.mxu0 0.0
        %1435 = vmatpush1.msra.mxu0 0.0
        %1436 = vmatprep.subr.mxu0 0.0
        %1437 = vmatpush1.msra.mxu0 0.0
        %1438 = vmatprep.subr.mxu0 0.0
        %1439 = vmatpush1.msra.mxu0 0.0
        %1440 = vmatprep.subr.mxu0 0.0
        %1441 = vmatpush1.msra.mxu0 0.0
        %1442 = vmatprep.subr.mxu0 0.0
        %1443 = vmatpush1.msra.mxu0 0.0
        %1444 = vmatprep.subr.mxu0 0.0
        %1445 = vmatpush1.msra.mxu0 0.0
        %1446 = vmatprep.subr.mxu0 0.0
        %1447 = vmatpush1.msra.mxu0 0.0
        %1448 = vmatprep.subr.mxu0 0.0
        %1449 = vmatpush1.msra.mxu0 0.0
        %1450 = vmatprep.subr.mxu0 0.0
        %1451 = vmatpush1.msra.mxu0 0.0
        %1452 = vmatprep.subr.mxu0 0.0
        %1453 = vmatpush1.msra.mxu0 0.0
        %1454 = vmatprep.subr.mxu0 0.0
        %1455 = vmatpush1.msra.mxu0 0.0
        %1456 = vmatprep.mubr.f32.mxu0 0.0
        %v1457 = vand.u32 %v1382, 4294901760
        %v1458 = vsub.f32 %v1382, %v1457
        %v1459 = vand.u32 %v1458, 4294901760
        %v1460 = vsub.f32 %v1458, %v1459
        %v1461 = vand.u32 %v1460, 4294901760
        %1462 = vmatmul.mubr.f32.gmra.mrb[0].mxu0 %v1461
        %v1463 = vpop.f32.mrb[0].mxu0
        %v1464 = vadd.f32 %v1377, %v1463
        %v1465 = vpop.f32.mrb[0].mxu0
        %v1466 = vadd.f32 %v1379, %v1465
        %1467 = vdwg.mxu0
        %v1468 = vand.u32 %v1388, 4294901760
        %v1469 = vsub.f32 %v1388, %v1468
        %v1470 = vand.u32 %v1469, 4294901760
        %v1471 = vsub.f32 %v1469, %v1470
        %v1472 = vand.u32 %v1471, 4294901760
        %1473 = vmatprep.subr.mxu0 %v1472
        %v1474 = vand.u32 %v1385, 4294901760
        %v1475 = vsub.f32 %v1385, %v1474
        %v1476 = vand.u32 %v1475, 4294901760
        %v1477 = vsub.f32 %v1475, %v1476
        %v1478 = vand.u32 %v1477, 4294901760
        %1479 = vmatpush1.msra.mxu0 %v1478
        %1480 = vmatprep.subr.mxu0 0.0
        %1481 = vmatpush1.msra.mxu0 0.0
        %1482 = vmatprep.subr.mxu0 0.0
        %1483 = vmatpush1.msra.mxu0 0.0
        %1484 = vmatprep.subr.mxu0 0.0
        %1485 = vmatpush1.msra.mxu0 0.0
        %1486 = vmatprep.subr.mxu0 0.0
        %1487 = vmatpush1.msra.mxu0 0.0
        %1488 = vmatprep.subr.mxu0 0.0
        %1489 = vmatpush1.msra.mxu0 0.0
        %1490 = vmatprep.subr.mxu0 0.0
        %1491 = vmatpush1.msra.mxu0 0.0
        %1492 = vmatprep.subr.mxu0 0.0
        %1493 = vmatpush1.msra.mxu0 0.0
        %1494 = vmatprep.subr.mxu0 0.0
        %1495 = vmatpush1.msra.mxu0 0.0
        %1496 = vmatprep.subr.mxu0 0.0
        %1497 = vmatpush1.msra.mxu0 0.0
        %1498 = vmatprep.subr.mxu0 0.0
        %1499 = vmatpush1.msra.mxu0 0.0
        %1500 = vmatprep.subr.mxu0 0.0
        %1501 = vmatpush1.msra.mxu0 0.0
        %1502 = vmatprep.subr.mxu0 0.0
        %1503 = vmatpush1.msra.mxu0 0.0
        %1504 = vmatprep.subr.mxu0 0.0
        %1505 = vmatpush1.msra.mxu0 0.0
        %1506 = vmatprep.subr.mxu0 0.0
        %1507 = vmatpush1.msra.mxu0 0.0
        %1508 = vmatprep.subr.mxu0 0.0
        %1509 = vmatpush1.msra.mxu0 0.0
        %1510 = vmatprep.subr.mxu0 0.0
        %1511 = vmatpush1.msra.mxu0 0.0
        %1512 = vmatprep.subr.mxu0 0.0
        %1513 = vmatpush1.msra.mxu0 0.0
        %1514 = vmatprep.subr.mxu0 0.0
        %1515 = vmatpush1.msra.mxu0 0.0
        %1516 = vmatprep.subr.mxu0 0.0
        %1517 = vmatpush1.msra.mxu0 0.0
        %1518 = vmatprep.subr.mxu0 0.0
        %1519 = vmatpush1.msra.mxu0 0.0
        %1520 = vmatprep.subr.mxu0 0.0
        %1521 = vmatpush1.msra.mxu0 0.0
        %1522 = vmatprep.subr.mxu0 0.0
        %1523 = vmatpush1.msra.mxu0 0.0
        %1524 = vmatprep.subr.mxu0 0.0
        %1525 = vmatpush1.msra.mxu0 0.0
        %1526 = vmatprep.subr.mxu0 0.0
        %1527 = vmatpush1.msra.mxu0 0.0
        %1528 = vmatprep.subr.mxu0 0.0
        %1529 = vmatpush1.msra.mxu0 0.0
        %1530 = vmatprep.subr.mxu0 0.0
        %1531 = vmatpush1.msra.mxu0 0.0
        %1532 = vmatprep.subr.mxu0 0.0
        %1533 = vmatpush1.msra.mxu0 0.0
        %1534 = vmatprep.subr.mxu0 0.0
        %1535 = vmatpush1.msra.mxu0 0.0
        %1536 = vmatprep.subr.mxu0 0.0
        %1537 = vmatpush1.msra.mxu0 0.0
        %1538 = vmatprep.subr.mxu0 0.0
        %1539 = vmatpush1.msra.mxu0 0.0
        %1540 = vmatprep.subr.mxu0 0.0
        %1541 = vmatpush1.msra.mxu0 0.0
        %1542 = vmatprep.mubr.f32.mxu0 0.0
        %v1543 = vand.u32 %v1382, 4294901760
        %1544 = vmatmul.mubr.f32.gmra.mrb[0].mxu0 %v1543
        %v1545 = vpop.f32.mrb[0].mxu0
        %v1546 = vadd.f32 %v1464, %v1545
        %v1547 = vpop.f32.mrb[0].mxu0
        %v1548 = vadd.f32 %v1466, %v1547
        %1549 = vdwg.mxu0
        %v1550 = vand.u32 %v1388, 4294901760
        %v1551 = vsub.f32 %v1388, %v1550
        %1552 = vmatprep.subr.mxu0 %v1551
        %v1553 = vand.u32 %v1385, 4294901760
        %v1554 = vsub.f32 %v1385, %v1553
        %1555 = vmatpush1.msra.mxu0 %v1554
        %1556 = vmatprep.subr.mxu0 0.0
        %1557 = vmatpush1.msra.mxu0 0.0
        %1558 = vmatprep.subr.mxu0 0.0
        %1559 = vmatpush1.msra.mxu0 0.0
        %1560 = vmatprep.subr.mxu0 0.0
        %1561 = vmatpush1.msra.mxu0 0.0
        %1562 = vmatprep.subr.mxu0 0.0
        %1563 = vmatpush1.msra.mxu0 0.0
        %1564 = vmatprep.subr.mxu0 0.0
        %1565 = vmatpush1.msra.mxu0 0.0
        %1566 = vmatprep.subr.mxu0 0.0
        %1567 = vmatpush1.msra.mxu0 0.0
        %1568 = vmatprep.subr.mxu0 0.0
        %1569 = vmatpush1.msra.mxu0 0.0
        %1570 = vmatprep.subr.mxu0 0.0
        %1571 = vmatpush1.msra.mxu0 0.0
        %1572 = vmatprep.subr.mxu0 0.0
        %1573 = vmatpush1.msra.mxu0 0.0
        %1574 = vmatprep.subr.mxu0 0.0
        %1575 = vmatpush1.msra.mxu0 0.0
        %1576 = vmatprep.subr.mxu0 0.0
        %1577 = vmatpush1.msra.mxu0 0.0
        %1578 = vmatprep.subr.mxu0 0.0
        %1579 = vmatpush1.msra.mxu0 0.0
        %1580 = vmatprep.subr.mxu0 0.0
        %1581 = vmatpush1.msra.mxu0 0.0
        %1582 = vmatprep.subr.mxu0 0.0
        %1583 = vmatpush1.msra.mxu0 0.0
        %1584 = vmatprep.subr.mxu0 0.0
        %1585 = vmatpush1.msra.mxu0 0.0
        %1586 = vmatprep.subr.mxu0 0.0
        %1587 = vmatpush1.msra.mxu0 0.0
        %1588 = vmatprep.subr.mxu0 0.0
        %1589 = vmatpush1.msra.mxu0 0.0
        %1590 = vmatprep.subr.mxu0 0.0
        %1591 = vmatpush1.msra.mxu0 0.0
        %1592 = vmatprep.subr.mxu0 0.0
        %1593 = vmatpush1.msra.mxu0 0.0
        %1594 = vmatprep.subr.mxu0 0.0
        %1595 = vmatpush1.msra.mxu0 0.0
        %1596 = vmatprep.subr.mxu0 0.0
        %1597 = vmatpush1.msra.mxu0 0.0
        %1598 = vmatprep.subr.mxu0 0.0
        %1599 = vmatpush1.msra.mxu0 0.0
        %1600 = vmatprep.subr.mxu0 0.0
        %1601 = vmatpush1.msra.mxu0 0.0
        %1602 = vmatprep.subr.mxu0 0.0
        %1603 = vmatpush1.msra.mxu0 0.0
        %1604 = vmatprep.subr.mxu0 0.0
        %1605 = vmatpush1.msra.mxu0 0.0
        %1606 = vmatprep.subr.mxu0 0.0
        %1607 = vmatpush1.msra.mxu0 0.0
        %1608 = vmatprep.subr.mxu0 0.0
        %1609 = vmatpush1.msra.mxu0 0.0
        %1610 = vmatprep.subr.mxu0 0.0
        %1611 = vmatpush1.msra.mxu0 0.0
        %1612 = vmatprep.subr.mxu0 0.0
        %1613 = vmatpush1.msra.mxu0 0.0
        %1614 = vmatprep.subr.mxu0 0.0
        %1615 = vmatpush1.msra.mxu0 0.0
        %1616 = vmatprep.subr.mxu0 0.0
        %1617 = vmatpush1.msra.mxu0 0.0
        %1618 = vmatprep.mubr.f32.mxu0 0.0
        %v1619 = vand.u32 %v1382, 4294901760
        %v1620 = vsub.f32 %v1382, %v1619
        %1621 = vmatmul.mubr.f32.gmra.mrb[0].mxu0 %v1620
        %v1622 = vpop.f32.mrb[0].mxu0
        %v1623 = vadd.f32 %v1546, %v1622
        %v1624 = vpop.f32.mrb[0].mxu0
        %v1625 = vadd.f32 %v1548, %v1624
        %1626 = vdwg.mxu0
        %v1627 = vand.u32 %v1388, 4294901760
        %1628 = vmatprep.subr.mxu0 %v1627
        %v1629 = vand.u32 %v1385, 4294901760
        %1630 = vmatpush1.msra.mxu0 %v1629
        %1631 = vmatprep.subr.mxu0 0.0
        %1632 = vmatpush1.msra.mxu0 0.0
        %1633 = vmatprep.subr.mxu0 0.0
        %1634 = vmatpush1.msra.mxu0 0.0
        %1635 = vmatprep.subr.mxu0 0.0
        %1636 = vmatpush1.msra.mxu0 0.0
        %1637 = vmatprep.subr.mxu0 0.0
        %1638 = vmatpush1.msra.mxu0 0.0
        %1639 = vmatprep.subr.mxu0 0.0
        %1640 = vmatpush1.msra.mxu0 0.0
        %1641 = vmatprep.subr.mxu0 0.0
        %1642 = vmatpush1.msra.mxu0 0.0
        %1643 = vmatprep.subr.mxu0 0.0
        %1644 = vmatpush1.msra.mxu0 0.0
        %1645 = vmatprep.subr.mxu0 0.0
        %1646 = vmatpush1.msra.mxu0 0.0
        %1647 = vmatprep.subr.mxu0 0.0
        %1648 = vmatpush1.msra.mxu0 0.0
        %1649 = vmatprep.subr.mxu0 0.0
        %1650 = vmatpush1.msra.mxu0 0.0
        %1651 = vmatprep.subr.mxu0 0.0
        %1652 = vmatpush1.msra.mxu0 0.0
        %1653 = vmatprep.subr.mxu0 0.0
        %1654 = vmatpush1.msra.mxu0 0.0
        %1655 = vmatprep.subr.mxu0 0.0
        %1656 = vmatpush1.msra.mxu0 0.0
        %1657 = vmatprep.subr.mxu0 0.0
        %1658 = vmatpush1.msra.mxu0 0.0
        %1659 = vmatprep.subr.mxu0 0.0
        %1660 = vmatpush1.msra.mxu0 0.0
        %1661 = vmatprep.subr.mxu0 0.0
        %1662 = vmatpush1.msra.mxu0 0.0
        %1663 = vmatprep.subr.mxu0 0.0
        %1664 = vmatpush1.msra.mxu0 0.0
        %1665 = vmatprep.subr.mxu0 0.0
        %1666 = vmatpush1.msra.mxu0 0.0
        %1667 = vmatprep.subr.mxu0 0.0
        %1668 = vmatpush1.msra.mxu0 0.0
        %1669 = vmatprep.subr.mxu0 0.0
        %1670 = vmatpush1.msra.mxu0 0.0
        %1671 = vmatprep.subr.mxu0 0.0
        %1672 = vmatpush1.msra.mxu0 0.0
        %1673 = vmatprep.subr.mxu0 0.0
        %1674 = vmatpush1.msra.mxu0 0.0
        %1675 = vmatprep.subr.mxu0 0.0
        %1676 = vmatpush1.msra.mxu0 0.0
        %1677 = vmatprep.subr.mxu0 0.0
        %1678 = vmatpush1.msra.mxu0 0.0
        %1679 = vmatprep.subr.mxu0 0.0
        %1680 = vmatpush1.msra.mxu0 0.0
        %1681 = vmatprep.subr.mxu0 0.0
        %1682 = vmatpush1.msra.mxu0 0.0
        %1683 = vmatprep.subr.mxu0 0.0
        %1684 = vmatpush1.msra.mxu0 0.0
        %1685 = vmatprep.subr.mxu0 0.0
        %1686 = vmatpush1.msra.mxu0 0.0
        %1687 = vmatprep.subr.mxu0 0.0
        %1688 = vmatpush1.msra.mxu0 0.0
        %1689 = vmatprep.subr.mxu0 0.0
        %1690 = vmatpush1.msra.mxu0 0.0
        %1691 = vmatprep.subr.mxu0 0.0
        %1692 = vmatpush1.msra.mxu0 0.0
        %1693 = vmatprep.mubr.f32.mxu0 0.0
        %v1694 = vand.u32 %v1382, 4294901760
        %v1695 = vsub.f32 %v1382, %v1694
        %v1696 = vand.u32 %v1695, 4294901760
        %1697 = vmatmul.mubr.f32.gmra.mrb[0].mxu0 %v1696
        %v1698 = vpop.f32.mrb[0].mxu0
        %v1699 = vadd.f32 %v1623, %v1698
        %v1700 = vpop.f32.mrb[0].mxu0
        %v1701 = vadd.f32 %v1625, %v1700
        %1702 = vdwg.mxu0
        %v1703 = vand.u32 %v1388, 4294901760
        %v1704 = vsub.f32 %v1388, %v1703
        %v1705 = vand.u32 %v1704, 4294901760
        %1706 = vmatprep.subr.mxu0 %v1705
        %v1707 = vand.u32 %v1385, 4294901760
        %v1708 = vsub.f32 %v1385, %v1707
        %v1709 = vand.u32 %v1708, 4294901760
        %1710 = vmatpush1.msra.mxu0 %v1709
        %1711 = vmatprep.subr.mxu0 0.0
        %1712 = vmatpush1.msra.mxu0 0.0
        %1713 = vmatprep.subr.mxu0 0.0
        %1714 = vmatpush1.msra.mxu0 0.0
        %1715 = vmatprep.subr.mxu0 0.0
        %1716 = vmatpush1.msra.mxu0 0.0
        %1717 = vmatprep.subr.mxu0 0.0
        %1718 = vmatpush1.msra.mxu0 0.0
        %1719 = vmatprep.subr.mxu0 0.0
        %1720 = vmatpush1.msra.mxu0 0.0
        %1721 = vmatprep.subr.mxu0 0.0
        %1722 = vmatpush1.msra.mxu0 0.0
        %1723 = vmatprep.subr.mxu0 0.0
        %1724 = vmatpush1.msra.mxu0 0.0
        %1725 = vmatprep.subr.mxu0 0.0
        %1726 = vmatpush1.msra.mxu0 0.0
        %1727 = vmatprep.subr.mxu0 0.0
        %1728 = vmatpush1.msra.mxu0 0.0
        %1729 = vmatprep.subr.mxu0 0.0
        %1730 = vmatpush1.msra.mxu0 0.0
        %1731 = vmatprep.subr.mxu0 0.0
        %1732 = vmatpush1.msra.mxu0 0.0
        %1733 = vmatprep.subr.mxu0 0.0
        %1734 = vmatpush1.msra.mxu0 0.0
        %1735 = vmatprep.subr.mxu0 0.0
        %1736 = vmatpush1.msra.mxu0 0.0
        %1737 = vmatprep.subr.mxu0 0.0
        %1738 = vmatpush1.msra.mxu0 0.0
        %1739 = vmatprep.subr.mxu0 0.0
        %1740 = vmatpush1.msra.mxu0 0.0
        %1741 = vmatprep.subr.mxu0 0.0
        %1742 = vmatpush1.msra.mxu0 0.0
        %1743 = vmatprep.subr.mxu0 0.0
        %1744 = vmatpush1.msra.mxu0 0.0
        %1745 = vmatprep.subr.mxu0 0.0
        %1746 = vmatpush1.msra.mxu0 0.0
        %1747 = vmatprep.subr.mxu0 0.0
        %1748 = vmatpush1.msra.mxu0 0.0
        %1749 = vmatprep.subr.mxu0 0.0
        %1750 = vmatpush1.msra.mxu0 0.0
        %1751 = vmatprep.subr.mxu0 0.0
        %1752 = vmatpush1.msra.mxu0 0.0
        %1753 = vmatprep.subr.mxu0 0.0
        %1754 = vmatpush1.msra.mxu0 0.0
        %1755 = vmatprep.subr.mxu0 0.0
        %1756 = vmatpush1.msra.mxu0 0.0
        %1757 = vmatprep.subr.mxu0 0.0
        %1758 = vmatpush1.msra.mxu0 0.0
        %1759 = vmatprep.subr.mxu0 0.0
        %1760 = vmatpush1.msra.mxu0 0.0
        %1761 = vmatprep.subr.mxu0 0.0
        %1762 = vmatpush1.msra.mxu0 0.0
        %1763 = vmatprep.subr.mxu0 0.0
        %1764 = vmatpush1.msra.mxu0 0.0
        %1765 = vmatprep.subr.mxu0 0.0
        %1766 = vmatpush1.msra.mxu0 0.0
        %1767 = vmatprep.subr.mxu0 0.0
        %1768 = vmatpush1.msra.mxu0 0.0
        %1769 = vmatprep.subr.mxu0 0.0
        %1770 = vmatpush1.msra.mxu0 0.0
        %1771 = vmatprep.subr.mxu0 0.0
        %1772 = vmatpush1.msra.mxu0 0.0
        %1773 = vmatprep.mubr.f32.mxu0 0.0
        %v1774 = vand.u32 %v1382, 4294901760
        %1775 = vmatmul.mubr.f32.gmra.mrb[0].mxu0 %v1774
        %v1776 = vpop.f32.mrb[0].mxu0
        %v1777 = vadd.f32 %v1699, %v1776
        %v1778 = vpop.f32.mrb[0].mxu0
        %v1779 = vadd.f32 %v1701, %v1778
        %1780 = vdwg.mxu0
        %v1781 = vand.u32 %v1388, 4294901760
        %1782 = vmatprep.subr.mxu0 %v1781
        %v1783 = vand.u32 %v1385, 4294901760
        %1784 = vmatpush1.msra.mxu0 %v1783
        %1785 = vmatprep.subr.mxu0 0.0
        %1786 = vmatpush1.msra.mxu0 0.0
        %1787 = vmatprep.subr.mxu0 0.0
        %1788 = vmatpush1.msra.mxu0 0.0
        %1789 = vmatprep.subr.mxu0 0.0
        %1790 = vmatpush1.msra.mxu0 0.0
        %1791 = vmatprep.subr.mxu0 0.0
        %1792 = vmatpush1.msra.mxu0 0.0
        %1793 = vmatprep.subr.mxu0 0.0
        %1794 = vmatpush1.msra.mxu0 0.0
        %1795 = vmatprep.subr.mxu0 0.0
        %1796 = vmatpush1.msra.mxu0 0.0
        %1797 = vmatprep.subr.mxu0 0.0
        %1798 = vmatpush1.msra.mxu0 0.0
        %1799 = vmatprep.subr.mxu0 0.0
        %1800 = vmatpush1.msra.mxu0 0.0
        %1801 = vmatprep.subr.mxu0 0.0
        %1802 = vmatpush1.msra.mxu0 0.0
        %1803 = vmatprep.subr.mxu0 0.0
        %1804 = vmatpush1.msra.mxu0 0.0
        %1805 = vmatprep.subr.mxu0 0.0
        %1806 = vmatpush1.msra.mxu0 0.0
        %1807 = vmatprep.subr.mxu0 0.0
        %1808 = vmatpush1.msra.mxu0 0.0
        %1809 = vmatprep.subr.mxu0 0.0
        %1810 = vmatpush1.msra.mxu0 0.0
        %1811 = vmatprep.subr.mxu0 0.0
        %1812 = vmatpush1.msra.mxu0 0.0
        %1813 = vmatprep.subr.mxu0 0.0
        %1814 = vmatpush1.msra.mxu0 0.0
        %1815 = vmatprep.subr.mxu0 0.0
        %1816 = vmatpush1.msra.mxu0 0.0
        %1817 = vmatprep.subr.mxu0 0.0
        %1818 = vmatpush1.msra.mxu0 0.0
        %1819 = vmatprep.subr.mxu0 0.0
        %1820 = vmatpush1.msra.mxu0 0.0
        %1821 = vmatprep.subr.mxu0 0.0
        %1822 = vmatpush1.msra.mxu0 0.0
        %1823 = vmatprep.subr.mxu0 0.0
        %1824 = vmatpush1.msra.mxu0 0.0
        %1825 = vmatprep.subr.mxu0 0.0
        %1826 = vmatpush1.msra.mxu0 0.0
        %1827 = vmatprep.subr.mxu0 0.0
        %1828 = vmatpush1.msra.mxu0 0.0
        %1829 = vmatprep.subr.mxu0 0.0
        %1830 = vmatpush1.msra.mxu0 0.0
        %1831 = vmatprep.subr.mxu0 0.0
        %1832 = vmatpush1.msra.mxu0 0.0
        %1833 = vmatprep.subr.mxu0 0.0
        %1834 = vmatpush1.msra.mxu0 0.0
        %1835 = vmatprep.subr.mxu0 0.0
        %1836 = vmatpush1.msra.mxu0 0.0
        %1837 = vmatprep.subr.mxu0 0.0
        %1838 = vmatpush1.msra.mxu0 0.0
        %1839 = vmatprep.subr.mxu0 0.0
        %1840 = vmatpush1.msra.mxu0 0.0
        %1841 = vmatprep.subr.mxu0 0.0
        %1842 = vmatpush1.msra.mxu0 0.0
        %1843 = vmatprep.subr.mxu0 0.0
        %1844 = vmatpush1.msra.mxu0 0.0
        %1845 = vmatprep.subr.mxu0 0.0
        %1846 = vmatpush1.msra.mxu0 0.0
        %1847 = vmatprep.mubr.f32.mxu0 0.0
        %v1848 = vand.u32 %v1382, 4294901760
        %1849 = vmatmul.mubr.f32.gmra.mrb[0].mxu0 %v1848
        %v1850 = vpop.f32.mrb[0].mxu0
        %v1851 = vadd.f32 %v1777, %v1850
        %v1852 = vpop.f32.mrb[0].mxu0
        %v1853 = vadd.f32 %v1779, %v1852
        %1854 = vdwg.mxu0
        %1855 = vrot.lane.b32.xlu0 %v875, 32
        %v1856 = vpop.permute.xlu0 %1855
        %1857 = vrot.lane.b32.xlu0 %v877, 32
        %v1858 = vpop.permute.xlu0 %1857
        %vm1859 = vcmp.lt.s32.totalorder %v886, 32
        %v1860 = vsel %vm1859, %v1856, %v1858
        %v1861 = vsel %vm1859, %v1858, %v1856
        %s1862 = scalar_lea.vmem %s5, 2
        %v1863 = vld [vmem:[%s1862] sm:$0x3]
        %v1865 = vlaneseq
        %v1866 = vshrl.u32 %v1865, 7
        %v1867 = vsub.s32 0, %v1866
        %v1868 = vrot.slane %v1863, %v1867
        %v1869 = vlaneseq
        %v1870 = vshrl.u32 %v1869, 7
        %v1871 = vsub.s32 1, %v1870
        %v1872 = vrot.slane %v1863, %v1871
        %v1875 = vmul.f32 %v1861, %v1868
        %v1876 = vmul.f32 %v1860, %v1872
        %s1877 = scalar_lea.vmem %s3, 4
        %v1878 = vld [vmem:[%s1877] sm:$0xf]
        %v1880 = vsel %vm905, %v1878, 0
        %v1883 = vsel %vm909, %v1875, 0
        %v1886 = vsel %vm909, %v1876, 0
        %v1888 = vand.u32 %v1886, 4294901760
        %1889 = vmatprep.subr.mxu0 %v1888
        %v1890 = vand.u32 %v1883, 4294901760
        %1891 = vmatpush1.msra.mxu0 %v1890
        %1892 = vmatprep.subr.mxu0 0.0
        %1893 = vmatpush1.msra.mxu0 0.0
        %1894 = vmatprep.subr.mxu0 0.0
        %1895 = vmatpush1.msra.mxu0 0.0
        %1896 = vmatprep.subr.mxu0 0.0
        %1897 = vmatpush1.msra.mxu0 0.0
        %1898 = vmatprep.subr.mxu0 0.0
        %1899 = vmatpush1.msra.mxu0 0.0
        %1900 = vmatprep.subr.mxu0 0.0
        %1901 = vmatpush1.msra.mxu0 0.0
        %1902 = vmatprep.subr.mxu0 0.0
        %1903 = vmatpush1.msra.mxu0 0.0
        %1904 = vmatprep.subr.mxu0 0.0
        %1905 = vmatpush1.msra.mxu0 0.0
        %1906 = vmatprep.subr.mxu0 0.0
        %1907 = vmatpush1.msra.mxu0 0.0
        %1908 = vmatprep.subr.mxu0 0.0
        %1909 = vmatpush1.msra.mxu0 0.0
        %1910 = vmatprep.subr.mxu0 0.0
        %1911 = vmatpush1.msra.mxu0 0.0
        %1912 = vmatprep.subr.mxu0 0.0
        %1913 = vmatpush1.msra.mxu0 0.0
        %1914 = vmatprep.subr.mxu0 0.0
        %1915 = vmatpush1.msra.mxu0 0.0
        %1916 = vmatprep.subr.mxu0 0.0
        %1917 = vmatpush1.msra.mxu0 0.0
        %1918 = vmatprep.subr.mxu0 0.0
        %1919 = vmatpush1.msra.mxu0 0.0
        %1920 = vmatprep.subr.mxu0 0.0
        %1921 = vmatpush1.msra.mxu0 0.0
        %1922 = vmatprep.subr.mxu0 0.0
        %1923 = vmatpush1.msra.mxu0 0.0
        %1924 = vmatprep.subr.mxu0 0.0
        %1925 = vmatpush1.msra.mxu0 0.0
        %1926 = vmatprep.subr.mxu0 0.0
        %1927 = vmatpush1.msra.mxu0 0.0
        %1928 = vmatprep.subr.mxu0 0.0
        %1929 = vmatpush1.msra.mxu0 0.0
        %1930 = vmatprep.subr.mxu0 0.0
        %1931 = vmatpush1.msra.mxu0 0.0
        %1932 = vmatprep.subr.mxu0 0.0
        %1933 = vmatpush1.msra.mxu0 0.0
        %1934 = vmatprep.subr.mxu0 0.0
        %1935 = vmatpush1.msra.mxu0 0.0
        %1936 = vmatprep.subr.mxu0 0.0
        %1937 = vmatpush1.msra.mxu0 0.0
        %1938 = vmatprep.subr.mxu0 0.0
        %1939 = vmatpush1.msra.mxu0 0.0
        %1940 = vmatprep.subr.mxu0 0.0
        %1941 = vmatpush1.msra.mxu0 0.0
        %1942 = vmatprep.subr.mxu0 0.0
        %1943 = vmatpush1.msra.mxu0 0.0
        %1944 = vmatprep.subr.mxu0 0.0
        %1945 = vmatpush1.msra.mxu0 0.0
        %1946 = vmatprep.subr.mxu0 0.0
        %1947 = vmatpush1.msra.mxu0 0.0
        %1948 = vmatprep.subr.mxu0 0.0
        %1949 = vmatpush1.msra.mxu0 0.0
        %1950 = vmatprep.subr.mxu0 0.0
        %1951 = vmatpush1.msra.mxu0 0.0
        %1952 = vmatprep.subr.mxu0 0.0
        %1953 = vmatpush1.msra.mxu0 0.0
        %1954 = vmatprep.mubr.f32.mxu0 0.0
        %v1955 = vand.u32 %v1880, 4294901760
        %v1956 = vsub.f32 %v1880, %v1955
        %v1957 = vand.u32 %v1956, 4294901760
        %v1958 = vsub.f32 %v1956, %v1957
        %v1959 = vand.u32 %v1958, 4294901760
        %1960 = vmatmul.mubr.f32.gmra.mrb[0].mxu0 %v1959
        %v1961 = vpop.f32.mrb[0].mxu0
        %v1962 = vadd.f32 0.0, %v1961
        %v1963 = vpop.f32.mrb[0].mxu0
        %v1964 = vadd.f32 0.0, %v1963
        %1965 = vdwg.mxu0
        %v1966 = vand.u32 %v1886, 4294901760
        %v1967 = vsub.f32 %v1886, %v1966
        %v1968 = vand.u32 %v1967, 4294901760
        %v1969 = vsub.f32 %v1967, %v1968
        %v1970 = vand.u32 %v1969, 4294901760
        %1971 = vmatprep.subr.mxu0 %v1970
        %v1972 = vand.u32 %v1883, 4294901760
        %v1973 = vsub.f32 %v1883, %v1972
        %v1974 = vand.u32 %v1973, 4294901760
        %v1975 = vsub.f32 %v1973, %v1974
        %v1976 = vand.u32 %v1975, 4294901760
        %1977 = vmatpush1.msra.mxu0 %v1976
        %1978 = vmatprep.subr.mxu0 0.0
        %1979 = vmatpush1.msra.mxu0 0.0
        %1980 = vmatprep.subr.mxu0 0.0
        %1981 = vmatpush1.msra.mxu0 0.0
        %1982 = vmatprep.subr.mxu0 0.0
        %1983 = vmatpush1.msra.mxu0 0.0
        %1984 = vmatprep.subr.mxu0 0.0
        %1985 = vmatpush1.msra.mxu0 0.0
        %1986 = vmatprep.subr.mxu0 0.0
        %1987 = vmatpush1.msra.mxu0 0.0
        %1988 = vmatprep.subr.mxu0 0.0
        %1989 = vmatpush1.msra.mxu0 0.0
        %1990 = vmatprep.subr.mxu0 0.0
        %1991 = vmatpush1.msra.mxu0 0.0
        %1992 = vmatprep.subr.mxu0 0.0
        %1993 = vmatpush1.msra.mxu0 0.0
        %1994 = vmatprep.subr.mxu0 0.0
        %1995 = vmatpush1.msra.mxu0 0.0
        %1996 = vmatprep.subr.mxu0 0.0
        %1997 = vmatpush1.msra.mxu0 0.0
        %1998 = vmatprep.subr.mxu0 0.0
        %1999 = vmatpush1.msra.mxu0 0.0
        %2000 = vmatprep.subr.mxu0 0.0
        %2001 = vmatpush1.msra.mxu0 0.0
        %2002 = vmatprep.subr.mxu0 0.0
        %2003 = vmatpush1.msra.mxu0 0.0
        %2004 = vmatprep.subr.mxu0 0.0
        %2005 = vmatpush1.msra.mxu0 0.0
        %2006 = vmatprep.subr.mxu0 0.0
        %2007 = vmatpush1.msra.mxu0 0.0
        %2008 = vmatprep.subr.mxu0 0.0
        %2009 = vmatpush1.msra.mxu0 0.0
        %2010 = vmatprep.subr.mxu0 0.0
        %2011 = vmatpush1.msra.mxu0 0.0
        %2012 = vmatprep.subr.mxu0 0.0
        %2013 = vmatpush1.msra.mxu0 0.0
        %2014 = vmatprep.subr.mxu0 0.0
        %2015 = vmatpush1.msra.mxu0 0.0
        %2016 = vmatprep.subr.mxu0 0.0
        %2017 = vmatpush1.msra.mxu0 0.0
        %2018 = vmatprep.subr.mxu0 0.0
        %2019 = vmatpush1.msra.mxu0 0.0
        %2020 = vmatprep.subr.mxu0 0.0
        %2021 = vmatpush1.msra.mxu0 0.0
        %2022 = vmatprep.subr.mxu0 0.0
        %2023 = vmatpush1.msra.mxu0 0.0
        %2024 = vmatprep.subr.mxu0 0.0
        %2025 = vmatpush1.msra.mxu0 0.0
        %2026 = vmatprep.subr.mxu0 0.0
        %2027 = vmatpush1.msra.mxu0 0.0
        %2028 = vmatprep.subr.mxu0 0.0
        %2029 = vmatpush1.msra.mxu0 0.0
        %2030 = vmatprep.subr.mxu0 0.0
        %2031 = vmatpush1.msra.mxu0 0.0
        %2032 = vmatprep.subr.mxu0 0.0
        %2033 = vmatpush1.msra.mxu0 0.0
        %2034 = vmatprep.subr.mxu0 0.0
        %2035 = vmatpush1.msra.mxu0 0.0
        %2036 = vmatprep.subr.mxu0 0.0
        %2037 = vmatpush1.msra.mxu0 0.0
        %2038 = vmatprep.subr.mxu0 0.0
        %2039 = vmatpush1.msra.mxu0 0.0
        %2040 = vmatprep.mubr.f32.mxu0 0.0
        %v2041 = vand.u32 %v1880, 4294901760
        %2042 = vmatmul.mubr.f32.gmra.mrb[0].mxu0 %v2041
        %v2043 = vpop.f32.mrb[0].mxu0
        %v2044 = vadd.f32 %v1962, %v2043
        %v2045 = vpop.f32.mrb[0].mxu0
        %v2046 = vadd.f32 %v1964, %v2045
        %2047 = vdwg.mxu0
        %v2048 = vand.u32 %v1886, 4294901760
        %v2049 = vsub.f32 %v1886, %v2048
        %2050 = vmatprep.subr.mxu0 %v2049
        %v2051 = vand.u32 %v1883, 4294901760
        %v2052 = vsub.f32 %v1883, %v2051
        %2053 = vmatpush1.msra.mxu0 %v2052
        %2054 = vmatprep.subr.mxu0 0.0
        %2055 = vmatpush1.msra.mxu0 0.0
        %2056 = vmatprep.subr.mxu0 0.0
        %2057 = vmatpush1.msra.mxu0 0.0
        %2058 = vmatprep.subr.mxu0 0.0
        %2059 = vmatpush1.msra.mxu0 0.0
        %2060 = vmatprep.subr.mxu0 0.0
        %2061 = vmatpush1.msra.mxu0 0.0
        %2062 = vmatprep.subr.mxu0 0.0
        %2063 = vmatpush1.msra.mxu0 0.0
        %2064 = vmatprep.subr.mxu0 0.0
        %2065 = vmatpush1.msra.mxu0 0.0
        %2066 = vmatprep.subr.mxu0 0.0
        %2067 = vmatpush1.msra.mxu0 0.0
        %2068 = vmatprep.subr.mxu0 0.0
        %2069 = vmatpush1.msra.mxu0 0.0
        %2070 = vmatprep.subr.mxu0 0.0
        %2071 = vmatpush1.msra.mxu0 0.0
        %2072 = vmatprep.subr.mxu0 0.0
        %2073 = vmatpush1.msra.mxu0 0.0
        %2074 = vmatprep.subr.mxu0 0.0
        %2075 = vmatpush1.msra.mxu0 0.0
        %2076 = vmatprep.subr.mxu0 0.0
        %2077 = vmatpush1.msra.mxu0 0.0
        %2078 = vmatprep.subr.mxu0 0.0
        %2079 = vmatpush1.msra.mxu0 0.0
        %2080 = vmatprep.subr.mxu0 0.0
        %2081 = vmatpush1.msra.mxu0 0.0
        %2082 = vmatprep.subr.mxu0 0.0
        %2083 = vmatpush1.msra.mxu0 0.0
        %2084 = vmatprep.subr.mxu0 0.0
        %2085 = vmatpush1.msra.mxu0 0.0
        %2086 = vmatprep.subr.mxu0 0.0
        %2087 = vmatpush1.msra.mxu0 0.0
        %2088 = vmatprep.subr.mxu0 0.0
        %2089 = vmatpush1.msra.mxu0 0.0
        %2090 = vmatprep.subr.mxu0 0.0
        %2091 = vmatpush1.msra.mxu0 0.0
        %2092 = vmatprep.subr.mxu0 0.0
        %2093 = vmatpush1.msra.mxu0 0.0
        %2094 = vmatprep.subr.mxu0 0.0
        %2095 = vmatpush1.msra.mxu0 0.0
        %2096 = vmatprep.subr.mxu0 0.0
        %2097 = vmatpush1.msra.mxu0 0.0
        %2098 = vmatprep.subr.mxu0 0.0
        %2099 = vmatpush1.msra.mxu0 0.0
        %2100 = vmatprep.subr.mxu0 0.0
        %2101 = vmatpush1.msra.mxu0 0.0
        %2102 = vmatprep.subr.mxu0 0.0
        %2103 = vmatpush1.msra.mxu0 0.0
        %2104 = vmatprep.subr.mxu0 0.0
        %2105 = vmatpush1.msra.mxu0 0.0
        %2106 = vmatprep.subr.mxu0 0.0
        %2107 = vmatpush1.msra.mxu0 0.0
        %2108 = vmatprep.subr.mxu0 0.0
        %2109 = vmatpush1.msra.mxu0 0.0
        %2110 = vmatprep.subr.mxu0 0.0
        %2111 = vmatpush1.msra.mxu0 0.0
        %2112 = vmatprep.subr.mxu0 0.0
        %2113 = vmatpush1.msra.mxu0 0.0
        %2114 = vmatprep.subr.mxu0 0.0
        %2115 = vmatpush1.msra.mxu0 0.0
        %2116 = vmatprep.mubr.f32.mxu0 0.0
        %v2117 = vand.u32 %v1880, 4294901760
        %v2118 = vsub.f32 %v1880, %v2117
        %2119 = vmatmul.mubr.f32.gmra.mrb[0].mxu0 %v2118
        %v2120 = vpop.f32.mrb[0].mxu0
        %v2121 = vadd.f32 %v2044, %v2120
        %v2122 = vpop.f32.mrb[0].mxu0
        %v2123 = vadd.f32 %v2046, %v2122
        %2124 = vdwg.mxu0
        %v2125 = vand.u32 %v1886, 4294901760
        %2126 = vmatprep.subr.mxu0 %v2125
        %v2127 = vand.u32 %v1883, 4294901760
        %2128 = vmatpush1.msra.mxu0 %v2127
        %2129 = vmatprep.subr.mxu0 0.0
        %2130 = vmatpush1.msra.mxu0 0.0
        %2131 = vmatprep.subr.mxu0 0.0
        %2132 = vmatpush1.msra.mxu0 0.0
        %2133 = vmatprep.subr.mxu0 0.0
        %2134 = vmatpush1.msra.mxu0 0.0
        %2135 = vmatprep.subr.mxu0 0.0
        %2136 = vmatpush1.msra.mxu0 0.0
        %2137 = vmatprep.subr.mxu0 0.0
        %2138 = vmatpush1.msra.mxu0 0.0
        %2139 = vmatprep.subr.mxu0 0.0
        %2140 = vmatpush1.msra.mxu0 0.0
        %2141 = vmatprep.subr.mxu0 0.0
        %2142 = vmatpush1.msra.mxu0 0.0
        %2143 = vmatprep.subr.mxu0 0.0
        %2144 = vmatpush1.msra.mxu0 0.0
        %2145 = vmatprep.subr.mxu0 0.0
        %2146 = vmatpush1.msra.mxu0 0.0
        %2147 = vmatprep.subr.mxu0 0.0
        %2148 = vmatpush1.msra.mxu0 0.0
        %2149 = vmatprep.subr.mxu0 0.0
        %2150 = vmatpush1.msra.mxu0 0.0
        %2151 = vmatprep.subr.mxu0 0.0
        %2152 = vmatpush1.msra.mxu0 0.0
        %2153 = vmatprep.subr.mxu0 0.0
        %2154 = vmatpush1.msra.mxu0 0.0
        %2155 = vmatprep.subr.mxu0 0.0
        %2156 = vmatpush1.msra.mxu0 0.0
        %2157 = vmatprep.subr.mxu0 0.0
        %2158 = vmatpush1.msra.mxu0 0.0
        %2159 = vmatprep.subr.mxu0 0.0
        %2160 = vmatpush1.msra.mxu0 0.0
        %2161 = vmatprep.subr.mxu0 0.0
        %2162 = vmatpush1.msra.mxu0 0.0
        %2163 = vmatprep.subr.mxu0 0.0
        %2164 = vmatpush1.msra.mxu0 0.0
        %2165 = vmatprep.subr.mxu0 0.0
        %2166 = vmatpush1.msra.mxu0 0.0
        %2167 = vmatprep.subr.mxu0 0.0
        %2168 = vmatpush1.msra.mxu0 0.0
        %2169 = vmatprep.subr.mxu0 0.0
        %2170 = vmatpush1.msra.mxu0 0.0
        %2171 = vmatprep.subr.mxu0 0.0
        %2172 = vmatpush1.msra.mxu0 0.0
        %2173 = vmatprep.subr.mxu0 0.0
        %2174 = vmatpush1.msra.mxu0 0.0
        %2175 = vmatprep.subr.mxu0 0.0
        %2176 = vmatpush1.msra.mxu0 0.0
        %2177 = vmatprep.subr.mxu0 0.0
        %2178 = vmatpush1.msra.mxu0 0.0
        %2179 = vmatprep.subr.mxu0 0.0
        %2180 = vmatpush1.msra.mxu0 0.0
        %2181 = vmatprep.subr.mxu0 0.0
        %2182 = vmatpush1.msra.mxu0 0.0
        %2183 = vmatprep.subr.mxu0 0.0
        %2184 = vmatpush1.msra.mxu0 0.0
        %2185 = vmatprep.subr.mxu0 0.0
        %2186 = vmatpush1.msra.mxu0 0.0
        %2187 = vmatprep.subr.mxu0 0.0
        %2188 = vmatpush1.msra.mxu0 0.0
        %2189 = vmatprep.subr.mxu0 0.0
        %2190 = vmatpush1.msra.mxu0 0.0
        %2191 = vmatprep.mubr.f32.mxu0 0.0
        %v2192 = vand.u32 %v1880, 4294901760
        %v2193 = vsub.f32 %v1880, %v2192
        %v2194 = vand.u32 %v2193, 4294901760
        %2195 = vmatmul.mubr.f32.gmra.mrb[0].mxu0 %v2194
        %v2196 = vpop.f32.mrb[0].mxu0
        %v2197 = vadd.f32 %v2121, %v2196
        %v2198 = vpop.f32.mrb[0].mxu0
        %v2199 = vadd.f32 %v2123, %v2198
        %2200 = vdwg.mxu0
        %v2201 = vand.u32 %v1886, 4294901760
        %v2202 = vsub.f32 %v1886, %v2201
        %v2203 = vand.u32 %v2202, 4294901760
        %2204 = vmatprep.subr.mxu0 %v2203
        %v2205 = vand.u32 %v1883, 4294901760
        %v2206 = vsub.f32 %v1883, %v2205
        %v2207 = vand.u32 %v2206, 4294901760
        %2208 = vmatpush1.msra.mxu0 %v2207
        %2209 = vmatprep.subr.mxu0 0.0
        %2210 = vmatpush1.msra.mxu0 0.0
        %2211 = vmatprep.subr.mxu0 0.0
        %2212 = vmatpush1.msra.mxu0 0.0
        %2213 = vmatprep.subr.mxu0 0.0
        %2214 = vmatpush1.msra.mxu0 0.0
        %2215 = vmatprep.subr.mxu0 0.0
        %2216 = vmatpush1.msra.mxu0 0.0
        %2217 = vmatprep.subr.mxu0 0.0
        %2218 = vmatpush1.msra.mxu0 0.0
        %2219 = vmatprep.subr.mxu0 0.0
        %2220 = vmatpush1.msra.mxu0 0.0
        %2221 = vmatprep.subr.mxu0 0.0
        %2222 = vmatpush1.msra.mxu0 0.0
        %2223 = vmatprep.subr.mxu0 0.0
        %2224 = vmatpush1.msra.mxu0 0.0
        %2225 = vmatprep.subr.mxu0 0.0
        %2226 = vmatpush1.msra.mxu0 0.0
        %2227 = vmatprep.subr.mxu0 0.0
        %2228 = vmatpush1.msra.mxu0 0.0
        %2229 = vmatprep.subr.mxu0 0.0
        %2230 = vmatpush1.msra.mxu0 0.0
        %2231 = vmatprep.subr.mxu0 0.0
        %2232 = vmatpush1.msra.mxu0 0.0
        %2233 = vmatprep.subr.mxu0 0.0
        %2234 = vmatpush1.msra.mxu0 0.0
        %2235 = vmatprep.subr.mxu0 0.0
        %2236 = vmatpush1.msra.mxu0 0.0
        %2237 = vmatprep.subr.mxu0 0.0
        %2238 = vmatpush1.msra.mxu0 0.0
        %2239 = vmatprep.subr.mxu0 0.0
        %2240 = vmatpush1.msra.mxu0 0.0
        %2241 = vmatprep.subr.mxu0 0.0
        %2242 = vmatpush1.msra.mxu0 0.0
        %2243 = vmatprep.subr.mxu0 0.0
        %2244 = vmatpush1.msra.mxu0 0.0
        %2245 = vmatprep.subr.mxu0 0.0
        %2246 = vmatpush1.msra.mxu0 0.0
        %2247 = vmatprep.subr.mxu0 0.0
        %2248 = vmatpush1.msra.mxu0 0.0
        %2249 = vmatprep.subr.mxu0 0.0
        %2250 = vmatpush1.msra.mxu0 0.0
        %2251 = vmatprep.subr.mxu0 0.0
        %2252 = vmatpush1.msra.mxu0 0.0
        %2253 = vmatprep.subr.mxu0 0.0
        %2254 = vmatpush1.msra.mxu0 0.0
        %2255 = vmatprep.subr.mxu0 0.0
        %2256 = vmatpush1.msra.mxu0 0.0
        %2257 = vmatprep.subr.mxu0 0.0
        %2258 = vmatpush1.msra.mxu0 0.0
        %2259 = vmatprep.subr.mxu0 0.0
        %2260 = vmatpush1.msra.mxu0 0.0
        %2261 = vmatprep.subr.mxu0 0.0
        %2262 = vmatpush1.msra.mxu0 0.0
        %2263 = vmatprep.subr.mxu0 0.0
        %2264 = vmatpush1.msra.mxu0 0.0
        %2265 = vmatprep.subr.mxu0 0.0
        %2266 = vmatpush1.msra.mxu0 0.0
        %2267 = vmatprep.subr.mxu0 0.0
        %2268 = vmatpush1.msra.mxu0 0.0
        %2269 = vmatprep.subr.mxu0 0.0
        %2270 = vmatpush1.msra.mxu0 0.0
        %2271 = vmatprep.mubr.f32.mxu0 0.0
        %v2272 = vand.u32 %v1880, 4294901760
        %2273 = vmatmul.mubr.f32.gmra.mrb[0].mxu0 %v2272
        %v2274 = vpop.f32.mrb[0].mxu0
        %v2275 = vadd.f32 %v2197, %v2274
        %v2276 = vpop.f32.mrb[0].mxu0
        %v2277 = vadd.f32 %v2199, %v2276
        %2278 = vdwg.mxu0
        %v2279 = vand.u32 %v1886, 4294901760
        %2280 = vmatprep.subr.mxu0 %v2279
        %v2281 = vand.u32 %v1883, 4294901760
        %2282 = vmatpush1.msra.mxu0 %v2281
        %2283 = vmatprep.subr.mxu0 0.0
        %2284 = vmatpush1.msra.mxu0 0.0
        %2285 = vmatprep.subr.mxu0 0.0
        %2286 = vmatpush1.msra.mxu0 0.0
        %2287 = vmatprep.subr.mxu0 0.0
        %2288 = vmatpush1.msra.mxu0 0.0
        %2289 = vmatprep.subr.mxu0 0.0
        %2290 = vmatpush1.msra.mxu0 0.0
        %2291 = vmatprep.subr.mxu0 0.0
        %2292 = vmatpush1.msra.mxu0 0.0
        %2293 = vmatprep.subr.mxu0 0.0
        %2294 = vmatpush1.msra.mxu0 0.0
        %2295 = vmatprep.subr.mxu0 0.0
        %2296 = vmatpush1.msra.mxu0 0.0
        %2297 = vmatprep.subr.mxu0 0.0
        %2298 = vmatpush1.msra.mxu0 0.0
        %2299 = vmatprep.subr.mxu0 0.0
        %2300 = vmatpush1.msra.mxu0 0.0
        %2301 = vmatprep.subr.mxu0 0.0
        %2302 = vmatpush1.msra.mxu0 0.0
        %2303 = vmatprep.subr.mxu0 0.0
        %2304 = vmatpush1.msra.mxu0 0.0
        %2305 = vmatprep.subr.mxu0 0.0
        %2306 = vmatpush1.msra.mxu0 0.0
        %2307 = vmatprep.subr.mxu0 0.0
        %2308 = vmatpush1.msra.mxu0 0.0
        %2309 = vmatprep.subr.mxu0 0.0
        %2310 = vmatpush1.msra.mxu0 0.0
        %2311 = vmatprep.subr.mxu0 0.0
        %2312 = vmatpush1.msra.mxu0 0.0
        %2313 = vmatprep.subr.mxu0 0.0
        %2314 = vmatpush1.msra.mxu0 0.0
        %2315 = vmatprep.subr.mxu0 0.0
        %2316 = vmatpush1.msra.mxu0 0.0
        %2317 = vmatprep.subr.mxu0 0.0
        %2318 = vmatpush1.msra.mxu0 0.0
        %2319 = vmatprep.subr.mxu0 0.0
        %2320 = vmatpush1.msra.mxu0 0.0
        %2321 = vmatprep.subr.mxu0 0.0
        %2322 = vmatpush1.msra.mxu0 0.0
        %2323 = vmatprep.subr.mxu0 0.0
        %2324 = vmatpush1.msra.mxu0 0.0
        %2325 = vmatprep.subr.mxu0 0.0
        %2326 = vmatpush1.msra.mxu0 0.0
        %2327 = vmatprep.subr.mxu0 0.0
        %2328 = vmatpush1.msra.mxu0 0.0
        %2329 = vmatprep.subr.mxu0 0.0
        %2330 = vmatpush1.msra.mxu0 0.0
        %2331 = vmatprep.subr.mxu0 0.0
        %2332 = vmatpush1.msra.mxu0 0.0
        %2333 = vmatprep.subr.mxu0 0.0
        %2334 = vmatpush1.msra.mxu0 0.0
        %2335 = vmatprep.subr.mxu0 0.0
        %2336 = vmatpush1.msra.mxu0 0.0
        %2337 = vmatprep.subr.mxu0 0.0
        %2338 = vmatpush1.msra.mxu0 0.0
        %2339 = vmatprep.subr.mxu0 0.0
        %2340 = vmatpush1.msra.mxu0 0.0
        %2341 = vmatprep.subr.mxu0 0.0
        %2342 = vmatpush1.msra.mxu0 0.0
        %2343 = vmatprep.subr.mxu0 0.0
        %2344 = vmatpush1.msra.mxu0 0.0
        %2345 = vmatprep.mubr.f32.mxu0 0.0
        %v2346 = vand.u32 %v1880, 4294901760
        %2347 = vmatmul.mubr.f32.gmra.mrb[0].mxu0 %v2346
        %v2348 = vpop.f32.mrb[0].mxu0
        %v2349 = vadd.f32 %v2275, %v2348
        %v2350 = vpop.f32.mrb[0].mxu0
        %v2351 = vadd.f32 %v2277, %v2350
        %2352 = vdwg.mxu0
        %v2353 = vadd.f32 %v1851, %v2349
        %v2354 = vadd.f32 %v1853, %v2351
        %2355 = vrot.lane.b32.xlu0 %v875, 30
        %v2356 = vpop.permute.xlu0 %2355
        %2357 = vrot.lane.b32.xlu0 %v877, 30
        %v2358 = vpop.permute.xlu0 %2357
        %vm2359 = vcmp.lt.s32.totalorder %v886, 30
        %v2360 = vsel %vm2359, %v2356, %v2358
        %v2361 = vsel %vm2359, %v2358, %v2356
        %s2362 = scalar_lea.vmem %s5, 4
        %v2363 = vld [vmem:[%s2362] sm:$0x3]
        %v2365 = vlaneseq
        %v2366 = vshrl.u32 %v2365, 7
        %v2367 = vsub.s32 0, %v2366
        %v2368 = vrot.slane %v2363, %v2367
        %v2369 = vlaneseq
        %v2370 = vshrl.u32 %v2369, 7
        %v2371 = vsub.s32 1, %v2370
        %v2372 = vrot.slane %v2363, %v2371
        %v2375 = vmul.f32 %v2361, %v2368
        %v2376 = vmul.f32 %v2360, %v2372
        %s2377 = scalar_lea.vmem %s3, 8
        %v2378 = vld [vmem:[%s2377] sm:$0xf]
        %v2380 = vsel %vm905, %v2378, 0
        %v2383 = vsel %vm909, %v2375, 0
        %v2386 = vsel %vm909, %v2376, 0
        %v2388 = vand.u32 %v2386, 4294901760
        %2389 = vmatprep.subr.mxu0 %v2388
        %v2390 = vand.u32 %v2383, 4294901760
        %2391 = vmatpush1.msra.mxu0 %v2390
        %2392 = vmatprep.subr.mxu0 0.0
        %2393 = vmatpush1.msra.mxu0 0.0
        %2394 = vmatprep.subr.mxu0 0.0
        %2395 = vmatpush1.msra.mxu0 0.0
        %2396 = vmatprep.subr.mxu0 0.0
        %2397 = vmatpush1.msra.mxu0 0.0
        %2398 = vmatprep.subr.mxu0 0.0
        %2399 = vmatpush1.msra.mxu0 0.0
        %2400 = vmatprep.subr.mxu0 0.0
        %2401 = vmatpush1.msra.mxu0 0.0
        %2402 = vmatprep.subr.mxu0 0.0
        %2403 = vmatpush1.msra.mxu0 0.0
        %2404 = vmatprep.subr.mxu0 0.0
        %2405 = vmatpush1.msra.mxu0 0.0
        %2406 = vmatprep.subr.mxu0 0.0
        %2407 = vmatpush1.msra.mxu0 0.0
        %2408 = vmatprep.subr.mxu0 0.0
        %2409 = vmatpush1.msra.mxu0 0.0
        %2410 = vmatprep.subr.mxu0 0.0
        %2411 = vmatpush1.msra.mxu0 0.0
        %2412 = vmatprep.subr.mxu0 0.0
        %2413 = vmatpush1.msra.mxu0 0.0
        %2414 = vmatprep.subr.mxu0 0.0
        %2415 = vmatpush1.msra.mxu0 0.0
        %2416 = vmatprep.subr.mxu0 0.0
        %2417 = vmatpush1.msra.mxu0 0.0
        %2418 = vmatprep.subr.mxu0 0.0
        %2419 = vmatpush1.msra.mxu0 0.0
        %2420 = vmatprep.subr.mxu0 0.0
        %2421 = vmatpush1.msra.mxu0 0.0
        %2422 = vmatprep.subr.mxu0 0.0
        %2423 = vmatpush1.msra.mxu0 0.0
        %2424 = vmatprep.subr.mxu0 0.0
        %2425 = vmatpush1.msra.mxu0 0.0
        %2426 = vmatprep.subr.mxu0 0.0
        %2427 = vmatpush1.msra.mxu0 0.0
        %2428 = vmatprep.subr.mxu0 0.0
        %2429 = vmatpush1.msra.mxu0 0.0
        %2430 = vmatprep.subr.mxu0 0.0
        %2431 = vmatpush1.msra.mxu0 0.0
        %2432 = vmatprep.subr.mxu0 0.0
        %2433 = vmatpush1.msra.mxu0 0.0
        %2434 = vmatprep.subr.mxu0 0.0
        %2435 = vmatpush1.msra.mxu0 0.0
        %2436 = vmatprep.subr.mxu0 0.0
        %2437 = vmatpush1.msra.mxu0 0.0
        %2438 = vmatprep.subr.mxu0 0.0
        %2439 = vmatpush1.msra.mxu0 0.0
        %2440 = vmatprep.subr.mxu0 0.0
        %2441 = vmatpush1.msra.mxu0 0.0
        %2442 = vmatprep.subr.mxu0 0.0
        %2443 = vmatpush1.msra.mxu0 0.0
        %2444 = vmatprep.subr.mxu0 0.0
        %2445 = vmatpush1.msra.mxu0 0.0
        %2446 = vmatprep.subr.mxu0 0.0
        %2447 = vmatpush1.msra.mxu0 0.0
        %2448 = vmatprep.subr.mxu0 0.0
        %2449 = vmatpush1.msra.mxu0 0.0
        %2450 = vmatprep.subr.mxu0 0.0
        %2451 = vmatpush1.msra.mxu0 0.0
        %2452 = vmatprep.subr.mxu0 0.0
        %2453 = vmatpush1.msra.mxu0 0.0
        %2454 = vmatprep.mubr.f32.mxu0 0.0
        %v2455 = vand.u32 %v2380, 4294901760
        %v2456 = vsub.f32 %v2380, %v2455
        %v2457 = vand.u32 %v2456, 4294901760
        %v2458 = vsub.f32 %v2456, %v2457
        %v2459 = vand.u32 %v2458, 4294901760
        %2460 = vmatmul.mubr.f32.gmra.mrb[0].mxu0 %v2459
        %v2461 = vpop.f32.mrb[0].mxu0
        %v2462 = vadd.f32 0.0, %v2461
        %v2463 = vpop.f32.mrb[0].mxu0
        %v2464 = vadd.f32 0.0, %v2463
        %2465 = vdwg.mxu0
        %v2466 = vand.u32 %v2386, 4294901760
        %v2467 = vsub.f32 %v2386, %v2466
        %v2468 = vand.u32 %v2467, 4294901760
        %v2469 = vsub.f32 %v2467, %v2468
        %v2470 = vand.u32 %v2469, 4294901760
        %2471 = vmatprep.subr.mxu0 %v2470
        %v2472 = vand.u32 %v2383, 4294901760
        %v2473 = vsub.f32 %v2383, %v2472
        %v2474 = vand.u32 %v2473, 4294901760
        %v2475 = vsub.f32 %v2473, %v2474
        %v2476 = vand.u32 %v2475, 4294901760
        %2477 = vmatpush1.msra.mxu0 %v2476
        %2478 = vmatprep.subr.mxu0 0.0
        %2479 = vmatpush1.msra.mxu0 0.0
        %2480 = vmatprep.subr.mxu0 0.0
        %2481 = vmatpush1.msra.mxu0 0.0
        %2482 = vmatprep.subr.mxu0 0.0
        %2483 = vmatpush1.msra.mxu0 0.0
        %2484 = vmatprep.subr.mxu0 0.0
        %2485 = vmatpush1.msra.mxu0 0.0
        %2486 = vmatprep.subr.mxu0 0.0
        %2487 = vmatpush1.msra.mxu0 0.0
        %2488 = vmatprep.subr.mxu0 0.0
        %2489 = vmatpush1.msra.mxu0 0.0
        %2490 = vmatprep.subr.mxu0 0.0
        %2491 = vmatpush1.msra.mxu0 0.0
        %2492 = vmatprep.subr.mxu0 0.0
        %2493 = vmatpush1.msra.mxu0 0.0
        %2494 = vmatprep.subr.mxu0 0.0
        %2495 = vmatpush1.msra.mxu0 0.0
        %2496 = vmatprep.subr.mxu0 0.0
        %2497 = vmatpush1.msra.mxu0 0.0
        %2498 = vmatprep.subr.mxu0 0.0
        %2499 = vmatpush1.msra.mxu0 0.0
        %2500 = vmatprep.subr.mxu0 0.0
        %2501 = vmatpush1.msra.mxu0 0.0
        %2502 = vmatprep.subr.mxu0 0.0
        %2503 = vmatpush1.msra.mxu0 0.0
        %2504 = vmatprep.subr.mxu0 0.0
        %2505 = vmatpush1.msra.mxu0 0.0
        %2506 = vmatprep.subr.mxu0 0.0
        %2507 = vmatpush1.msra.mxu0 0.0
        %2508 = vmatprep.subr.mxu0 0.0
        %2509 = vmatpush1.msra.mxu0 0.0
        %2510 = vmatprep.subr.mxu0 0.0
        %2511 = vmatpush1.msra.mxu0 0.0
        %2512 = vmatprep.subr.mxu0 0.0
        %2513 = vmatpush1.msra.mxu0 0.0
        %2514 = vmatprep.subr.mxu0 0.0
        %2515 = vmatpush1.msra.mxu0 0.0
        %2516 = vmatprep.subr.mxu0 0.0
        %2517 = vmatpush1.msra.mxu0 0.0
        %2518 = vmatprep.subr.mxu0 0.0
        %2519 = vmatpush1.msra.mxu0 0.0
        %2520 = vmatprep.subr.mxu0 0.0
        %2521 = vmatpush1.msra.mxu0 0.0
        %2522 = vmatprep.subr.mxu0 0.0
        %2523 = vmatpush1.msra.mxu0 0.0
        %2524 = vmatprep.subr.mxu0 0.0
        %2525 = vmatpush1.msra.mxu0 0.0
        %2526 = vmatprep.subr.mxu0 0.0
        %2527 = vmatpush1.msra.mxu0 0.0
        %2528 = vmatprep.subr.mxu0 0.0
        %2529 = vmatpush1.msra.mxu0 0.0
        %2530 = vmatprep.subr.mxu0 0.0
        %2531 = vmatpush1.msra.mxu0 0.0
        %2532 = vmatprep.subr.mxu0 0.0
        %2533 = vmatpush1.msra.mxu0 0.0
        %2534 = vmatprep.subr.mxu0 0.0
        %2535 = vmatpush1.msra.mxu0 0.0
        %2536 = vmatprep.subr.mxu0 0.0
        %2537 = vmatpush1.msra.mxu0 0.0
        %2538 = vmatprep.subr.mxu0 0.0
        %2539 = vmatpush1.msra.mxu0 0.0
        %2540 = vmatprep.mubr.f32.mxu0 0.0
        %v2541 = vand.u32 %v2380, 4294901760
        %2542 = vmatmul.mubr.f32.gmra.mrb[0].mxu0 %v2541
        %v2543 = vpop.f32.mrb[0].mxu0
        %v2544 = vadd.f32 %v2462, %v2543
        %v2545 = vpop.f32.mrb[0].mxu0
        %v2546 = vadd.f32 %v2464, %v2545
        %2547 = vdwg.mxu0
        %v2548 = vand.u32 %v2386, 4294901760
        %v2549 = vsub.f32 %v2386, %v2548
        %2550 = vmatprep.subr.mxu0 %v2549
        %v2551 = vand.u32 %v2383, 4294901760
        %v2552 = vsub.f32 %v2383, %v2551
        %2553 = vmatpush1.msra.mxu0 %v2552
        %2554 = vmatprep.subr.mxu0 0.0
        %2555 = vmatpush1.msra.mxu0 0.0
        %2556 = vmatprep.subr.mxu0 0.0
        %2557 = vmatpush1.msra.mxu0 0.0
        %2558 = vmatprep.subr.mxu0 0.0
        %2559 = vmatpush1.msra.mxu0 0.0
        %2560 = vmatprep.subr.mxu0 0.0
        %2561 = vmatpush1.msra.mxu0 0.0
        %2562 = vmatprep.subr.mxu0 0.0
        %2563 = vmatpush1.msra.mxu0 0.0
        %2564 = vmatprep.subr.mxu0 0.0
        %2565 = vmatpush1.msra.mxu0 0.0
        %2566 = vmatprep.subr.mxu0 0.0
        %2567 = vmatpush1.msra.mxu0 0.0
        %2568 = vmatprep.subr.mxu0 0.0
        %2569 = vmatpush1.msra.mxu0 0.0
        %2570 = vmatprep.subr.mxu0 0.0
        %2571 = vmatpush1.msra.mxu0 0.0
        %2572 = vmatprep.subr.mxu0 0.0
        %2573 = vmatpush1.msra.mxu0 0.0
        %2574 = vmatprep.subr.mxu0 0.0
        %2575 = vmatpush1.msra.mxu0 0.0
        %2576 = vmatprep.subr.mxu0 0.0
        %2577 = vmatpush1.msra.mxu0 0.0
        %2578 = vmatprep.subr.mxu0 0.0
        %2579 = vmatpush1.msra.mxu0 0.0
        %2580 = vmatprep.subr.mxu0 0.0
        %2581 = vmatpush1.msra.mxu0 0.0
        %2582 = vmatprep.subr.mxu0 0.0
        %2583 = vmatpush1.msra.mxu0 0.0
        %2584 = vmatprep.subr.mxu0 0.0
        %2585 = vmatpush1.msra.mxu0 0.0
        %2586 = vmatprep.subr.mxu0 0.0
        %2587 = vmatpush1.msra.mxu0 0.0
        %2588 = vmatprep.subr.mxu0 0.0
        %2589 = vmatpush1.msra.mxu0 0.0
        %2590 = vmatprep.subr.mxu0 0.0
        %2591 = vmatpush1.msra.mxu0 0.0
        %2592 = vmatprep.subr.mxu0 0.0
        %2593 = vmatpush1.msra.mxu0 0.0
        %2594 = vmatprep.subr.mxu0 0.0
        %2595 = vmatpush1.msra.mxu0 0.0
        %2596 = vmatprep.subr.mxu0 0.0
        %2597 = vmatpush1.msra.mxu0 0.0
        %2598 = vmatprep.subr.mxu0 0.0
        %2599 = vmatpush1.msra.mxu0 0.0
        %2600 = vmatprep.subr.mxu0 0.0
        %2601 = vmatpush1.msra.mxu0 0.0
        %2602 = vmatprep.subr.mxu0 0.0
        %2603 = vmatpush1.msra.mxu0 0.0
        %2604 = vmatprep.subr.mxu0 0.0
        %2605 = vmatpush1.msra.mxu0 0.0
        %2606 = vmatprep.subr.mxu0 0.0
        %2607 = vmatpush1.msra.mxu0 0.0
        %2608 = vmatprep.subr.mxu0 0.0
        %2609 = vmatpush1.msra.mxu0 0.0
        %2610 = vmatprep.subr.mxu0 0.0
        %2611 = vmatpush1.msra.mxu0 0.0
        %2612 = vmatprep.subr.mxu0 0.0
        %2613 = vmatpush1.msra.mxu0 0.0
        %2614 = vmatprep.subr.mxu0 0.0
        %2615 = vmatpush1.msra.mxu0 0.0
        %2616 = vmatprep.mubr.f32.mxu0 0.0
        %v2617 = vand.u32 %v2380, 4294901760
        %v2618 = vsub.f32 %v2380, %v2617
        %2619 = vmatmul.mubr.f32.gmra.mrb[0].mxu0 %v2618
        %v2620 = vpop.f32.mrb[0].mxu0
        %v2621 = vadd.f32 %v2544, %v2620
        %v2622 = vpop.f32.mrb[0].mxu0
        %v2623 = vadd.f32 %v2546, %v2622
        %2624 = vdwg.mxu0
        %v2625 = vand.u32 %v2386, 4294901760
        %2626 = vmatprep.subr.mxu0 %v2625
        %v2627 = vand.u32 %v2383, 4294901760
        %2628 = vmatpush1.msra.mxu0 %v2627
        %2629 = vmatprep.subr.mxu0 0.0
        %2630 = vmatpush1.msra.mxu0 0.0
        %2631 = vmatprep.subr.mxu0 0.0
        %2632 = vmatpush1.msra.mxu0 0.0
        %2633 = vmatprep.subr.mxu0 0.0
        %2634 = vmatpush1.msra.mxu0 0.0
        %2635 = vmatprep.subr.mxu0 0.0
        %2636 = vmatpush1.msra.mxu0 0.0
        %2637 = vmatprep.subr.mxu0 0.0
        %2638 = vmatpush1.msra.mxu0 0.0
        %2639 = vmatprep.subr.mxu0 0.0
        %2640 = vmatpush1.msra.mxu0 0.0
        %2641 = vmatprep.subr.mxu0 0.0
        %2642 = vmatpush1.msra.mxu0 0.0
        %2643 = vmatprep.subr.mxu0 0.0
        %2644 = vmatpush1.msra.mxu0 0.0
        %2645 = vmatprep.subr.mxu0 0.0
        %2646 = vmatpush1.msra.mxu0 0.0
        %2647 = vmatprep.subr.mxu0 0.0
        %2648 = vmatpush1.msra.mxu0 0.0
        %2649 = vmatprep.subr.mxu0 0.0
        %2650 = vmatpush1.msra.mxu0 0.0
        %2651 = vmatprep.subr.mxu0 0.0
        %2652 = vmatpush1.msra.mxu0 0.0
        %2653 = vmatprep.subr.mxu0 0.0
        %2654 = vmatpush1.msra.mxu0 0.0
        %2655 = vmatprep.subr.mxu0 0.0
        %2656 = vmatpush1.msra.mxu0 0.0
        %2657 = vmatprep.subr.mxu0 0.0
        %2658 = vmatpush1.msra.mxu0 0.0
        %2659 = vmatprep.subr.mxu0 0.0
        %2660 = vmatpush1.msra.mxu0 0.0
        %2661 = vmatprep.subr.mxu0 0.0
        %2662 = vmatpush1.msra.mxu0 0.0
        %2663 = vmatprep.subr.mxu0 0.0
        %2664 = vmatpush1.msra.mxu0 0.0
        %2665 = vmatprep.subr.mxu0 0.0
        %2666 = vmatpush1.msra.mxu0 0.0
        %2667 = vmatprep.subr.mxu0 0.0
        %2668 = vmatpush1.msra.mxu0 0.0
        %2669 = vmatprep.subr.mxu0 0.0
        %2670 = vmatpush1.msra.mxu0 0.0
        %2671 = vmatprep.subr.mxu0 0.0
        %2672 = vmatpush1.msra.mxu0 0.0
        %2673 = vmatprep.subr.mxu0 0.0
        %2674 = vmatpush1.msra.mxu0 0.0
        %2675 = vmatprep.subr.mxu0 0.0
        %2676 = vmatpush1.msra.mxu0 0.0
        %2677 = vmatprep.subr.mxu0 0.0
        %2678 = vmatpush1.msra.mxu0 0.0
        %2679 = vmatprep.subr.mxu0 0.0
        %2680 = vmatpush1.msra.mxu0 0.0
        %2681 = vmatprep.subr.mxu0 0.0
        %2682 = vmatpush1.msra.mxu0 0.0
        %2683 = vmatprep.subr.mxu0 0.0
        %2684 = vmatpush1.msra.mxu0 0.0
        %2685 = vmatprep.subr.mxu0 0.0
        %2686 = vmatpush1.msra.mxu0 0.0
        %2687 = vmatprep.subr.mxu0 0.0
        %2688 = vmatpush1.msra.mxu0 0.0
        %2689 = vmatprep.subr.mxu0 0.0
        %2690 = vmatpush1.msra.mxu0 0.0
        %2691 = vmatprep.mubr.f32.mxu0 0.0
        %v2692 = vand.u32 %v2380, 4294901760
        %v2693 = vsub.f32 %v2380, %v2692
        %v2694 = vand.u32 %v2693, 4294901760
        %2695 = vmatmul.mubr.f32.gmra.mrb[0].mxu0 %v2694
        %v2696 = vpop.f32.mrb[0].mxu0
        %v2697 = vadd.f32 %v2621, %v2696
        %v2698 = vpop.f32.mrb[0].mxu0
        %v2699 = vadd.f32 %v2623, %v2698
        %2700 = vdwg.mxu0
        %v2701 = vand.u32 %v2386, 4294901760
        %v2702 = vsub.f32 %v2386, %v2701
        %v2703 = vand.u32 %v2702, 4294901760
        %2704 = vmatprep.subr.mxu0 %v2703
        %v2705 = vand.u32 %v2383, 4294901760
        %v2706 = vsub.f32 %v2383, %v2705
        %v2707 = vand.u32 %v2706, 4294901760
        %2708 = vmatpush1.msra.mxu0 %v2707
        %2709 = vmatprep.subr.mxu0 0.0
        %2710 = vmatpush1.msra.mxu0 0.0
        %2711 = vmatprep.subr.mxu0 0.0
        %2712 = vmatpush1.msra.mxu0 0.0
        %2713 = vmatprep.subr.mxu0 0.0
        %2714 = vmatpush1.msra.mxu0 0.0
        %2715 = vmatprep.subr.mxu0 0.0
        %2716 = vmatpush1.msra.mxu0 0.0
        %2717 = vmatprep.subr.mxu0 0.0
        %2718 = vmatpush1.msra.mxu0 0.0
        %2719 = vmatprep.subr.mxu0 0.0
        %2720 = vmatpush1.msra.mxu0 0.0
        %2721 = vmatprep.subr.mxu0 0.0
        %2722 = vmatpush1.msra.mxu0 0.0
        %2723 = vmatprep.subr.mxu0 0.0
        %2724 = vmatpush1.msra.mxu0 0.0
        %2725 = vmatprep.subr.mxu0 0.0
        %2726 = vmatpush1.msra.mxu0 0.0
        %2727 = vmatprep.subr.mxu0 0.0
        %2728 = vmatpush1.msra.mxu0 0.0
        %2729 = vmatprep.subr.mxu0 0.0
        %2730 = vmatpush1.msra.mxu0 0.0
        %2731 = vmatprep.subr.mxu0 0.0
        %2732 = vmatpush1.msra.mxu0 0.0
        %2733 = vmatprep.subr.mxu0 0.0
        %2734 = vmatpush1.msra.mxu0 0.0
        %2735 = vmatprep.subr.mxu0 0.0
        %2736 = vmatpush1.msra.mxu0 0.0
        %2737 = vmatprep.subr.mxu0 0.0
        %2738 = vmatpush1.msra.mxu0 0.0
        %2739 = vmatprep.subr.mxu0 0.0
        %2740 = vmatpush1.msra.mxu0 0.0
        %2741 = vmatprep.subr.mxu0 0.0
        %2742 = vmatpush1.msra.mxu0 0.0
        %2743 = vmatprep.subr.mxu0 0.0
        %2744 = vmatpush1.msra.mxu0 0.0
        %2745 = vmatprep.subr.mxu0 0.0
        %2746 = vmatpush1.msra.mxu0 0.0
        %2747 = vmatprep.subr.mxu0 0.0
        %2748 = vmatpush1.msra.mxu0 0.0
        %2749 = vmatprep.subr.mxu0 0.0
        %2750 = vmatpush1.msra.mxu0 0.0
        %2751 = vmatprep.subr.mxu0 0.0
        %2752 = vmatpush1.msra.mxu0 0.0
        %2753 = vmatprep.subr.mxu0 0.0
        %2754 = vmatpush1.msra.mxu0 0.0
        %2755 = vmatprep.subr.mxu0 0.0
        %2756 = vmatpush1.msra.mxu0 0.0
        %2757 = vmatprep.subr.mxu0 0.0
        %2758 = vmatpush1.msra.mxu0 0.0
        %2759 = vmatprep.subr.mxu0 0.0
        %2760 = vmatpush1.msra.mxu0 0.0
        %2761 = vmatprep.subr.mxu0 0.0
        %2762 = vmatpush1.msra.mxu0 0.0
        %2763 = vmatprep.subr.mxu0 0.0
        %2764 = vmatpush1.msra.mxu0 0.0
        %2765 = vmatprep.subr.mxu0 0.0
        %2766 = vmatpush1.msra.mxu0 0.0
        %2767 = vmatprep.subr.mxu0 0.0
        %2768 = vmatpush1.msra.mxu0 0.0
        %2769 = vmatprep.subr.mxu0 0.0
        %2770 = vmatpush1.msra.mxu0 0.0
        %2771 = vmatprep.mubr.f32.mxu0 0.0
        %v2772 = vand.u32 %v2380, 4294901760
        %2773 = vmatmul.mubr.f32.gmra.mrb[0].mxu0 %v2772
        %v2774 = vpop.f32.mrb[0].mxu0
        %v2775 = vadd.f32 %v2697, %v2774
        %v2776 = vpop.f32.mrb[0].mxu0
        %v2777 = vadd.f32 %v2699, %v2776
        %2778 = vdwg.mxu0
        %v2779 = vand.u32 %v2386, 4294901760
        %2780 = vmatprep.subr.mxu0 %v2779
        %v2781 = vand.u32 %v2383, 4294901760
        %2782 = vmatpush1.msra.mxu0 %v2781
        %2783 = vmatprep.subr.mxu0 0.0
        %2784 = vmatpush1.msra.mxu0 0.0
        %2785 = vmatprep.subr.mxu0 0.0
        %2786 = vmatpush1.msra.mxu0 0.0
        %2787 = vmatprep.subr.mxu0 0.0
        %2788 = vmatpush1.msra.mxu0 0.0
        %2789 = vmatprep.subr.mxu0 0.0
        %2790 = vmatpush1.msra.mxu0 0.0
        %2791 = vmatprep.subr.mxu0 0.0
        %2792 = vmatpush1.msra.mxu0 0.0
        %2793 = vmatprep.subr.mxu0 0.0
        %2794 = vmatpush1.msra.mxu0 0.0
        %2795 = vmatprep.subr.mxu0 0.0
        %2796 = vmatpush1.msra.mxu0 0.0
        %2797 = vmatprep.subr.mxu0 0.0
        %2798 = vmatpush1.msra.mxu0 0.0
        %2799 = vmatprep.subr.mxu0 0.0
        %2800 = vmatpush1.msra.mxu0 0.0
        %2801 = vmatprep.subr.mxu0 0.0
        %2802 = vmatpush1.msra.mxu0 0.0
        %2803 = vmatprep.subr.mxu0 0.0
        %2804 = vmatpush1.msra.mxu0 0.0
        %2805 = vmatprep.subr.mxu0 0.0
        %2806 = vmatpush1.msra.mxu0 0.0
        %2807 = vmatprep.subr.mxu0 0.0
        %2808 = vmatpush1.msra.mxu0 0.0
        %2809 = vmatprep.subr.mxu0 0.0
        %2810 = vmatpush1.msra.mxu0 0.0
        %2811 = vmatprep.subr.mxu0 0.0
        %2812 = vmatpush1.msra.mxu0 0.0
        %2813 = vmatprep.subr.mxu0 0.0
        %2814 = vmatpush1.msra.mxu0 0.0
        %2815 = vmatprep.subr.mxu0 0.0
        %2816 = vmatpush1.msra.mxu0 0.0
        %2817 = vmatprep.subr.mxu0 0.0
        %2818 = vmatpush1.msra.mxu0 0.0
        %2819 = vmatprep.subr.mxu0 0.0
        %2820 = vmatpush1.msra.mxu0 0.0
        %2821 = vmatprep.subr.mxu0 0.0
        %2822 = vmatpush1.msra.mxu0 0.0
        %2823 = vmatprep.subr.mxu0 0.0
        %2824 = vmatpush1.msra.mxu0 0.0
        %2825 = vmatprep.subr.mxu0 0.0
        %2826 = vmatpush1.msra.mxu0 0.0
        %2827 = vmatprep.subr.mxu0 0.0
        %2828 = vmatpush1.msra.mxu0 0.0
        %2829 = vmatprep.subr.mxu0 0.0
        %2830 = vmatpush1.msra.mxu0 0.0
        %2831 = vmatprep.subr.mxu0 0.0
        %2832 = vmatpush1.msra.mxu0 0.0
        %2833 = vmatprep.subr.mxu0 0.0
        %2834 = vmatpush1.msra.mxu0 0.0
        %2835 = vmatprep.subr.mxu0 0.0
        %2836 = vmatpush1.msra.mxu0 0.0
        %2837 = vmatprep.subr.mxu0 0.0
        %2838 = vmatpush1.msra.mxu0 0.0
        %2839 = vmatprep.subr.mxu0 0.0
        %2840 = vmatpush1.msra.mxu0 0.0
        %2841 = vmatprep.subr.mxu0 0.0
        %2842 = vmatpush1.msra.mxu0 0.0
        %2843 = vmatprep.subr.mxu0 0.0
        %2844 = vmatpush1.msra.mxu0 0.0
        %2845 = vmatprep.mubr.f32.mxu0 0.0
        %v2846 = vand.u32 %v2380, 4294901760
        %2847 = vmatmul.mubr.f32.gmra.mrb[0].mxu0 %v2846
        %v2848 = vpop.f32.mrb[0].mxu0
        %v2849 = vadd.f32 %v2775, %v2848
        %v2850 = vpop.f32.mrb[0].mxu0
        %v2851 = vadd.f32 %v2777, %v2850
        %2852 = vdwg.mxu0
        %v2853 = vadd.f32 %v2353, %v2849
        %v2854 = vadd.f32 %v2354, %v2851
        %2855 = vrot.lane.b32.xlu0 %v875, 2
        %v2856 = vpop.permute.xlu0 %2855
        %2857 = vrot.lane.b32.xlu0 %v877, 2
        %v2858 = vpop.permute.xlu0 %2857
        %vm2859 = vcmp.lt.s32.totalorder %v886, 2
        %v2860 = vsel %vm2859, %v2856, %v2858
        %v2861 = vsel %vm2859, %v2858, %v2856
        %s2862 = scalar_lea.vmem %s5, 6
        %v2863 = vld [vmem:[%s2862] sm:$0x3]
        %v2865 = vlaneseq
        %v2866 = vshrl.u32 %v2865, 7
        %v2867 = vsub.s32 0, %v2866
        %v2868 = vrot.slane %v2863, %v2867
        %v2869 = vlaneseq
        %v2870 = vshrl.u32 %v2869, 7
        %v2871 = vsub.s32 1, %v2870
        %v2872 = vrot.slane %v2863, %v2871
        %v2875 = vmul.f32 %v2861, %v2868
        %v2876 = vmul.f32 %v2860, %v2872
        %s2877 = scalar_lea.vmem %s3, 12
        %v2878 = vld [vmem:[%s2877] sm:$0xf]
        %v2880 = vsel %vm905, %v2878, 0
        %v2883 = vsel %vm909, %v2875, 0
        %v2886 = vsel %vm909, %v2876, 0
        %v2888 = vand.u32 %v2886, 4294901760
        %2889 = vmatprep.subr.mxu0 %v2888
        %v2890 = vand.u32 %v2883, 4294901760
        %2891 = vmatpush1.msra.mxu0 %v2890
        %2892 = vmatprep.subr.mxu0 0.0
        %2893 = vmatpush1.msra.mxu0 0.0
        %2894 = vmatprep.subr.mxu0 0.0
        %2895 = vmatpush1.msra.mxu0 0.0
        %2896 = vmatprep.subr.mxu0 0.0
        %2897 = vmatpush1.msra.mxu0 0.0
        %2898 = vmatprep.subr.mxu0 0.0
        %2899 = vmatpush1.msra.mxu0 0.0
        %2900 = vmatprep.subr.mxu0 0.0
        %2901 = vmatpush1.msra.mxu0 0.0
        %2902 = vmatprep.subr.mxu0 0.0
        %2903 = vmatpush1.msra.mxu0 0.0
        %2904 = vmatprep.subr.mxu0 0.0
        %2905 = vmatpush1.msra.mxu0 0.0
        %2906 = vmatprep.subr.mxu0 0.0
        %2907 = vmatpush1.msra.mxu0 0.0
        %2908 = vmatprep.subr.mxu0 0.0
        %2909 = vmatpush1.msra.mxu0 0.0
        %2910 = vmatprep.subr.mxu0 0.0
        %2911 = vmatpush1.msra.mxu0 0.0
        %2912 = vmatprep.subr.mxu0 0.0
        %2913 = vmatpush1.msra.mxu0 0.0
        %2914 = vmatprep.subr.mxu0 0.0
        %2915 = vmatpush1.msra.mxu0 0.0
        %2916 = vmatprep.subr.mxu0 0.0
        %2917 = vmatpush1.msra.mxu0 0.0
        %2918 = vmatprep.subr.mxu0 0.0
        %2919 = vmatpush1.msra.mxu0 0.0
        %2920 = vmatprep.subr.mxu0 0.0
        %2921 = vmatpush1.msra.mxu0 0.0
        %2922 = vmatprep.subr.mxu0 0.0
        %2923 = vmatpush1.msra.mxu0 0.0
        %2924 = vmatprep.subr.mxu0 0.0
        %2925 = vmatpush1.msra.mxu0 0.0
        %2926 = vmatprep.subr.mxu0 0.0
        %2927 = vmatpush1.msra.mxu0 0.0
        %2928 = vmatprep.subr.mxu0 0.0
        %2929 = vmatpush1.msra.mxu0 0.0
        %2930 = vmatprep.subr.mxu0 0.0
        %2931 = vmatpush1.msra.mxu0 0.0
        %2932 = vmatprep.subr.mxu0 0.0
        %2933 = vmatpush1.msra.mxu0 0.0
        %2934 = vmatprep.subr.mxu0 0.0
        %2935 = vmatpush1.msra.mxu0 0.0
        %2936 = vmatprep.subr.mxu0 0.0
        %2937 = vmatpush1.msra.mxu0 0.0
        %2938 = vmatprep.subr.mxu0 0.0
        %2939 = vmatpush1.msra.mxu0 0.0
        %2940 = vmatprep.subr.mxu0 0.0
        %2941 = vmatpush1.msra.mxu0 0.0
        %2942 = vmatprep.subr.mxu0 0.0
        %2943 = vmatpush1.msra.mxu0 0.0
        %2944 = vmatprep.subr.mxu0 0.0
        %2945 = vmatpush1.msra.mxu0 0.0
        %2946 = vmatprep.subr.mxu0 0.0
        %2947 = vmatpush1.msra.mxu0 0.0
        %2948 = vmatprep.subr.mxu0 0.0
        %2949 = vmatpush1.msra.mxu0 0.0
        %2950 = vmatprep.subr.mxu0 0.0
        %2951 = vmatpush1.msra.mxu0 0.0
        %2952 = vmatprep.subr.mxu0 0.0
        %2953 = vmatpush1.msra.mxu0 0.0
        %2954 = vmatprep.mubr.f32.mxu0 0.0
        %v2955 = vand.u32 %v2880, 4294901760
        %v2956 = vsub.f32 %v2880, %v2955
        %v2957 = vand.u32 %v2956, 4294901760
        %v2958 = vsub.f32 %v2956, %v2957
        %v2959 = vand.u32 %v2958, 4294901760
        %2960 = vmatmul.mubr.f32.gmra.mrb[0].mxu0 %v2959
        %v2961 = vpop.f32.mrb[0].mxu0
        %v2962 = vadd.f32 0.0, %v2961
        %v2963 = vpop.f32.mrb[0].mxu0
        %v2964 = vadd.f32 0.0, %v2963
        %2965 = vdwg.mxu0
        %v2966 = vand.u32 %v2886, 4294901760
        %v2967 = vsub.f32 %v2886, %v2966
        %v2968 = vand.u32 %v2967, 4294901760
        %v2969 = vsub.f32 %v2967, %v2968
        %v2970 = vand.u32 %v2969, 4294901760
        %2971 = vmatprep.subr.mxu0 %v2970
        %v2972 = vand.u32 %v2883, 4294901760
        %v2973 = vsub.f32 %v2883, %v2972
        %v2974 = vand.u32 %v2973, 4294901760
        %v2975 = vsub.f32 %v2973, %v2974
        %v2976 = vand.u32 %v2975, 4294901760
        %2977 = vmatpush1.msra.mxu0 %v2976
        %2978 = vmatprep.subr.mxu0 0.0
        %2979 = vmatpush1.msra.mxu0 0.0
        %2980 = vmatprep.subr.mxu0 0.0
        %2981 = vmatpush1.msra.mxu0 0.0
        %2982 = vmatprep.subr.mxu0 0.0
        %2983 = vmatpush1.msra.mxu0 0.0
        %2984 = vmatprep.subr.mxu0 0.0
        %2985 = vmatpush1.msra.mxu0 0.0
        %2986 = vmatprep.subr.mxu0 0.0
        %2987 = vmatpush1.msra.mxu0 0.0
        %2988 = vmatprep.subr.mxu0 0.0
        %2989 = vmatpush1.msra.mxu0 0.0
        %2990 = vmatprep.subr.mxu0 0.0
        %2991 = vmatpush1.msra.mxu0 0.0
        %2992 = vmatprep.subr.mxu0 0.0
        %2993 = vmatpush1.msra.mxu0 0.0
        %2994 = vmatprep.subr.mxu0 0.0
        %2995 = vmatpush1.msra.mxu0 0.0
        %2996 = vmatprep.subr.mxu0 0.0
        %2997 = vmatpush1.msra.mxu0 0.0
        %2998 = vmatprep.subr.mxu0 0.0
        %2999 = vmatpush1.msra.mxu0 0.0
        %3000 = vmatprep.subr.mxu0 0.0
        %3001 = vmatpush1.msra.mxu0 0.0
        %3002 = vmatprep.subr.mxu0 0.0
        %3003 = vmatpush1.msra.mxu0 0.0
        %3004 = vmatprep.subr.mxu0 0.0
        %3005 = vmatpush1.msra.mxu0 0.0
        %3006 = vmatprep.subr.mxu0 0.0
        %3007 = vmatpush1.msra.mxu0 0.0
        %3008 = vmatprep.subr.mxu0 0.0
        %3009 = vmatpush1.msra.mxu0 0.0
        %3010 = vmatprep.subr.mxu0 0.0
        %3011 = vmatpush1.msra.mxu0 0.0
        %3012 = vmatprep.subr.mxu0 0.0
        %3013 = vmatpush1.msra.mxu0 0.0
        %3014 = vmatprep.subr.mxu0 0.0
        %3015 = vmatpush1.msra.mxu0 0.0
        %3016 = vmatprep.subr.mxu0 0.0
        %3017 = vmatpush1.msra.mxu0 0.0
        %3018 = vmatprep.subr.mxu0 0.0
        %3019 = vmatpush1.msra.mxu0 0.0
        %3020 = vmatprep.subr.mxu0 0.0
        %3021 = vmatpush1.msra.mxu0 0.0
        %3022 = vmatprep.subr.mxu0 0.0
        %3023 = vmatpush1.msra.mxu0 0.0
        %3024 = vmatprep.subr.mxu0 0.0
        %3025 = vmatpush1.msra.mxu0 0.0
        %3026 = vmatprep.subr.mxu0 0.0
        %3027 = vmatpush1.msra.mxu0 0.0
        %3028 = vmatprep.subr.mxu0 0.0
        %3029 = vmatpush1.msra.mxu0 0.0
        %3030 = vmatprep.subr.mxu0 0.0
        %3031 = vmatpush1.msra.mxu0 0.0
        %3032 = vmatprep.subr.mxu0 0.0
        %3033 = vmatpush1.msra.mxu0 0.0
        %3034 = vmatprep.subr.mxu0 0.0
        %3035 = vmatpush1.msra.mxu0 0.0
        %3036 = vmatprep.subr.mxu0 0.0
        %3037 = vmatpush1.msra.mxu0 0.0
        %3038 = vmatprep.subr.mxu0 0.0
        %3039 = vmatpush1.msra.mxu0 0.0
        %3040 = vmatprep.mubr.f32.mxu0 0.0
        %v3041 = vand.u32 %v2880, 4294901760
        %3042 = vmatmul.mubr.f32.gmra.mrb[0].mxu0 %v3041
        %v3043 = vpop.f32.mrb[0].mxu0
        %v3044 = vadd.f32 %v2962, %v3043
        %v3045 = vpop.f32.mrb[0].mxu0
        %v3046 = vadd.f32 %v2964, %v3045
        %3047 = vdwg.mxu0
        %v3048 = vand.u32 %v2886, 4294901760
        %v3049 = vsub.f32 %v2886, %v3048
        %3050 = vmatprep.subr.mxu0 %v3049
        %v3051 = vand.u32 %v2883, 4294901760
        %v3052 = vsub.f32 %v2883, %v3051
        %3053 = vmatpush1.msra.mxu0 %v3052
        %3054 = vmatprep.subr.mxu0 0.0
        %3055 = vmatpush1.msra.mxu0 0.0
        %3056 = vmatprep.subr.mxu0 0.0
        %3057 = vmatpush1.msra.mxu0 0.0
        %3058 = vmatprep.subr.mxu0 0.0
        %3059 = vmatpush1.msra.mxu0 0.0
        %3060 = vmatprep.subr.mxu0 0.0
        %3061 = vmatpush1.msra.mxu0 0.0
        %3062 = vmatprep.subr.mxu0 0.0
        %3063 = vmatpush1.msra.mxu0 0.0
        %3064 = vmatprep.subr.mxu0 0.0
        %3065 = vmatpush1.msra.mxu0 0.0
        %3066 = vmatprep.subr.mxu0 0.0
        %3067 = vmatpush1.msra.mxu0 0.0
        %3068 = vmatprep.subr.mxu0 0.0
        %3069 = vmatpush1.msra.mxu0 0.0
        %3070 = vmatprep.subr.mxu0 0.0
        %3071 = vmatpush1.msra.mxu0 0.0
        %3072 = vmatprep.subr.mxu0 0.0
        %3073 = vmatpush1.msra.mxu0 0.0
        %3074 = vmatprep.subr.mxu0 0.0
        %3075 = vmatpush1.msra.mxu0 0.0
        %3076 = vmatprep.subr.mxu0 0.0
        %3077 = vmatpush1.msra.mxu0 0.0
        %3078 = vmatprep.subr.mxu0 0.0
        %3079 = vmatpush1.msra.mxu0 0.0
        %3080 = vmatprep.subr.mxu0 0.0
        %3081 = vmatpush1.msra.mxu0 0.0
        %3082 = vmatprep.subr.mxu0 0.0
        %3083 = vmatpush1.msra.mxu0 0.0
        %3084 = vmatprep.subr.mxu0 0.0
        %3085 = vmatpush1.msra.mxu0 0.0
        %3086 = vmatprep.subr.mxu0 0.0
        %3087 = vmatpush1.msra.mxu0 0.0
        %3088 = vmatprep.subr.mxu0 0.0
        %3089 = vmatpush1.msra.mxu0 0.0
        %3090 = vmatprep.subr.mxu0 0.0
        %3091 = vmatpush1.msra.mxu0 0.0
        %3092 = vmatprep.subr.mxu0 0.0
        %3093 = vmatpush1.msra.mxu0 0.0
        %3094 = vmatprep.subr.mxu0 0.0
        %3095 = vmatpush1.msra.mxu0 0.0
        %3096 = vmatprep.subr.mxu0 0.0
        %3097 = vmatpush1.msra.mxu0 0.0
        %3098 = vmatprep.subr.mxu0 0.0
        %3099 = vmatpush1.msra.mxu0 0.0
        %3100 = vmatprep.subr.mxu0 0.0
        %3101 = vmatpush1.msra.mxu0 0.0
        %3102 = vmatprep.subr.mxu0 0.0
        %3103 = vmatpush1.msra.mxu0 0.0
        %3104 = vmatprep.subr.mxu0 0.0
        %3105 = vmatpush1.msra.mxu0 0.0
        %3106 = vmatprep.subr.mxu0 0.0
        %3107 = vmatpush1.msra.mxu0 0.0
        %3108 = vmatprep.subr.mxu0 0.0
        %3109 = vmatpush1.msra.mxu0 0.0
        %3110 = vmatprep.subr.mxu0 0.0
        %3111 = vmatpush1.msra.mxu0 0.0
        %3112 = vmatprep.subr.mxu0 0.0
        %3113 = vmatpush1.msra.mxu0 0.0
        %3114 = vmatprep.subr.mxu0 0.0
        %3115 = vmatpush1.msra.mxu0 0.0
        %3116 = vmatprep.mubr.f32.mxu0 0.0
        %v3117 = vand.u32 %v2880, 4294901760
        %v3118 = vsub.f32 %v2880, %v3117
        %3119 = vmatmul.mubr.f32.gmra.mrb[0].mxu0 %v3118
        %v3120 = vpop.f32.mrb[0].mxu0
        %v3121 = vadd.f32 %v3044, %v3120
        %v3122 = vpop.f32.mrb[0].mxu0
        %v3123 = vadd.f32 %v3046, %v3122
        %3124 = vdwg.mxu0
        %v3125 = vand.u32 %v2886, 4294901760
        %3126 = vmatprep.subr.mxu0 %v3125
        %v3127 = vand.u32 %v2883, 4294901760
        %3128 = vmatpush1.msra.mxu0 %v3127
        %3129 = vmatprep.subr.mxu0 0.0
        %3130 = vmatpush1.msra.mxu0 0.0
        %3131 = vmatprep.subr.mxu0 0.0
        %3132 = vmatpush1.msra.mxu0 0.0
        %3133 = vmatprep.subr.mxu0 0.0
        %3134 = vmatpush1.msra.mxu0 0.0
        %3135 = vmatprep.subr.mxu0 0.0
        %3136 = vmatpush1.msra.mxu0 0.0
        %3137 = vmatprep.subr.mxu0 0.0
        %3138 = vmatpush1.msra.mxu0 0.0
        %3139 = vmatprep.subr.mxu0 0.0
        %3140 = vmatpush1.msra.mxu0 0.0
        %3141 = vmatprep.subr.mxu0 0.0
        %3142 = vmatpush1.msra.mxu0 0.0
        %3143 = vmatprep.subr.mxu0 0.0
        %3144 = vmatpush1.msra.mxu0 0.0
        %3145 = vmatprep.subr.mxu0 0.0
        %3146 = vmatpush1.msra.mxu0 0.0
        %3147 = vmatprep.subr.mxu0 0.0
        %3148 = vmatpush1.msra.mxu0 0.0
        %3149 = vmatprep.subr.mxu0 0.0
        %3150 = vmatpush1.msra.mxu0 0.0
        %3151 = vmatprep.subr.mxu0 0.0
        %3152 = vmatpush1.msra.mxu0 0.0
        %3153 = vmatprep.subr.mxu0 0.0
        %3154 = vmatpush1.msra.mxu0 0.0
        %3155 = vmatprep.subr.mxu0 0.0
        %3156 = vmatpush1.msra.mxu0 0.0
        %3157 = vmatprep.subr.mxu0 0.0
        %3158 = vmatpush1.msra.mxu0 0.0
        %3159 = vmatprep.subr.mxu0 0.0
        %3160 = vmatpush1.msra.mxu0 0.0
        %3161 = vmatprep.subr.mxu0 0.0
        %3162 = vmatpush1.msra.mxu0 0.0
        %3163 = vmatprep.subr.mxu0 0.0
        %3164 = vmatpush1.msra.mxu0 0.0
        %3165 = vmatprep.subr.mxu0 0.0
        %3166 = vmatpush1.msra.mxu0 0.0
        %3167 = vmatprep.subr.mxu0 0.0
        %3168 = vmatpush1.msra.mxu0 0.0
        %3169 = vmatprep.subr.mxu0 0.0
        %3170 = vmatpush1.msra.mxu0 0.0
        %3171 = vmatprep.subr.mxu0 0.0
        %3172 = vmatpush1.msra.mxu0 0.0
        %3173 = vmatprep.subr.mxu0 0.0
        %3174 = vmatpush1.msra.mxu0 0.0
        %3175 = vmatprep.subr.mxu0 0.0
        %3176 = vmatpush1.msra.mxu0 0.0
        %3177 = vmatprep.subr.mxu0 0.0
        %3178 = vmatpush1.msra.mxu0 0.0
        %3179 = vmatprep.subr.mxu0 0.0
        %3180 = vmatpush1.msra.mxu0 0.0
        %3181 = vmatprep.subr.mxu0 0.0
        %3182 = vmatpush1.msra.mxu0 0.0
        %3183 = vmatprep.subr.mxu0 0.0
        %3184 = vmatpush1.msra.mxu0 0.0
        %3185 = vmatprep.subr.mxu0 0.0
        %3186 = vmatpush1.msra.mxu0 0.0
        %3187 = vmatprep.subr.mxu0 0.0
        %3188 = vmatpush1.msra.mxu0 0.0
        %3189 = vmatprep.subr.mxu0 0.0
        %3190 = vmatpush1.msra.mxu0 0.0
        %3191 = vmatprep.mubr.f32.mxu0 0.0
        %v3192 = vand.u32 %v2880, 4294901760
        %v3193 = vsub.f32 %v2880, %v3192
        %v3194 = vand.u32 %v3193, 4294901760
        %3195 = vmatmul.mubr.f32.gmra.mrb[0].mxu0 %v3194
        %v3196 = vpop.f32.mrb[0].mxu0
        %v3197 = vadd.f32 %v3121, %v3196
        %v3198 = vpop.f32.mrb[0].mxu0
        %v3199 = vadd.f32 %v3123, %v3198
        %3200 = vdwg.mxu0
        %v3201 = vand.u32 %v2886, 4294901760
        %v3202 = vsub.f32 %v2886, %v3201
        %v3203 = vand.u32 %v3202, 4294901760
        %3204 = vmatprep.subr.mxu0 %v3203
        %v3205 = vand.u32 %v2883, 4294901760
        %v3206 = vsub.f32 %v2883, %v3205
        %v3207 = vand.u32 %v3206, 4294901760
        %3208 = vmatpush1.msra.mxu0 %v3207
        %3209 = vmatprep.subr.mxu0 0.0
        %3210 = vmatpush1.msra.mxu0 0.0
        %3211 = vmatprep.subr.mxu0 0.0
        %3212 = vmatpush1.msra.mxu0 0.0
        %3213 = vmatprep.subr.mxu0 0.0
        %3214 = vmatpush1.msra.mxu0 0.0
        %3215 = vmatprep.subr.mxu0 0.0
        %3216 = vmatpush1.msra.mxu0 0.0
        %3217 = vmatprep.subr.mxu0 0.0
        %3218 = vmatpush1.msra.mxu0 0.0
        %3219 = vmatprep.subr.mxu0 0.0
        %3220 = vmatpush1.msra.mxu0 0.0
        %3221 = vmatprep.subr.mxu0 0.0
        %3222 = vmatpush1.msra.mxu0 0.0
        %3223 = vmatprep.subr.mxu0 0.0
        %3224 = vmatpush1.msra.mxu0 0.0
        %3225 = vmatprep.subr.mxu0 0.0
        %3226 = vmatpush1.msra.mxu0 0.0
        %3227 = vmatprep.subr.mxu0 0.0
        %3228 = vmatpush1.msra.mxu0 0.0
        %3229 = vmatprep.subr.mxu0 0.0
        %3230 = vmatpush1.msra.mxu0 0.0
        %3231 = vmatprep.subr.mxu0 0.0
        %3232 = vmatpush1.msra.mxu0 0.0
        %3233 = vmatprep.subr.mxu0 0.0
        %3234 = vmatpush1.msra.mxu0 0.0
        %3235 = vmatprep.subr.mxu0 0.0
        %3236 = vmatpush1.msra.mxu0 0.0
        %3237 = vmatprep.subr.mxu0 0.0
        %3238 = vmatpush1.msra.mxu0 0.0
        %3239 = vmatprep.subr.mxu0 0.0
        %3240 = vmatpush1.msra.mxu0 0.0
        %3241 = vmatprep.subr.mxu0 0.0
        %3242 = vmatpush1.msra.mxu0 0.0
        %3243 = vmatprep.subr.mxu0 0.0
        %3244 = vmatpush1.msra.mxu0 0.0
        %3245 = vmatprep.subr.mxu0 0.0
        %3246 = vmatpush1.msra.mxu0 0.0
        %3247 = vmatprep.subr.mxu0 0.0
        %3248 = vmatpush1.msra.mxu0 0.0
        %3249 = vmatprep.subr.mxu0 0.0
        %3250 = vmatpush1.msra.mxu0 0.0
        %3251 = vmatprep.subr.mxu0 0.0
        %3252 = vmatpush1.msra.mxu0 0.0
        %3253 = vmatprep.subr.mxu0 0.0
        %3254 = vmatpush1.msra.mxu0 0.0
        %3255 = vmatprep.subr.mxu0 0.0
        %3256 = vmatpush1.msra.mxu0 0.0
        %3257 = vmatprep.subr.mxu0 0.0
        %3258 = vmatpush1.msra.mxu0 0.0
        %3259 = vmatprep.subr.mxu0 0.0
        %3260 = vmatpush1.msra.mxu0 0.0
        %3261 = vmatprep.subr.mxu0 0.0
        %3262 = vmatpush1.msra.mxu0 0.0
        %3263 = vmatprep.subr.mxu0 0.0
        %3264 = vmatpush1.msra.mxu0 0.0
        %3265 = vmatprep.subr.mxu0 0.0
        %3266 = vmatpush1.msra.mxu0 0.0
        %3267 = vmatprep.subr.mxu0 0.0
        %3268 = vmatpush1.msra.mxu0 0.0
        %3269 = vmatprep.subr.mxu0 0.0
        %3270 = vmatpush1.msra.mxu0 0.0
        %3271 = vmatprep.mubr.f32.mxu0 0.0
        %v3272 = vand.u32 %v2880, 4294901760
        %3273 = vmatmul.mubr.f32.gmra.mrb[0].mxu0 %v3272
        %v3274 = vpop.f32.mrb[0].mxu0
        %v3275 = vadd.f32 %v3197, %v3274
        %v3276 = vpop.f32.mrb[0].mxu0
        %v3277 = vadd.f32 %v3199, %v3276
        %3278 = vdwg.mxu0
        %v3279 = vand.u32 %v2886, 4294901760
        %3280 = vmatprep.subr.mxu0 %v3279
        %v3281 = vand.u32 %v2883, 4294901760
        %3282 = vmatpush1.msra.mxu0 %v3281
        %3283 = vmatprep.subr.mxu0 0.0
        %3284 = vmatpush1.msra.mxu0 0.0
        %3285 = vmatprep.subr.mxu0 0.0
        %3286 = vmatpush1.msra.mxu0 0.0
        %3287 = vmatprep.subr.mxu0 0.0
        %3288 = vmatpush1.msra.mxu0 0.0
        %3289 = vmatprep.subr.mxu0 0.0
        %3290 = vmatpush1.msra.mxu0 0.0
        %3291 = vmatprep.subr.mxu0 0.0
        %3292 = vmatpush1.msra.mxu0 0.0
        %3293 = vmatprep.subr.mxu0 0.0
        %3294 = vmatpush1.msra.mxu0 0.0
        %3295 = vmatprep.subr.mxu0 0.0
        %3296 = vmatpush1.msra.mxu0 0.0
        %3297 = vmatprep.subr.mxu0 0.0
        %3298 = vmatpush1.msra.mxu0 0.0
        %3299 = vmatprep.subr.mxu0 0.0
        %3300 = vmatpush1.msra.mxu0 0.0
        %3301 = vmatprep.subr.mxu0 0.0
        %3302 = vmatpush1.msra.mxu0 0.0
        %3303 = vmatprep.subr.mxu0 0.0
        %3304 = vmatpush1.msra.mxu0 0.0
        %3305 = vmatprep.subr.mxu0 0.0
        %3306 = vmatpush1.msra.mxu0 0.0
        %3307 = vmatprep.subr.mxu0 0.0
        %3308 = vmatpush1.msra.mxu0 0.0
        %3309 = vmatprep.subr.mxu0 0.0
        %3310 = vmatpush1.msra.mxu0 0.0
        %3311 = vmatprep.subr.mxu0 0.0
        %3312 = vmatpush1.msra.mxu0 0.0
        %3313 = vmatprep.subr.mxu0 0.0
        %3314 = vmatpush1.msra.mxu0 0.0
        %3315 = vmatprep.subr.mxu0 0.0
        %3316 = vmatpush1.msra.mxu0 0.0
        %3317 = vmatprep.subr.mxu0 0.0
        %3318 = vmatpush1.msra.mxu0 0.0
        %3319 = vmatprep.subr.mxu0 0.0
        %3320 = vmatpush1.msra.mxu0 0.0
        %3321 = vmatprep.subr.mxu0 0.0
        %3322 = vmatpush1.msra.mxu0 0.0
        %3323 = vmatprep.subr.mxu0 0.0
        %3324 = vmatpush1.msra.mxu0 0.0
        %3325 = vmatprep.subr.mxu0 0.0
        %3326 = vmatpush1.msra.mxu0 0.0
        %3327 = vmatprep.subr.mxu0 0.0
        %3328 = vmatpush1.msra.mxu0 0.0
        %3329 = vmatprep.subr.mxu0 0.0
        %3330 = vmatpush1.msra.mxu0 0.0
        %3331 = vmatprep.subr.mxu0 0.0
        %3332 = vmatpush1.msra.mxu0 0.0
        %3333 = vmatprep.subr.mxu0 0.0
        %3334 = vmatpush1.msra.mxu0 0.0
        %3335 = vmatprep.subr.mxu0 0.0
        %3336 = vmatpush1.msra.mxu0 0.0
        %3337 = vmatprep.subr.mxu0 0.0
        %3338 = vmatpush1.msra.mxu0 0.0
        %3339 = vmatprep.subr.mxu0 0.0
        %3340 = vmatpush1.msra.mxu0 0.0
        %3341 = vmatprep.subr.mxu0 0.0
        %3342 = vmatpush1.msra.mxu0 0.0
        %3343 = vmatprep.subr.mxu0 0.0
        %3344 = vmatpush1.msra.mxu0 0.0
        %3345 = vmatprep.mubr.f32.mxu0 0.0
        %v3346 = vand.u32 %v2880, 4294901760
        %3347 = vmatmul.mubr.f32.gmra.mrb[0].mxu0 %v3346
        %v3348 = vpop.f32.mrb[0].mxu0
        %v3349 = vadd.f32 %v3275, %v3348
        %v3350 = vpop.f32.mrb[0].mxu0
        %v3351 = vadd.f32 %v3277, %v3350
        %3352 = vdwg.mxu0
        %v3353 = vadd.f32 %v2853, %v3349
        %v3354 = vadd.f32 %v2854, %v3351
        %3355 = vrot.lane.b32.xlu0 %v875, 126
        %v3356 = vpop.permute.xlu0 %3355
        %3357 = vrot.lane.b32.xlu0 %v877, 126
        %v3358 = vpop.permute.xlu0 %3357
        %vm3359 = vcmp.lt.s32.totalorder %v886, 126
        %v3360 = vsel %vm3359, %v3356, %v3358
        %v3361 = vsel %vm3359, %v3358, %v3356
        %s3362 = scalar_lea.vmem %s5, 10
        %v3363 = vld [vmem:[%s3362] sm:$0x3]
        %v3365 = vlaneseq
        %v3366 = vshrl.u32 %v3365, 7
        %v3367 = vsub.s32 0, %v3366
        %v3368 = vrot.slane %v3363, %v3367
        %v3369 = vlaneseq
        %v3370 = vshrl.u32 %v3369, 7
        %v3371 = vsub.s32 1, %v3370
        %v3372 = vrot.slane %v3363, %v3371
        %v3375 = vmul.f32 %v3360, %v3368
        %v3376 = vmul.f32 %v3361, %v3372
        %s3377 = scalar_lea.vmem %s3, 20
        %v3378 = vld [vmem:[%s3377] sm:$0xf]
        %v3380 = vsel %vm905, %v3378, 0
        %v3383 = vsel %vm909, %v3375, 0
        %v3386 = vsel %vm909, %v3376, 0
        %v3388 = vand.u32 %v3386, 4294901760
        %3389 = vmatprep.subr.mxu0 %v3388
        %v3390 = vand.u32 %v3383, 4294901760
        %3391 = vmatpush1.msra.mxu0 %v3390
        %3392 = vmatprep.subr.mxu0 0.0
        %3393 = vmatpush1.msra.mxu0 0.0
        %3394 = vmatprep.subr.mxu0 0.0
        %3395 = vmatpush1.msra.mxu0 0.0
        %3396 = vmatprep.subr.mxu0 0.0
        %3397 = vmatpush1.msra.mxu0 0.0
        %3398 = vmatprep.subr.mxu0 0.0
        %3399 = vmatpush1.msra.mxu0 0.0
        %3400 = vmatprep.subr.mxu0 0.0
        %3401 = vmatpush1.msra.mxu0 0.0
        %3402 = vmatprep.subr.mxu0 0.0
        %3403 = vmatpush1.msra.mxu0 0.0
        %3404 = vmatprep.subr.mxu0 0.0
        %3405 = vmatpush1.msra.mxu0 0.0
        %3406 = vmatprep.subr.mxu0 0.0
        %3407 = vmatpush1.msra.mxu0 0.0
        %3408 = vmatprep.subr.mxu0 0.0
        %3409 = vmatpush1.msra.mxu0 0.0
        %3410 = vmatprep.subr.mxu0 0.0
        %3411 = vmatpush1.msra.mxu0 0.0
        %3412 = vmatprep.subr.mxu0 0.0
        %3413 = vmatpush1.msra.mxu0 0.0
        %3414 = vmatprep.subr.mxu0 0.0
        %3415 = vmatpush1.msra.mxu0 0.0
        %3416 = vmatprep.subr.mxu0 0.0
        %3417 = vmatpush1.msra.mxu0 0.0
        %3418 = vmatprep.subr.mxu0 0.0
        %3419 = vmatpush1.msra.mxu0 0.0
        %3420 = vmatprep.subr.mxu0 0.0
        %3421 = vmatpush1.msra.mxu0 0.0
        %3422 = vmatprep.subr.mxu0 0.0
        %3423 = vmatpush1.msra.mxu0 0.0
        %3424 = vmatprep.subr.mxu0 0.0
        %3425 = vmatpush1.msra.mxu0 0.0
        %3426 = vmatprep.subr.mxu0 0.0
        %3427 = vmatpush1.msra.mxu0 0.0
        %3428 = vmatprep.subr.mxu0 0.0
        %3429 = vmatpush1.msra.mxu0 0.0
        %3430 = vmatprep.subr.mxu0 0.0
        %3431 = vmatpush1.msra.mxu0 0.0
        %3432 = vmatprep.subr.mxu0 0.0
        %3433 = vmatpush1.msra.mxu0 0.0
        %3434 = vmatprep.subr.mxu0 0.0
        %3435 = vmatpush1.msra.mxu0 0.0
        %3436 = vmatprep.subr.mxu0 0.0
        %3437 = vmatpush1.msra.mxu0 0.0
        %3438 = vmatprep.subr.mxu0 0.0
        %3439 = vmatpush1.msra.mxu0 0.0
        %3440 = vmatprep.subr.mxu0 0.0
        %3441 = vmatpush1.msra.mxu0 0.0
        %3442 = vmatprep.subr.mxu0 0.0
        %3443 = vmatpush1.msra.mxu0 0.0
        %3444 = vmatprep.subr.mxu0 0.0
        %3445 = vmatpush1.msra.mxu0 0.0
        %3446 = vmatprep.subr.mxu0 0.0
        %3447 = vmatpush1.msra.mxu0 0.0
        %3448 = vmatprep.subr.mxu0 0.0
        %3449 = vmatpush1.msra.mxu0 0.0
        %3450 = vmatprep.subr.mxu0 0.0
        %3451 = vmatpush1.msra.mxu0 0.0
        %3452 = vmatprep.subr.mxu0 0.0
        %3453 = vmatpush1.msra.mxu0 0.0
        %3454 = vmatprep.mubr.f32.mxu0 0.0
        %v3455 = vand.u32 %v3380, 4294901760
        %v3456 = vsub.f32 %v3380, %v3455
        %v3457 = vand.u32 %v3456, 4294901760
        %v3458 = vsub.f32 %v3456, %v3457
        %v3459 = vand.u32 %v3458, 4294901760
        %3460 = vmatmul.mubr.f32.gmra.mrb[0].mxu0 %v3459
        %v3461 = vpop.f32.mrb[0].mxu0
        %v3462 = vadd.f32 0.0, %v3461
        %v3463 = vpop.f32.mrb[0].mxu0
        %v3464 = vadd.f32 0.0, %v3463
        %3465 = vdwg.mxu0
        %v3466 = vand.u32 %v3386, 4294901760
        %v3467 = vsub.f32 %v3386, %v3466
        %v3468 = vand.u32 %v3467, 4294901760
        %v3469 = vsub.f32 %v3467, %v3468
        %v3470 = vand.u32 %v3469, 4294901760
        %3471 = vmatprep.subr.mxu0 %v3470
        %v3472 = vand.u32 %v3383, 4294901760
        %v3473 = vsub.f32 %v3383, %v3472
        %v3474 = vand.u32 %v3473, 4294901760
        %v3475 = vsub.f32 %v3473, %v3474
        %v3476 = vand.u32 %v3475, 4294901760
        %3477 = vmatpush1.msra.mxu0 %v3476
        %3478 = vmatprep.subr.mxu0 0.0
        %3479 = vmatpush1.msra.mxu0 0.0
        %3480 = vmatprep.subr.mxu0 0.0
        %3481 = vmatpush1.msra.mxu0 0.0
        %3482 = vmatprep.subr.mxu0 0.0
        %3483 = vmatpush1.msra.mxu0 0.0
        %3484 = vmatprep.subr.mxu0 0.0
        %3485 = vmatpush1.msra.mxu0 0.0
        %3486 = vmatprep.subr.mxu0 0.0
        %3487 = vmatpush1.msra.mxu0 0.0
        %3488 = vmatprep.subr.mxu0 0.0
        %3489 = vmatpush1.msra.mxu0 0.0
        %3490 = vmatprep.subr.mxu0 0.0
        %3491 = vmatpush1.msra.mxu0 0.0
        %3492 = vmatprep.subr.mxu0 0.0
        %3493 = vmatpush1.msra.mxu0 0.0
        %3494 = vmatprep.subr.mxu0 0.0
        %3495 = vmatpush1.msra.mxu0 0.0
        %3496 = vmatprep.subr.mxu0 0.0
        %3497 = vmatpush1.msra.mxu0 0.0
        %3498 = vmatprep.subr.mxu0 0.0
        %3499 = vmatpush1.msra.mxu0 0.0
        %3500 = vmatprep.subr.mxu0 0.0
        %3501 = vmatpush1.msra.mxu0 0.0
        %3502 = vmatprep.subr.mxu0 0.0
        %3503 = vmatpush1.msra.mxu0 0.0
        %3504 = vmatprep.subr.mxu0 0.0
        %3505 = vmatpush1.msra.mxu0 0.0
        %3506 = vmatprep.subr.mxu0 0.0
        %3507 = vmatpush1.msra.mxu0 0.0
        %3508 = vmatprep.subr.mxu0 0.0
        %3509 = vmatpush1.msra.mxu0 0.0
        %3510 = vmatprep.subr.mxu0 0.0
        %3511 = vmatpush1.msra.mxu0 0.0
        %3512 = vmatprep.subr.mxu0 0.0
        %3513 = vmatpush1.msra.mxu0 0.0
        %3514 = vmatprep.subr.mxu0 0.0
        %3515 = vmatpush1.msra.mxu0 0.0
        %3516 = vmatprep.subr.mxu0 0.0
        %3517 = vmatpush1.msra.mxu0 0.0
        %3518 = vmatprep.subr.mxu0 0.0
        %3519 = vmatpush1.msra.mxu0 0.0
        %3520 = vmatprep.subr.mxu0 0.0
        %3521 = vmatpush1.msra.mxu0 0.0
        %3522 = vmatprep.subr.mxu0 0.0
        %3523 = vmatpush1.msra.mxu0 0.0
        %3524 = vmatprep.subr.mxu0 0.0
        %3525 = vmatpush1.msra.mxu0 0.0
        %3526 = vmatprep.subr.mxu0 0.0
        %3527 = vmatpush1.msra.mxu0 0.0
        %3528 = vmatprep.subr.mxu0 0.0
        %3529 = vmatpush1.msra.mxu0 0.0
        %3530 = vmatprep.subr.mxu0 0.0
        %3531 = vmatpush1.msra.mxu0 0.0
        %3532 = vmatprep.subr.mxu0 0.0
        %3533 = vmatpush1.msra.mxu0 0.0
        %3534 = vmatprep.subr.mxu0 0.0
        %3535 = vmatpush1.msra.mxu0 0.0
        %3536 = vmatprep.subr.mxu0 0.0
        %3537 = vmatpush1.msra.mxu0 0.0
        %3538 = vmatprep.subr.mxu0 0.0
        %3539 = vmatpush1.msra.mxu0 0.0
        %3540 = vmatprep.mubr.f32.mxu0 0.0
        %v3541 = vand.u32 %v3380, 4294901760
        %3542 = vmatmul.mubr.f32.gmra.mrb[0].mxu0 %v3541
        %v3543 = vpop.f32.mrb[0].mxu0
        %v3544 = vadd.f32 %v3462, %v3543
        %v3545 = vpop.f32.mrb[0].mxu0
        %v3546 = vadd.f32 %v3464, %v3545
        %3547 = vdwg.mxu0
        %v3548 = vand.u32 %v3386, 4294901760
        %v3549 = vsub.f32 %v3386, %v3548
        %3550 = vmatprep.subr.mxu0 %v3549
        %v3551 = vand.u32 %v3383, 4294901760
        %v3552 = vsub.f32 %v3383, %v3551
        %3553 = vmatpush1.msra.mxu0 %v3552
        %3554 = vmatprep.subr.mxu0 0.0
        %3555 = vmatpush1.msra.mxu0 0.0
        %3556 = vmatprep.subr.mxu0 0.0
        %3557 = vmatpush1.msra.mxu0 0.0
        %3558 = vmatprep.subr.mxu0 0.0
        %3559 = vmatpush1.msra.mxu0 0.0
        %3560 = vmatprep.subr.mxu0 0.0
        %3561 = vmatpush1.msra.mxu0 0.0
        %3562 = vmatprep.subr.mxu0 0.0
        %3563 = vmatpush1.msra.mxu0 0.0
        %3564 = vmatprep.subr.mxu0 0.0
        %3565 = vmatpush1.msra.mxu0 0.0
        %3566 = vmatprep.subr.mxu0 0.0
        %3567 = vmatpush1.msra.mxu0 0.0
        %3568 = vmatprep.subr.mxu0 0.0
        %3569 = vmatpush1.msra.mxu0 0.0
        %3570 = vmatprep.subr.mxu0 0.0
        %3571 = vmatpush1.msra.mxu0 0.0
        %3572 = vmatprep.subr.mxu0 0.0
        %3573 = vmatpush1.msra.mxu0 0.0
        %3574 = vmatprep.subr.mxu0 0.0
        %3575 = vmatpush1.msra.mxu0 0.0
        %3576 = vmatprep.subr.mxu0 0.0
        %3577 = vmatpush1.msra.mxu0 0.0
        %3578 = vmatprep.subr.mxu0 0.0
        %3579 = vmatpush1.msra.mxu0 0.0
        %3580 = vmatprep.subr.mxu0 0.0
        %3581 = vmatpush1.msra.mxu0 0.0
        %3582 = vmatprep.subr.mxu0 0.0
        %3583 = vmatpush1.msra.mxu0 0.0
        %3584 = vmatprep.subr.mxu0 0.0
        %3585 = vmatpush1.msra.mxu0 0.0
        %3586 = vmatprep.subr.mxu0 0.0
        %3587 = vmatpush1.msra.mxu0 0.0
        %3588 = vmatprep.subr.mxu0 0.0
        %3589 = vmatpush1.msra.mxu0 0.0
        %3590 = vmatprep.subr.mxu0 0.0
        %3591 = vmatpush1.msra.mxu0 0.0
        %3592 = vmatprep.subr.mxu0 0.0
        %3593 = vmatpush1.msra.mxu0 0.0
        %3594 = vmatprep.subr.mxu0 0.0
        %3595 = vmatpush1.msra.mxu0 0.0
        %3596 = vmatprep.subr.mxu0 0.0
        %3597 = vmatpush1.msra.mxu0 0.0
        %3598 = vmatprep.subr.mxu0 0.0
        %3599 = vmatpush1.msra.mxu0 0.0
        %3600 = vmatprep.subr.mxu0 0.0
        %3601 = vmatpush1.msra.mxu0 0.0
        %3602 = vmatprep.subr.mxu0 0.0
        %3603 = vmatpush1.msra.mxu0 0.0
        %3604 = vmatprep.subr.mxu0 0.0
        %3605 = vmatpush1.msra.mxu0 0.0
        %3606 = vmatprep.subr.mxu0 0.0
        %3607 = vmatpush1.msra.mxu0 0.0
        %3608 = vmatprep.subr.mxu0 0.0
        %3609 = vmatpush1.msra.mxu0 0.0
        %3610 = vmatprep.subr.mxu0 0.0
        %3611 = vmatpush1.msra.mxu0 0.0
        %3612 = vmatprep.subr.mxu0 0.0
        %3613 = vmatpush1.msra.mxu0 0.0
        %3614 = vmatprep.subr.mxu0 0.0
        %3615 = vmatpush1.msra.mxu0 0.0
        %3616 = vmatprep.mubr.f32.mxu0 0.0
        %v3617 = vand.u32 %v3380, 4294901760
        %v3618 = vsub.f32 %v3380, %v3617
        %3619 = vmatmul.mubr.f32.gmra.mrb[0].mxu0 %v3618
        %v3620 = vpop.f32.mrb[0].mxu0
        %v3621 = vadd.f32 %v3544, %v3620
        %v3622 = vpop.f32.mrb[0].mxu0
        %v3623 = vadd.f32 %v3546, %v3622
        %3624 = vdwg.mxu0
        %v3625 = vand.u32 %v3386, 4294901760
        %3626 = vmatprep.subr.mxu0 %v3625
        %v3627 = vand.u32 %v3383, 4294901760
        %3628 = vmatpush1.msra.mxu0 %v3627
        %3629 = vmatprep.subr.mxu0 0.0
        %3630 = vmatpush1.msra.mxu0 0.0
        %3631 = vmatprep.subr.mxu0 0.0
        %3632 = vmatpush1.msra.mxu0 0.0
        %3633 = vmatprep.subr.mxu0 0.0
        %3634 = vmatpush1.msra.mxu0 0.0
        %3635 = vmatprep.subr.mxu0 0.0
        %3636 = vmatpush1.msra.mxu0 0.0
        %3637 = vmatprep.subr.mxu0 0.0
        %3638 = vmatpush1.msra.mxu0 0.0
        %3639 = vmatprep.subr.mxu0 0.0
        %3640 = vmatpush1.msra.mxu0 0.0
        %3641 = vmatprep.subr.mxu0 0.0
        %3642 = vmatpush1.msra.mxu0 0.0
        %3643 = vmatprep.subr.mxu0 0.0
        %3644 = vmatpush1.msra.mxu0 0.0
        %3645 = vmatprep.subr.mxu0 0.0
        %3646 = vmatpush1.msra.mxu0 0.0
        %3647 = vmatprep.subr.mxu0 0.0
        %3648 = vmatpush1.msra.mxu0 0.0
        %3649 = vmatprep.subr.mxu0 0.0
        %3650 = vmatpush1.msra.mxu0 0.0
        %3651 = vmatprep.subr.mxu0 0.0
        %3652 = vmatpush1.msra.mxu0 0.0
        %3653 = vmatprep.subr.mxu0 0.0
        %3654 = vmatpush1.msra.mxu0 0.0
        %3655 = vmatprep.subr.mxu0 0.0
        %3656 = vmatpush1.msra.mxu0 0.0
        %3657 = vmatprep.subr.mxu0 0.0
        %3658 = vmatpush1.msra.mxu0 0.0
        %3659 = vmatprep.subr.mxu0 0.0
        %3660 = vmatpush1.msra.mxu0 0.0
        %3661 = vmatprep.subr.mxu0 0.0
        %3662 = vmatpush1.msra.mxu0 0.0
        %3663 = vmatprep.subr.mxu0 0.0
        %3664 = vmatpush1.msra.mxu0 0.0
        %3665 = vmatprep.subr.mxu0 0.0
        %3666 = vmatpush1.msra.mxu0 0.0
        %3667 = vmatprep.subr.mxu0 0.0
        %3668 = vmatpush1.msra.mxu0 0.0
        %3669 = vmatprep.subr.mxu0 0.0
        %3670 = vmatpush1.msra.mxu0 0.0
        %3671 = vmatprep.subr.mxu0 0.0
        %3672 = vmatpush1.msra.mxu0 0.0
        %3673 = vmatprep.subr.mxu0 0.0
        %3674 = vmatpush1.msra.mxu0 0.0
        %3675 = vmatprep.subr.mxu0 0.0
        %3676 = vmatpush1.msra.mxu0 0.0
        %3677 = vmatprep.subr.mxu0 0.0
        %3678 = vmatpush1.msra.mxu0 0.0
        %3679 = vmatprep.subr.mxu0 0.0
        %3680 = vmatpush1.msra.mxu0 0.0
        %3681 = vmatprep.subr.mxu0 0.0
        %3682 = vmatpush1.msra.mxu0 0.0
        %3683 = vmatprep.subr.mxu0 0.0
        %3684 = vmatpush1.msra.mxu0 0.0
        %3685 = vmatprep.subr.mxu0 0.0
        %3686 = vmatpush1.msra.mxu0 0.0
        %3687 = vmatprep.subr.mxu0 0.0
        %3688 = vmatpush1.msra.mxu0 0.0
        %3689 = vmatprep.subr.mxu0 0.0
        %3690 = vmatpush1.msra.mxu0 0.0
        %3691 = vmatprep.mubr.f32.mxu0 0.0
        %v3692 = vand.u32 %v3380, 4294901760
        %v3693 = vsub.f32 %v3380, %v3692
        %v3694 = vand.u32 %v3693, 4294901760
        %3695 = vmatmul.mubr.f32.gmra.mrb[0].mxu0 %v3694
        %v3696 = vpop.f32.mrb[0].mxu0
        %v3697 = vadd.f32 %v3621, %v3696
        %v3698 = vpop.f32.mrb[0].mxu0
        %v3699 = vadd.f32 %v3623, %v3698
        %3700 = vdwg.mxu0
        %v3701 = vand.u32 %v3386, 4294901760
        %v3702 = vsub.f32 %v3386, %v3701
        %v3703 = vand.u32 %v3702, 4294901760
        %3704 = vmatprep.subr.mxu0 %v3703
        %v3705 = vand.u32 %v3383, 4294901760
        %v3706 = vsub.f32 %v3383, %v3705
        %v3707 = vand.u32 %v3706, 4294901760
        %3708 = vmatpush1.msra.mxu0 %v3707
        %3709 = vmatprep.subr.mxu0 0.0
        %3710 = vmatpush1.msra.mxu0 0.0
        %3711 = vmatprep.subr.mxu0 0.0
        %3712 = vmatpush1.msra.mxu0 0.0
        %3713 = vmatprep.subr.mxu0 0.0
        %3714 = vmatpush1.msra.mxu0 0.0
        %3715 = vmatprep.subr.mxu0 0.0
        %3716 = vmatpush1.msra.mxu0 0.0
        %3717 = vmatprep.subr.mxu0 0.0
        %3718 = vmatpush1.msra.mxu0 0.0
        %3719 = vmatprep.subr.mxu0 0.0
        %3720 = vmatpush1.msra.mxu0 0.0
        %3721 = vmatprep.subr.mxu0 0.0
        %3722 = vmatpush1.msra.mxu0 0.0
        %3723 = vmatprep.subr.mxu0 0.0
        %3724 = vmatpush1.msra.mxu0 0.0
        %3725 = vmatprep.subr.mxu0 0.0
        %3726 = vmatpush1.msra.mxu0 0.0
        %3727 = vmatprep.subr.mxu0 0.0
        %3728 = vmatpush1.msra.mxu0 0.0
        %3729 = vmatprep.subr.mxu0 0.0
        %3730 = vmatpush1.msra.mxu0 0.0
        %3731 = vmatprep.subr.mxu0 0.0
        %3732 = vmatpush1.msra.mxu0 0.0
        %3733 = vmatprep.subr.mxu0 0.0
        %3734 = vmatpush1.msra.mxu0 0.0
        %3735 = vmatprep.subr.mxu0 0.0
        %3736 = vmatpush1.msra.mxu0 0.0
        %3737 = vmatprep.subr.mxu0 0.0
        %3738 = vmatpush1.msra.mxu0 0.0
        %3739 = vmatprep.subr.mxu0 0.0
        %3740 = vmatpush1.msra.mxu0 0.0
        %3741 = vmatprep.subr.mxu0 0.0
        %3742 = vmatpush1.msra.mxu0 0.0
        %3743 = vmatprep.subr.mxu0 0.0
        %3744 = vmatpush1.msra.mxu0 0.0
        %3745 = vmatprep.subr.mxu0 0.0
        %3746 = vmatpush1.msra.mxu0 0.0
        %3747 = vmatprep.subr.mxu0 0.0
        %3748 = vmatpush1.msra.mxu0 0.0
        %3749 = vmatprep.subr.mxu0 0.0
        %3750 = vmatpush1.msra.mxu0 0.0
        %3751 = vmatprep.subr.mxu0 0.0
        %3752 = vmatpush1.msra.mxu0 0.0
        %3753 = vmatprep.subr.mxu0 0.0
        %3754 = vmatpush1.msra.mxu0 0.0
        %3755 = vmatprep.subr.mxu0 0.0
        %3756 = vmatpush1.msra.mxu0 0.0
        %3757 = vmatprep.subr.mxu0 0.0
        %3758 = vmatpush1.msra.mxu0 0.0
        %3759 = vmatprep.subr.mxu0 0.0
        %3760 = vmatpush1.msra.mxu0 0.0
        %3761 = vmatprep.subr.mxu0 0.0
        %3762 = vmatpush1.msra.mxu0 0.0
        %3763 = vmatprep.subr.mxu0 0.0
        %3764 = vmatpush1.msra.mxu0 0.0
        %3765 = vmatprep.subr.mxu0 0.0
        %3766 = vmatpush1.msra.mxu0 0.0
        %3767 = vmatprep.subr.mxu0 0.0
        %3768 = vmatpush1.msra.mxu0 0.0
        %3769 = vmatprep.subr.mxu0 0.0
        %3770 = vmatpush1.msra.mxu0 0.0
        %3771 = vmatprep.mubr.f32.mxu0 0.0
        %v3772 = vand.u32 %v3380, 4294901760
        %3773 = vmatmul.mubr.f32.gmra.mrb[0].mxu0 %v3772
        %v3774 = vpop.f32.mrb[0].mxu0
        %v3775 = vadd.f32 %v3697, %v3774
        %v3776 = vpop.f32.mrb[0].mxu0
        %v3777 = vadd.f32 %v3699, %v3776
        %3778 = vdwg.mxu0
        %v3779 = vand.u32 %v3386, 4294901760
        %3780 = vmatprep.subr.mxu0 %v3779
        %v3781 = vand.u32 %v3383, 4294901760
        %3782 = vmatpush1.msra.mxu0 %v3781
        %3783 = vmatprep.subr.mxu0 0.0
        %3784 = vmatpush1.msra.mxu0 0.0
        %3785 = vmatprep.subr.mxu0 0.0
        %3786 = vmatpush1.msra.mxu0 0.0
        %3787 = vmatprep.subr.mxu0 0.0
        %3788 = vmatpush1.msra.mxu0 0.0
        %3789 = vmatprep.subr.mxu0 0.0
        %3790 = vmatpush1.msra.mxu0 0.0
        %3791 = vmatprep.subr.mxu0 0.0
        %3792 = vmatpush1.msra.mxu0 0.0
        %3793 = vmatprep.subr.mxu0 0.0
        %3794 = vmatpush1.msra.mxu0 0.0
        %3795 = vmatprep.subr.mxu0 0.0
        %3796 = vmatpush1.msra.mxu0 0.0
        %3797 = vmatprep.subr.mxu0 0.0
        %3798 = vmatpush1.msra.mxu0 0.0
        %3799 = vmatprep.subr.mxu0 0.0
        %3800 = vmatpush1.msra.mxu0 0.0
        %3801 = vmatprep.subr.mxu0 0.0
        %3802 = vmatpush1.msra.mxu0 0.0
        %3803 = vmatprep.subr.mxu0 0.0
        %3804 = vmatpush1.msra.mxu0 0.0
        %3805 = vmatprep.subr.mxu0 0.0
        %3806 = vmatpush1.msra.mxu0 0.0
        %3807 = vmatprep.subr.mxu0 0.0
        %3808 = vmatpush1.msra.mxu0 0.0
        %3809 = vmatprep.subr.mxu0 0.0
        %3810 = vmatpush1.msra.mxu0 0.0
        %3811 = vmatprep.subr.mxu0 0.0
        %3812 = vmatpush1.msra.mxu0 0.0
        %3813 = vmatprep.subr.mxu0 0.0
        %3814 = vmatpush1.msra.mxu0 0.0
        %3815 = vmatprep.subr.mxu0 0.0
        %3816 = vmatpush1.msra.mxu0 0.0
        %3817 = vmatprep.subr.mxu0 0.0
        %3818 = vmatpush1.msra.mxu0 0.0
        %3819 = vmatprep.subr.mxu0 0.0
        %3820 = vmatpush1.msra.mxu0 0.0
        %3821 = vmatprep.subr.mxu0 0.0
        %3822 = vmatpush1.msra.mxu0 0.0
        %3823 = vmatprep.subr.mxu0 0.0
        %3824 = vmatpush1.msra.mxu0 0.0
        %3825 = vmatprep.subr.mxu0 0.0
        %3826 = vmatpush1.msra.mxu0 0.0
        %3827 = vmatprep.subr.mxu0 0.0
        %3828 = vmatpush1.msra.mxu0 0.0
        %3829 = vmatprep.subr.mxu0 0.0
        %3830 = vmatpush1.msra.mxu0 0.0
        %3831 = vmatprep.subr.mxu0 0.0
        %3832 = vmatpush1.msra.mxu0 0.0
        %3833 = vmatprep.subr.mxu0 0.0
        %3834 = vmatpush1.msra.mxu0 0.0
        %3835 = vmatprep.subr.mxu0 0.0
        %3836 = vmatpush1.msra.mxu0 0.0
        %3837 = vmatprep.subr.mxu0 0.0
        %3838 = vmatpush1.msra.mxu0 0.0
        %3839 = vmatprep.subr.mxu0 0.0
        %3840 = vmatpush1.msra.mxu0 0.0
        %3841 = vmatprep.subr.mxu0 0.0
        %3842 = vmatpush1.msra.mxu0 0.0
        %3843 = vmatprep.subr.mxu0 0.0
        %3844 = vmatpush1.msra.mxu0 0.0
        %3845 = vmatprep.mubr.f32.mxu0 0.0
        %v3846 = vand.u32 %v3380, 4294901760
        %3847 = vmatmul.mubr.f32.gmra.mrb[0].mxu0 %v3846
        %v3848 = vpop.f32.mrb[0].mxu0
        %v3849 = vadd.f32 %v3775, %v3848
        %v3850 = vpop.f32.mrb[0].mxu0
        %v3851 = vadd.f32 %v3777, %v3850
        %3852 = vdwg.mxu0
        %v3853 = vadd.f32 %v3353, %v3849
        %v3854 = vadd.f32 %v3354, %v3851
        %3855 = vrot.lane.b32.xlu0 %v875, 98
        %v3856 = vpop.permute.xlu0 %3855
        %3857 = vrot.lane.b32.xlu0 %v877, 98
        %v3858 = vpop.permute.xlu0 %3857
        %vm3859 = vcmp.lt.s32.totalorder %v886, 98
        %v3860 = vsel %vm3859, %v3856, %v3858
        %v3861 = vsel %vm3859, %v3858, %v3856
        %s3862 = scalar_lea.vmem %s5, 12
        %v3863 = vld [vmem:[%s3862] sm:$0x3]
        %v3865 = vlaneseq
        %v3866 = vshrl.u32 %v3865, 7
        %v3867 = vsub.s32 0, %v3866
        %v3868 = vrot.slane %v3863, %v3867
        %v3869 = vlaneseq
        %v3870 = vshrl.u32 %v3869, 7
        %v3871 = vsub.s32 1, %v3870
        %v3872 = vrot.slane %v3863, %v3871
        %v3875 = vmul.f32 %v3860, %v3868
        %v3876 = vmul.f32 %v3861, %v3872
        %s3877 = scalar_lea.vmem %s3, 24
        %v3878 = vld [vmem:[%s3877] sm:$0xf]
        %v3880 = vsel %vm905, %v3878, 0
        %v3883 = vsel %vm909, %v3875, 0
        %v3886 = vsel %vm909, %v3876, 0
        %v3888 = vand.u32 %v3886, 4294901760
        %3889 = vmatprep.subr.mxu0 %v3888
        %v3890 = vand.u32 %v3883, 4294901760
        %3891 = vmatpush1.msra.mxu0 %v3890
        %3892 = vmatprep.subr.mxu0 0.0
        %3893 = vmatpush1.msra.mxu0 0.0
        %3894 = vmatprep.subr.mxu0 0.0
        %3895 = vmatpush1.msra.mxu0 0.0
        %3896 = vmatprep.subr.mxu0 0.0
        %3897 = vmatpush1.msra.mxu0 0.0
        %3898 = vmatprep.subr.mxu0 0.0
        %3899 = vmatpush1.msra.mxu0 0.0
        %3900 = vmatprep.subr.mxu0 0.0
        %3901 = vmatpush1.msra.mxu0 0.0
        %3902 = vmatprep.subr.mxu0 0.0
        %3903 = vmatpush1.msra.mxu0 0.0
        %3904 = vmatprep.subr.mxu0 0.0
        %3905 = vmatpush1.msra.mxu0 0.0
        %3906 = vmatprep.subr.mxu0 0.0
        %3907 = vmatpush1.msra.mxu0 0.0
        %3908 = vmatprep.subr.mxu0 0.0
        %3909 = vmatpush1.msra.mxu0 0.0
        %3910 = vmatprep.subr.mxu0 0.0
        %3911 = vmatpush1.msra.mxu0 0.0
        %3912 = vmatprep.subr.mxu0 0.0
        %3913 = vmatpush1.msra.mxu0 0.0
        %3914 = vmatprep.subr.mxu0 0.0
        %3915 = vmatpush1.msra.mxu0 0.0
        %3916 = vmatprep.subr.mxu0 0.0
        %3917 = vmatpush1.msra.mxu0 0.0
        %3918 = vmatprep.subr.mxu0 0.0
        %3919 = vmatpush1.msra.mxu0 0.0
        %3920 = vmatprep.subr.mxu0 0.0
        %3921 = vmatpush1.msra.mxu0 0.0
        %3922 = vmatprep.subr.mxu0 0.0
        %3923 = vmatpush1.msra.mxu0 0.0
        %3924 = vmatprep.subr.mxu0 0.0
        %3925 = vmatpush1.msra.mxu0 0.0
        %3926 = vmatprep.subr.mxu0 0.0
        %3927 = vmatpush1.msra.mxu0 0.0
        %3928 = vmatprep.subr.mxu0 0.0
        %3929 = vmatpush1.msra.mxu0 0.0
        %3930 = vmatprep.subr.mxu0 0.0
        %3931 = vmatpush1.msra.mxu0 0.0
        %3932 = vmatprep.subr.mxu0 0.0
        %3933 = vmatpush1.msra.mxu0 0.0
        %3934 = vmatprep.subr.mxu0 0.0
        %3935 = vmatpush1.msra.mxu0 0.0
        %3936 = vmatprep.subr.mxu0 0.0
        %3937 = vmatpush1.msra.mxu0 0.0
        %3938 = vmatprep.subr.mxu0 0.0
        %3939 = vmatpush1.msra.mxu0 0.0
        %3940 = vmatprep.subr.mxu0 0.0
        %3941 = vmatpush1.msra.mxu0 0.0
        %3942 = vmatprep.subr.mxu0 0.0
        %3943 = vmatpush1.msra.mxu0 0.0
        %3944 = vmatprep.subr.mxu0 0.0
        %3945 = vmatpush1.msra.mxu0 0.0
        %3946 = vmatprep.subr.mxu0 0.0
        %3947 = vmatpush1.msra.mxu0 0.0
        %3948 = vmatprep.subr.mxu0 0.0
        %3949 = vmatpush1.msra.mxu0 0.0
        %3950 = vmatprep.subr.mxu0 0.0
        %3951 = vmatpush1.msra.mxu0 0.0
        %3952 = vmatprep.subr.mxu0 0.0
        %3953 = vmatpush1.msra.mxu0 0.0
        %3954 = vmatprep.mubr.f32.mxu0 0.0
        %v3955 = vand.u32 %v3880, 4294901760
        %v3956 = vsub.f32 %v3880, %v3955
        %v3957 = vand.u32 %v3956, 4294901760
        %v3958 = vsub.f32 %v3956, %v3957
        %v3959 = vand.u32 %v3958, 4294901760
        %3960 = vmatmul.mubr.f32.gmra.mrb[0].mxu0 %v3959
        %v3961 = vpop.f32.mrb[0].mxu0
        %v3962 = vadd.f32 0.0, %v3961
        %v3963 = vpop.f32.mrb[0].mxu0
        %v3964 = vadd.f32 0.0, %v3963
        %3965 = vdwg.mxu0
        %v3966 = vand.u32 %v3886, 4294901760
        %v3967 = vsub.f32 %v3886, %v3966
        %v3968 = vand.u32 %v3967, 4294901760
        %v3969 = vsub.f32 %v3967, %v3968
        %v3970 = vand.u32 %v3969, 4294901760
        %3971 = vmatprep.subr.mxu0 %v3970
        %v3972 = vand.u32 %v3883, 4294901760
        %v3973 = vsub.f32 %v3883, %v3972
        %v3974 = vand.u32 %v3973, 4294901760
        %v3975 = vsub.f32 %v3973, %v3974
        %v3976 = vand.u32 %v3975, 4294901760
        %3977 = vmatpush1.msra.mxu0 %v3976
        %3978 = vmatprep.subr.mxu0 0.0
        %3979 = vmatpush1.msra.mxu0 0.0
        %3980 = vmatprep.subr.mxu0 0.0
        %3981 = vmatpush1.msra.mxu0 0.0
        %3982 = vmatprep.subr.mxu0 0.0
        %3983 = vmatpush1.msra.mxu0 0.0
        %3984 = vmatprep.subr.mxu0 0.0
        %3985 = vmatpush1.msra.mxu0 0.0
        %3986 = vmatprep.subr.mxu0 0.0
        %3987 = vmatpush1.msra.mxu0 0.0
        %3988 = vmatprep.subr.mxu0 0.0
        %3989 = vmatpush1.msra.mxu0 0.0
        %3990 = vmatprep.subr.mxu0 0.0
        %3991 = vmatpush1.msra.mxu0 0.0
        %3992 = vmatprep.subr.mxu0 0.0
        %3993 = vmatpush1.msra.mxu0 0.0
        %3994 = vmatprep.subr.mxu0 0.0
        %3995 = vmatpush1.msra.mxu0 0.0
        %3996 = vmatprep.subr.mxu0 0.0
        %3997 = vmatpush1.msra.mxu0 0.0
        %3998 = vmatprep.subr.mxu0 0.0
        %3999 = vmatpush1.msra.mxu0 0.0
        %4000 = vmatprep.subr.mxu0 0.0
        %4001 = vmatpush1.msra.mxu0 0.0
        %4002 = vmatprep.subr.mxu0 0.0
        %4003 = vmatpush1.msra.mxu0 0.0
        %4004 = vmatprep.subr.mxu0 0.0
        %4005 = vmatpush1.msra.mxu0 0.0
        %4006 = vmatprep.subr.mxu0 0.0
        %4007 = vmatpush1.msra.mxu0 0.0
        %4008 = vmatprep.subr.mxu0 0.0
        %4009 = vmatpush1.msra.mxu0 0.0
        %4010 = vmatprep.subr.mxu0 0.0
        %4011 = vmatpush1.msra.mxu0 0.0
        %4012 = vmatprep.subr.mxu0 0.0
        %4013 = vmatpush1.msra.mxu0 0.0
        %4014 = vmatprep.subr.mxu0 0.0
        %4015 = vmatpush1.msra.mxu0 0.0
        %4016 = vmatprep.subr.mxu0 0.0
        %4017 = vmatpush1.msra.mxu0 0.0
        %4018 = vmatprep.subr.mxu0 0.0
        %4019 = vmatpush1.msra.mxu0 0.0
        %4020 = vmatprep.subr.mxu0 0.0
        %4021 = vmatpush1.msra.mxu0 0.0
        %4022 = vmatprep.subr.mxu0 0.0
        %4023 = vmatpush1.msra.mxu0 0.0
        %4024 = vmatprep.subr.mxu0 0.0
        %4025 = vmatpush1.msra.mxu0 0.0
        %4026 = vmatprep.subr.mxu0 0.0
        %4027 = vmatpush1.msra.mxu0 0.0
        %4028 = vmatprep.subr.mxu0 0.0
        %4029 = vmatpush1.msra.mxu0 0.0
        %4030 = vmatprep.subr.mxu0 0.0
        %4031 = vmatpush1.msra.mxu0 0.0
        %4032 = vmatprep.subr.mxu0 0.0
        %4033 = vmatpush1.msra.mxu0 0.0
        %4034 = vmatprep.subr.mxu0 0.0
        %4035 = vmatpush1.msra.mxu0 0.0
        %4036 = vmatprep.subr.mxu0 0.0
        %4037 = vmatpush1.msra.mxu0 0.0
        %4038 = vmatprep.subr.mxu0 0.0
        %4039 = vmatpush1.msra.mxu0 0.0
        %4040 = vmatprep.mubr.f32.mxu0 0.0
        %v4041 = vand.u32 %v3880, 4294901760
        %4042 = vmatmul.mubr.f32.gmra.mrb[0].mxu0 %v4041
        %v4043 = vpop.f32.mrb[0].mxu0
        %v4044 = vadd.f32 %v3962, %v4043
        %v4045 = vpop.f32.mrb[0].mxu0
        %v4046 = vadd.f32 %v3964, %v4045
        %4047 = vdwg.mxu0
        %v4048 = vand.u32 %v3886, 4294901760
        %v4049 = vsub.f32 %v3886, %v4048
        %4050 = vmatprep.subr.mxu0 %v4049
        %v4051 = vand.u32 %v3883, 4294901760
        %v4052 = vsub.f32 %v3883, %v4051
        %4053 = vmatpush1.msra.mxu0 %v4052
        %4054 = vmatprep.subr.mxu0 0.0
        %4055 = vmatpush1.msra.mxu0 0.0
        %4056 = vmatprep.subr.mxu0 0.0
        %4057 = vmatpush1.msra.mxu0 0.0
        %4058 = vmatprep.subr.mxu0 0.0
        %4059 = vmatpush1.msra.mxu0 0.0
        %4060 = vmatprep.subr.mxu0 0.0
        %4061 = vmatpush1.msra.mxu0 0.0
        %4062 = vmatprep.subr.mxu0 0.0
        %4063 = vmatpush1.msra.mxu0 0.0
        %4064 = vmatprep.subr.mxu0 0.0
        %4065 = vmatpush1.msra.mxu0 0.0
        %4066 = vmatprep.subr.mxu0 0.0
        %4067 = vmatpush1.msra.mxu0 0.0
        %4068 = vmatprep.subr.mxu0 0.0
        %4069 = vmatpush1.msra.mxu0 0.0
        %4070 = vmatprep.subr.mxu0 0.0
        %4071 = vmatpush1.msra.mxu0 0.0
        %4072 = vmatprep.subr.mxu0 0.0
        %4073 = vmatpush1.msra.mxu0 0.0
        %4074 = vmatprep.subr.mxu0 0.0
        %4075 = vmatpush1.msra.mxu0 0.0
        %4076 = vmatprep.subr.mxu0 0.0
        %4077 = vmatpush1.msra.mxu0 0.0
        %4078 = vmatprep.subr.mxu0 0.0
        %4079 = vmatpush1.msra.mxu0 0.0
        %4080 = vmatprep.subr.mxu0 0.0
        %4081 = vmatpush1.msra.mxu0 0.0
        %4082 = vmatprep.subr.mxu0 0.0
        %4083 = vmatpush1.msra.mxu0 0.0
        %4084 = vmatprep.subr.mxu0 0.0
        %4085 = vmatpush1.msra.mxu0 0.0
        %4086 = vmatprep.subr.mxu0 0.0
        %4087 = vmatpush1.msra.mxu0 0.0
        %4088 = vmatprep.subr.mxu0 0.0
        %4089 = vmatpush1.msra.mxu0 0.0
        %4090 = vmatprep.subr.mxu0 0.0
        %4091 = vmatpush1.msra.mxu0 0.0
        %4092 = vmatprep.subr.mxu0 0.0
        %4093 = vmatpush1.msra.mxu0 0.0
        %4094 = vmatprep.subr.mxu0 0.0
        %4095 = vmatpush1.msra.mxu0 0.0
        %4096 = vmatprep.subr.mxu0 0.0
        %4097 = vmatpush1.msra.mxu0 0.0
        %4098 = vmatprep.subr.mxu0 0.0
        %4099 = vmatpush1.msra.mxu0 0.0
        %4100 = vmatprep.subr.mxu0 0.0
        %4101 = vmatpush1.msra.mxu0 0.0
        %4102 = vmatprep.subr.mxu0 0.0
        %4103 = vmatpush1.msra.mxu0 0.0
        %4104 = vmatprep.subr.mxu0 0.0
        %4105 = vmatpush1.msra.mxu0 0.0
        %4106 = vmatprep.subr.mxu0 0.0
        %4107 = vmatpush1.msra.mxu0 0.0
        %4108 = vmatprep.subr.mxu0 0.0
        %4109 = vmatpush1.msra.mxu0 0.0
        %4110 = vmatprep.subr.mxu0 0.0
        %4111 = vmatpush1.msra.mxu0 0.0
        %4112 = vmatprep.subr.mxu0 0.0
        %4113 = vmatpush1.msra.mxu0 0.0
        %4114 = vmatprep.subr.mxu0 0.0
        %4115 = vmatpush1.msra.mxu0 0.0
        %4116 = vmatprep.mubr.f32.mxu0 0.0
        %v4117 = vand.u32 %v3880, 4294901760
        %v4118 = vsub.f32 %v3880, %v4117
        %4119 = vmatmul.mubr.f32.gmra.mrb[0].mxu0 %v4118
        %v4120 = vpop.f32.mrb[0].mxu0
        %v4121 = vadd.f32 %v4044, %v4120
        %v4122 = vpop.f32.mrb[0].mxu0
        %v4123 = vadd.f32 %v4046, %v4122
        %4124 = vdwg.mxu0
        %v4125 = vand.u32 %v3886, 4294901760
        %4126 = vmatprep.subr.mxu0 %v4125
        %v4127 = vand.u32 %v3883, 4294901760
        %4128 = vmatpush1.msra.mxu0 %v4127
        %4129 = vmatprep.subr.mxu0 0.0
        %4130 = vmatpush1.msra.mxu0 0.0
        %4131 = vmatprep.subr.mxu0 0.0
        %4132 = vmatpush1.msra.mxu0 0.0
        %4133 = vmatprep.subr.mxu0 0.0
        %4134 = vmatpush1.msra.mxu0 0.0
        %4135 = vmatprep.subr.mxu0 0.0
        %4136 = vmatpush1.msra.mxu0 0.0
        %4137 = vmatprep.subr.mxu0 0.0
        %4138 = vmatpush1.msra.mxu0 0.0
        %4139 = vmatprep.subr.mxu0 0.0
        %4140 = vmatpush1.msra.mxu0 0.0
        %4141 = vmatprep.subr.mxu0 0.0
        %4142 = vmatpush1.msra.mxu0 0.0
        %4143 = vmatprep.subr.mxu0 0.0
        %4144 = vmatpush1.msra.mxu0 0.0
        %4145 = vmatprep.subr.mxu0 0.0
        %4146 = vmatpush1.msra.mxu0 0.0
        %4147 = vmatprep.subr.mxu0 0.0
        %4148 = vmatpush1.msra.mxu0 0.0
        %4149 = vmatprep.subr.mxu0 0.0
        %4150 = vmatpush1.msra.mxu0 0.0
        %4151 = vmatprep.subr.mxu0 0.0
        %4152 = vmatpush1.msra.mxu0 0.0
        %4153 = vmatprep.subr.mxu0 0.0
        %4154 = vmatpush1.msra.mxu0 0.0
        %4155 = vmatprep.subr.mxu0 0.0
        %4156 = vmatpush1.msra.mxu0 0.0
        %4157 = vmatprep.subr.mxu0 0.0
        %4158 = vmatpush1.msra.mxu0 0.0
        %4159 = vmatprep.subr.mxu0 0.0
        %4160 = vmatpush1.msra.mxu0 0.0
        %4161 = vmatprep.subr.mxu0 0.0
        %4162 = vmatpush1.msra.mxu0 0.0
        %4163 = vmatprep.subr.mxu0 0.0
        %4164 = vmatpush1.msra.mxu0 0.0
        %4165 = vmatprep.subr.mxu0 0.0
        %4166 = vmatpush1.msra.mxu0 0.0
        %4167 = vmatprep.subr.mxu0 0.0
        %4168 = vmatpush1.msra.mxu0 0.0
        %4169 = vmatprep.subr.mxu0 0.0
        %4170 = vmatpush1.msra.mxu0 0.0
        %4171 = vmatprep.subr.mxu0 0.0
        %4172 = vmatpush1.msra.mxu0 0.0
        %4173 = vmatprep.subr.mxu0 0.0
        %4174 = vmatpush1.msra.mxu0 0.0
        %4175 = vmatprep.subr.mxu0 0.0
        %4176 = vmatpush1.msra.mxu0 0.0
        %4177 = vmatprep.subr.mxu0 0.0
        %4178 = vmatpush1.msra.mxu0 0.0
        %4179 = vmatprep.subr.mxu0 0.0
        %4180 = vmatpush1.msra.mxu0 0.0
        %4181 = vmatprep.subr.mxu0 0.0
        %4182 = vmatpush1.msra.mxu0 0.0
        %4183 = vmatprep.subr.mxu0 0.0
        %4184 = vmatpush1.msra.mxu0 0.0
        %4185 = vmatprep.subr.mxu0 0.0
        %4186 = vmatpush1.msra.mxu0 0.0
        %4187 = vmatprep.subr.mxu0 0.0
        %4188 = vmatpush1.msra.mxu0 0.0
        %4189 = vmatprep.subr.mxu0 0.0
        %4190 = vmatpush1.msra.mxu0 0.0
        %4191 = vmatprep.mubr.f32.mxu0 0.0
        %v4192 = vand.u32 %v3880, 4294901760
        %v4193 = vsub.f32 %v3880, %v4192
        %v4194 = vand.u32 %v4193, 4294901760
        %4195 = vmatmul.mubr.f32.gmra.mrb[0].mxu0 %v4194
        %v4196 = vpop.f32.mrb[0].mxu0
        %v4197 = vadd.f32 %v4121, %v4196
        %v4198 = vpop.f32.mrb[0].mxu0
        %v4199 = vadd.f32 %v4123, %v4198
        %4200 = vdwg.mxu0
        %v4201 = vand.u32 %v3886, 4294901760
        %v4202 = vsub.f32 %v3886, %v4201
        %v4203 = vand.u32 %v4202, 4294901760
        %4204 = vmatprep.subr.mxu0 %v4203
        %v4205 = vand.u32 %v3883, 4294901760
        %v4206 = vsub.f32 %v3883, %v4205
        %v4207 = vand.u32 %v4206, 4294901760
        %4208 = vmatpush1.msra.mxu0 %v4207
        %4209 = vmatprep.subr.mxu0 0.0
        %4210 = vmatpush1.msra.mxu0 0.0
        %4211 = vmatprep.subr.mxu0 0.0
        %4212 = vmatpush1.msra.mxu0 0.0
        %4213 = vmatprep.subr.mxu0 0.0
        %4214 = vmatpush1.msra.mxu0 0.0
        %4215 = vmatprep.subr.mxu0 0.0
        %4216 = vmatpush1.msra.mxu0 0.0
        %4217 = vmatprep.subr.mxu0 0.0
        %4218 = vmatpush1.msra.mxu0 0.0
        %4219 = vmatprep.subr.mxu0 0.0
        %4220 = vmatpush1.msra.mxu0 0.0
        %4221 = vmatprep.subr.mxu0 0.0
        %4222 = vmatpush1.msra.mxu0 0.0
        %4223 = vmatprep.subr.mxu0 0.0
        %4224 = vmatpush1.msra.mxu0 0.0
        %4225 = vmatprep.subr.mxu0 0.0
        %4226 = vmatpush1.msra.mxu0 0.0
        %4227 = vmatprep.subr.mxu0 0.0
        %4228 = vmatpush1.msra.mxu0 0.0
        %4229 = vmatprep.subr.mxu0 0.0
        %4230 = vmatpush1.msra.mxu0 0.0
        %4231 = vmatprep.subr.mxu0 0.0
        %4232 = vmatpush1.msra.mxu0 0.0
        %4233 = vmatprep.subr.mxu0 0.0
        %4234 = vmatpush1.msra.mxu0 0.0
        %4235 = vmatprep.subr.mxu0 0.0
        %4236 = vmatpush1.msra.mxu0 0.0
        %4237 = vmatprep.subr.mxu0 0.0
        %4238 = vmatpush1.msra.mxu0 0.0
        %4239 = vmatprep.subr.mxu0 0.0
        %4240 = vmatpush1.msra.mxu0 0.0
        %4241 = vmatprep.subr.mxu0 0.0
        %4242 = vmatpush1.msra.mxu0 0.0
        %4243 = vmatprep.subr.mxu0 0.0
        %4244 = vmatpush1.msra.mxu0 0.0
        %4245 = vmatprep.subr.mxu0 0.0
        %4246 = vmatpush1.msra.mxu0 0.0
        %4247 = vmatprep.subr.mxu0 0.0
        %4248 = vmatpush1.msra.mxu0 0.0
        %4249 = vmatprep.subr.mxu0 0.0
        %4250 = vmatpush1.msra.mxu0 0.0
        %4251 = vmatprep.subr.mxu0 0.0
        %4252 = vmatpush1.msra.mxu0 0.0
        %4253 = vmatprep.subr.mxu0 0.0
        %4254 = vmatpush1.msra.mxu0 0.0
        %4255 = vmatprep.subr.mxu0 0.0
        %4256 = vmatpush1.msra.mxu0 0.0
        %4257 = vmatprep.subr.mxu0 0.0
        %4258 = vmatpush1.msra.mxu0 0.0
        %4259 = vmatprep.subr.mxu0 0.0
        %4260 = vmatpush1.msra.mxu0 0.0
        %4261 = vmatprep.subr.mxu0 0.0
        %4262 = vmatpush1.msra.mxu0 0.0
        %4263 = vmatprep.subr.mxu0 0.0
        %4264 = vmatpush1.msra.mxu0 0.0
        %4265 = vmatprep.subr.mxu0 0.0
        %4266 = vmatpush1.msra.mxu0 0.0
        %4267 = vmatprep.subr.mxu0 0.0
        %4268 = vmatpush1.msra.mxu0 0.0
        %4269 = vmatprep.subr.mxu0 0.0
        %4270 = vmatpush1.msra.mxu0 0.0
        %4271 = vmatprep.mubr.f32.mxu0 0.0
        %v4272 = vand.u32 %v3880, 4294901760
        %4273 = vmatmul.mubr.f32.gmra.mrb[0].mxu0 %v4272
        %v4274 = vpop.f32.mrb[0].mxu0
        %v4275 = vadd.f32 %v4197, %v4274
        %v4276 = vpop.f32.mrb[0].mxu0
        %v4277 = vadd.f32 %v4199, %v4276
        %4278 = vdwg.mxu0
        %v4279 = vand.u32 %v3886, 4294901760
        %4280 = vmatprep.subr.mxu0 %v4279
        %v4281 = vand.u32 %v3883, 4294901760
        %4282 = vmatpush1.msra.mxu0 %v4281
        %4283 = vmatprep.subr.mxu0 0.0
        %4284 = vmatpush1.msra.mxu0 0.0
        %4285 = vmatprep.subr.mxu0 0.0
        %4286 = vmatpush1.msra.mxu0 0.0
        %4287 = vmatprep.subr.mxu0 0.0
        %4288 = vmatpush1.msra.mxu0 0.0
        %4289 = vmatprep.subr.mxu0 0.0
        %4290 = vmatpush1.msra.mxu0 0.0
        %4291 = vmatprep.subr.mxu0 0.0
        %4292 = vmatpush1.msra.mxu0 0.0
        %4293 = vmatprep.subr.mxu0 0.0
        %4294 = vmatpush1.msra.mxu0 0.0
        %4295 = vmatprep.subr.mxu0 0.0
        %4296 = vmatpush1.msra.mxu0 0.0
        %4297 = vmatprep.subr.mxu0 0.0
        %4298 = vmatpush1.msra.mxu0 0.0
        %4299 = vmatprep.subr.mxu0 0.0
        %4300 = vmatpush1.msra.mxu0 0.0
        %4301 = vmatprep.subr.mxu0 0.0
        %4302 = vmatpush1.msra.mxu0 0.0
        %4303 = vmatprep.subr.mxu0 0.0
        %4304 = vmatpush1.msra.mxu0 0.0
        %4305 = vmatprep.subr.mxu0 0.0
        %4306 = vmatpush1.msra.mxu0 0.0
        %4307 = vmatprep.subr.mxu0 0.0
        %4308 = vmatpush1.msra.mxu0 0.0
        %4309 = vmatprep.subr.mxu0 0.0
        %4310 = vmatpush1.msra.mxu0 0.0
        %4311 = vmatprep.subr.mxu0 0.0
        %4312 = vmatpush1.msra.mxu0 0.0
        %4313 = vmatprep.subr.mxu0 0.0
        %4314 = vmatpush1.msra.mxu0 0.0
        %4315 = vmatprep.subr.mxu0 0.0
        %4316 = vmatpush1.msra.mxu0 0.0
        %4317 = vmatprep.subr.mxu0 0.0
        %4318 = vmatpush1.msra.mxu0 0.0
        %4319 = vmatprep.subr.mxu0 0.0
        %4320 = vmatpush1.msra.mxu0 0.0
        %4321 = vmatprep.subr.mxu0 0.0
        %4322 = vmatpush1.msra.mxu0 0.0
        %4323 = vmatprep.subr.mxu0 0.0
        %4324 = vmatpush1.msra.mxu0 0.0
        %4325 = vmatprep.subr.mxu0 0.0
        %4326 = vmatpush1.msra.mxu0 0.0
        %4327 = vmatprep.subr.mxu0 0.0
        %4328 = vmatpush1.msra.mxu0 0.0
        %4329 = vmatprep.subr.mxu0 0.0
        %4330 = vmatpush1.msra.mxu0 0.0
        %4331 = vmatprep.subr.mxu0 0.0
        %4332 = vmatpush1.msra.mxu0 0.0
        %4333 = vmatprep.subr.mxu0 0.0
        %4334 = vmatpush1.msra.mxu0 0.0
        %4335 = vmatprep.subr.mxu0 0.0
        %4336 = vmatpush1.msra.mxu0 0.0
        %4337 = vmatprep.subr.mxu0 0.0
        %4338 = vmatpush1.msra.mxu0 0.0
        %4339 = vmatprep.subr.mxu0 0.0
        %4340 = vmatpush1.msra.mxu0 0.0
        %4341 = vmatprep.subr.mxu0 0.0
        %4342 = vmatpush1.msra.mxu0 0.0
        %4343 = vmatprep.subr.mxu0 0.0
        %4344 = vmatpush1.msra.mxu0 0.0
        %4345 = vmatprep.mubr.f32.mxu0 0.0
        %v4346 = vand.u32 %v3880, 4294901760
        %4347 = vmatmul.mubr.f32.gmra.mrb[0].mxu0 %v4346
        %v4348 = vpop.f32.mrb[0].mxu0
        %v4349 = vadd.f32 %v4275, %v4348
        %v4350 = vpop.f32.mrb[0].mxu0
        %v4351 = vadd.f32 %v4277, %v4350
        %4352 = vdwg.mxu0
        %v4353 = vadd.f32 %v3853, %v4349
        %v4354 = vadd.f32 %v3854, %v4351
        %4355 = vrot.lane.b32.xlu0 %v875, 96
        %v4356 = vpop.permute.xlu0 %4355
        %4357 = vrot.lane.b32.xlu0 %v877, 96
        %v4358 = vpop.permute.xlu0 %4357
        %vm4359 = vcmp.lt.s32.totalorder %v886, 96
        %v4360 = vsel %vm4359, %v4356, %v4358
        %v4361 = vsel %vm4359, %v4358, %v4356
        %s4362 = scalar_lea.vmem %s5, 14
        %v4363 = vld [vmem:[%s4362] sm:$0x3]
        %v4365 = vlaneseq
        %v4366 = vshrl.u32 %v4365, 7
        %v4367 = vsub.s32 0, %v4366
        %v4368 = vrot.slane %v4363, %v4367
        %v4369 = vlaneseq
        %v4370 = vshrl.u32 %v4369, 7
        %v4371 = vsub.s32 1, %v4370
        %v4372 = vrot.slane %v4363, %v4371
        %v4375 = vmul.f32 %v4360, %v4368
        %v4376 = vmul.f32 %v4361, %v4372
        %s4377 = scalar_lea.vmem %s3, 28
        %v4378 = vld [vmem:[%s4377] sm:$0xf]
        %v4380 = vsel %vm905, %v4378, 0
        %v4383 = vsel %vm909, %v4375, 0
        %v4386 = vsel %vm909, %v4376, 0
        %v4388 = vand.u32 %v4386, 4294901760
        %4389 = vmatprep.subr.mxu0 %v4388
        %v4390 = vand.u32 %v4383, 4294901760
        %4391 = vmatpush1.msra.mxu0 %v4390
        %4392 = vmatprep.subr.mxu0 0.0
        %4393 = vmatpush1.msra.mxu0 0.0
        %4394 = vmatprep.subr.mxu0 0.0
        %4395 = vmatpush1.msra.mxu0 0.0
        %4396 = vmatprep.subr.mxu0 0.0
        %4397 = vmatpush1.msra.mxu0 0.0
        %4398 = vmatprep.subr.mxu0 0.0
        %4399 = vmatpush1.msra.mxu0 0.0
        %4400 = vmatprep.subr.mxu0 0.0
        %4401 = vmatpush1.msra.mxu0 0.0
        %4402 = vmatprep.subr.mxu0 0.0
        %4403 = vmatpush1.msra.mxu0 0.0
        %4404 = vmatprep.subr.mxu0 0.0
        %4405 = vmatpush1.msra.mxu0 0.0
        %4406 = vmatprep.subr.mxu0 0.0
        %4407 = vmatpush1.msra.mxu0 0.0
        %4408 = vmatprep.subr.mxu0 0.0
        %4409 = vmatpush1.msra.mxu0 0.0
        %4410 = vmatprep.subr.mxu0 0.0
        %4411 = vmatpush1.msra.mxu0 0.0
        %4412 = vmatprep.subr.mxu0 0.0
        %4413 = vmatpush1.msra.mxu0 0.0
        %4414 = vmatprep.subr.mxu0 0.0
        %4415 = vmatpush1.msra.mxu0 0.0
        %4416 = vmatprep.subr.mxu0 0.0
        %4417 = vmatpush1.msra.mxu0 0.0
        %4418 = vmatprep.subr.mxu0 0.0
        %4419 = vmatpush1.msra.mxu0 0.0
        %4420 = vmatprep.subr.mxu0 0.0
        %4421 = vmatpush1.msra.mxu0 0.0
        %4422 = vmatprep.subr.mxu0 0.0
        %4423 = vmatpush1.msra.mxu0 0.0
        %4424 = vmatprep.subr.mxu0 0.0
        %4425 = vmatpush1.msra.mxu0 0.0
        %4426 = vmatprep.subr.mxu0 0.0
        %4427 = vmatpush1.msra.mxu0 0.0
        %4428 = vmatprep.subr.mxu0 0.0
        %4429 = vmatpush1.msra.mxu0 0.0
        %4430 = vmatprep.subr.mxu0 0.0
        %4431 = vmatpush1.msra.mxu0 0.0
        %4432 = vmatprep.subr.mxu0 0.0
        %4433 = vmatpush1.msra.mxu0 0.0
        %4434 = vmatprep.subr.mxu0 0.0
        %4435 = vmatpush1.msra.mxu0 0.0
        %4436 = vmatprep.subr.mxu0 0.0
        %4437 = vmatpush1.msra.mxu0 0.0
        %4438 = vmatprep.subr.mxu0 0.0
        %4439 = vmatpush1.msra.mxu0 0.0
        %4440 = vmatprep.subr.mxu0 0.0
        %4441 = vmatpush1.msra.mxu0 0.0
        %4442 = vmatprep.subr.mxu0 0.0
        %4443 = vmatpush1.msra.mxu0 0.0
        %4444 = vmatprep.subr.mxu0 0.0
        %4445 = vmatpush1.msra.mxu0 0.0
        %4446 = vmatprep.subr.mxu0 0.0
        %4447 = vmatpush1.msra.mxu0 0.0
        %4448 = vmatprep.subr.mxu0 0.0
        %4449 = vmatpush1.msra.mxu0 0.0
        %4450 = vmatprep.subr.mxu0 0.0
        %4451 = vmatpush1.msra.mxu0 0.0
        %4452 = vmatprep.subr.mxu0 0.0
        %4453 = vmatpush1.msra.mxu0 0.0
        %4454 = vmatprep.mubr.f32.mxu0 0.0
        %v4455 = vand.u32 %v4380, 4294901760
        %v4456 = vsub.f32 %v4380, %v4455
        %v4457 = vand.u32 %v4456, 4294901760
        %v4458 = vsub.f32 %v4456, %v4457
        %v4459 = vand.u32 %v4458, 4294901760
        %4460 = vmatmul.mubr.f32.gmra.mrb[0].mxu0 %v4459
        %v4461 = vpop.f32.mrb[0].mxu0
        %v4462 = vadd.f32 0.0, %v4461
        %v4463 = vpop.f32.mrb[0].mxu0
        %v4464 = vadd.f32 0.0, %v4463
        %4465 = vdwg.mxu0
        %v4466 = vand.u32 %v4386, 4294901760
        %v4467 = vsub.f32 %v4386, %v4466
        %v4468 = vand.u32 %v4467, 4294901760
        %v4469 = vsub.f32 %v4467, %v4468
        %v4470 = vand.u32 %v4469, 4294901760
        %4471 = vmatprep.subr.mxu0 %v4470
        %v4472 = vand.u32 %v4383, 4294901760
        %v4473 = vsub.f32 %v4383, %v4472
        %v4474 = vand.u32 %v4473, 4294901760
        %v4475 = vsub.f32 %v4473, %v4474
        %v4476 = vand.u32 %v4475, 4294901760
        %4477 = vmatpush1.msra.mxu0 %v4476
        %4478 = vmatprep.subr.mxu0 0.0
        %4479 = vmatpush1.msra.mxu0 0.0
        %4480 = vmatprep.subr.mxu0 0.0
        %4481 = vmatpush1.msra.mxu0 0.0
        %4482 = vmatprep.subr.mxu0 0.0
        %4483 = vmatpush1.msra.mxu0 0.0
        %4484 = vmatprep.subr.mxu0 0.0
        %4485 = vmatpush1.msra.mxu0 0.0
        %4486 = vmatprep.subr.mxu0 0.0
        %4487 = vmatpush1.msra.mxu0 0.0
        %4488 = vmatprep.subr.mxu0 0.0
        %4489 = vmatpush1.msra.mxu0 0.0
        %4490 = vmatprep.subr.mxu0 0.0
        %4491 = vmatpush1.msra.mxu0 0.0
        %4492 = vmatprep.subr.mxu0 0.0
        %4493 = vmatpush1.msra.mxu0 0.0
        %4494 = vmatprep.subr.mxu0 0.0
        %4495 = vmatpush1.msra.mxu0 0.0
        %4496 = vmatprep.subr.mxu0 0.0
        %4497 = vmatpush1.msra.mxu0 0.0
        %4498 = vmatprep.subr.mxu0 0.0
        %4499 = vmatpush1.msra.mxu0 0.0
        %4500 = vmatprep.subr.mxu0 0.0
        %4501 = vmatpush1.msra.mxu0 0.0
        %4502 = vmatprep.subr.mxu0 0.0
        %4503 = vmatpush1.msra.mxu0 0.0
        %4504 = vmatprep.subr.mxu0 0.0
        %4505 = vmatpush1.msra.mxu0 0.0
        %4506 = vmatprep.subr.mxu0 0.0
        %4507 = vmatpush1.msra.mxu0 0.0
        %4508 = vmatprep.subr.mxu0 0.0
        %4509 = vmatpush1.msra.mxu0 0.0
        %4510 = vmatprep.subr.mxu0 0.0
        %4511 = vmatpush1.msra.mxu0 0.0
        %4512 = vmatprep.subr.mxu0 0.0
        %4513 = vmatpush1.msra.mxu0 0.0
        %4514 = vmatprep.subr.mxu0 0.0
        %4515 = vmatpush1.msra.mxu0 0.0
        %4516 = vmatprep.subr.mxu0 0.0
        %4517 = vmatpush1.msra.mxu0 0.0
        %4518 = vmatprep.subr.mxu0 0.0
        %4519 = vmatpush1.msra.mxu0 0.0
        %4520 = vmatprep.subr.mxu0 0.0
        %4521 = vmatpush1.msra.mxu0 0.0
        %4522 = vmatprep.subr.mxu0 0.0
        %4523 = vmatpush1.msra.mxu0 0.0
        %4524 = vmatprep.subr.mxu0 0.0
        %4525 = vmatpush1.msra.mxu0 0.0
        %4526 = vmatprep.subr.mxu0 0.0
        %4527 = vmatpush1.msra.mxu0 0.0
        %4528 = vmatprep.subr.mxu0 0.0
        %4529 = vmatpush1.msra.mxu0 0.0
        %4530 = vmatprep.subr.mxu0 0.0
        %4531 = vmatpush1.msra.mxu0 0.0
        %4532 = vmatprep.subr.mxu0 0.0
        %4533 = vmatpush1.msra.mxu0 0.0
        %4534 = vmatprep.subr.mxu0 0.0
        %4535 = vmatpush1.msra.mxu0 0.0
        %4536 = vmatprep.subr.mxu0 0.0
        %4537 = vmatpush1.msra.mxu0 0.0
        %4538 = vmatprep.subr.mxu0 0.0
        %4539 = vmatpush1.msra.mxu0 0.0
        %4540 = vmatprep.mubr.f32.mxu0 0.0
        %v4541 = vand.u32 %v4380, 4294901760
        %4542 = vmatmul.mubr.f32.gmra.mrb[0].mxu0 %v4541
        %v4543 = vpop.f32.mrb[0].mxu0
        %v4544 = vadd.f32 %v4462, %v4543
        %v4545 = vpop.f32.mrb[0].mxu0
        %v4546 = vadd.f32 %v4464, %v4545
        %4547 = vdwg.mxu0
        %v4548 = vand.u32 %v4386, 4294901760
        %v4549 = vsub.f32 %v4386, %v4548
        %4550 = vmatprep.subr.mxu0 %v4549
        %v4551 = vand.u32 %v4383, 4294901760
        %v4552 = vsub.f32 %v4383, %v4551
        %4553 = vmatpush1.msra.mxu0 %v4552
        %4554 = vmatprep.subr.mxu0 0.0
        %4555 = vmatpush1.msra.mxu0 0.0
        %4556 = vmatprep.subr.mxu0 0.0
        %4557 = vmatpush1.msra.mxu0 0.0
        %4558 = vmatprep.subr.mxu0 0.0
        %4559 = vmatpush1.msra.mxu0 0.0
        %4560 = vmatprep.subr.mxu0 0.0
        %4561 = vmatpush1.msra.mxu0 0.0
        %4562 = vmatprep.subr.mxu0 0.0
        %4563 = vmatpush1.msra.mxu0 0.0
        %4564 = vmatprep.subr.mxu0 0.0
        %4565 = vmatpush1.msra.mxu0 0.0
        %4566 = vmatprep.subr.mxu0 0.0
        %4567 = vmatpush1.msra.mxu0 0.0
        %4568 = vmatprep.subr.mxu0 0.0
        %4569 = vmatpush1.msra.mxu0 0.0
        %4570 = vmatprep.subr.mxu0 0.0
        %4571 = vmatpush1.msra.mxu0 0.0
        %4572 = vmatprep.subr.mxu0 0.0
        %4573 = vmatpush1.msra.mxu0 0.0
        %4574 = vmatprep.subr.mxu0 0.0
        %4575 = vmatpush1.msra.mxu0 0.0
        %4576 = vmatprep.subr.mxu0 0.0
        %4577 = vmatpush1.msra.mxu0 0.0
        %4578 = vmatprep.subr.mxu0 0.0
        %4579 = vmatpush1.msra.mxu0 0.0
        %4580 = vmatprep.subr.mxu0 0.0
        %4581 = vmatpush1.msra.mxu0 0.0
        %4582 = vmatprep.subr.mxu0 0.0
        %4583 = vmatpush1.msra.mxu0 0.0
        %4584 = vmatprep.subr.mxu0 0.0
        %4585 = vmatpush1.msra.mxu0 0.0
        %4586 = vmatprep.subr.mxu0 0.0
        %4587 = vmatpush1.msra.mxu0 0.0
        %4588 = vmatprep.subr.mxu0 0.0
        %4589 = vmatpush1.msra.mxu0 0.0
        %4590 = vmatprep.subr.mxu0 0.0
        %4591 = vmatpush1.msra.mxu0 0.0
        %4592 = vmatprep.subr.mxu0 0.0
        %4593 = vmatpush1.msra.mxu0 0.0
        %4594 = vmatprep.subr.mxu0 0.0
        %4595 = vmatpush1.msra.mxu0 0.0
        %4596 = vmatprep.subr.mxu0 0.0
        %4597 = vmatpush1.msra.mxu0 0.0
        %4598 = vmatprep.subr.mxu0 0.0
        %4599 = vmatpush1.msra.mxu0 0.0
        %4600 = vmatprep.subr.mxu0 0.0
        %4601 = vmatpush1.msra.mxu0 0.0
        %4602 = vmatprep.subr.mxu0 0.0
        %4603 = vmatpush1.msra.mxu0 0.0
        %4604 = vmatprep.subr.mxu0 0.0
        %4605 = vmatpush1.msra.mxu0 0.0
        %4606 = vmatprep.subr.mxu0 0.0
        %4607 = vmatpush1.msra.mxu0 0.0
        %4608 = vmatprep.subr.mxu0 0.0
        %4609 = vmatpush1.msra.mxu0 0.0
        %4610 = vmatprep.subr.mxu0 0.0
        %4611 = vmatpush1.msra.mxu0 0.0
        %4612 = vmatprep.subr.mxu0 0.0
        %4613 = vmatpush1.msra.mxu0 0.0
        %4614 = vmatprep.subr.mxu0 0.0
        %4615 = vmatpush1.msra.mxu0 0.0
        %4616 = vmatprep.mubr.f32.mxu0 0.0
        %v4617 = vand.u32 %v4380, 4294901760
        %v4618 = vsub.f32 %v4380, %v4617
        %4619 = vmatmul.mubr.f32.gmra.mrb[0].mxu0 %v4618
        %v4620 = vpop.f32.mrb[0].mxu0
        %v4621 = vadd.f32 %v4544, %v4620
        %v4622 = vpop.f32.mrb[0].mxu0
        %v4623 = vadd.f32 %v4546, %v4622
        %4624 = vdwg.mxu0
        %v4625 = vand.u32 %v4386, 4294901760
        %4626 = vmatprep.subr.mxu0 %v4625
        %v4627 = vand.u32 %v4383, 4294901760
        %4628 = vmatpush1.msra.mxu0 %v4627
        %4629 = vmatprep.subr.mxu0 0.0
        %4630 = vmatpush1.msra.mxu0 0.0
        %4631 = vmatprep.subr.mxu0 0.0
        %4632 = vmatpush1.msra.mxu0 0.0
        %4633 = vmatprep.subr.mxu0 0.0
        %4634 = vmatpush1.msra.mxu0 0.0
        %4635 = vmatprep.subr.mxu0 0.0
        %4636 = vmatpush1.msra.mxu0 0.0
        %4637 = vmatprep.subr.mxu0 0.0
        %4638 = vmatpush1.msra.mxu0 0.0
        %4639 = vmatprep.subr.mxu0 0.0
        %4640 = vmatpush1.msra.mxu0 0.0
        %4641 = vmatprep.subr.mxu0 0.0
        %4642 = vmatpush1.msra.mxu0 0.0
        %4643 = vmatprep.subr.mxu0 0.0
        %4644 = vmatpush1.msra.mxu0 0.0
        %4645 = vmatprep.subr.mxu0 0.0
        %4646 = vmatpush1.msra.mxu0 0.0
        %4647 = vmatprep.subr.mxu0 0.0
        %4648 = vmatpush1.msra.mxu0 0.0
        %4649 = vmatprep.subr.mxu0 0.0
        %4650 = vmatpush1.msra.mxu0 0.0
        %4651 = vmatprep.subr.mxu0 0.0
        %4652 = vmatpush1.msra.mxu0 0.0
        %4653 = vmatprep.subr.mxu0 0.0
        %4654 = vmatpush1.msra.mxu0 0.0
        %4655 = vmatprep.subr.mxu0 0.0
        %4656 = vmatpush1.msra.mxu0 0.0
        %4657 = vmatprep.subr.mxu0 0.0
        %4658 = vmatpush1.msra.mxu0 0.0
        %4659 = vmatprep.subr.mxu0 0.0
        %4660 = vmatpush1.msra.mxu0 0.0
        %4661 = vmatprep.subr.mxu0 0.0
        %4662 = vmatpush1.msra.mxu0 0.0
        %4663 = vmatprep.subr.mxu0 0.0
        %4664 = vmatpush1.msra.mxu0 0.0
        %4665 = vmatprep.subr.mxu0 0.0
        %4666 = vmatpush1.msra.mxu0 0.0
        %4667 = vmatprep.subr.mxu0 0.0
        %4668 = vmatpush1.msra.mxu0 0.0
        %4669 = vmatprep.subr.mxu0 0.0
        %4670 = vmatpush1.msra.mxu0 0.0
        %4671 = vmatprep.subr.mxu0 0.0
        %4672 = vmatpush1.msra.mxu0 0.0
        %4673 = vmatprep.subr.mxu0 0.0
        %4674 = vmatpush1.msra.mxu0 0.0
        %4675 = vmatprep.subr.mxu0 0.0
        %4676 = vmatpush1.msra.mxu0 0.0
        %4677 = vmatprep.subr.mxu0 0.0
        %4678 = vmatpush1.msra.mxu0 0.0
        %4679 = vmatprep.subr.mxu0 0.0
        %4680 = vmatpush1.msra.mxu0 0.0
        %4681 = vmatprep.subr.mxu0 0.0
        %4682 = vmatpush1.msra.mxu0 0.0
        %4683 = vmatprep.subr.mxu0 0.0
        %4684 = vmatpush1.msra.mxu0 0.0
        %4685 = vmatprep.subr.mxu0 0.0
        %4686 = vmatpush1.msra.mxu0 0.0
        %4687 = vmatprep.subr.mxu0 0.0
        %4688 = vmatpush1.msra.mxu0 0.0
        %4689 = vmatprep.subr.mxu0 0.0
        %4690 = vmatpush1.msra.mxu0 0.0
        %4691 = vmatprep.mubr.f32.mxu0 0.0
        %v4692 = vand.u32 %v4380, 4294901760
        %v4693 = vsub.f32 %v4380, %v4692
        %v4694 = vand.u32 %v4693, 4294901760
        %4695 = vmatmul.mubr.f32.gmra.mrb[0].mxu0 %v4694
        %v4696 = vpop.f32.mrb[0].mxu0
        %v4697 = vadd.f32 %v4621, %v4696
        %v4698 = vpop.f32.mrb[0].mxu0
        %v4699 = vadd.f32 %v4623, %v4698
        %4700 = vdwg.mxu0
        %v4701 = vand.u32 %v4386, 4294901760
        %v4702 = vsub.f32 %v4386, %v4701
        %v4703 = vand.u32 %v4702, 4294901760
        %4704 = vmatprep.subr.mxu0 %v4703
        %v4705 = vand.u32 %v4383, 4294901760
        %v4706 = vsub.f32 %v4383, %v4705
        %v4707 = vand.u32 %v4706, 4294901760
        %4708 = vmatpush1.msra.mxu0 %v4707
        %4709 = vmatprep.subr.mxu0 0.0
        %4710 = vmatpush1.msra.mxu0 0.0
        %4711 = vmatprep.subr.mxu0 0.0
        %4712 = vmatpush1.msra.mxu0 0.0
        %4713 = vmatprep.subr.mxu0 0.0
        %4714 = vmatpush1.msra.mxu0 0.0
        %4715 = vmatprep.subr.mxu0 0.0
        %4716 = vmatpush1.msra.mxu0 0.0
        %4717 = vmatprep.subr.mxu0 0.0
        %4718 = vmatpush1.msra.mxu0 0.0
        %4719 = vmatprep.subr.mxu0 0.0
        %4720 = vmatpush1.msra.mxu0 0.0
        %4721 = vmatprep.subr.mxu0 0.0
        %4722 = vmatpush1.msra.mxu0 0.0
        %4723 = vmatprep.subr.mxu0 0.0
        %4724 = vmatpush1.msra.mxu0 0.0
        %4725 = vmatprep.subr.mxu0 0.0
        %4726 = vmatpush1.msra.mxu0 0.0
        %4727 = vmatprep.subr.mxu0 0.0
        %4728 = vmatpush1.msra.mxu0 0.0
        %4729 = vmatprep.subr.mxu0 0.0
        %4730 = vmatpush1.msra.mxu0 0.0
        %4731 = vmatprep.subr.mxu0 0.0
        %4732 = vmatpush1.msra.mxu0 0.0
        %4733 = vmatprep.subr.mxu0 0.0
        %4734 = vmatpush1.msra.mxu0 0.0
        %4735 = vmatprep.subr.mxu0 0.0
        %4736 = vmatpush1.msra.mxu0 0.0
        %4737 = vmatprep.subr.mxu0 0.0
        %4738 = vmatpush1.msra.mxu0 0.0
        %4739 = vmatprep.subr.mxu0 0.0
        %4740 = vmatpush1.msra.mxu0 0.0
        %4741 = vmatprep.subr.mxu0 0.0
        %4742 = vmatpush1.msra.mxu0 0.0
        %4743 = vmatprep.subr.mxu0 0.0
        %4744 = vmatpush1.msra.mxu0 0.0
        %4745 = vmatprep.subr.mxu0 0.0
        %4746 = vmatpush1.msra.mxu0 0.0
        %4747 = vmatprep.subr.mxu0 0.0
        %4748 = vmatpush1.msra.mxu0 0.0
        %4749 = vmatprep.subr.mxu0 0.0
        %4750 = vmatpush1.msra.mxu0 0.0
        %4751 = vmatprep.subr.mxu0 0.0
        %4752 = vmatpush1.msra.mxu0 0.0
        %4753 = vmatprep.subr.mxu0 0.0
        %4754 = vmatpush1.msra.mxu0 0.0
        %4755 = vmatprep.subr.mxu0 0.0
        %4756 = vmatpush1.msra.mxu0 0.0
        %4757 = vmatprep.subr.mxu0 0.0
        %4758 = vmatpush1.msra.mxu0 0.0
        %4759 = vmatprep.subr.mxu0 0.0
        %4760 = vmatpush1.msra.mxu0 0.0
        %4761 = vmatprep.subr.mxu0 0.0
        %4762 = vmatpush1.msra.mxu0 0.0
        %4763 = vmatprep.subr.mxu0 0.0
        %4764 = vmatpush1.msra.mxu0 0.0
        %4765 = vmatprep.subr.mxu0 0.0
        %4766 = vmatpush1.msra.mxu0 0.0
        %4767 = vmatprep.subr.mxu0 0.0
        %4768 = vmatpush1.msra.mxu0 0.0
        %4769 = vmatprep.subr.mxu0 0.0
        %4770 = vmatpush1.msra.mxu0 0.0
        %4771 = vmatprep.mubr.f32.mxu0 0.0
        %v4772 = vand.u32 %v4380, 4294901760
        %4773 = vmatmul.mubr.f32.gmra.mrb[0].mxu0 %v4772
        %v4774 = vpop.f32.mrb[0].mxu0
        %v4775 = vadd.f32 %v4697, %v4774
        %v4776 = vpop.f32.mrb[0].mxu0
        %v4777 = vadd.f32 %v4699, %v4776
        %4778 = vdwg.mxu0
        %v4779 = vand.u32 %v4386, 4294901760
        %4780 = vmatprep.subr.mxu0 %v4779
        %v4781 = vand.u32 %v4383, 4294901760
        %4782 = vmatpush1.msra.mxu0 %v4781
        %4783 = vmatprep.subr.mxu0 0.0
        %4784 = vmatpush1.msra.mxu0 0.0
        %4785 = vmatprep.subr.mxu0 0.0
        %4786 = vmatpush1.msra.mxu0 0.0
        %4787 = vmatprep.subr.mxu0 0.0
        %4788 = vmatpush1.msra.mxu0 0.0
        %4789 = vmatprep.subr.mxu0 0.0
        %4790 = vmatpush1.msra.mxu0 0.0
        %4791 = vmatprep.subr.mxu0 0.0
        %4792 = vmatpush1.msra.mxu0 0.0
        %4793 = vmatprep.subr.mxu0 0.0
        %4794 = vmatpush1.msra.mxu0 0.0
        %4795 = vmatprep.subr.mxu0 0.0
        %4796 = vmatpush1.msra.mxu0 0.0
        %4797 = vmatprep.subr.mxu0 0.0
        %4798 = vmatpush1.msra.mxu0 0.0
        %4799 = vmatprep.subr.mxu0 0.0
        %4800 = vmatpush1.msra.mxu0 0.0
        %4801 = vmatprep.subr.mxu0 0.0
        %4802 = vmatpush1.msra.mxu0 0.0
        %4803 = vmatprep.subr.mxu0 0.0
        %4804 = vmatpush1.msra.mxu0 0.0
        %4805 = vmatprep.subr.mxu0 0.0
        %4806 = vmatpush1.msra.mxu0 0.0
        %4807 = vmatprep.subr.mxu0 0.0
        %4808 = vmatpush1.msra.mxu0 0.0
        %4809 = vmatprep.subr.mxu0 0.0
        %4810 = vmatpush1.msra.mxu0 0.0
        %4811 = vmatprep.subr.mxu0 0.0
        %4812 = vmatpush1.msra.mxu0 0.0
        %4813 = vmatprep.subr.mxu0 0.0
        %4814 = vmatpush1.msra.mxu0 0.0
        %4815 = vmatprep.subr.mxu0 0.0
        %4816 = vmatpush1.msra.mxu0 0.0
        %4817 = vmatprep.subr.mxu0 0.0
        %4818 = vmatpush1.msra.mxu0 0.0
        %4819 = vmatprep.subr.mxu0 0.0
        %4820 = vmatpush1.msra.mxu0 0.0
        %4821 = vmatprep.subr.mxu0 0.0
        %4822 = vmatpush1.msra.mxu0 0.0
        %4823 = vmatprep.subr.mxu0 0.0
        %4824 = vmatpush1.msra.mxu0 0.0
        %4825 = vmatprep.subr.mxu0 0.0
        %4826 = vmatpush1.msra.mxu0 0.0
        %4827 = vmatprep.subr.mxu0 0.0
        %4828 = vmatpush1.msra.mxu0 0.0
        %4829 = vmatprep.subr.mxu0 0.0
        %4830 = vmatpush1.msra.mxu0 0.0
        %4831 = vmatprep.subr.mxu0 0.0
        %4832 = vmatpush1.msra.mxu0 0.0
        %4833 = vmatprep.subr.mxu0 0.0
        %4834 = vmatpush1.msra.mxu0 0.0
        %4835 = vmatprep.subr.mxu0 0.0
        %4836 = vmatpush1.msra.mxu0 0.0
        %4837 = vmatprep.subr.mxu0 0.0
        %4838 = vmatpush1.msra.mxu0 0.0
        %4839 = vmatprep.subr.mxu0 0.0
        %4840 = vmatpush1.msra.mxu0 0.0
        %4841 = vmatprep.subr.mxu0 0.0
        %4842 = vmatpush1.msra.mxu0 0.0
        %4843 = vmatprep.subr.mxu0 0.0
        %4844 = vmatpush1.msra.mxu0 0.0
        %4845 = vmatprep.mubr.f32.mxu0 0.0
        %v4846 = vand.u32 %v4380, 4294901760
        %4847 = vmatmul.mubr.f32.gmra.mrb[0].mxu0 %v4846
        %v4848 = vpop.f32.mrb[0].mxu0
        %v4849 = vadd.f32 %v4775, %v4848
        %v4850 = vpop.f32.mrb[0].mxu0
        %v4851 = vadd.f32 %v4777, %v4850
        %4852 = vdwg.mxu0
        %v4853 = vadd.f32 %v4353, %v4849
        %v4854 = vadd.f32 %v4354, %v4851
        %4855 = vrot.lane.b32.xlu0 %v875, 94
        %v4856 = vpop.permute.xlu0 %4855
        %4857 = vrot.lane.b32.xlu0 %v877, 94
        %v4858 = vpop.permute.xlu0 %4857
        %vm4859 = vcmp.lt.s32.totalorder %v886, 94
        %v4860 = vsel %vm4859, %v4856, %v4858
        %v4861 = vsel %vm4859, %v4858, %v4856
        %s4862 = scalar_lea.vmem %s5, 16
        %v4863 = vld [vmem:[%s4862] sm:$0x3]
        %v4865 = vlaneseq
        %v4866 = vshrl.u32 %v4865, 7
        %v4867 = vsub.s32 0, %v4866
        %v4868 = vrot.slane %v4863, %v4867
        %v4869 = vlaneseq
        %v4870 = vshrl.u32 %v4869, 7
        %v4871 = vsub.s32 1, %v4870
        %v4872 = vrot.slane %v4863, %v4871
        %v4875 = vmul.f32 %v4860, %v4868
        %v4876 = vmul.f32 %v4861, %v4872
        %s4877 = scalar_lea.vmem %s3, 32
        %v4878 = vld [vmem:[%s4877] sm:$0xf]
        %v4880 = vsel %vm905, %v4878, 0
        %v4883 = vsel %vm909, %v4875, 0
        %v4886 = vsel %vm909, %v4876, 0
        %v4888 = vand.u32 %v4886, 4294901760
        %4889 = vmatprep.subr.mxu0 %v4888
        %v4890 = vand.u32 %v4883, 4294901760
        %4891 = vmatpush1.msra.mxu0 %v4890
        %4892 = vmatprep.subr.mxu0 0.0
        %4893 = vmatpush1.msra.mxu0 0.0
        %4894 = vmatprep.subr.mxu0 0.0
        %4895 = vmatpush1.msra.mxu0 0.0
        %4896 = vmatprep.subr.mxu0 0.0
        %4897 = vmatpush1.msra.mxu0 0.0
        %4898 = vmatprep.subr.mxu0 0.0
        %4899 = vmatpush1.msra.mxu0 0.0
        %4900 = vmatprep.subr.mxu0 0.0
        %4901 = vmatpush1.msra.mxu0 0.0
        %4902 = vmatprep.subr.mxu0 0.0
        %4903 = vmatpush1.msra.mxu0 0.0
        %4904 = vmatprep.subr.mxu0 0.0
        %4905 = vmatpush1.msra.mxu0 0.0
        %4906 = vmatprep.subr.mxu0 0.0
        %4907 = vmatpush1.msra.mxu0 0.0
        %4908 = vmatprep.subr.mxu0 0.0
        %4909 = vmatpush1.msra.mxu0 0.0
        %4910 = vmatprep.subr.mxu0 0.0
        %4911 = vmatpush1.msra.mxu0 0.0
        %4912 = vmatprep.subr.mxu0 0.0
        %4913 = vmatpush1.msra.mxu0 0.0
        %4914 = vmatprep.subr.mxu0 0.0
        %4915 = vmatpush1.msra.mxu0 0.0
        %4916 = vmatprep.subr.mxu0 0.0
        %4917 = vmatpush1.msra.mxu0 0.0
        %4918 = vmatprep.subr.mxu0 0.0
        %4919 = vmatpush1.msra.mxu0 0.0
        %4920 = vmatprep.subr.mxu0 0.0
        %4921 = vmatpush1.msra.mxu0 0.0
        %4922 = vmatprep.subr.mxu0 0.0
        %4923 = vmatpush1.msra.mxu0 0.0
        %4924 = vmatprep.subr.mxu0 0.0
        %4925 = vmatpush1.msra.mxu0 0.0
        %4926 = vmatprep.subr.mxu0 0.0
        %4927 = vmatpush1.msra.mxu0 0.0
        %4928 = vmatprep.subr.mxu0 0.0
        %4929 = vmatpush1.msra.mxu0 0.0
        %4930 = vmatprep.subr.mxu0 0.0
        %4931 = vmatpush1.msra.mxu0 0.0
        %4932 = vmatprep.subr.mxu0 0.0
        %4933 = vmatpush1.msra.mxu0 0.0
        %4934 = vmatprep.subr.mxu0 0.0
        %4935 = vmatpush1.msra.mxu0 0.0
        %4936 = vmatprep.subr.mxu0 0.0
        %4937 = vmatpush1.msra.mxu0 0.0
        %4938 = vmatprep.subr.mxu0 0.0
        %4939 = vmatpush1.msra.mxu0 0.0
        %4940 = vmatprep.subr.mxu0 0.0
        %4941 = vmatpush1.msra.mxu0 0.0
        %4942 = vmatprep.subr.mxu0 0.0
        %4943 = vmatpush1.msra.mxu0 0.0
        %4944 = vmatprep.subr.mxu0 0.0
        %4945 = vmatpush1.msra.mxu0 0.0
        %4946 = vmatprep.subr.mxu0 0.0
        %4947 = vmatpush1.msra.mxu0 0.0
        %4948 = vmatprep.subr.mxu0 0.0
        %4949 = vmatpush1.msra.mxu0 0.0
        %4950 = vmatprep.subr.mxu0 0.0
        %4951 = vmatpush1.msra.mxu0 0.0
        %4952 = vmatprep.subr.mxu0 0.0
        %4953 = vmatpush1.msra.mxu0 0.0
        %4954 = vmatprep.mubr.f32.mxu0 0.0
        %v4955 = vand.u32 %v4880, 4294901760
        %v4956 = vsub.f32 %v4880, %v4955
        %v4957 = vand.u32 %v4956, 4294901760
        %v4958 = vsub.f32 %v4956, %v4957
        %v4959 = vand.u32 %v4958, 4294901760
        %4960 = vmatmul.mubr.f32.gmra.mrb[0].mxu0 %v4959
        %v4961 = vpop.f32.mrb[0].mxu0
        %v4962 = vadd.f32 0.0, %v4961
        %v4963 = vpop.f32.mrb[0].mxu0
        %v4964 = vadd.f32 0.0, %v4963
        %4965 = vdwg.mxu0
        %v4966 = vand.u32 %v4886, 4294901760
        %v4967 = vsub.f32 %v4886, %v4966
        %v4968 = vand.u32 %v4967, 4294901760
        %v4969 = vsub.f32 %v4967, %v4968
        %v4970 = vand.u32 %v4969, 4294901760
        %4971 = vmatprep.subr.mxu0 %v4970
        %v4972 = vand.u32 %v4883, 4294901760
        %v4973 = vsub.f32 %v4883, %v4972
        %v4974 = vand.u32 %v4973, 4294901760
        %v4975 = vsub.f32 %v4973, %v4974
        %v4976 = vand.u32 %v4975, 4294901760
        %4977 = vmatpush1.msra.mxu0 %v4976
        %4978 = vmatprep.subr.mxu0 0.0
        %4979 = vmatpush1.msra.mxu0 0.0
        %4980 = vmatprep.subr.mxu0 0.0
        %4981 = vmatpush1.msra.mxu0 0.0
        %4982 = vmatprep.subr.mxu0 0.0
        %4983 = vmatpush1.msra.mxu0 0.0
        %4984 = vmatprep.subr.mxu0 0.0
        %4985 = vmatpush1.msra.mxu0 0.0
        %4986 = vmatprep.subr.mxu0 0.0
        %4987 = vmatpush1.msra.mxu0 0.0
        %4988 = vmatprep.subr.mxu0 0.0
        %4989 = vmatpush1.msra.mxu0 0.0
        %4990 = vmatprep.subr.mxu0 0.0
        %4991 = vmatpush1.msra.mxu0 0.0
        %4992 = vmatprep.subr.mxu0 0.0
        %4993 = vmatpush1.msra.mxu0 0.0
        %4994 = vmatprep.subr.mxu0 0.0
        %4995 = vmatpush1.msra.mxu0 0.0
        %4996 = vmatprep.subr.mxu0 0.0
        %4997 = vmatpush1.msra.mxu0 0.0
        %4998 = vmatprep.subr.mxu0 0.0
        %4999 = vmatpush1.msra.mxu0 0.0
        %5000 = vmatprep.subr.mxu0 0.0
        %5001 = vmatpush1.msra.mxu0 0.0
        %5002 = vmatprep.subr.mxu0 0.0
        %5003 = vmatpush1.msra.mxu0 0.0
        %5004 = vmatprep.subr.mxu0 0.0
        %5005 = vmatpush1.msra.mxu0 0.0
        %5006 = vmatprep.subr.mxu0 0.0
        %5007 = vmatpush1.msra.mxu0 0.0
        %5008 = vmatprep.subr.mxu0 0.0
        %5009 = vmatpush1.msra.mxu0 0.0
        %5010 = vmatprep.subr.mxu0 0.0
        %5011 = vmatpush1.msra.mxu0 0.0
        %5012 = vmatprep.subr.mxu0 0.0
        %5013 = vmatpush1.msra.mxu0 0.0
        %5014 = vmatprep.subr.mxu0 0.0
        %5015 = vmatpush1.msra.mxu0 0.0
        %5016 = vmatprep.subr.mxu0 0.0
        %5017 = vmatpush1.msra.mxu0 0.0
        %5018 = vmatprep.subr.mxu0 0.0
        %5019 = vmatpush1.msra.mxu0 0.0
        %5020 = vmatprep.subr.mxu0 0.0
        %5021 = vmatpush1.msra.mxu0 0.0
        %5022 = vmatprep.subr.mxu0 0.0
        %5023 = vmatpush1.msra.mxu0 0.0
        %5024 = vmatprep.subr.mxu0 0.0
        %5025 = vmatpush1.msra.mxu0 0.0
        %5026 = vmatprep.subr.mxu0 0.0
        %5027 = vmatpush1.msra.mxu0 0.0
        %5028 = vmatprep.subr.mxu0 0.0
        %5029 = vmatpush1.msra.mxu0 0.0
        %5030 = vmatprep.subr.mxu0 0.0
        %5031 = vmatpush1.msra.mxu0 0.0
        %5032 = vmatprep.subr.mxu0 0.0
        %5033 = vmatpush1.msra.mxu0 0.0
        %5034 = vmatprep.subr.mxu0 0.0
        %5035 = vmatpush1.msra.mxu0 0.0
        %5036 = vmatprep.subr.mxu0 0.0
        %5037 = vmatpush1.msra.mxu0 0.0
        %5038 = vmatprep.subr.mxu0 0.0
        %5039 = vmatpush1.msra.mxu0 0.0
        %5040 = vmatprep.mubr.f32.mxu0 0.0
        %v5041 = vand.u32 %v4880, 4294901760
        %5042 = vmatmul.mubr.f32.gmra.mrb[0].mxu0 %v5041
        %v5043 = vpop.f32.mrb[0].mxu0
        %v5044 = vadd.f32 %v4962, %v5043
        %v5045 = vpop.f32.mrb[0].mxu0
        %v5046 = vadd.f32 %v4964, %v5045
        %5047 = vdwg.mxu0
        %v5048 = vand.u32 %v4886, 4294901760
        %v5049 = vsub.f32 %v4886, %v5048
        %5050 = vmatprep.subr.mxu0 %v5049
        %v5051 = vand.u32 %v4883, 4294901760
        %v5052 = vsub.f32 %v4883, %v5051
        %5053 = vmatpush1.msra.mxu0 %v5052
        %5054 = vmatprep.subr.mxu0 0.0
        %5055 = vmatpush1.msra.mxu0 0.0
        %5056 = vmatprep.subr.mxu0 0.0
        %5057 = vmatpush1.msra.mxu0 0.0
        %5058 = vmatprep.subr.mxu0 0.0
        %5059 = vmatpush1.msra.mxu0 0.0
        %5060 = vmatprep.subr.mxu0 0.0
        %5061 = vmatpush1.msra.mxu0 0.0
        %5062 = vmatprep.subr.mxu0 0.0
        %5063 = vmatpush1.msra.mxu0 0.0
        %5064 = vmatprep.subr.mxu0 0.0
        %5065 = vmatpush1.msra.mxu0 0.0
        %5066 = vmatprep.subr.mxu0 0.0
        %5067 = vmatpush1.msra.mxu0 0.0
        %5068 = vmatprep.subr.mxu0 0.0
        %5069 = vmatpush1.msra.mxu0 0.0
        %5070 = vmatprep.subr.mxu0 0.0
        %5071 = vmatpush1.msra.mxu0 0.0
        %5072 = vmatprep.subr.mxu0 0.0
        %5073 = vmatpush1.msra.mxu0 0.0
        %5074 = vmatprep.subr.mxu0 0.0
        %5075 = vmatpush1.msra.mxu0 0.0
        %5076 = vmatprep.subr.mxu0 0.0
        %5077 = vmatpush1.msra.mxu0 0.0
        %5078 = vmatprep.subr.mxu0 0.0
        %5079 = vmatpush1.msra.mxu0 0.0
        %5080 = vmatprep.subr.mxu0 0.0
        %5081 = vmatpush1.msra.mxu0 0.0
        %5082 = vmatprep.subr.mxu0 0.0
        %5083 = vmatpush1.msra.mxu0 0.0
        %5084 = vmatprep.subr.mxu0 0.0
        %5085 = vmatpush1.msra.mxu0 0.0
        %5086 = vmatprep.subr.mxu0 0.0
        %5087 = vmatpush1.msra.mxu0 0.0
        %5088 = vmatprep.subr.mxu0 0.0
        %5089 = vmatpush1.msra.mxu0 0.0
        %5090 = vmatprep.subr.mxu0 0.0
        %5091 = vmatpush1.msra.mxu0 0.0
        %5092 = vmatprep.subr.mxu0 0.0
        %5093 = vmatpush1.msra.mxu0 0.0
        %5094 = vmatprep.subr.mxu0 0.0
        %5095 = vmatpush1.msra.mxu0 0.0
        %5096 = vmatprep.subr.mxu0 0.0
        %5097 = vmatpush1.msra.mxu0 0.0
        %5098 = vmatprep.subr.mxu0 0.0
        %5099 = vmatpush1.msra.mxu0 0.0
        %5100 = vmatprep.subr.mxu0 0.0
        %5101 = vmatpush1.msra.mxu0 0.0
        %5102 = vmatprep.subr.mxu0 0.0
        %5103 = vmatpush1.msra.mxu0 0.0
        %5104 = vmatprep.subr.mxu0 0.0
        %5105 = vmatpush1.msra.mxu0 0.0
        %5106 = vmatprep.subr.mxu0 0.0
        %5107 = vmatpush1.msra.mxu0 0.0
        %5108 = vmatprep.subr.mxu0 0.0
        %5109 = vmatpush1.msra.mxu0 0.0
        %5110 = vmatprep.subr.mxu0 0.0
        %5111 = vmatpush1.msra.mxu0 0.0
        %5112 = vmatprep.subr.mxu0 0.0
        %5113 = vmatpush1.msra.mxu0 0.0
        %5114 = vmatprep.subr.mxu0 0.0
        %5115 = vmatpush1.msra.mxu0 0.0
        %5116 = vmatprep.mubr.f32.mxu0 0.0
        %v5117 = vand.u32 %v4880, 4294901760
        %v5118 = vsub.f32 %v4880, %v5117
        %5119 = vmatmul.mubr.f32.gmra.mrb[0].mxu0 %v5118
        %v5120 = vpop.f32.mrb[0].mxu0
        %v5121 = vadd.f32 %v5044, %v5120
        %v5122 = vpop.f32.mrb[0].mxu0
        %v5123 = vadd.f32 %v5046, %v5122
        %5124 = vdwg.mxu0
        %v5125 = vand.u32 %v4886, 4294901760
        %5126 = vmatprep.subr.mxu0 %v5125
        %v5127 = vand.u32 %v4883, 4294901760
        %5128 = vmatpush1.msra.mxu0 %v5127
        %5129 = vmatprep.subr.mxu0 0.0
        %5130 = vmatpush1.msra.mxu0 0.0
        %5131 = vmatprep.subr.mxu0 0.0
        %5132 = vmatpush1.msra.mxu0 0.0
        %5133 = vmatprep.subr.mxu0 0.0
        %5134 = vmatpush1.msra.mxu0 0.0
        %5135 = vmatprep.subr.mxu0 0.0
        %5136 = vmatpush1.msra.mxu0 0.0
        %5137 = vmatprep.subr.mxu0 0.0
        %5138 = vmatpush1.msra.mxu0 0.0
        %5139 = vmatprep.subr.mxu0 0.0
        %5140 = vmatpush1.msra.mxu0 0.0
        %5141 = vmatprep.subr.mxu0 0.0
        %5142 = vmatpush1.msra.mxu0 0.0
        %5143 = vmatprep.subr.mxu0 0.0
        %5144 = vmatpush1.msra.mxu0 0.0
        %5145 = vmatprep.subr.mxu0 0.0
        %5146 = vmatpush1.msra.mxu0 0.0
        %5147 = vmatprep.subr.mxu0 0.0
        %5148 = vmatpush1.msra.mxu0 0.0
        %5149 = vmatprep.subr.mxu0 0.0
        %5150 = vmatpush1.msra.mxu0 0.0
        %5151 = vmatprep.subr.mxu0 0.0
        %5152 = vmatpush1.msra.mxu0 0.0
        %5153 = vmatprep.subr.mxu0 0.0
        %5154 = vmatpush1.msra.mxu0 0.0
        %5155 = vmatprep.subr.mxu0 0.0
        %5156 = vmatpush1.msra.mxu0 0.0
        %5157 = vmatprep.subr.mxu0 0.0
        %5158 = vmatpush1.msra.mxu0 0.0
        %5159 = vmatprep.subr.mxu0 0.0
        %5160 = vmatpush1.msra.mxu0 0.0
        %5161 = vmatprep.subr.mxu0 0.0
        %5162 = vmatpush1.msra.mxu0 0.0
        %5163 = vmatprep.subr.mxu0 0.0
        %5164 = vmatpush1.msra.mxu0 0.0
        %5165 = vmatprep.subr.mxu0 0.0
        %5166 = vmatpush1.msra.mxu0 0.0
        %5167 = vmatprep.subr.mxu0 0.0
        %5168 = vmatpush1.msra.mxu0 0.0
        %5169 = vmatprep.subr.mxu0 0.0
        %5170 = vmatpush1.msra.mxu0 0.0
        %5171 = vmatprep.subr.mxu0 0.0
        %5172 = vmatpush1.msra.mxu0 0.0
        %5173 = vmatprep.subr.mxu0 0.0
        %5174 = vmatpush1.msra.mxu0 0.0
        %5175 = vmatprep.subr.mxu0 0.0
        %5176 = vmatpush1.msra.mxu0 0.0
        %5177 = vmatprep.subr.mxu0 0.0
        %5178 = vmatpush1.msra.mxu0 0.0
        %5179 = vmatprep.subr.mxu0 0.0
        %5180 = vmatpush1.msra.mxu0 0.0
        %5181 = vmatprep.subr.mxu0 0.0
        %5182 = vmatpush1.msra.mxu0 0.0
        %5183 = vmatprep.subr.mxu0 0.0
        %5184 = vmatpush1.msra.mxu0 0.0
        %5185 = vmatprep.subr.mxu0 0.0
        %5186 = vmatpush1.msra.mxu0 0.0
        %5187 = vmatprep.subr.mxu0 0.0
        %5188 = vmatpush1.msra.mxu0 0.0
        %5189 = vmatprep.subr.mxu0 0.0
        %5190 = vmatpush1.msra.mxu0 0.0
        %5191 = vmatprep.mubr.f32.mxu0 0.0
        %v5192 = vand.u32 %v4880, 4294901760
        %v5193 = vsub.f32 %v4880, %v5192
        %v5194 = vand.u32 %v5193, 4294901760
        %5195 = vmatmul.mubr.f32.gmra.mrb[0].mxu0 %v5194
        %v5196 = vpop.f32.mrb[0].mxu0
        %v5197 = vadd.f32 %v5121, %v5196
        %v5198 = vpop.f32.mrb[0].mxu0
        %v5199 = vadd.f32 %v5123, %v5198
        %5200 = vdwg.mxu0
        %v5201 = vand.u32 %v4886, 4294901760
        %v5202 = vsub.f32 %v4886, %v5201
        %v5203 = vand.u32 %v5202, 4294901760
        %5204 = vmatprep.subr.mxu0 %v5203
        %v5205 = vand.u32 %v4883, 4294901760
        %v5206 = vsub.f32 %v4883, %v5205
        %v5207 = vand.u32 %v5206, 4294901760
        %5208 = vmatpush1.msra.mxu0 %v5207
        %5209 = vmatprep.subr.mxu0 0.0
        %5210 = vmatpush1.msra.mxu0 0.0
        %5211 = vmatprep.subr.mxu0 0.0
        %5212 = vmatpush1.msra.mxu0 0.0
        %5213 = vmatprep.subr.mxu0 0.0
        %5214 = vmatpush1.msra.mxu0 0.0
        %5215 = vmatprep.subr.mxu0 0.0
        %5216 = vmatpush1.msra.mxu0 0.0
        %5217 = vmatprep.subr.mxu0 0.0
        %5218 = vmatpush1.msra.mxu0 0.0
        %5219 = vmatprep.subr.mxu0 0.0
        %5220 = vmatpush1.msra.mxu0 0.0
        %5221 = vmatprep.subr.mxu0 0.0
        %5222 = vmatpush1.msra.mxu0 0.0
        %5223 = vmatprep.subr.mxu0 0.0
        %5224 = vmatpush1.msra.mxu0 0.0
        %5225 = vmatprep.subr.mxu0 0.0
        %5226 = vmatpush1.msra.mxu0 0.0
        %5227 = vmatprep.subr.mxu0 0.0
        %5228 = vmatpush1.msra.mxu0 0.0
        %5229 = vmatprep.subr.mxu0 0.0
        %5230 = vmatpush1.msra.mxu0 0.0
        %5231 = vmatprep.subr.mxu0 0.0
        %5232 = vmatpush1.msra.mxu0 0.0
        %5233 = vmatprep.subr.mxu0 0.0
        %5234 = vmatpush1.msra.mxu0 0.0
        %5235 = vmatprep.subr.mxu0 0.0
        %5236 = vmatpush1.msra.mxu0 0.0
        %5237 = vmatprep.subr.mxu0 0.0
        %5238 = vmatpush1.msra.mxu0 0.0
        %5239 = vmatprep.subr.mxu0 0.0
        %5240 = vmatpush1.msra.mxu0 0.0
        %5241 = vmatprep.subr.mxu0 0.0
        %5242 = vmatpush1.msra.mxu0 0.0
        %5243 = vmatprep.subr.mxu0 0.0
        %5244 = vmatpush1.msra.mxu0 0.0
        %5245 = vmatprep.subr.mxu0 0.0
        %5246 = vmatpush1.msra.mxu0 0.0
        %5247 = vmatprep.subr.mxu0 0.0
        %5248 = vmatpush1.msra.mxu0 0.0
        %5249 = vmatprep.subr.mxu0 0.0
        %5250 = vmatpush1.msra.mxu0 0.0
        %5251 = vmatprep.subr.mxu0 0.0
        %5252 = vmatpush1.msra.mxu0 0.0
        %5253 = vmatprep.subr.mxu0 0.0
        %5254 = vmatpush1.msra.mxu0 0.0
        %5255 = vmatprep.subr.mxu0 0.0
        %5256 = vmatpush1.msra.mxu0 0.0
        %5257 = vmatprep.subr.mxu0 0.0
        %5258 = vmatpush1.msra.mxu0 0.0
        %5259 = vmatprep.subr.mxu0 0.0
        %5260 = vmatpush1.msra.mxu0 0.0
        %5261 = vmatprep.subr.mxu0 0.0
        %5262 = vmatpush1.msra.mxu0 0.0
        %5263 = vmatprep.subr.mxu0 0.0
        %5264 = vmatpush1.msra.mxu0 0.0
        %5265 = vmatprep.subr.mxu0 0.0
        %5266 = vmatpush1.msra.mxu0 0.0
        %5267 = vmatprep.subr.mxu0 0.0
        %5268 = vmatpush1.msra.mxu0 0.0
        %5269 = vmatprep.subr.mxu0 0.0
        %5270 = vmatpush1.msra.mxu0 0.0
        %5271 = vmatprep.mubr.f32.mxu0 0.0
        %v5272 = vand.u32 %v4880, 4294901760
        %5273 = vmatmul.mubr.f32.gmra.mrb[0].mxu0 %v5272
        %v5274 = vpop.f32.mrb[0].mxu0
        %v5275 = vadd.f32 %v5197, %v5274
        %v5276 = vpop.f32.mrb[0].mxu0
        %v5277 = vadd.f32 %v5199, %v5276
        %5278 = vdwg.mxu0
        %v5279 = vand.u32 %v4886, 4294901760
        %5280 = vmatprep.subr.mxu0 %v5279
        %v5281 = vand.u32 %v4883, 4294901760
        %5282 = vmatpush1.msra.mxu0 %v5281
        %5283 = vmatprep.subr.mxu0 0.0
        %5284 = vmatpush1.msra.mxu0 0.0
        %5285 = vmatprep.subr.mxu0 0.0
        %5286 = vmatpush1.msra.mxu0 0.0
        %5287 = vmatprep.subr.mxu0 0.0
        %5288 = vmatpush1.msra.mxu0 0.0
        %5289 = vmatprep.subr.mxu0 0.0
        %5290 = vmatpush1.msra.mxu0 0.0
        %5291 = vmatprep.subr.mxu0 0.0
        %5292 = vmatpush1.msra.mxu0 0.0
        %5293 = vmatprep.subr.mxu0 0.0
        %5294 = vmatpush1.msra.mxu0 0.0
        %5295 = vmatprep.subr.mxu0 0.0
        %5296 = vmatpush1.msra.mxu0 0.0
        %5297 = vmatprep.subr.mxu0 0.0
        %5298 = vmatpush1.msra.mxu0 0.0
        %5299 = vmatprep.subr.mxu0 0.0
        %5300 = vmatpush1.msra.mxu0 0.0
        %5301 = vmatprep.subr.mxu0 0.0
        %5302 = vmatpush1.msra.mxu0 0.0
        %5303 = vmatprep.subr.mxu0 0.0
        %5304 = vmatpush1.msra.mxu0 0.0
        %5305 = vmatprep.subr.mxu0 0.0
        %5306 = vmatpush1.msra.mxu0 0.0
        %5307 = vmatprep.subr.mxu0 0.0
        %5308 = vmatpush1.msra.mxu0 0.0
        %5309 = vmatprep.subr.mxu0 0.0
        %5310 = vmatpush1.msra.mxu0 0.0
        %5311 = vmatprep.subr.mxu0 0.0
        %5312 = vmatpush1.msra.mxu0 0.0
        %5313 = vmatprep.subr.mxu0 0.0
        %5314 = vmatpush1.msra.mxu0 0.0
        %5315 = vmatprep.subr.mxu0 0.0
        %5316 = vmatpush1.msra.mxu0 0.0
        %5317 = vmatprep.subr.mxu0 0.0
        %5318 = vmatpush1.msra.mxu0 0.0
        %5319 = vmatprep.subr.mxu0 0.0
        %5320 = vmatpush1.msra.mxu0 0.0
        %5321 = vmatprep.subr.mxu0 0.0
        %5322 = vmatpush1.msra.mxu0 0.0
        %5323 = vmatprep.subr.mxu0 0.0
        %5324 = vmatpush1.msra.mxu0 0.0
        %5325 = vmatprep.subr.mxu0 0.0
        %5326 = vmatpush1.msra.mxu0 0.0
        %5327 = vmatprep.subr.mxu0 0.0
        %5328 = vmatpush1.msra.mxu0 0.0
        %5329 = vmatprep.subr.mxu0 0.0
        %5330 = vmatpush1.msra.mxu0 0.0
        %5331 = vmatprep.subr.mxu0 0.0
        %5332 = vmatpush1.msra.mxu0 0.0
        %5333 = vmatprep.subr.mxu0 0.0
        %5334 = vmatpush1.msra.mxu0 0.0
        %5335 = vmatprep.subr.mxu0 0.0
        %5336 = vmatpush1.msra.mxu0 0.0
        %5337 = vmatprep.subr.mxu0 0.0
        %5338 = vmatpush1.msra.mxu0 0.0
        %5339 = vmatprep.subr.mxu0 0.0
        %5340 = vmatpush1.msra.mxu0 0.0
        %5341 = vmatprep.subr.mxu0 0.0
        %5342 = vmatpush1.msra.mxu0 0.0
        %5343 = vmatprep.subr.mxu0 0.0
        %5344 = vmatpush1.msra.mxu0 0.0
        %5345 = vmatprep.mubr.f32.mxu0 0.0
        %v5346 = vand.u32 %v4880, 4294901760
        %5347 = vmatmul.mubr.f32.gmra.mrb[0].mxu0 %v5346
        %v5348 = vpop.f32.mrb[0].mxu0
        %v5349 = vadd.f32 %v5275, %v5348
        %v5350 = vpop.f32.mrb[0].mxu0
        %v5351 = vadd.f32 %v5277, %v5350
        %5352 = vdwg.mxu0
        %v5353 = vadd.f32 %v4853, %v5349
        %v5354 = vadd.f32 %v4854, %v5351
        %s5355 = scalar_lea.vmem %s4, 16
        %v5356 = vld [vmem:[%s5355] sm:$0xf]
        %5357 = vrot.lane.b32.xlu0 %v5353, 34
        %v5358 = vpop.permute.xlu0 %5357
        %5359 = vrot.lane.b32.xlu0 %v5354, 34
        %v5360 = vpop.permute.xlu0 %5359
        %v5361 = vsel %vm887, %v5358, %v5360
        %v5362 = vsel %vm887, %v5360, %v5358
        %v5363 = vmul.f32 %v5362, %v895
        %v5364 = vmul.f32 %v5361, %v899
        %v5365 = vld [vmem:[%s4] sm:$0xf]
        %v5367 = vsel %vm905, %v5365, 0
        %v5370 = vsel %vm909, %v5363, 0
        %v5373 = vsel %vm909, %v5364, 0
        %v5375 = vand.u32 %v5373, 4294901760
        %5376 = vmatprep.subr.mxu0 %v5375
        %v5377 = vand.u32 %v5370, 4294901760
        %5378 = vmatpush1.msra.mxu0 %v5377
        %5379 = vmatprep.subr.mxu0 0.0
        %5380 = vmatpush1.msra.mxu0 0.0
        %5381 = vmatprep.subr.mxu0 0.0
        %5382 = vmatpush1.msra.mxu0 0.0
        %5383 = vmatprep.subr.mxu0 0.0
        %5384 = vmatpush1.msra.mxu0 0.0
        %5385 = vmatprep.subr.mxu0 0.0
        %5386 = vmatpush1.msra.mxu0 0.0
        %5387 = vmatprep.subr.mxu0 0.0
        %5388 = vmatpush1.msra.mxu0 0.0
        %5389 = vmatprep.subr.mxu0 0.0
        %5390 = vmatpush1.msra.mxu0 0.0
        %5391 = vmatprep.subr.mxu0 0.0
        %5392 = vmatpush1.msra.mxu0 0.0
        %5393 = vmatprep.subr.mxu0 0.0
        %5394 = vmatpush1.msra.mxu0 0.0
        %5395 = vmatprep.subr.mxu0 0.0
        %5396 = vmatpush1.msra.mxu0 0.0
        %5397 = vmatprep.subr.mxu0 0.0
        %5398 = vmatpush1.msra.mxu0 0.0
        %5399 = vmatprep.subr.mxu0 0.0
        %5400 = vmatpush1.msra.mxu0 0.0
        %5401 = vmatprep.subr.mxu0 0.0
        %5402 = vmatpush1.msra.mxu0 0.0
        %5403 = vmatprep.subr.mxu0 0.0
        %5404 = vmatpush1.msra.mxu0 0.0
        %5405 = vmatprep.subr.mxu0 0.0
        %5406 = vmatpush1.msra.mxu0 0.0
        %5407 = vmatprep.subr.mxu0 0.0
        %5408 = vmatpush1.msra.mxu0 0.0
        %5409 = vmatprep.subr.mxu0 0.0
        %5410 = vmatpush1.msra.mxu0 0.0
        %5411 = vmatprep.subr.mxu0 0.0
        %5412 = vmatpush1.msra.mxu0 0.0
        %5413 = vmatprep.subr.mxu0 0.0
        %5414 = vmatpush1.msra.mxu0 0.0
        %5415 = vmatprep.subr.mxu0 0.0
        %5416 = vmatpush1.msra.mxu0 0.0
        %5417 = vmatprep.subr.mxu0 0.0
        %5418 = vmatpush1.msra.mxu0 0.0
        %5419 = vmatprep.subr.mxu0 0.0
        %5420 = vmatpush1.msra.mxu0 0.0
        %5421 = vmatprep.subr.mxu0 0.0
        %5422 = vmatpush1.msra.mxu0 0.0
        %5423 = vmatprep.subr.mxu0 0.0
        %5424 = vmatpush1.msra.mxu0 0.0
        %5425 = vmatprep.subr.mxu0 0.0
        %5426 = vmatpush1.msra.mxu0 0.0
        %5427 = vmatprep.subr.mxu0 0.0
        %5428 = vmatpush1.msra.mxu0 0.0
        %5429 = vmatprep.subr.mxu0 0.0
        %5430 = vmatpush1.msra.mxu0 0.0
        %5431 = vmatprep.subr.mxu0 0.0
        %5432 = vmatpush1.msra.mxu0 0.0
        %5433 = vmatprep.subr.mxu0 0.0
        %5434 = vmatpush1.msra.mxu0 0.0
        %5435 = vmatprep.subr.mxu0 0.0
        %5436 = vmatpush1.msra.mxu0 0.0
        %5437 = vmatprep.subr.mxu0 0.0
        %5438 = vmatpush1.msra.mxu0 0.0
        %5439 = vmatprep.subr.mxu0 0.0
        %5440 = vmatpush1.msra.mxu0 0.0
        %5441 = vmatprep.mubr.f32.mxu0 0.0
        %v5442 = vand.u32 %v5367, 4294901760
        %v5443 = vsub.f32 %v5367, %v5442
        %v5444 = vand.u32 %v5443, 4294901760
        %v5445 = vsub.f32 %v5443, %v5444
        %v5446 = vand.u32 %v5445, 4294901760
        %5447 = vmatmul.mubr.f32.gmra.mrb[0].mxu0 %v5446
        %v5448 = vpop.f32.mrb[0].mxu0
        %v5449 = vadd.f32 0.0, %v5448
        %v5450 = vpop.f32.mrb[0].mxu0
        %v5451 = vadd.f32 0.0, %v5450
        %5452 = vdwg.mxu0
        %v5453 = vand.u32 %v5373, 4294901760
        %v5454 = vsub.f32 %v5373, %v5453
        %v5455 = vand.u32 %v5454, 4294901760
        %v5456 = vsub.f32 %v5454, %v5455
        %v5457 = vand.u32 %v5456, 4294901760
        %5458 = vmatprep.subr.mxu0 %v5457
        %v5459 = vand.u32 %v5370, 4294901760
        %v5460 = vsub.f32 %v5370, %v5459
        %v5461 = vand.u32 %v5460, 4294901760
        %v5462 = vsub.f32 %v5460, %v5461
        %v5463 = vand.u32 %v5462, 4294901760
        %5464 = vmatpush1.msra.mxu0 %v5463
        %5465 = vmatprep.subr.mxu0 0.0
        %5466 = vmatpush1.msra.mxu0 0.0
        %5467 = vmatprep.subr.mxu0 0.0
        %5468 = vmatpush1.msra.mxu0 0.0
        %5469 = vmatprep.subr.mxu0 0.0
        %5470 = vmatpush1.msra.mxu0 0.0
        %5471 = vmatprep.subr.mxu0 0.0
        %5472 = vmatpush1.msra.mxu0 0.0
        %5473 = vmatprep.subr.mxu0 0.0
        %5474 = vmatpush1.msra.mxu0 0.0
        %5475 = vmatprep.subr.mxu0 0.0
        %5476 = vmatpush1.msra.mxu0 0.0
        %5477 = vmatprep.subr.mxu0 0.0
        %5478 = vmatpush1.msra.mxu0 0.0
        %5479 = vmatprep.subr.mxu0 0.0
        %5480 = vmatpush1.msra.mxu0 0.0
        %5481 = vmatprep.subr.mxu0 0.0
        %5482 = vmatpush1.msra.mxu0 0.0
        %5483 = vmatprep.subr.mxu0 0.0
        %5484 = vmatpush1.msra.mxu0 0.0
        %5485 = vmatprep.subr.mxu0 0.0
        %5486 = vmatpush1.msra.mxu0 0.0
        %5487 = vmatprep.subr.mxu0 0.0
        %5488 = vmatpush1.msra.mxu0 0.0
        %5489 = vmatprep.subr.mxu0 0.0
        %5490 = vmatpush1.msra.mxu0 0.0
        %5491 = vmatprep.subr.mxu0 0.0
        %5492 = vmatpush1.msra.mxu0 0.0
        %5493 = vmatprep.subr.mxu0 0.0
        %5494 = vmatpush1.msra.mxu0 0.0
        %5495 = vmatprep.subr.mxu0 0.0
        %5496 = vmatpush1.msra.mxu0 0.0
        %5497 = vmatprep.subr.mxu0 0.0
        %5498 = vmatpush1.msra.mxu0 0.0
        %5499 = vmatprep.subr.mxu0 0.0
        %5500 = vmatpush1.msra.mxu0 0.0
        %5501 = vmatprep.subr.mxu0 0.0
        %5502 = vmatpush1.msra.mxu0 0.0
        %5503 = vmatprep.subr.mxu0 0.0
        %5504 = vmatpush1.msra.mxu0 0.0
        %5505 = vmatprep.subr.mxu0 0.0
        %5506 = vmatpush1.msra.mxu0 0.0
        %5507 = vmatprep.subr.mxu0 0.0
        %5508 = vmatpush1.msra.mxu0 0.0
        %5509 = vmatprep.subr.mxu0 0.0
        %5510 = vmatpush1.msra.mxu0 0.0
        %5511 = vmatprep.subr.mxu0 0.0
        %5512 = vmatpush1.msra.mxu0 0.0
        %5513 = vmatprep.subr.mxu0 0.0
        %5514 = vmatpush1.msra.mxu0 0.0
        %5515 = vmatprep.subr.mxu0 0.0
        %5516 = vmatpush1.msra.mxu0 0.0
        %5517 = vmatprep.subr.mxu0 0.0
        %5518 = vmatpush1.msra.mxu0 0.0
        %5519 = vmatprep.subr.mxu0 0.0
        %5520 = vmatpush1.msra.mxu0 0.0
        %5521 = vmatprep.subr.mxu0 0.0
        %5522 = vmatpush1.msra.mxu0 0.0
        %5523 = vmatprep.subr.mxu0 0.0
        %5524 = vmatpush1.msra.mxu0 0.0
        %5525 = vmatprep.subr.mxu0 0.0
        %5526 = vmatpush1.msra.mxu0 0.0
        %5527 = vmatprep.mubr.f32.mxu0 0.0
        %v5528 = vand.u32 %v5367, 4294901760
        %5529 = vmatmul.mubr.f32.gmra.mrb[0].mxu0 %v5528
        %v5530 = vpop.f32.mrb[0].mxu0
        %v5531 = vadd.f32 %v5449, %v5530
        %v5532 = vpop.f32.mrb[0].mxu0
        %v5533 = vadd.f32 %v5451, %v5532
        %5534 = vdwg.mxu0
        %v5535 = vand.u32 %v5373, 4294901760
        %v5536 = vsub.f32 %v5373, %v5535
        %5537 = vmatprep.subr.mxu0 %v5536
        %v5538 = vand.u32 %v5370, 4294901760
        %v5539 = vsub.f32 %v5370, %v5538
        %5540 = vmatpush1.msra.mxu0 %v5539
        %5541 = vmatprep.subr.mxu0 0.0
        %5542 = vmatpush1.msra.mxu0 0.0
        %5543 = vmatprep.subr.mxu0 0.0
        %5544 = vmatpush1.msra.mxu0 0.0
        %5545 = vmatprep.subr.mxu0 0.0
        %5546 = vmatpush1.msra.mxu0 0.0
        %5547 = vmatprep.subr.mxu0 0.0
        %5548 = vmatpush1.msra.mxu0 0.0
        %5549 = vmatprep.subr.mxu0 0.0
        %5550 = vmatpush1.msra.mxu0 0.0
        %5551 = vmatprep.subr.mxu0 0.0
        %5552 = vmatpush1.msra.mxu0 0.0
        %5553 = vmatprep.subr.mxu0 0.0
        %5554 = vmatpush1.msra.mxu0 0.0
        %5555 = vmatprep.subr.mxu0 0.0
        %5556 = vmatpush1.msra.mxu0 0.0
        %5557 = vmatprep.subr.mxu0 0.0
        %5558 = vmatpush1.msra.mxu0 0.0
        %5559 = vmatprep.subr.mxu0 0.0
        %5560 = vmatpush1.msra.mxu0 0.0
        %5561 = vmatprep.subr.mxu0 0.0
        %5562 = vmatpush1.msra.mxu0 0.0
        %5563 = vmatprep.subr.mxu0 0.0
        %5564 = vmatpush1.msra.mxu0 0.0
        %5565 = vmatprep.subr.mxu0 0.0
        %5566 = vmatpush1.msra.mxu0 0.0
        %5567 = vmatprep.subr.mxu0 0.0
        %5568 = vmatpush1.msra.mxu0 0.0
        %5569 = vmatprep.subr.mxu0 0.0
        %5570 = vmatpush1.msra.mxu0 0.0
        %5571 = vmatprep.subr.mxu0 0.0
        %5572 = vmatpush1.msra.mxu0 0.0
        %5573 = vmatprep.subr.mxu0 0.0
        %5574 = vmatpush1.msra.mxu0 0.0
        %5575 = vmatprep.subr.mxu0 0.0
        %5576 = vmatpush1.msra.mxu0 0.0
        %5577 = vmatprep.subr.mxu0 0.0
        %5578 = vmatpush1.msra.mxu0 0.0
        %5579 = vmatprep.subr.mxu0 0.0
        %5580 = vmatpush1.msra.mxu0 0.0
        %5581 = vmatprep.subr.mxu0 0.0
        %5582 = vmatpush1.msra.mxu0 0.0
        %5583 = vmatprep.subr.mxu0 0.0
        %5584 = vmatpush1.msra.mxu0 0.0
        %5585 = vmatprep.subr.mxu0 0.0
        %5586 = vmatpush1.msra.mxu0 0.0
        %5587 = vmatprep.subr.mxu0 0.0
        %5588 = vmatpush1.msra.mxu0 0.0
        %5589 = vmatprep.subr.mxu0 0.0
        %5590 = vmatpush1.msra.mxu0 0.0
        %5591 = vmatprep.subr.mxu0 0.0
        %5592 = vmatpush1.msra.mxu0 0.0
        %5593 = vmatprep.subr.mxu0 0.0
        %5594 = vmatpush1.msra.mxu0 0.0
        %5595 = vmatprep.subr.mxu0 0.0
        %5596 = vmatpush1.msra.mxu0 0.0
        %5597 = vmatprep.subr.mxu0 0.0
        %5598 = vmatpush1.msra.mxu0 0.0
        %5599 = vmatprep.subr.mxu0 0.0
        %5600 = vmatpush1.msra.mxu0 0.0
        %5601 = vmatprep.subr.mxu0 0.0
        %5602 = vmatpush1.msra.mxu0 0.0
        %5603 = vmatprep.mubr.f32.mxu0 0.0
        %v5604 = vand.u32 %v5367, 4294901760
        %v5605 = vsub.f32 %v5367, %v5604
        %5606 = vmatmul.mubr.f32.gmra.mrb[0].mxu0 %v5605
        %v5607 = vpop.f32.mrb[0].mxu0
        %v5608 = vadd.f32 %v5531, %v5607
        %v5609 = vpop.f32.mrb[0].mxu0
        %v5610 = vadd.f32 %v5533, %v5609
        %5611 = vdwg.mxu0
        %v5612 = vand.u32 %v5373, 4294901760
        %5613 = vmatprep.subr.mxu0 %v5612
        %v5614 = vand.u32 %v5370, 4294901760
        %5615 = vmatpush1.msra.mxu0 %v5614
        %5616 = vmatprep.subr.mxu0 0.0
        %5617 = vmatpush1.msra.mxu0 0.0
        %5618 = vmatprep.subr.mxu0 0.0
        %5619 = vmatpush1.msra.mxu0 0.0
        %5620 = vmatprep.subr.mxu0 0.0
        %5621 = vmatpush1.msra.mxu0 0.0
        %5622 = vmatprep.subr.mxu0 0.0
        %5623 = vmatpush1.msra.mxu0 0.0
        %5624 = vmatprep.subr.mxu0 0.0
        %5625 = vmatpush1.msra.mxu0 0.0
        %5626 = vmatprep.subr.mxu0 0.0
        %5627 = vmatpush1.msra.mxu0 0.0
        %5628 = vmatprep.subr.mxu0 0.0
        %5629 = vmatpush1.msra.mxu0 0.0
        %5630 = vmatprep.subr.mxu0 0.0
        %5631 = vmatpush1.msra.mxu0 0.0
        %5632 = vmatprep.subr.mxu0 0.0
        %5633 = vmatpush1.msra.mxu0 0.0
        %5634 = vmatprep.subr.mxu0 0.0
        %5635 = vmatpush1.msra.mxu0 0.0
        %5636 = vmatprep.subr.mxu0 0.0
        %5637 = vmatpush1.msra.mxu0 0.0
        %5638 = vmatprep.subr.mxu0 0.0
        %5639 = vmatpush1.msra.mxu0 0.0
        %5640 = vmatprep.subr.mxu0 0.0
        %5641 = vmatpush1.msra.mxu0 0.0
        %5642 = vmatprep.subr.mxu0 0.0
        %5643 = vmatpush1.msra.mxu0 0.0
        %5644 = vmatprep.subr.mxu0 0.0
        %5645 = vmatpush1.msra.mxu0 0.0
        %5646 = vmatprep.subr.mxu0 0.0
        %5647 = vmatpush1.msra.mxu0 0.0
        %5648 = vmatprep.subr.mxu0 0.0
        %5649 = vmatpush1.msra.mxu0 0.0
        %5650 = vmatprep.subr.mxu0 0.0
        %5651 = vmatpush1.msra.mxu0 0.0
        %5652 = vmatprep.subr.mxu0 0.0
        %5653 = vmatpush1.msra.mxu0 0.0
        %5654 = vmatprep.subr.mxu0 0.0
        %5655 = vmatpush1.msra.mxu0 0.0
        %5656 = vmatprep.subr.mxu0 0.0
        %5657 = vmatpush1.msra.mxu0 0.0
        %5658 = vmatprep.subr.mxu0 0.0
        %5659 = vmatpush1.msra.mxu0 0.0
        %5660 = vmatprep.subr.mxu0 0.0
        %5661 = vmatpush1.msra.mxu0 0.0
        %5662 = vmatprep.subr.mxu0 0.0
        %5663 = vmatpush1.msra.mxu0 0.0
        %5664 = vmatprep.subr.mxu0 0.0
        %5665 = vmatpush1.msra.mxu0 0.0
        %5666 = vmatprep.subr.mxu0 0.0
        %5667 = vmatpush1.msra.mxu0 0.0
        %5668 = vmatprep.subr.mxu0 0.0
        %5669 = vmatpush1.msra.mxu0 0.0
        %5670 = vmatprep.subr.mxu0 0.0
        %5671 = vmatpush1.msra.mxu0 0.0
        %5672 = vmatprep.subr.mxu0 0.0
        %5673 = vmatpush1.msra.mxu0 0.0
        %5674 = vmatprep.subr.mxu0 0.0
        %5675 = vmatpush1.msra.mxu0 0.0
        %5676 = vmatprep.subr.mxu0 0.0
        %5677 = vmatpush1.msra.mxu0 0.0
        %5678 = vmatprep.mubr.f32.mxu0 0.0
        %v5679 = vand.u32 %v5367, 4294901760
        %v5680 = vsub.f32 %v5367, %v5679
        %v5681 = vand.u32 %v5680, 4294901760
        %5682 = vmatmul.mubr.f32.gmra.mrb[0].mxu0 %v5681
        %v5683 = vpop.f32.mrb[0].mxu0
        %v5684 = vadd.f32 %v5608, %v5683
        %v5685 = vpop.f32.mrb[0].mxu0
        %v5686 = vadd.f32 %v5610, %v5685
        %5687 = vdwg.mxu0
        %v5688 = vand.u32 %v5373, 4294901760
        %v5689 = vsub.f32 %v5373, %v5688
        %v5690 = vand.u32 %v5689, 4294901760
        %5691 = vmatprep.subr.mxu0 %v5690
        %v5692 = vand.u32 %v5370, 4294901760
        %v5693 = vsub.f32 %v5370, %v5692
        %v5694 = vand.u32 %v5693, 4294901760
        %5695 = vmatpush1.msra.mxu0 %v5694
        %5696 = vmatprep.subr.mxu0 0.0
        %5697 = vmatpush1.msra.mxu0 0.0
        %5698 = vmatprep.subr.mxu0 0.0
        %5699 = vmatpush1.msra.mxu0 0.0
        %5700 = vmatprep.subr.mxu0 0.0
        %5701 = vmatpush1.msra.mxu0 0.0
        %5702 = vmatprep.subr.mxu0 0.0
        %5703 = vmatpush1.msra.mxu0 0.0
        %5704 = vmatprep.subr.mxu0 0.0
        %5705 = vmatpush1.msra.mxu0 0.0
        %5706 = vmatprep.subr.mxu0 0.0
        %5707 = vmatpush1.msra.mxu0 0.0
        %5708 = vmatprep.subr.mxu0 0.0
        %5709 = vmatpush1.msra.mxu0 0.0
        %5710 = vmatprep.subr.mxu0 0.0
        %5711 = vmatpush1.msra.mxu0 0.0
        %5712 = vmatprep.subr.mxu0 0.0
        %5713 = vmatpush1.msra.mxu0 0.0
        %5714 = vmatprep.subr.mxu0 0.0
        %5715 = vmatpush1.msra.mxu0 0.0
        %5716 = vmatprep.subr.mxu0 0.0
        %5717 = vmatpush1.msra.mxu0 0.0
        %5718 = vmatprep.subr.mxu0 0.0
        %5719 = vmatpush1.msra.mxu0 0.0
        %5720 = vmatprep.subr.mxu0 0.0
        %5721 = vmatpush1.msra.mxu0 0.0
        %5722 = vmatprep.subr.mxu0 0.0
        %5723 = vmatpush1.msra.mxu0 0.0
        %5724 = vmatprep.subr.mxu0 0.0
        %5725 = vmatpush1.msra.mxu0 0.0
        %5726 = vmatprep.subr.mxu0 0.0
        %5727 = vmatpush1.msra.mxu0 0.0
        %5728 = vmatprep.subr.mxu0 0.0
        %5729 = vmatpush1.msra.mxu0 0.0
        %5730 = vmatprep.subr.mxu0 0.0
        %5731 = vmatpush1.msra.mxu0 0.0
        %5732 = vmatprep.subr.mxu0 0.0
        %5733 = vmatpush1.msra.mxu0 0.0
        %5734 = vmatprep.subr.mxu0 0.0
        %5735 = vmatpush1.msra.mxu0 0.0
        %5736 = vmatprep.subr.mxu0 0.0
        %5737 = vmatpush1.msra.mxu0 0.0
        %5738 = vmatprep.subr.mxu0 0.0
        %5739 = vmatpush1.msra.mxu0 0.0
        %5740 = vmatprep.subr.mxu0 0.0
        %5741 = vmatpush1.msra.mxu0 0.0
        %5742 = vmatprep.subr.mxu0 0.0
        %5743 = vmatpush1.msra.mxu0 0.0
        %5744 = vmatprep.subr.mxu0 0.0
        %5745 = vmatpush1.msra.mxu0 0.0
        %5746 = vmatprep.subr.mxu0 0.0
        %5747 = vmatpush1.msra.mxu0 0.0
        %5748 = vmatprep.subr.mxu0 0.0
        %5749 = vmatpush1.msra.mxu0 0.0
        %5750 = vmatprep.subr.mxu0 0.0
        %5751 = vmatpush1.msra.mxu0 0.0
        %5752 = vmatprep.subr.mxu0 0.0
        %5753 = vmatpush1.msra.mxu0 0.0
        %5754 = vmatprep.subr.mxu0 0.0
        %5755 = vmatpush1.msra.mxu0 0.0
        %5756 = vmatprep.subr.mxu0 0.0
        %5757 = vmatpush1.msra.mxu0 0.0
        %5758 = vmatprep.mubr.f32.mxu0 0.0
        %v5759 = vand.u32 %v5367, 4294901760
        %5760 = vmatmul.mubr.f32.gmra.mrb[0].mxu0 %v5759
        %v5761 = vpop.f32.mrb[0].mxu0
        %v5762 = vadd.f32 %v5684, %v5761
        %v5763 = vpop.f32.mrb[0].mxu0
        %v5764 = vadd.f32 %v5686, %v5763
        %5765 = vdwg.mxu0
        %v5766 = vand.u32 %v5373, 4294901760
        %5767 = vmatprep.subr.mxu0 %v5766
        %v5768 = vand.u32 %v5370, 4294901760
        %5769 = vmatpush1.msra.mxu0 %v5768
        %5770 = vmatprep.subr.mxu0 0.0
        %5771 = vmatpush1.msra.mxu0 0.0
        %5772 = vmatprep.subr.mxu0 0.0
        %5773 = vmatpush1.msra.mxu0 0.0
        %5774 = vmatprep.subr.mxu0 0.0
        %5775 = vmatpush1.msra.mxu0 0.0
        %5776 = vmatprep.subr.mxu0 0.0
        %5777 = vmatpush1.msra.mxu0 0.0
        %5778 = vmatprep.subr.mxu0 0.0
        %5779 = vmatpush1.msra.mxu0 0.0
        %5780 = vmatprep.subr.mxu0 0.0
        %5781 = vmatpush1.msra.mxu0 0.0
        %5782 = vmatprep.subr.mxu0 0.0
        %5783 = vmatpush1.msra.mxu0 0.0
        %5784 = vmatprep.subr.mxu0 0.0
        %5785 = vmatpush1.msra.mxu0 0.0
        %5786 = vmatprep.subr.mxu0 0.0
        %5787 = vmatpush1.msra.mxu0 0.0
        %5788 = vmatprep.subr.mxu0 0.0
        %5789 = vmatpush1.msra.mxu0 0.0
        %5790 = vmatprep.subr.mxu0 0.0
        %5791 = vmatpush1.msra.mxu0 0.0
        %5792 = vmatprep.subr.mxu0 0.0
        %5793 = vmatpush1.msra.mxu0 0.0
        %5794 = vmatprep.subr.mxu0 0.0
        %5795 = vmatpush1.msra.mxu0 0.0
        %5796 = vmatprep.subr.mxu0 0.0
        %5797 = vmatpush1.msra.mxu0 0.0
        %5798 = vmatprep.subr.mxu0 0.0
        %5799 = vmatpush1.msra.mxu0 0.0
        %5800 = vmatprep.subr.mxu0 0.0
        %5801 = vmatpush1.msra.mxu0 0.0
        %5802 = vmatprep.subr.mxu0 0.0
        %5803 = vmatpush1.msra.mxu0 0.0
        %5804 = vmatprep.subr.mxu0 0.0
        %5805 = vmatpush1.msra.mxu0 0.0
        %5806 = vmatprep.subr.mxu0 0.0
        %5807 = vmatpush1.msra.mxu0 0.0
        %5808 = vmatprep.subr.mxu0 0.0
        %5809 = vmatpush1.msra.mxu0 0.0
        %5810 = vmatprep.subr.mxu0 0.0
        %5811 = vmatpush1.msra.mxu0 0.0
        %5812 = vmatprep.subr.mxu0 0.0
        %5813 = vmatpush1.msra.mxu0 0.0
        %5814 = vmatprep.subr.mxu0 0.0
        %5815 = vmatpush1.msra.mxu0 0.0
        %5816 = vmatprep.subr.mxu0 0.0
        %5817 = vmatpush1.msra.mxu0 0.0
        %5818 = vmatprep.subr.mxu0 0.0
        %5819 = vmatpush1.msra.mxu0 0.0
        %5820 = vmatprep.subr.mxu0 0.0
        %5821 = vmatpush1.msra.mxu0 0.0
        %5822 = vmatprep.subr.mxu0 0.0
        %5823 = vmatpush1.msra.mxu0 0.0
        %5824 = vmatprep.subr.mxu0 0.0
        %5825 = vmatpush1.msra.mxu0 0.0
        %5826 = vmatprep.subr.mxu0 0.0
        %5827 = vmatpush1.msra.mxu0 0.0
        %5828 = vmatprep.subr.mxu0 0.0
        %5829 = vmatpush1.msra.mxu0 0.0
        %5830 = vmatprep.subr.mxu0 0.0
        %5831 = vmatpush1.msra.mxu0 0.0
        %5832 = vmatprep.mubr.f32.mxu0 0.0
        %v5833 = vand.u32 %v5367, 4294901760
        %5834 = vmatmul.mubr.f32.gmra.mrb[0].mxu0 %v5833
        %v5835 = vpop.f32.mrb[0].mxu0
        %v5836 = vadd.f32 %v5762, %v5835
        %v5837 = vpop.f32.mrb[0].mxu0
        %v5838 = vadd.f32 %v5764, %v5837
        %5839 = vdwg.mxu0
        %v5841 = vsel %vm905, %v5356, 0
        %v5844 = vsel %vm909, %v5353, 0
        %v5847 = vsel %vm909, %v5354, 0
        %v5849 = vand.u32 %v5847, 4294901760
        %5850 = vmatprep.subr.mxu0 %v5849
        %v5851 = vand.u32 %v5844, 4294901760
        %5852 = vmatpush1.msra.mxu0 %v5851
        %5853 = vmatprep.subr.mxu0 0.0
        %5854 = vmatpush1.msra.mxu0 0.0
        %5855 = vmatprep.subr.mxu0 0.0
        %5856 = vmatpush1.msra.mxu0 0.0
        %5857 = vmatprep.subr.mxu0 0.0
        %5858 = vmatpush1.msra.mxu0 0.0
        %5859 = vmatprep.subr.mxu0 0.0
        %5860 = vmatpush1.msra.mxu0 0.0
        %5861 = vmatprep.subr.mxu0 0.0
        %5862 = vmatpush1.msra.mxu0 0.0
        %5863 = vmatprep.subr.mxu0 0.0
        %5864 = vmatpush1.msra.mxu0 0.0
        %5865 = vmatprep.subr.mxu0 0.0
        %5866 = vmatpush1.msra.mxu0 0.0
        %5867 = vmatprep.subr.mxu0 0.0
        %5868 = vmatpush1.msra.mxu0 0.0
        %5869 = vmatprep.subr.mxu0 0.0
        %5870 = vmatpush1.msra.mxu0 0.0
        %5871 = vmatprep.subr.mxu0 0.0
        %5872 = vmatpush1.msra.mxu0 0.0
        %5873 = vmatprep.subr.mxu0 0.0
        %5874 = vmatpush1.msra.mxu0 0.0
        %5875 = vmatprep.subr.mxu0 0.0
        %5876 = vmatpush1.msra.mxu0 0.0
        %5877 = vmatprep.subr.mxu0 0.0
        %5878 = vmatpush1.msra.mxu0 0.0
        %5879 = vmatprep.subr.mxu0 0.0
        %5880 = vmatpush1.msra.mxu0 0.0
        %5881 = vmatprep.subr.mxu0 0.0
        %5882 = vmatpush1.msra.mxu0 0.0
        %5883 = vmatprep.subr.mxu0 0.0
        %5884 = vmatpush1.msra.mxu0 0.0
        %5885 = vmatprep.subr.mxu0 0.0
        %5886 = vmatpush1.msra.mxu0 0.0
        %5887 = vmatprep.subr.mxu0 0.0
        %5888 = vmatpush1.msra.mxu0 0.0
        %5889 = vmatprep.subr.mxu0 0.0
        %5890 = vmatpush1.msra.mxu0 0.0
        %5891 = vmatprep.subr.mxu0 0.0
        %5892 = vmatpush1.msra.mxu0 0.0
        %5893 = vmatprep.subr.mxu0 0.0
        %5894 = vmatpush1.msra.mxu0 0.0
        %5895 = vmatprep.subr.mxu0 0.0
        %5896 = vmatpush1.msra.mxu0 0.0
        %5897 = vmatprep.subr.mxu0 0.0
        %5898 = vmatpush1.msra.mxu0 0.0
        %5899 = vmatprep.subr.mxu0 0.0
        %5900 = vmatpush1.msra.mxu0 0.0
        %5901 = vmatprep.subr.mxu0 0.0
        %5902 = vmatpush1.msra.mxu0 0.0
        %5903 = vmatprep.subr.mxu0 0.0
        %5904 = vmatpush1.msra.mxu0 0.0
        %5905 = vmatprep.subr.mxu0 0.0
        %5906 = vmatpush1.msra.mxu0 0.0
        %5907 = vmatprep.subr.mxu0 0.0
        %5908 = vmatpush1.msra.mxu0 0.0
        %5909 = vmatprep.subr.mxu0 0.0
        %5910 = vmatpush1.msra.mxu0 0.0
        %5911 = vmatprep.subr.mxu0 0.0
        %5912 = vmatpush1.msra.mxu0 0.0
        %5913 = vmatprep.subr.mxu0 0.0
        %5914 = vmatpush1.msra.mxu0 0.0
        %5915 = vmatprep.mubr.f32.mxu0 0.0
        %v5916 = vand.u32 %v5841, 4294901760
        %v5917 = vsub.f32 %v5841, %v5916
        %v5918 = vand.u32 %v5917, 4294901760
        %v5919 = vsub.f32 %v5917, %v5918
        %v5920 = vand.u32 %v5919, 4294901760
        %5921 = vmatmul.mubr.f32.gmra.mrb[0].mxu0 %v5920
        %v5922 = vpop.f32.mrb[0].mxu0
        %v5923 = vadd.f32 %v5836, %v5922
        %v5924 = vpop.f32.mrb[0].mxu0
        %v5925 = vadd.f32 %v5838, %v5924
        %5926 = vdwg.mxu0
        %v5927 = vand.u32 %v5847, 4294901760
        %v5928 = vsub.f32 %v5847, %v5927
        %v5929 = vand.u32 %v5928, 4294901760
        %v5930 = vsub.f32 %v5928, %v5929
        %v5931 = vand.u32 %v5930, 4294901760
        %5932 = vmatprep.subr.mxu0 %v5931
        %v5933 = vand.u32 %v5844, 4294901760
        %v5934 = vsub.f32 %v5844, %v5933
        %v5935 = vand.u32 %v5934, 4294901760
        %v5936 = vsub.f32 %v5934, %v5935
        %v5937 = vand.u32 %v5936, 4294901760
        %5938 = vmatpush1.msra.mxu0 %v5937
        %5939 = vmatprep.subr.mxu0 0.0
        %5940 = vmatpush1.msra.mxu0 0.0
        %5941 = vmatprep.subr.mxu0 0.0
        %5942 = vmatpush1.msra.mxu0 0.0
        %5943 = vmatprep.subr.mxu0 0.0
        %5944 = vmatpush1.msra.mxu0 0.0
        %5945 = vmatprep.subr.mxu0 0.0
        %5946 = vmatpush1.msra.mxu0 0.0
        %5947 = vmatprep.subr.mxu0 0.0
        %5948 = vmatpush1.msra.mxu0 0.0
        %5949 = vmatprep.subr.mxu0 0.0
        %5950 = vmatpush1.msra.mxu0 0.0
        %5951 = vmatprep.subr.mxu0 0.0
        %5952 = vmatpush1.msra.mxu0 0.0
        %5953 = vmatprep.subr.mxu0 0.0
        %5954 = vmatpush1.msra.mxu0 0.0
        %5955 = vmatprep.subr.mxu0 0.0
        %5956 = vmatpush1.msra.mxu0 0.0
        %5957 = vmatprep.subr.mxu0 0.0
        %5958 = vmatpush1.msra.mxu0 0.0
        %5959 = vmatprep.subr.mxu0 0.0
        %5960 = vmatpush1.msra.mxu0 0.0
        %5961 = vmatprep.subr.mxu0 0.0
        %5962 = vmatpush1.msra.mxu0 0.0
        %5963 = vmatprep.subr.mxu0 0.0
        %5964 = vmatpush1.msra.mxu0 0.0
        %5965 = vmatprep.subr.mxu0 0.0
        %5966 = vmatpush1.msra.mxu0 0.0
        %5967 = vmatprep.subr.mxu0 0.0
        %5968 = vmatpush1.msra.mxu0 0.0
        %5969 = vmatprep.subr.mxu0 0.0
        %5970 = vmatpush1.msra.mxu0 0.0
        %5971 = vmatprep.subr.mxu0 0.0
        %5972 = vmatpush1.msra.mxu0 0.0
        %5973 = vmatprep.subr.mxu0 0.0
        %5974 = vmatpush1.msra.mxu0 0.0
        %5975 = vmatprep.subr.mxu0 0.0
        %5976 = vmatpush1.msra.mxu0 0.0
        %5977 = vmatprep.subr.mxu0 0.0
        %5978 = vmatpush1.msra.mxu0 0.0
        %5979 = vmatprep.subr.mxu0 0.0
        %5980 = vmatpush1.msra.mxu0 0.0
        %5981 = vmatprep.subr.mxu0 0.0
        %5982 = vmatpush1.msra.mxu0 0.0
        %5983 = vmatprep.subr.mxu0 0.0
        %5984 = vmatpush1.msra.mxu0 0.0
        %5985 = vmatprep.subr.mxu0 0.0
        %5986 = vmatpush1.msra.mxu0 0.0
        %5987 = vmatprep.subr.mxu0 0.0
        %5988 = vmatpush1.msra.mxu0 0.0
        %5989 = vmatprep.subr.mxu0 0.0
        %5990 = vmatpush1.msra.mxu0 0.0
        %5991 = vmatprep.subr.mxu0 0.0
        %5992 = vmatpush1.msra.mxu0 0.0
        %5993 = vmatprep.subr.mxu0 0.0
        %5994 = vmatpush1.msra.mxu0 0.0
        %5995 = vmatprep.subr.mxu0 0.0
        %5996 = vmatpush1.msra.mxu0 0.0
        %5997 = vmatprep.subr.mxu0 0.0
        %5998 = vmatpush1.msra.mxu0 0.0
        %5999 = vmatprep.subr.mxu0 0.0
        %6000 = vmatpush1.msra.mxu0 0.0
        %6001 = vmatprep.mubr.f32.mxu0 0.0
        %v6002 = vand.u32 %v5841, 4294901760
        %6003 = vmatmul.mubr.f32.gmra.mrb[0].mxu0 %v6002
        %v6004 = vpop.f32.mrb[0].mxu0
        %v6005 = vadd.f32 %v5923, %v6004
        %v6006 = vpop.f32.mrb[0].mxu0
        %v6007 = vadd.f32 %v5925, %v6006
        %6008 = vdwg.mxu0
        %v6009 = vand.u32 %v5847, 4294901760
        %v6010 = vsub.f32 %v5847, %v6009
        %6011 = vmatprep.subr.mxu0 %v6010
        %v6012 = vand.u32 %v5844, 4294901760
        %v6013 = vsub.f32 %v5844, %v6012
        %6014 = vmatpush1.msra.mxu0 %v6013
        %6015 = vmatprep.subr.mxu0 0.0
        %6016 = vmatpush1.msra.mxu0 0.0
        %6017 = vmatprep.subr.mxu0 0.0
        %6018 = vmatpush1.msra.mxu0 0.0
        %6019 = vmatprep.subr.mxu0 0.0
        %6020 = vmatpush1.msra.mxu0 0.0
        %6021 = vmatprep.subr.mxu0 0.0
        %6022 = vmatpush1.msra.mxu0 0.0
        %6023 = vmatprep.subr.mxu0 0.0
        %6024 = vmatpush1.msra.mxu0 0.0
        %6025 = vmatprep.subr.mxu0 0.0
        %6026 = vmatpush1.msra.mxu0 0.0
        %6027 = vmatprep.subr.mxu0 0.0
        %6028 = vmatpush1.msra.mxu0 0.0
        %6029 = vmatprep.subr.mxu0 0.0
        %6030 = vmatpush1.msra.mxu0 0.0
        %6031 = vmatprep.subr.mxu0 0.0
        %6032 = vmatpush1.msra.mxu0 0.0
        %6033 = vmatprep.subr.mxu0 0.0
        %6034 = vmatpush1.msra.mxu0 0.0
        %6035 = vmatprep.subr.mxu0 0.0
        %6036 = vmatpush1.msra.mxu0 0.0
        %6037 = vmatprep.subr.mxu0 0.0
        %6038 = vmatpush1.msra.mxu0 0.0
        %6039 = vmatprep.subr.mxu0 0.0
        %6040 = vmatpush1.msra.mxu0 0.0
        %6041 = vmatprep.subr.mxu0 0.0
        %6042 = vmatpush1.msra.mxu0 0.0
        %6043 = vmatprep.subr.mxu0 0.0
        %6044 = vmatpush1.msra.mxu0 0.0
        %6045 = vmatprep.subr.mxu0 0.0
        %6046 = vmatpush1.msra.mxu0 0.0
        %6047 = vmatprep.subr.mxu0 0.0
        %6048 = vmatpush1.msra.mxu0 0.0
        %6049 = vmatprep.subr.mxu0 0.0
        %6050 = vmatpush1.msra.mxu0 0.0
        %6051 = vmatprep.subr.mxu0 0.0
        %6052 = vmatpush1.msra.mxu0 0.0
        %6053 = vmatprep.subr.mxu0 0.0
        %6054 = vmatpush1.msra.mxu0 0.0
        %6055 = vmatprep.subr.mxu0 0.0
        %6056 = vmatpush1.msra.mxu0 0.0
        %6057 = vmatprep.subr.mxu0 0.0
        %6058 = vmatpush1.msra.mxu0 0.0
        %6059 = vmatprep.subr.mxu0 0.0
        %6060 = vmatpush1.msra.mxu0 0.0
        %6061 = vmatprep.subr.mxu0 0.0
        %6062 = vmatpush1.msra.mxu0 0.0
        %6063 = vmatprep.subr.mxu0 0.0
        %6064 = vmatpush1.msra.mxu0 0.0
        %6065 = vmatprep.subr.mxu0 0.0
        %6066 = vmatpush1.msra.mxu0 0.0
        %6067 = vmatprep.subr.mxu0 0.0
        %6068 = vmatpush1.msra.mxu0 0.0
        %6069 = vmatprep.subr.mxu0 0.0
        %6070 = vmatpush1.msra.mxu0 0.0
        %6071 = vmatprep.subr.mxu0 0.0
        %6072 = vmatpush1.msra.mxu0 0.0
        %6073 = vmatprep.subr.mxu0 0.0
        %6074 = vmatpush1.msra.mxu0 0.0
        %6075 = vmatprep.subr.mxu0 0.0
        %6076 = vmatpush1.msra.mxu0 0.0
        %6077 = vmatprep.mubr.f32.mxu0 0.0
        %v6078 = vand.u32 %v5841, 4294901760
        %v6079 = vsub.f32 %v5841, %v6078
        %6080 = vmatmul.mubr.f32.gmra.mrb[0].mxu0 %v6079
        %v6081 = vpop.f32.mrb[0].mxu0
        %v6082 = vadd.f32 %v6005, %v6081
        %v6083 = vpop.f32.mrb[0].mxu0
        %v6084 = vadd.f32 %v6007, %v6083
        %6085 = vdwg.mxu0
        %v6086 = vand.u32 %v5847, 4294901760
        %6087 = vmatprep.subr.mxu0 %v6086
        %v6088 = vand.u32 %v5844, 4294901760
        %6089 = vmatpush1.msra.mxu0 %v6088
        %6090 = vmatprep.subr.mxu0 0.0
        %6091 = vmatpush1.msra.mxu0 0.0
        %6092 = vmatprep.subr.mxu0 0.0
        %6093 = vmatpush1.msra.mxu0 0.0
        %6094 = vmatprep.subr.mxu0 0.0
        %6095 = vmatpush1.msra.mxu0 0.0
        %6096 = vmatprep.subr.mxu0 0.0
        %6097 = vmatpush1.msra.mxu0 0.0
        %6098 = vmatprep.subr.mxu0 0.0
        %6099 = vmatpush1.msra.mxu0 0.0
        %6100 = vmatprep.subr.mxu0 0.0
        %6101 = vmatpush1.msra.mxu0 0.0
        %6102 = vmatprep.subr.mxu0 0.0
        %6103 = vmatpush1.msra.mxu0 0.0
        %6104 = vmatprep.subr.mxu0 0.0
        %6105 = vmatpush1.msra.mxu0 0.0
        %6106 = vmatprep.subr.mxu0 0.0
        %6107 = vmatpush1.msra.mxu0 0.0
        %6108 = vmatprep.subr.mxu0 0.0
        %6109 = vmatpush1.msra.mxu0 0.0
        %6110 = vmatprep.subr.mxu0 0.0
        %6111 = vmatpush1.msra.mxu0 0.0
        %6112 = vmatprep.subr.mxu0 0.0
        %6113 = vmatpush1.msra.mxu0 0.0
        %6114 = vmatprep.subr.mxu0 0.0
        %6115 = vmatpush1.msra.mxu0 0.0
        %6116 = vmatprep.subr.mxu0 0.0
        %6117 = vmatpush1.msra.mxu0 0.0
        %6118 = vmatprep.subr.mxu0 0.0
        %6119 = vmatpush1.msra.mxu0 0.0
        %6120 = vmatprep.subr.mxu0 0.0
        %6121 = vmatpush1.msra.mxu0 0.0
        %6122 = vmatprep.subr.mxu0 0.0
        %6123 = vmatpush1.msra.mxu0 0.0
        %6124 = vmatprep.subr.mxu0 0.0
        %6125 = vmatpush1.msra.mxu0 0.0
        %6126 = vmatprep.subr.mxu0 0.0
        %6127 = vmatpush1.msra.mxu0 0.0
        %6128 = vmatprep.subr.mxu0 0.0
        %6129 = vmatpush1.msra.mxu0 0.0
        %6130 = vmatprep.subr.mxu0 0.0
        %6131 = vmatpush1.msra.mxu0 0.0
        %6132 = vmatprep.subr.mxu0 0.0
        %6133 = vmatpush1.msra.mxu0 0.0
        %6134 = vmatprep.subr.mxu0 0.0
        %6135 = vmatpush1.msra.mxu0 0.0
        %6136 = vmatprep.subr.mxu0 0.0
        %6137 = vmatpush1.msra.mxu0 0.0
        %6138 = vmatprep.subr.mxu0 0.0
        %6139 = vmatpush1.msra.mxu0 0.0
        %6140 = vmatprep.subr.mxu0 0.0
        %6141 = vmatpush1.msra.mxu0 0.0
        %6142 = vmatprep.subr.mxu0 0.0
        %6143 = vmatpush1.msra.mxu0 0.0
        %6144 = vmatprep.subr.mxu0 0.0
        %6145 = vmatpush1.msra.mxu0 0.0
        %6146 = vmatprep.subr.mxu0 0.0
        %6147 = vmatpush1.msra.mxu0 0.0
        %6148 = vmatprep.subr.mxu0 0.0
        %6149 = vmatpush1.msra.mxu0 0.0
        %6150 = vmatprep.subr.mxu0 0.0
        %6151 = vmatpush1.msra.mxu0 0.0
        %6152 = vmatprep.mubr.f32.mxu0 0.0
        %v6153 = vand.u32 %v5841, 4294901760
        %v6154 = vsub.f32 %v5841, %v6153
        %v6155 = vand.u32 %v6154, 4294901760
        %6156 = vmatmul.mubr.f32.gmra.mrb[0].mxu0 %v6155
        %v6157 = vpop.f32.mrb[0].mxu0
        %v6158 = vadd.f32 %v6082, %v6157
        %v6159 = vpop.f32.mrb[0].mxu0
        %v6160 = vadd.f32 %v6084, %v6159
        %6161 = vdwg.mxu0
        %v6162 = vand.u32 %v5847, 4294901760
        %v6163 = vsub.f32 %v5847, %v6162
        %v6164 = vand.u32 %v6163, 4294901760
        %6165 = vmatprep.subr.mxu0 %v6164
        %v6166 = vand.u32 %v5844, 4294901760
        %v6167 = vsub.f32 %v5844, %v6166
        %v6168 = vand.u32 %v6167, 4294901760
        %6169 = vmatpush1.msra.mxu0 %v6168
        %6170 = vmatprep.subr.mxu0 0.0
        %6171 = vmatpush1.msra.mxu0 0.0
        %6172 = vmatprep.subr.mxu0 0.0
        %6173 = vmatpush1.msra.mxu0 0.0
        %6174 = vmatprep.subr.mxu0 0.0
        %6175 = vmatpush1.msra.mxu0 0.0
        %6176 = vmatprep.subr.mxu0 0.0
        %6177 = vmatpush1.msra.mxu0 0.0
        %6178 = vmatprep.subr.mxu0 0.0
        %6179 = vmatpush1.msra.mxu0 0.0
        %6180 = vmatprep.subr.mxu0 0.0
        %6181 = vmatpush1.msra.mxu0 0.0
        %6182 = vmatprep.subr.mxu0 0.0
        %6183 = vmatpush1.msra.mxu0 0.0
        %6184 = vmatprep.subr.mxu0 0.0
        %6185 = vmatpush1.msra.mxu0 0.0
        %6186 = vmatprep.subr.mxu0 0.0
        %6187 = vmatpush1.msra.mxu0 0.0
        %6188 = vmatprep.subr.mxu0 0.0
        %6189 = vmatpush1.msra.mxu0 0.0
        %6190 = vmatprep.subr.mxu0 0.0
        %6191 = vmatpush1.msra.mxu0 0.0
        %6192 = vmatprep.subr.mxu0 0.0
        %6193 = vmatpush1.msra.mxu0 0.0
        %6194 = vmatprep.subr.mxu0 0.0
        %6195 = vmatpush1.msra.mxu0 0.0
        %6196 = vmatprep.subr.mxu0 0.0
        %6197 = vmatpush1.msra.mxu0 0.0
        %6198 = vmatprep.subr.mxu0 0.0
        %6199 = vmatpush1.msra.mxu0 0.0
        %6200 = vmatprep.subr.mxu0 0.0
        %6201 = vmatpush1.msra.mxu0 0.0
        %6202 = vmatprep.subr.mxu0 0.0
        %6203 = vmatpush1.msra.mxu0 0.0
        %6204 = vmatprep.subr.mxu0 0.0
        %6205 = vmatpush1.msra.mxu0 0.0
        %6206 = vmatprep.subr.mxu0 0.0
        %6207 = vmatpush1.msra.mxu0 0.0
        %6208 = vmatprep.subr.mxu0 0.0
        %6209 = vmatpush1.msra.mxu0 0.0
        %6210 = vmatprep.subr.mxu0 0.0
        %6211 = vmatpush1.msra.mxu0 0.0
        %6212 = vmatprep.subr.mxu0 0.0
        %6213 = vmatpush1.msra.mxu0 0.0
        %6214 = vmatprep.subr.mxu0 0.0
        %6215 = vmatpush1.msra.mxu0 0.0
        %6216 = vmatprep.subr.mxu0 0.0
        %6217 = vmatpush1.msra.mxu0 0.0
        %6218 = vmatprep.subr.mxu0 0.0
        %6219 = vmatpush1.msra.mxu0 0.0
        %6220 = vmatprep.subr.mxu0 0.0
        %6221 = vmatpush1.msra.mxu0 0.0
        %6222 = vmatprep.subr.mxu0 0.0
        %6223 = vmatpush1.msra.mxu0 0.0
        %6224 = vmatprep.subr.mxu0 0.0
        %6225 = vmatpush1.msra.mxu0 0.0
        %6226 = vmatprep.subr.mxu0 0.0
        %6227 = vmatpush1.msra.mxu0 0.0
        %6228 = vmatprep.subr.mxu0 0.0
        %6229 = vmatpush1.msra.mxu0 0.0
        %6230 = vmatprep.subr.mxu0 0.0
        %6231 = vmatpush1.msra.mxu0 0.0
        %6232 = vmatprep.mubr.f32.mxu0 0.0
        %v6233 = vand.u32 %v5841, 4294901760
        %6234 = vmatmul.mubr.f32.gmra.mrb[0].mxu0 %v6233
        %v6235 = vpop.f32.mrb[0].mxu0
        %v6236 = vadd.f32 %v6158, %v6235
        %v6237 = vpop.f32.mrb[0].mxu0
        %v6238 = vadd.f32 %v6160, %v6237
        %6239 = vdwg.mxu0
        %v6240 = vand.u32 %v5847, 4294901760
        %6241 = vmatprep.subr.mxu0 %v6240
        %v6242 = vand.u32 %v5844, 4294901760
        %6243 = vmatpush1.msra.mxu0 %v6242
        %6244 = vmatprep.subr.mxu0 0.0
        %6245 = vmatpush1.msra.mxu0 0.0
        %6246 = vmatprep.subr.mxu0 0.0
        %6247 = vmatpush1.msra.mxu0 0.0
        %6248 = vmatprep.subr.mxu0 0.0
        %6249 = vmatpush1.msra.mxu0 0.0
        %6250 = vmatprep.subr.mxu0 0.0
        %6251 = vmatpush1.msra.mxu0 0.0
        %6252 = vmatprep.subr.mxu0 0.0
        %6253 = vmatpush1.msra.mxu0 0.0
        %6254 = vmatprep.subr.mxu0 0.0
        %6255 = vmatpush1.msra.mxu0 0.0
        %6256 = vmatprep.subr.mxu0 0.0
        %6257 = vmatpush1.msra.mxu0 0.0
        %6258 = vmatprep.subr.mxu0 0.0
        %6259 = vmatpush1.msra.mxu0 0.0
        %6260 = vmatprep.subr.mxu0 0.0
        %6261 = vmatpush1.msra.mxu0 0.0
        %6262 = vmatprep.subr.mxu0 0.0
        %6263 = vmatpush1.msra.mxu0 0.0
        %6264 = vmatprep.subr.mxu0 0.0
        %6265 = vmatpush1.msra.mxu0 0.0
        %6266 = vmatprep.subr.mxu0 0.0
        %6267 = vmatpush1.msra.mxu0 0.0
        %6268 = vmatprep.subr.mxu0 0.0
        %6269 = vmatpush1.msra.mxu0 0.0
        %6270 = vmatprep.subr.mxu0 0.0
        %6271 = vmatpush1.msra.mxu0 0.0
        %6272 = vmatprep.subr.mxu0 0.0
        %6273 = vmatpush1.msra.mxu0 0.0
        %6274 = vmatprep.subr.mxu0 0.0
        %6275 = vmatpush1.msra.mxu0 0.0
        %6276 = vmatprep.subr.mxu0 0.0
        %6277 = vmatpush1.msra.mxu0 0.0
        %6278 = vmatprep.subr.mxu0 0.0
        %6279 = vmatpush1.msra.mxu0 0.0
        %6280 = vmatprep.subr.mxu0 0.0
        %6281 = vmatpush1.msra.mxu0 0.0
        %6282 = vmatprep.subr.mxu0 0.0
        %6283 = vmatpush1.msra.mxu0 0.0
        %6284 = vmatprep.subr.mxu0 0.0
        %6285 = vmatpush1.msra.mxu0 0.0
        %6286 = vmatprep.subr.mxu0 0.0
        %6287 = vmatpush1.msra.mxu0 0.0
        %6288 = vmatprep.subr.mxu0 0.0
        %6289 = vmatpush1.msra.mxu0 0.0
        %6290 = vmatprep.subr.mxu0 0.0
        %6291 = vmatpush1.msra.mxu0 0.0
        %6292 = vmatprep.subr.mxu0 0.0
        %6293 = vmatpush1.msra.mxu0 0.0
        %6294 = vmatprep.subr.mxu0 0.0
        %6295 = vmatpush1.msra.mxu0 0.0
        %6296 = vmatprep.subr.mxu0 0.0
        %6297 = vmatpush1.msra.mxu0 0.0
        %6298 = vmatprep.subr.mxu0 0.0
        %6299 = vmatpush1.msra.mxu0 0.0
        %6300 = vmatprep.subr.mxu0 0.0
        %6301 = vmatpush1.msra.mxu0 0.0
        %6302 = vmatprep.subr.mxu0 0.0
        %6303 = vmatpush1.msra.mxu0 0.0
        %6304 = vmatprep.subr.mxu0 0.0
        %6305 = vmatpush1.msra.mxu0 0.0
        %6306 = vmatprep.mubr.f32.mxu0 0.0
        %v6307 = vand.u32 %v5841, 4294901760
        %6308 = vmatmul.mubr.f32.gmra.mrb[0].mxu0 %v6307
        %v6309 = vpop.f32.mrb[0].mxu0
        %v6310 = vadd.f32 %v6236, %v6309
        %v6311 = vpop.f32.mrb[0].mxu0
        %v6312 = vadd.f32 %v6238, %v6311
        %6313 = vdwg.mxu0
        %6314 = vrot.lane.b32.xlu0 %v5353, 32
        %v6315 = vpop.permute.xlu0 %6314
        %6316 = vrot.lane.b32.xlu0 %v5354, 32
        %v6317 = vpop.permute.xlu0 %6316
        %v6318 = vsel %vm1859, %v6315, %v6317
        %v6319 = vsel %vm1859, %v6317, %v6315
        %v6320 = vmul.f32 %v6319, %v1868
        %v6321 = vmul.f32 %v6318, %v1872
        %s6322 = scalar_lea.vmem %s4, 4
        %v6323 = vld [vmem:[%s6322] sm:$0xf]
        %v6325 = vsel %vm905, %v6323, 0
        %v6328 = vsel %vm909, %v6320, 0
        %v6331 = vsel %vm909, %v6321, 0
        %v6333 = vand.u32 %v6331, 4294901760
        %6334 = vmatprep.subr.mxu0 %v6333
        %v6335 = vand.u32 %v6328, 4294901760
        %6336 = vmatpush1.msra.mxu0 %v6335
        %6337 = vmatprep.subr.mxu0 0.0
        %6338 = vmatpush1.msra.mxu0 0.0
        %6339 = vmatprep.subr.mxu0 0.0
        %6340 = vmatpush1.msra.mxu0 0.0
        %6341 = vmatprep.subr.mxu0 0.0
        %6342 = vmatpush1.msra.mxu0 0.0
        %6343 = vmatprep.subr.mxu0 0.0
        %6344 = vmatpush1.msra.mxu0 0.0
        %6345 = vmatprep.subr.mxu0 0.0
        %6346 = vmatpush1.msra.mxu0 0.0
        %6347 = vmatprep.subr.mxu0 0.0
        %6348 = vmatpush1.msra.mxu0 0.0
        %6349 = vmatprep.subr.mxu0 0.0
        %6350 = vmatpush1.msra.mxu0 0.0
        %6351 = vmatprep.subr.mxu0 0.0
        %6352 = vmatpush1.msra.mxu0 0.0
        %6353 = vmatprep.subr.mxu0 0.0
        %6354 = vmatpush1.msra.mxu0 0.0
        %6355 = vmatprep.subr.mxu0 0.0
        %6356 = vmatpush1.msra.mxu0 0.0
        %6357 = vmatprep.subr.mxu0 0.0
        %6358 = vmatpush1.msra.mxu0 0.0
        %6359 = vmatprep.subr.mxu0 0.0
        %6360 = vmatpush1.msra.mxu0 0.0
        %6361 = vmatprep.subr.mxu0 0.0
        %6362 = vmatpush1.msra.mxu0 0.0
        %6363 = vmatprep.subr.mxu0 0.0
        %6364 = vmatpush1.msra.mxu0 0.0
        %6365 = vmatprep.subr.mxu0 0.0
        %6366 = vmatpush1.msra.mxu0 0.0
        %6367 = vmatprep.subr.mxu0 0.0
        %6368 = vmatpush1.msra.mxu0 0.0
        %6369 = vmatprep.subr.mxu0 0.0
        %6370 = vmatpush1.msra.mxu0 0.0
        %6371 = vmatprep.subr.mxu0 0.0
        %6372 = vmatpush1.msra.mxu0 0.0
        %6373 = vmatprep.subr.mxu0 0.0
        %6374 = vmatpush1.msra.mxu0 0.0
        %6375 = vmatprep.subr.mxu0 0.0
        %6376 = vmatpush1.msra.mxu0 0.0
        %6377 = vmatprep.subr.mxu0 0.0
        %6378 = vmatpush1.msra.mxu0 0.0
        %6379 = vmatprep.subr.mxu0 0.0
        %6380 = vmatpush1.msra.mxu0 0.0
        %6381 = vmatprep.subr.mxu0 0.0
        %6382 = vmatpush1.msra.mxu0 0.0
        %6383 = vmatprep.subr.mxu0 0.0
        %6384 = vmatpush1.msra.mxu0 0.0
        %6385 = vmatprep.subr.mxu0 0.0
        %6386 = vmatpush1.msra.mxu0 0.0
        %6387 = vmatprep.subr.mxu0 0.0
        %6388 = vmatpush1.msra.mxu0 0.0
        %6389 = vmatprep.subr.mxu0 0.0
        %6390 = vmatpush1.msra.mxu0 0.0
        %6391 = vmatprep.subr.mxu0 0.0
        %6392 = vmatpush1.msra.mxu0 0.0
        %6393 = vmatprep.subr.mxu0 0.0
        %6394 = vmatpush1.msra.mxu0 0.0
        %6395 = vmatprep.subr.mxu0 0.0
        %6396 = vmatpush1.msra.mxu0 0.0
        %6397 = vmatprep.subr.mxu0 0.0
        %6398 = vmatpush1.msra.mxu0 0.0
        %6399 = vmatprep.mubr.f32.mxu0 0.0
        %v6400 = vand.u32 %v6325, 4294901760
        %v6401 = vsub.f32 %v6325, %v6400
        %v6402 = vand.u32 %v6401, 4294901760
        %v6403 = vsub.f32 %v6401, %v6402
        %v6404 = vand.u32 %v6403, 4294901760
        %6405 = vmatmul.mubr.f32.gmra.mrb[0].mxu0 %v6404
        %v6406 = vpop.f32.mrb[0].mxu0
        %v6407 = vadd.f32 0.0, %v6406
        %v6408 = vpop.f32.mrb[0].mxu0
        %v6409 = vadd.f32 0.0, %v6408
        %6410 = vdwg.mxu0
        %v6411 = vand.u32 %v6331, 4294901760
        %v6412 = vsub.f32 %v6331, %v6411
        %v6413 = vand.u32 %v6412, 4294901760
        %v6414 = vsub.f32 %v6412, %v6413
        %v6415 = vand.u32 %v6414, 4294901760
        %6416 = vmatprep.subr.mxu0 %v6415
        %v6417 = vand.u32 %v6328, 4294901760
        %v6418 = vsub.f32 %v6328, %v6417
        %v6419 = vand.u32 %v6418, 4294901760
        %v6420 = vsub.f32 %v6418, %v6419
        %v6421 = vand.u32 %v6420, 4294901760
        %6422 = vmatpush1.msra.mxu0 %v6421
        %6423 = vmatprep.subr.mxu0 0.0
        %6424 = vmatpush1.msra.mxu0 0.0
        %6425 = vmatprep.subr.mxu0 0.0
        %6426 = vmatpush1.msra.mxu0 0.0
        %6427 = vmatprep.subr.mxu0 0.0
        %6428 = vmatpush1.msra.mxu0 0.0
        %6429 = vmatprep.subr.mxu0 0.0
        %6430 = vmatpush1.msra.mxu0 0.0
        %6431 = vmatprep.subr.mxu0 0.0
        %6432 = vmatpush1.msra.mxu0 0.0
        %6433 = vmatprep.subr.mxu0 0.0
        %6434 = vmatpush1.msra.mxu0 0.0
        %6435 = vmatprep.subr.mxu0 0.0
        %6436 = vmatpush1.msra.mxu0 0.0
        %6437 = vmatprep.subr.mxu0 0.0
        %6438 = vmatpush1.msra.mxu0 0.0
        %6439 = vmatprep.subr.mxu0 0.0
        %6440 = vmatpush1.msra.mxu0 0.0
        %6441 = vmatprep.subr.mxu0 0.0
        %6442 = vmatpush1.msra.mxu0 0.0
        %6443 = vmatprep.subr.mxu0 0.0
        %6444 = vmatpush1.msra.mxu0 0.0
        %6445 = vmatprep.subr.mxu0 0.0
        %6446 = vmatpush1.msra.mxu0 0.0
        %6447 = vmatprep.subr.mxu0 0.0
        %6448 = vmatpush1.msra.mxu0 0.0
        %6449 = vmatprep.subr.mxu0 0.0
        %6450 = vmatpush1.msra.mxu0 0.0
        %6451 = vmatprep.subr.mxu0 0.0
        %6452 = vmatpush1.msra.mxu0 0.0
        %6453 = vmatprep.subr.mxu0 0.0
        %6454 = vmatpush1.msra.mxu0 0.0
        %6455 = vmatprep.subr.mxu0 0.0
        %6456 = vmatpush1.msra.mxu0 0.0
        %6457 = vmatprep.subr.mxu0 0.0
        %6458 = vmatpush1.msra.mxu0 0.0
        %6459 = vmatprep.subr.mxu0 0.0
        %6460 = vmatpush1.msra.mxu0 0.0
        %6461 = vmatprep.subr.mxu0 0.0
        %6462 = vmatpush1.msra.mxu0 0.0
        %6463 = vmatprep.subr.mxu0 0.0
        %6464 = vmatpush1.msra.mxu0 0.0
        %6465 = vmatprep.subr.mxu0 0.0
        %6466 = vmatpush1.msra.mxu0 0.0
        %6467 = vmatprep.subr.mxu0 0.0
        %6468 = vmatpush1.msra.mxu0 0.0
        %6469 = vmatprep.subr.mxu0 0.0
        %6470 = vmatpush1.msra.mxu0 0.0
        %6471 = vmatprep.subr.mxu0 0.0
        %6472 = vmatpush1.msra.mxu0 0.0
        %6473 = vmatprep.subr.mxu0 0.0
        %6474 = vmatpush1.msra.mxu0 0.0
        %6475 = vmatprep.subr.mxu0 0.0
        %6476 = vmatpush1.msra.mxu0 0.0
        %6477 = vmatprep.subr.mxu0 0.0
        %6478 = vmatpush1.msra.mxu0 0.0
        %6479 = vmatprep.subr.mxu0 0.0
        %6480 = vmatpush1.msra.mxu0 0.0
        %6481 = vmatprep.subr.mxu0 0.0
        %6482 = vmatpush1.msra.mxu0 0.0
        %6483 = vmatprep.subr.mxu0 0.0
        %6484 = vmatpush1.msra.mxu0 0.0
        %6485 = vmatprep.mubr.f32.mxu0 0.0
        %v6486 = vand.u32 %v6325, 4294901760
        %6487 = vmatmul.mubr.f32.gmra.mrb[0].mxu0 %v6486
        %v6488 = vpop.f32.mrb[0].mxu0
        %v6489 = vadd.f32 %v6407, %v6488
        %v6490 = vpop.f32.mrb[0].mxu0
        %v6491 = vadd.f32 %v6409, %v6490
        %6492 = vdwg.mxu0
        %v6493 = vand.u32 %v6331, 4294901760
        %v6494 = vsub.f32 %v6331, %v6493
        %6495 = vmatprep.subr.mxu0 %v6494
        %v6496 = vand.u32 %v6328, 4294901760
        %v6497 = vsub.f32 %v6328, %v6496
        %6498 = vmatpush1.msra.mxu0 %v6497
        %6499 = vmatprep.subr.mxu0 0.0
        %6500 = vmatpush1.msra.mxu0 0.0
        %6501 = vmatprep.subr.mxu0 0.0
        %6502 = vmatpush1.msra.mxu0 0.0
        %6503 = vmatprep.subr.mxu0 0.0
        %6504 = vmatpush1.msra.mxu0 0.0
        %6505 = vmatprep.subr.mxu0 0.0
        %6506 = vmatpush1.msra.mxu0 0.0
        %6507 = vmatprep.subr.mxu0 0.0
        %6508 = vmatpush1.msra.mxu0 0.0
        %6509 = vmatprep.subr.mxu0 0.0
        %6510 = vmatpush1.msra.mxu0 0.0
        %6511 = vmatprep.subr.mxu0 0.0
        %6512 = vmatpush1.msra.mxu0 0.0
        %6513 = vmatprep.subr.mxu0 0.0
        %6514 = vmatpush1.msra.mxu0 0.0
        %6515 = vmatprep.subr.mxu0 0.0
        %6516 = vmatpush1.msra.mxu0 0.0
        %6517 = vmatprep.subr.mxu0 0.0
        %6518 = vmatpush1.msra.mxu0 0.0
        %6519 = vmatprep.subr.mxu0 0.0
        %6520 = vmatpush1.msra.mxu0 0.0
        %6521 = vmatprep.subr.mxu0 0.0
        %6522 = vmatpush1.msra.mxu0 0.0
        %6523 = vmatprep.subr.mxu0 0.0
        %6524 = vmatpush1.msra.mxu0 0.0
        %6525 = vmatprep.subr.mxu0 0.0
        %6526 = vmatpush1.msra.mxu0 0.0
        %6527 = vmatprep.subr.mxu0 0.0
        %6528 = vmatpush1.msra.mxu0 0.0
        %6529 = vmatprep.subr.mxu0 0.0
        %6530 = vmatpush1.msra.mxu0 0.0
        %6531 = vmatprep.subr.mxu0 0.0
        %6532 = vmatpush1.msra.mxu0 0.0
        %6533 = vmatprep.subr.mxu0 0.0
        %6534 = vmatpush1.msra.mxu0 0.0
        %6535 = vmatprep.subr.mxu0 0.0
        %6536 = vmatpush1.msra.mxu0 0.0
        %6537 = vmatprep.subr.mxu0 0.0
        %6538 = vmatpush1.msra.mxu0 0.0
        %6539 = vmatprep.subr.mxu0 0.0
        %6540 = vmatpush1.msra.mxu0 0.0
        %6541 = vmatprep.subr.mxu0 0.0
        %6542 = vmatpush1.msra.mxu0 0.0
        %6543 = vmatprep.subr.mxu0 0.0
        %6544 = vmatpush1.msra.mxu0 0.0
        %6545 = vmatprep.subr.mxu0 0.0
        %6546 = vmatpush1.msra.mxu0 0.0
        %6547 = vmatprep.subr.mxu0 0.0
        %6548 = vmatpush1.msra.mxu0 0.0
        %6549 = vmatprep.subr.mxu0 0.0
        %6550 = vmatpush1.msra.mxu0 0.0
        %6551 = vmatprep.subr.mxu0 0.0
        %6552 = vmatpush1.msra.mxu0 0.0
        %6553 = vmatprep.subr.mxu0 0.0
        %6554 = vmatpush1.msra.mxu0 0.0
        %6555 = vmatprep.subr.mxu0 0.0
        %6556 = vmatpush1.msra.mxu0 0.0
        %6557 = vmatprep.subr.mxu0 0.0
        %6558 = vmatpush1.msra.mxu0 0.0
        %6559 = vmatprep.subr.mxu0 0.0
        %6560 = vmatpush1.msra.mxu0 0.0
        %6561 = vmatprep.mubr.f32.mxu0 0.0
        %v6562 = vand.u32 %v6325, 4294901760
        %v6563 = vsub.f32 %v6325, %v6562
        %6564 = vmatmul.mubr.f32.gmra.mrb[0].mxu0 %v6563
        %v6565 = vpop.f32.mrb[0].mxu0
        %v6566 = vadd.f32 %v6489, %v6565
        %v6567 = vpop.f32.mrb[0].mxu0
        %v6568 = vadd.f32 %v6491, %v6567
        %6569 = vdwg.mxu0
        %v6570 = vand.u32 %v6331, 4294901760
        %6571 = vmatprep.subr.mxu0 %v6570
        %v6572 = vand.u32 %v6328, 4294901760
        %6573 = vmatpush1.msra.mxu0 %v6572
        %6574 = vmatprep.subr.mxu0 0.0
        %6575 = vmatpush1.msra.mxu0 0.0
        %6576 = vmatprep.subr.mxu0 0.0
        %6577 = vmatpush1.msra.mxu0 0.0
        %6578 = vmatprep.subr.mxu0 0.0
        %6579 = vmatpush1.msra.mxu0 0.0
        %6580 = vmatprep.subr.mxu0 0.0
        %6581 = vmatpush1.msra.mxu0 0.0
        %6582 = vmatprep.subr.mxu0 0.0
        %6583 = vmatpush1.msra.mxu0 0.0
        %6584 = vmatprep.subr.mxu0 0.0
        %6585 = vmatpush1.msra.mxu0 0.0
        %6586 = vmatprep.subr.mxu0 0.0
        %6587 = vmatpush1.msra.mxu0 0.0
        %6588 = vmatprep.subr.mxu0 0.0
        %6589 = vmatpush1.msra.mxu0 0.0
        %6590 = vmatprep.subr.mxu0 0.0
        %6591 = vmatpush1.msra.mxu0 0.0
        %6592 = vmatprep.subr.mxu0 0.0
        %6593 = vmatpush1.msra.mxu0 0.0
        %6594 = vmatprep.subr.mxu0 0.0
        %6595 = vmatpush1.msra.mxu0 0.0
        %6596 = vmatprep.subr.mxu0 0.0
        %6597 = vmatpush1.msra.mxu0 0.0
        %6598 = vmatprep.subr.mxu0 0.0
        %6599 = vmatpush1.msra.mxu0 0.0
        %6600 = vmatprep.subr.mxu0 0.0
        %6601 = vmatpush1.msra.mxu0 0.0
        %6602 = vmatprep.subr.mxu0 0.0
        %6603 = vmatpush1.msra.mxu0 0.0
        %6604 = vmatprep.subr.mxu0 0.0
        %6605 = vmatpush1.msra.mxu0 0.0
        %6606 = vmatprep.subr.mxu0 0.0
        %6607 = vmatpush1.msra.mxu0 0.0
        %6608 = vmatprep.subr.mxu0 0.0
        %6609 = vmatpush1.msra.mxu0 0.0
        %6610 = vmatprep.subr.mxu0 0.0
        %6611 = vmatpush1.msra.mxu0 0.0
        %6612 = vmatprep.subr.mxu0 0.0
        %6613 = vmatpush1.msra.mxu0 0.0
        %6614 = vmatprep.subr.mxu0 0.0
        %6615 = vmatpush1.msra.mxu0 0.0
        %6616 = vmatprep.subr.mxu0 0.0
        %6617 = vmatpush1.msra.mxu0 0.0
        %6618 = vmatprep.subr.mxu0 0.0
        %6619 = vmatpush1.msra.mxu0 0.0
        %6620 = vmatprep.subr.mxu0 0.0
        %6621 = vmatpush1.msra.mxu0 0.0
        %6622 = vmatprep.subr.mxu0 0.0
        %6623 = vmatpush1.msra.mxu0 0.0
        %6624 = vmatprep.subr.mxu0 0.0
        %6625 = vmatpush1.msra.mxu0 0.0
        %6626 = vmatprep.subr.mxu0 0.0
        %6627 = vmatpush1.msra.mxu0 0.0
        %6628 = vmatprep.subr.mxu0 0.0
        %6629 = vmatpush1.msra.mxu0 0.0
        %6630 = vmatprep.subr.mxu0 0.0
        %6631 = vmatpush1.msra.mxu0 0.0
        %6632 = vmatprep.subr.mxu0 0.0
        %6633 = vmatpush1.msra.mxu0 0.0
        %6634 = vmatprep.subr.mxu0 0.0
        %6635 = vmatpush1.msra.mxu0 0.0
        %6636 = vmatprep.mubr.f32.mxu0 0.0
        %v6637 = vand.u32 %v6325, 4294901760
        %v6638 = vsub.f32 %v6325, %v6637
        %v6639 = vand.u32 %v6638, 4294901760
        %6640 = vmatmul.mubr.f32.gmra.mrb[0].mxu0 %v6639
        %v6641 = vpop.f32.mrb[0].mxu0
        %v6642 = vadd.f32 %v6566, %v6641
        %v6643 = vpop.f32.mrb[0].mxu0
        %v6644 = vadd.f32 %v6568, %v6643
        %6645 = vdwg.mxu0
        %v6646 = vand.u32 %v6331, 4294901760
        %v6647 = vsub.f32 %v6331, %v6646
        %v6648 = vand.u32 %v6647, 4294901760
        %6649 = vmatprep.subr.mxu0 %v6648
        %v6650 = vand.u32 %v6328, 4294901760
        %v6651 = vsub.f32 %v6328, %v6650
        %v6652 = vand.u32 %v6651, 4294901760
        %6653 = vmatpush1.msra.mxu0 %v6652
        %6654 = vmatprep.subr.mxu0 0.0
        %6655 = vmatpush1.msra.mxu0 0.0
        %6656 = vmatprep.subr.mxu0 0.0
        %6657 = vmatpush1.msra.mxu0 0.0
        %6658 = vmatprep.subr.mxu0 0.0
        %6659 = vmatpush1.msra.mxu0 0.0
        %6660 = vmatprep.subr.mxu0 0.0
        %6661 = vmatpush1.msra.mxu0 0.0
        %6662 = vmatprep.subr.mxu0 0.0
        %6663 = vmatpush1.msra.mxu0 0.0
        %6664 = vmatprep.subr.mxu0 0.0
        %6665 = vmatpush1.msra.mxu0 0.0
        %6666 = vmatprep.subr.mxu0 0.0
        %6667 = vmatpush1.msra.mxu0 0.0
        %6668 = vmatprep.subr.mxu0 0.0
        %6669 = vmatpush1.msra.mxu0 0.0
        %6670 = vmatprep.subr.mxu0 0.0
        %6671 = vmatpush1.msra.mxu0 0.0
        %6672 = vmatprep.subr.mxu0 0.0
        %6673 = vmatpush1.msra.mxu0 0.0
        %6674 = vmatprep.subr.mxu0 0.0
        %6675 = vmatpush1.msra.mxu0 0.0
        %6676 = vmatprep.subr.mxu0 0.0
        %6677 = vmatpush1.msra.mxu0 0.0
        %6678 = vmatprep.subr.mxu0 0.0
        %6679 = vmatpush1.msra.mxu0 0.0
        %6680 = vmatprep.subr.mxu0 0.0
        %6681 = vmatpush1.msra.mxu0 0.0
        %6682 = vmatprep.subr.mxu0 0.0
        %6683 = vmatpush1.msra.mxu0 0.0
        %6684 = vmatprep.subr.mxu0 0.0
        %6685 = vmatpush1.msra.mxu0 0.0
        %6686 = vmatprep.subr.mxu0 0.0
        %6687 = vmatpush1.msra.mxu0 0.0
        %6688 = vmatprep.subr.mxu0 0.0
        %6689 = vmatpush1.msra.mxu0 0.0
        %6690 = vmatprep.subr.mxu0 0.0
        %6691 = vmatpush1.msra.mxu0 0.0
        %6692 = vmatprep.subr.mxu0 0.0
        %6693 = vmatpush1.msra.mxu0 0.0
        %6694 = vmatprep.subr.mxu0 0.0
        %6695 = vmatpush1.msra.mxu0 0.0
        %6696 = vmatprep.subr.mxu0 0.0
        %6697 = vmatpush1.msra.mxu0 0.0
        %6698 = vmatprep.subr.mxu0 0.0
        %6699 = vmatpush1.msra.mxu0 0.0
        %6700 = vmatprep.subr.mxu0 0.0
        %6701 = vmatpush1.msra.mxu0 0.0
        %6702 = vmatprep.subr.mxu0 0.0
        %6703 = vmatpush1.msra.mxu0 0.0
        %6704 = vmatprep.subr.mxu0 0.0
        %6705 = vmatpush1.msra.mxu0 0.0
        %6706 = vmatprep.subr.mxu0 0.0
        %6707 = vmatpush1.msra.mxu0 0.0
        %6708 = vmatprep.subr.mxu0 0.0
        %6709 = vmatpush1.msra.mxu0 0.0
        %6710 = vmatprep.subr.mxu0 0.0
        %6711 = vmatpush1.msra.mxu0 0.0
        %6712 = vmatprep.subr.mxu0 0.0
        %6713 = vmatpush1.msra.mxu0 0.0
        %6714 = vmatprep.subr.mxu0 0.0
        %6715 = vmatpush1.msra.mxu0 0.0
        %6716 = vmatprep.mubr.f32.mxu0 0.0
        %v6717 = vand.u32 %v6325, 4294901760
        %6718 = vmatmul.mubr.f32.gmra.mrb[0].mxu0 %v6717
        %v6719 = vpop.f32.mrb[0].mxu0
        %v6720 = vadd.f32 %v6642, %v6719
        %v6721 = vpop.f32.mrb[0].mxu0
        %v6722 = vadd.f32 %v6644, %v6721
        %6723 = vdwg.mxu0
        %v6724 = vand.u32 %v6331, 4294901760
        %6725 = vmatprep.subr.mxu0 %v6724
        %v6726 = vand.u32 %v6328, 4294901760
        %6727 = vmatpush1.msra.mxu0 %v6726
        %6728 = vmatprep.subr.mxu0 0.0
        %6729 = vmatpush1.msra.mxu0 0.0
        %6730 = vmatprep.subr.mxu0 0.0
        %6731 = vmatpush1.msra.mxu0 0.0
        %6732 = vmatprep.subr.mxu0 0.0
        %6733 = vmatpush1.msra.mxu0 0.0
        %6734 = vmatprep.subr.mxu0 0.0
        %6735 = vmatpush1.msra.mxu0 0.0
        %6736 = vmatprep.subr.mxu0 0.0
        %6737 = vmatpush1.msra.mxu0 0.0
        %6738 = vmatprep.subr.mxu0 0.0
        %6739 = vmatpush1.msra.mxu0 0.0
        %6740 = vmatprep.subr.mxu0 0.0
        %6741 = vmatpush1.msra.mxu0 0.0
        %6742 = vmatprep.subr.mxu0 0.0
        %6743 = vmatpush1.msra.mxu0 0.0
        %6744 = vmatprep.subr.mxu0 0.0
        %6745 = vmatpush1.msra.mxu0 0.0
        %6746 = vmatprep.subr.mxu0 0.0
        %6747 = vmatpush1.msra.mxu0 0.0
        %6748 = vmatprep.subr.mxu0 0.0
        %6749 = vmatpush1.msra.mxu0 0.0
        %6750 = vmatprep.subr.mxu0 0.0
        %6751 = vmatpush1.msra.mxu0 0.0
        %6752 = vmatprep.subr.mxu0 0.0
        %6753 = vmatpush1.msra.mxu0 0.0
        %6754 = vmatprep.subr.mxu0 0.0
        %6755 = vmatpush1.msra.mxu0 0.0
        %6756 = vmatprep.subr.mxu0 0.0
        %6757 = vmatpush1.msra.mxu0 0.0
        %6758 = vmatprep.subr.mxu0 0.0
        %6759 = vmatpush1.msra.mxu0 0.0
        %6760 = vmatprep.subr.mxu0 0.0
        %6761 = vmatpush1.msra.mxu0 0.0
        %6762 = vmatprep.subr.mxu0 0.0
        %6763 = vmatpush1.msra.mxu0 0.0
        %6764 = vmatprep.subr.mxu0 0.0
        %6765 = vmatpush1.msra.mxu0 0.0
        %6766 = vmatprep.subr.mxu0 0.0
        %6767 = vmatpush1.msra.mxu0 0.0
        %6768 = vmatprep.subr.mxu0 0.0
        %6769 = vmatpush1.msra.mxu0 0.0
        %6770 = vmatprep.subr.mxu0 0.0
        %6771 = vmatpush1.msra.mxu0 0.0
        %6772 = vmatprep.subr.mxu0 0.0
        %6773 = vmatpush1.msra.mxu0 0.0
        %6774 = vmatprep.subr.mxu0 0.0
        %6775 = vmatpush1.msra.mxu0 0.0
        %6776 = vmatprep.subr.mxu0 0.0
        %6777 = vmatpush1.msra.mxu0 0.0
        %6778 = vmatprep.subr.mxu0 0.0
        %6779 = vmatpush1.msra.mxu0 0.0
        %6780 = vmatprep.subr.mxu0 0.0
        %6781 = vmatpush1.msra.mxu0 0.0
        %6782 = vmatprep.subr.mxu0 0.0
        %6783 = vmatpush1.msra.mxu0 0.0
        %6784 = vmatprep.subr.mxu0 0.0
        %6785 = vmatpush1.msra.mxu0 0.0
        %6786 = vmatprep.subr.mxu0 0.0
        %6787 = vmatpush1.msra.mxu0 0.0
        %6788 = vmatprep.subr.mxu0 0.0
        %6789 = vmatpush1.msra.mxu0 0.0
        %6790 = vmatprep.mubr.f32.mxu0 0.0
        %v6791 = vand.u32 %v6325, 4294901760
        %6792 = vmatmul.mubr.f32.gmra.mrb[0].mxu0 %v6791
        %v6793 = vpop.f32.mrb[0].mxu0
        %v6794 = vadd.f32 %v6720, %v6793
        %v6795 = vpop.f32.mrb[0].mxu0
        %v6796 = vadd.f32 %v6722, %v6795
        %6797 = vdwg.mxu0
        %v6798 = vadd.f32 %v6310, %v6794
        %v6799 = vadd.f32 %v6312, %v6796
        %6800 = vrot.lane.b32.xlu0 %v5353, 30
        %v6801 = vpop.permute.xlu0 %6800
        %6802 = vrot.lane.b32.xlu0 %v5354, 30
        %v6803 = vpop.permute.xlu0 %6802
        %v6804 = vsel %vm2359, %v6801, %v6803
        %v6805 = vsel %vm2359, %v6803, %v6801
        %v6806 = vmul.f32 %v6805, %v2368
        %v6807 = vmul.f32 %v6804, %v2372
        %s6808 = scalar_lea.vmem %s4, 8
        %v6809 = vld [vmem:[%s6808] sm:$0xf]
        %v6811 = vsel %vm905, %v6809, 0
        %v6814 = vsel %vm909, %v6806, 0
        %v6817 = vsel %vm909, %v6807, 0
        %v6819 = vand.u32 %v6817, 4294901760
        %6820 = vmatprep.subr.mxu0 %v6819
        %v6821 = vand.u32 %v6814, 4294901760
        %6822 = vmatpush1.msra.mxu0 %v6821
        %6823 = vmatprep.subr.mxu0 0.0
        %6824 = vmatpush1.msra.mxu0 0.0
        %6825 = vmatprep.subr.mxu0 0.0
        %6826 = vmatpush1.msra.mxu0 0.0
        %6827 = vmatprep.subr.mxu0 0.0
        %6828 = vmatpush1.msra.mxu0 0.0
        %6829 = vmatprep.subr.mxu0 0.0
        %6830 = vmatpush1.msra.mxu0 0.0
        %6831 = vmatprep.subr.mxu0 0.0
        %6832 = vmatpush1.msra.mxu0 0.0
        %6833 = vmatprep.subr.mxu0 0.0
        %6834 = vmatpush1.msra.mxu0 0.0
        %6835 = vmatprep.subr.mxu0 0.0
        %6836 = vmatpush1.msra.mxu0 0.0
        %6837 = vmatprep.subr.mxu0 0.0
        %6838 = vmatpush1.msra.mxu0 0.0
        %6839 = vmatprep.subr.mxu0 0.0
        %6840 = vmatpush1.msra.mxu0 0.0
        %6841 = vmatprep.subr.mxu0 0.0
        %6842 = vmatpush1.msra.mxu0 0.0
        %6843 = vmatprep.subr.mxu0 0.0
        %6844 = vmatpush1.msra.mxu0 0.0
        %6845 = vmatprep.subr.mxu0 0.0
        %6846 = vmatpush1.msra.mxu0 0.0
        %6847 = vmatprep.subr.mxu0 0.0
        %6848 = vmatpush1.msra.mxu0 0.0
        %6849 = vmatprep.subr.mxu0 0.0
        %6850 = vmatpush1.msra.mxu0 0.0
        %6851 = vmatprep.subr.mxu0 0.0
        %6852 = vmatpush1.msra.mxu0 0.0
        %6853 = vmatprep.subr.mxu0 0.0
        %6854 = vmatpush1.msra.mxu0 0.0
        %6855 = vmatprep.subr.mxu0 0.0
        %6856 = vmatpush1.msra.mxu0 0.0
        %6857 = vmatprep.subr.mxu0 0.0
        %6858 = vmatpush1.msra.mxu0 0.0
        %6859 = vmatprep.subr.mxu0 0.0
        %6860 = vmatpush1.msra.mxu0 0.0
        %6861 = vmatprep.subr.mxu0 0.0
        %6862 = vmatpush1.msra.mxu0 0.0
        %6863 = vmatprep.subr.mxu0 0.0
        %6864 = vmatpush1.msra.mxu0 0.0
        %6865 = vmatprep.subr.mxu0 0.0
        %6866 = vmatpush1.msra.mxu0 0.0
        %6867 = vmatprep.subr.mxu0 0.0
        %6868 = vmatpush1.msra.mxu0 0.0
        %6869 = vmatprep.subr.mxu0 0.0
        %6870 = vmatpush1.msra.mxu0 0.0
        %6871 = vmatprep.subr.mxu0 0.0
        %6872 = vmatpush1.msra.mxu0 0.0
        %6873 = vmatprep.subr.mxu0 0.0
        %6874 = vmatpush1.msra.mxu0 0.0
        %6875 = vmatprep.subr.mxu0 0.0
        %6876 = vmatpush1.msra.mxu0 0.0
        %6877 = vmatprep.subr.mxu0 0.0
        %6878 = vmatpush1.msra.mxu0 0.0
        %6879 = vmatprep.subr.mxu0 0.0
        %6880 = vmatpush1.msra.mxu0 0.0
        %6881 = vmatprep.subr.mxu0 0.0
        %6882 = vmatpush1.msra.mxu0 0.0
        %6883 = vmatprep.subr.mxu0 0.0
        %6884 = vmatpush1.msra.mxu0 0.0
        %6885 = vmatprep.mubr.f32.mxu0 0.0
        %v6886 = vand.u32 %v6811, 4294901760
        %v6887 = vsub.f32 %v6811, %v6886
        %v6888 = vand.u32 %v6887, 4294901760
        %v6889 = vsub.f32 %v6887, %v6888
        %v6890 = vand.u32 %v6889, 4294901760
        %6891 = vmatmul.mubr.f32.gmra.mrb[0].mxu0 %v6890
        %v6892 = vpop.f32.mrb[0].mxu0
        %v6893 = vadd.f32 0.0, %v6892
        %v6894 = vpop.f32.mrb[0].mxu0
        %v6895 = vadd.f32 0.0, %v6894
        %6896 = vdwg.mxu0
        %v6897 = vand.u32 %v6817, 4294901760
        %v6898 = vsub.f32 %v6817, %v6897
        %v6899 = vand.u32 %v6898, 4294901760
        %v6900 = vsub.f32 %v6898, %v6899
        %v6901 = vand.u32 %v6900, 4294901760
        %6902 = vmatprep.subr.mxu0 %v6901
        %v6903 = vand.u32 %v6814, 4294901760
        %v6904 = vsub.f32 %v6814, %v6903
        %v6905 = vand.u32 %v6904, 4294901760
        %v6906 = vsub.f32 %v6904, %v6905
        %v6907 = vand.u32 %v6906, 4294901760
        %6908 = vmatpush1.msra.mxu0 %v6907
        %6909 = vmatprep.subr.mxu0 0.0
        %6910 = vmatpush1.msra.mxu0 0.0
        %6911 = vmatprep.subr.mxu0 0.0
        %6912 = vmatpush1.msra.mxu0 0.0
        %6913 = vmatprep.subr.mxu0 0.0
        %6914 = vmatpush1.msra.mxu0 0.0
        %6915 = vmatprep.subr.mxu0 0.0
        %6916 = vmatpush1.msra.mxu0 0.0
        %6917 = vmatprep.subr.mxu0 0.0
        %6918 = vmatpush1.msra.mxu0 0.0
        %6919 = vmatprep.subr.mxu0 0.0
        %6920 = vmatpush1.msra.mxu0 0.0
        %6921 = vmatprep.subr.mxu0 0.0
        %6922 = vmatpush1.msra.mxu0 0.0
        %6923 = vmatprep.subr.mxu0 0.0
        %6924 = vmatpush1.msra.mxu0 0.0
        %6925 = vmatprep.subr.mxu0 0.0
        %6926 = vmatpush1.msra.mxu0 0.0
        %6927 = vmatprep.subr.mxu0 0.0
        %6928 = vmatpush1.msra.mxu0 0.0
        %6929 = vmatprep.subr.mxu0 0.0
        %6930 = vmatpush1.msra.mxu0 0.0
        %6931 = vmatprep.subr.mxu0 0.0
        %6932 = vmatpush1.msra.mxu0 0.0
        %6933 = vmatprep.subr.mxu0 0.0
        %6934 = vmatpush1.msra.mxu0 0.0
        %6935 = vmatprep.subr.mxu0 0.0
        %6936 = vmatpush1.msra.mxu0 0.0
        %6937 = vmatprep.subr.mxu0 0.0
        %6938 = vmatpush1.msra.mxu0 0.0
        %6939 = vmatprep.subr.mxu0 0.0
        %6940 = vmatpush1.msra.mxu0 0.0
        %6941 = vmatprep.subr.mxu0 0.0
        %6942 = vmatpush1.msra.mxu0 0.0
        %6943 = vmatprep.subr.mxu0 0.0
        %6944 = vmatpush1.msra.mxu0 0.0
        %6945 = vmatprep.subr.mxu0 0.0
        %6946 = vmatpush1.msra.mxu0 0.0
        %6947 = vmatprep.subr.mxu0 0.0
        %6948 = vmatpush1.msra.mxu0 0.0
        %6949 = vmatprep.subr.mxu0 0.0
        %6950 = vmatpush1.msra.mxu0 0.0
        %6951 = vmatprep.subr.mxu0 0.0
        %6952 = vmatpush1.msra.mxu0 0.0
        %6953 = vmatprep.subr.mxu0 0.0
        %6954 = vmatpush1.msra.mxu0 0.0
        %6955 = vmatprep.subr.mxu0 0.0
        %6956 = vmatpush1.msra.mxu0 0.0
        %6957 = vmatprep.subr.mxu0 0.0
        %6958 = vmatpush1.msra.mxu0 0.0
        %6959 = vmatprep.subr.mxu0 0.0
        %6960 = vmatpush1.msra.mxu0 0.0
        %6961 = vmatprep.subr.mxu0 0.0
        %6962 = vmatpush1.msra.mxu0 0.0
        %6963 = vmatprep.subr.mxu0 0.0
        %6964 = vmatpush1.msra.mxu0 0.0
        %6965 = vmatprep.subr.mxu0 0.0
        %6966 = vmatpush1.msra.mxu0 0.0
        %6967 = vmatprep.subr.mxu0 0.0
        %6968 = vmatpush1.msra.mxu0 0.0
        %6969 = vmatprep.subr.mxu0 0.0
        %6970 = vmatpush1.msra.mxu0 0.0
        %6971 = vmatprep.mubr.f32.mxu0 0.0
        %v6972 = vand.u32 %v6811, 4294901760
        %6973 = vmatmul.mubr.f32.gmra.mrb[0].mxu0 %v6972
        %v6974 = vpop.f32.mrb[0].mxu0
        %v6975 = vadd.f32 %v6893, %v6974
        %v6976 = vpop.f32.mrb[0].mxu0
        %v6977 = vadd.f32 %v6895, %v6976
        %6978 = vdwg.mxu0
        %v6979 = vand.u32 %v6817, 4294901760
        %v6980 = vsub.f32 %v6817, %v6979
        %6981 = vmatprep.subr.mxu0 %v6980
        %v6982 = vand.u32 %v6814, 4294901760
        %v6983 = vsub.f32 %v6814, %v6982
        %6984 = vmatpush1.msra.mxu0 %v6983
        %6985 = vmatprep.subr.mxu0 0.0
        %6986 = vmatpush1.msra.mxu0 0.0
        %6987 = vmatprep.subr.mxu0 0.0
        %6988 = vmatpush1.msra.mxu0 0.0
        %6989 = vmatprep.subr.mxu0 0.0
        %6990 = vmatpush1.msra.mxu0 0.0
        %6991 = vmatprep.subr.mxu0 0.0
        %6992 = vmatpush1.msra.mxu0 0.0
        %6993 = vmatprep.subr.mxu0 0.0
        %6994 = vmatpush1.msra.mxu0 0.0
        %6995 = vmatprep.subr.mxu0 0.0
        %6996 = vmatpush1.msra.mxu0 0.0
        %6997 = vmatprep.subr.mxu0 0.0
        %6998 = vmatpush1.msra.mxu0 0.0
        %6999 = vmatprep.subr.mxu0 0.0
        %7000 = vmatpush1.msra.mxu0 0.0
        %7001 = vmatprep.subr.mxu0 0.0
        %7002 = vmatpush1.msra.mxu0 0.0
        %7003 = vmatprep.subr.mxu0 0.0
        %7004 = vmatpush1.msra.mxu0 0.0
        %7005 = vmatprep.subr.mxu0 0.0
        %7006 = vmatpush1.msra.mxu0 0.0
        %7007 = vmatprep.subr.mxu0 0.0
        %7008 = vmatpush1.msra.mxu0 0.0
        %7009 = vmatprep.subr.mxu0 0.0
        %7010 = vmatpush1.msra.mxu0 0.0
        %7011 = vmatprep.subr.mxu0 0.0
        %7012 = vmatpush1.msra.mxu0 0.0
        %7013 = vmatprep.subr.mxu0 0.0
        %7014 = vmatpush1.msra.mxu0 0.0
        %7015 = vmatprep.subr.mxu0 0.0
        %7016 = vmatpush1.msra.mxu0 0.0
        %7017 = vmatprep.subr.mxu0 0.0
        %7018 = vmatpush1.msra.mxu0 0.0
        %7019 = vmatprep.subr.mxu0 0.0
        %7020 = vmatpush1.msra.mxu0 0.0
        %7021 = vmatprep.subr.mxu0 0.0
        %7022 = vmatpush1.msra.mxu0 0.0
        %7023 = vmatprep.subr.mxu0 0.0
        %7024 = vmatpush1.msra.mxu0 0.0
        %7025 = vmatprep.subr.mxu0 0.0
        %7026 = vmatpush1.msra.mxu0 0.0
        %7027 = vmatprep.subr.mxu0 0.0
        %7028 = vmatpush1.msra.mxu0 0.0
        %7029 = vmatprep.subr.mxu0 0.0
        %7030 = vmatpush1.msra.mxu0 0.0
        %7031 = vmatprep.subr.mxu0 0.0
        %7032 = vmatpush1.msra.mxu0 0.0
        %7033 = vmatprep.subr.mxu0 0.0
        %7034 = vmatpush1.msra.mxu0 0.0
        %7035 = vmatprep.subr.mxu0 0.0
        %7036 = vmatpush1.msra.mxu0 0.0
        %7037 = vmatprep.subr.mxu0 0.0
        %7038 = vmatpush1.msra.mxu0 0.0
        %7039 = vmatprep.subr.mxu0 0.0
        %7040 = vmatpush1.msra.mxu0 0.0
        %7041 = vmatprep.subr.mxu0 0.0
        %7042 = vmatpush1.msra.mxu0 0.0
        %7043 = vmatprep.subr.mxu0 0.0
        %7044 = vmatpush1.msra.mxu0 0.0
        %7045 = vmatprep.subr.mxu0 0.0
        %7046 = vmatpush1.msra.mxu0 0.0
        %7047 = vmatprep.mubr.f32.mxu0 0.0
        %v7048 = vand.u32 %v6811, 4294901760
        %v7049 = vsub.f32 %v6811, %v7048
        %7050 = vmatmul.mubr.f32.gmra.mrb[0].mxu0 %v7049
        %v7051 = vpop.f32.mrb[0].mxu0
        %v7052 = vadd.f32 %v6975, %v7051
        %v7053 = vpop.f32.mrb[0].mxu0
        %v7054 = vadd.f32 %v6977, %v7053
        %7055 = vdwg.mxu0
        %v7056 = vand.u32 %v6817, 4294901760
        %7057 = vmatprep.subr.mxu0 %v7056
        %v7058 = vand.u32 %v6814, 4294901760
        %7059 = vmatpush1.msra.mxu0 %v7058
        %7060 = vmatprep.subr.mxu0 0.0
        %7061 = vmatpush1.msra.mxu0 0.0
        %7062 = vmatprep.subr.mxu0 0.0
        %7063 = vmatpush1.msra.mxu0 0.0
        %7064 = vmatprep.subr.mxu0 0.0
        %7065 = vmatpush1.msra.mxu0 0.0
        %7066 = vmatprep.subr.mxu0 0.0
        %7067 = vmatpush1.msra.mxu0 0.0
        %7068 = vmatprep.subr.mxu0 0.0
        %7069 = vmatpush1.msra.mxu0 0.0
        %7070 = vmatprep.subr.mxu0 0.0
        %7071 = vmatpush1.msra.mxu0 0.0
        %7072 = vmatprep.subr.mxu0 0.0
        %7073 = vmatpush1.msra.mxu0 0.0
        %7074 = vmatprep.subr.mxu0 0.0
        %7075 = vmatpush1.msra.mxu0 0.0
        %7076 = vmatprep.subr.mxu0 0.0
        %7077 = vmatpush1.msra.mxu0 0.0
        %7078 = vmatprep.subr.mxu0 0.0
        %7079 = vmatpush1.msra.mxu0 0.0
        %7080 = vmatprep.subr.mxu0 0.0
        %7081 = vmatpush1.msra.mxu0 0.0
        %7082 = vmatprep.subr.mxu0 0.0
        %7083 = vmatpush1.msra.mxu0 0.0
        %7084 = vmatprep.subr.mxu0 0.0
        %7085 = vmatpush1.msra.mxu0 0.0
        %7086 = vmatprep.subr.mxu0 0.0
        %7087 = vmatpush1.msra.mxu0 0.0
        %7088 = vmatprep.subr.mxu0 0.0
        %7089 = vmatpush1.msra.mxu0 0.0
        %7090 = vmatprep.subr.mxu0 0.0
        %7091 = vmatpush1.msra.mxu0 0.0
        %7092 = vmatprep.subr.mxu0 0.0
        %7093 = vmatpush1.msra.mxu0 0.0
        %7094 = vmatprep.subr.mxu0 0.0
        %7095 = vmatpush1.msra.mxu0 0.0
        %7096 = vmatprep.subr.mxu0 0.0
        %7097 = vmatpush1.msra.mxu0 0.0
        %7098 = vmatprep.subr.mxu0 0.0
        %7099 = vmatpush1.msra.mxu0 0.0
        %7100 = vmatprep.subr.mxu0 0.0
        %7101 = vmatpush1.msra.mxu0 0.0
        %7102 = vmatprep.subr.mxu0 0.0
        %7103 = vmatpush1.msra.mxu0 0.0
        %7104 = vmatprep.subr.mxu0 0.0
        %7105 = vmatpush1.msra.mxu0 0.0
        %7106 = vmatprep.subr.mxu0 0.0
        %7107 = vmatpush1.msra.mxu0 0.0
        %7108 = vmatprep.subr.mxu0 0.0
        %7109 = vmatpush1.msra.mxu0 0.0
        %7110 = vmatprep.subr.mxu0 0.0
        %7111 = vmatpush1.msra.mxu0 0.0
        %7112 = vmatprep.subr.mxu0 0.0
        %7113 = vmatpush1.msra.mxu0 0.0
        %7114 = vmatprep.subr.mxu0 0.0
        %7115 = vmatpush1.msra.mxu0 0.0
        %7116 = vmatprep.subr.mxu0 0.0
        %7117 = vmatpush1.msra.mxu0 0.0
        %7118 = vmatprep.subr.mxu0 0.0
        %7119 = vmatpush1.msra.mxu0 0.0
        %7120 = vmatprep.subr.mxu0 0.0
        %7121 = vmatpush1.msra.mxu0 0.0
        %7122 = vmatprep.mubr.f32.mxu0 0.0
        %v7123 = vand.u32 %v6811, 4294901760
        %v7124 = vsub.f32 %v6811, %v7123
        %v7125 = vand.u32 %v7124, 4294901760
        %7126 = vmatmul.mubr.f32.gmra.mrb[0].mxu0 %v7125
        %v7127 = vpop.f32.mrb[0].mxu0
        %v7128 = vadd.f32 %v7052, %v7127
        %v7129 = vpop.f32.mrb[0].mxu0
        %v7130 = vadd.f32 %v7054, %v7129
        %7131 = vdwg.mxu0
        %v7132 = vand.u32 %v6817, 4294901760
        %v7133 = vsub.f32 %v6817, %v7132
        %v7134 = vand.u32 %v7133, 4294901760
        %7135 = vmatprep.subr.mxu0 %v7134
        %v7136 = vand.u32 %v6814, 4294901760
        %v7137 = vsub.f32 %v6814, %v7136
        %v7138 = vand.u32 %v7137, 4294901760
        %7139 = vmatpush1.msra.mxu0 %v7138
        %7140 = vmatprep.subr.mxu0 0.0
        %7141 = vmatpush1.msra.mxu0 0.0
        %7142 = vmatprep.subr.mxu0 0.0
        %7143 = vmatpush1.msra.mxu0 0.0
        %7144 = vmatprep.subr.mxu0 0.0
        %7145 = vmatpush1.msra.mxu0 0.0
        %7146 = vmatprep.subr.mxu0 0.0
        %7147 = vmatpush1.msra.mxu0 0.0
        %7148 = vmatprep.subr.mxu0 0.0
        %7149 = vmatpush1.msra.mxu0 0.0
        %7150 = vmatprep.subr.mxu0 0.0
        %7151 = vmatpush1.msra.mxu0 0.0
        %7152 = vmatprep.subr.mxu0 0.0
        %7153 = vmatpush1.msra.mxu0 0.0
        %7154 = vmatprep.subr.mxu0 0.0
        %7155 = vmatpush1.msra.mxu0 0.0
        %7156 = vmatprep.subr.mxu0 0.0
        %7157 = vmatpush1.msra.mxu0 0.0
        %7158 = vmatprep.subr.mxu0 0.0
        %7159 = vmatpush1.msra.mxu0 0.0
        %7160 = vmatprep.subr.mxu0 0.0
        %7161 = vmatpush1.msra.mxu0 0.0
        %7162 = vmatprep.subr.mxu0 0.0
        %7163 = vmatpush1.msra.mxu0 0.0
        %7164 = vmatprep.subr.mxu0 0.0
        %7165 = vmatpush1.msra.mxu0 0.0
        %7166 = vmatprep.subr.mxu0 0.0
        %7167 = vmatpush1.msra.mxu0 0.0
        %7168 = vmatprep.subr.mxu0 0.0
        %7169 = vmatpush1.msra.mxu0 0.0
        %7170 = vmatprep.subr.mxu0 0.0
        %7171 = vmatpush1.msra.mxu0 0.0
        %7172 = vmatprep.subr.mxu0 0.0
        %7173 = vmatpush1.msra.mxu0 0.0
        %7174 = vmatprep.subr.mxu0 0.0
        %7175 = vmatpush1.msra.mxu0 0.0
        %7176 = vmatprep.subr.mxu0 0.0
        %7177 = vmatpush1.msra.mxu0 0.0
        %7178 = vmatprep.subr.mxu0 0.0
        %7179 = vmatpush1.msra.mxu0 0.0
        %7180 = vmatprep.subr.mxu0 0.0
        %7181 = vmatpush1.msra.mxu0 0.0
        %7182 = vmatprep.subr.mxu0 0.0
        %7183 = vmatpush1.msra.mxu0 0.0
        %7184 = vmatprep.subr.mxu0 0.0
        %7185 = vmatpush1.msra.mxu0 0.0
        %7186 = vmatprep.subr.mxu0 0.0
        %7187 = vmatpush1.msra.mxu0 0.0
        %7188 = vmatprep.subr.mxu0 0.0
        %7189 = vmatpush1.msra.mxu0 0.0
        %7190 = vmatprep.subr.mxu0 0.0
        %7191 = vmatpush1.msra.mxu0 0.0
        %7192 = vmatprep.subr.mxu0 0.0
        %7193 = vmatpush1.msra.mxu0 0.0
        %7194 = vmatprep.subr.mxu0 0.0
        %7195 = vmatpush1.msra.mxu0 0.0
        %7196 = vmatprep.subr.mxu0 0.0
        %7197 = vmatpush1.msra.mxu0 0.0
        %7198 = vmatprep.subr.mxu0 0.0
        %7199 = vmatpush1.msra.mxu0 0.0
        %7200 = vmatprep.subr.mxu0 0.0
        %7201 = vmatpush1.msra.mxu0 0.0
        %7202 = vmatprep.mubr.f32.mxu0 0.0
        %v7203 = vand.u32 %v6811, 4294901760
        %7204 = vmatmul.mubr.f32.gmra.mrb[0].mxu0 %v7203
        %v7205 = vpop.f32.mrb[0].mxu0
        %v7206 = vadd.f32 %v7128, %v7205
        %v7207 = vpop.f32.mrb[0].mxu0
        %v7208 = vadd.f32 %v7130, %v7207
        %7209 = vdwg.mxu0
        %v7210 = vand.u32 %v6817, 4294901760
        %7211 = vmatprep.subr.mxu0 %v7210
        %v7212 = vand.u32 %v6814, 4294901760
        %7213 = vmatpush1.msra.mxu0 %v7212
        %7214 = vmatprep.subr.mxu0 0.0
        %7215 = vmatpush1.msra.mxu0 0.0
        %7216 = vmatprep.subr.mxu0 0.0
        %7217 = vmatpush1.msra.mxu0 0.0
        %7218 = vmatprep.subr.mxu0 0.0
        %7219 = vmatpush1.msra.mxu0 0.0
        %7220 = vmatprep.subr.mxu0 0.0
        %7221 = vmatpush1.msra.mxu0 0.0
        %7222 = vmatprep.subr.mxu0 0.0
        %7223 = vmatpush1.msra.mxu0 0.0
        %7224 = vmatprep.subr.mxu0 0.0
        %7225 = vmatpush1.msra.mxu0 0.0
        %7226 = vmatprep.subr.mxu0 0.0
        %7227 = vmatpush1.msra.mxu0 0.0
        %7228 = vmatprep.subr.mxu0 0.0
        %7229 = vmatpush1.msra.mxu0 0.0
        %7230 = vmatprep.subr.mxu0 0.0
        %7231 = vmatpush1.msra.mxu0 0.0
        %7232 = vmatprep.subr.mxu0 0.0
        %7233 = vmatpush1.msra.mxu0 0.0
        %7234 = vmatprep.subr.mxu0 0.0
        %7235 = vmatpush1.msra.mxu0 0.0
        %7236 = vmatprep.subr.mxu0 0.0
        %7237 = vmatpush1.msra.mxu0 0.0
        %7238 = vmatprep.subr.mxu0 0.0
        %7239 = vmatpush1.msra.mxu0 0.0
        %7240 = vmatprep.subr.mxu0 0.0
        %7241 = vmatpush1.msra.mxu0 0.0
        %7242 = vmatprep.subr.mxu0 0.0
        %7243 = vmatpush1.msra.mxu0 0.0
        %7244 = vmatprep.subr.mxu0 0.0
        %7245 = vmatpush1.msra.mxu0 0.0
        %7246 = vmatprep.subr.mxu0 0.0
        %7247 = vmatpush1.msra.mxu0 0.0
        %7248 = vmatprep.subr.mxu0 0.0
        %7249 = vmatpush1.msra.mxu0 0.0
        %7250 = vmatprep.subr.mxu0 0.0
        %7251 = vmatpush1.msra.mxu0 0.0
        %7252 = vmatprep.subr.mxu0 0.0
        %7253 = vmatpush1.msra.mxu0 0.0
        %7254 = vmatprep.subr.mxu0 0.0
        %7255 = vmatpush1.msra.mxu0 0.0
        %7256 = vmatprep.subr.mxu0 0.0
        %7257 = vmatpush1.msra.mxu0 0.0
        %7258 = vmatprep.subr.mxu0 0.0
        %7259 = vmatpush1.msra.mxu0 0.0
        %7260 = vmatprep.subr.mxu0 0.0
        %7261 = vmatpush1.msra.mxu0 0.0
        %7262 = vmatprep.subr.mxu0 0.0
        %7263 = vmatpush1.msra.mxu0 0.0
        %7264 = vmatprep.subr.mxu0 0.0
        %7265 = vmatpush1.msra.mxu0 0.0
        %7266 = vmatprep.subr.mxu0 0.0
        %7267 = vmatpush1.msra.mxu0 0.0
        %7268 = vmatprep.subr.mxu0 0.0
        %7269 = vmatpush1.msra.mxu0 0.0
        %7270 = vmatprep.subr.mxu0 0.0
        %7271 = vmatpush1.msra.mxu0 0.0
        %7272 = vmatprep.subr.mxu0 0.0
        %7273 = vmatpush1.msra.mxu0 0.0
        %7274 = vmatprep.subr.mxu0 0.0
        %7275 = vmatpush1.msra.mxu0 0.0
        %7276 = vmatprep.mubr.f32.mxu0 0.0
        %v7277 = vand.u32 %v6811, 4294901760
        %7278 = vmatmul.mubr.f32.gmra.mrb[0].mxu0 %v7277
        %v7279 = vpop.f32.mrb[0].mxu0
        %v7280 = vadd.f32 %v7206, %v7279
        %v7281 = vpop.f32.mrb[0].mxu0
        %v7282 = vadd.f32 %v7208, %v7281
        %7283 = vdwg.mxu0
        %v7284 = vadd.f32 %v6798, %v7280
        %v7285 = vadd.f32 %v6799, %v7282
        %7286 = vrot.lane.b32.xlu0 %v5353, 2
        %v7287 = vpop.permute.xlu0 %7286
        %7288 = vrot.lane.b32.xlu0 %v5354, 2
        %v7289 = vpop.permute.xlu0 %7288
        %v7290 = vsel %vm2859, %v7287, %v7289
        %v7291 = vsel %vm2859, %v7289, %v7287
        %v7292 = vmul.f32 %v7291, %v2868
        %v7293 = vmul.f32 %v7290, %v2872
        %s7294 = scalar_lea.vmem %s4, 12
        %v7295 = vld [vmem:[%s7294] sm:$0xf]
        %v7297 = vsel %vm905, %v7295, 0
        %v7300 = vsel %vm909, %v7292, 0
        %v7303 = vsel %vm909, %v7293, 0
        %v7305 = vand.u32 %v7303, 4294901760
        %7306 = vmatprep.subr.mxu0 %v7305
        %v7307 = vand.u32 %v7300, 4294901760
        %7308 = vmatpush1.msra.mxu0 %v7307
        %7309 = vmatprep.subr.mxu0 0.0
        %7310 = vmatpush1.msra.mxu0 0.0
        %7311 = vmatprep.subr.mxu0 0.0
        %7312 = vmatpush1.msra.mxu0 0.0
        %7313 = vmatprep.subr.mxu0 0.0
        %7314 = vmatpush1.msra.mxu0 0.0
        %7315 = vmatprep.subr.mxu0 0.0
        %7316 = vmatpush1.msra.mxu0 0.0
        %7317 = vmatprep.subr.mxu0 0.0
        %7318 = vmatpush1.msra.mxu0 0.0
        %7319 = vmatprep.subr.mxu0 0.0
        %7320 = vmatpush1.msra.mxu0 0.0
        %7321 = vmatprep.subr.mxu0 0.0
        %7322 = vmatpush1.msra.mxu0 0.0
        %7323 = vmatprep.subr.mxu0 0.0
        %7324 = vmatpush1.msra.mxu0 0.0
        %7325 = vmatprep.subr.mxu0 0.0
        %7326 = vmatpush1.msra.mxu0 0.0
        %7327 = vmatprep.subr.mxu0 0.0
        %7328 = vmatpush1.msra.mxu0 0.0
        %7329 = vmatprep.subr.mxu0 0.0
        %7330 = vmatpush1.msra.mxu0 0.0
        %7331 = vmatprep.subr.mxu0 0.0
        %7332 = vmatpush1.msra.mxu0 0.0
        %7333 = vmatprep.subr.mxu0 0.0
        %7334 = vmatpush1.msra.mxu0 0.0
        %7335 = vmatprep.subr.mxu0 0.0
        %7336 = vmatpush1.msra.mxu0 0.0
        %7337 = vmatprep.subr.mxu0 0.0
        %7338 = vmatpush1.msra.mxu0 0.0
        %7339 = vmatprep.subr.mxu0 0.0
        %7340 = vmatpush1.msra.mxu0 0.0
        %7341 = vmatprep.subr.mxu0 0.0
        %7342 = vmatpush1.msra.mxu0 0.0
        %7343 = vmatprep.subr.mxu0 0.0
        %7344 = vmatpush1.msra.mxu0 0.0
        %7345 = vmatprep.subr.mxu0 0.0
        %7346 = vmatpush1.msra.mxu0 0.0
        %7347 = vmatprep.subr.mxu0 0.0
        %7348 = vmatpush1.msra.mxu0 0.0
        %7349 = vmatprep.subr.mxu0 0.0
        %7350 = vmatpush1.msra.mxu0 0.0
        %7351 = vmatprep.subr.mxu0 0.0
        %7352 = vmatpush1.msra.mxu0 0.0
        %7353 = vmatprep.subr.mxu0 0.0
        %7354 = vmatpush1.msra.mxu0 0.0
        %7355 = vmatprep.subr.mxu0 0.0
        %7356 = vmatpush1.msra.mxu0 0.0
        %7357 = vmatprep.subr.mxu0 0.0
        %7358 = vmatpush1.msra.mxu0 0.0
        %7359 = vmatprep.subr.mxu0 0.0
        %7360 = vmatpush1.msra.mxu0 0.0
        %7361 = vmatprep.subr.mxu0 0.0
        %7362 = vmatpush1.msra.mxu0 0.0
        %7363 = vmatprep.subr.mxu0 0.0
        %7364 = vmatpush1.msra.mxu0 0.0
        %7365 = vmatprep.subr.mxu0 0.0
        %7366 = vmatpush1.msra.mxu0 0.0
        %7367 = vmatprep.subr.mxu0 0.0
        %7368 = vmatpush1.msra.mxu0 0.0
        %7369 = vmatprep.subr.mxu0 0.0
        %7370 = vmatpush1.msra.mxu0 0.0
        %7371 = vmatprep.mubr.f32.mxu0 0.0
        %v7372 = vand.u32 %v7297, 4294901760
        %v7373 = vsub.f32 %v7297, %v7372
        %v7374 = vand.u32 %v7373, 4294901760
        %v7375 = vsub.f32 %v7373, %v7374
        %v7376 = vand.u32 %v7375, 4294901760
        %7377 = vmatmul.mubr.f32.gmra.mrb[0].mxu0 %v7376
        %v7378 = vpop.f32.mrb[0].mxu0
        %v7379 = vadd.f32 0.0, %v7378
        %v7380 = vpop.f32.mrb[0].mxu0
        %v7381 = vadd.f32 0.0, %v7380
        %7382 = vdwg.mxu0
        %v7383 = vand.u32 %v7303, 4294901760
        %v7384 = vsub.f32 %v7303, %v7383
        %v7385 = vand.u32 %v7384, 4294901760
        %v7386 = vsub.f32 %v7384, %v7385
        %v7387 = vand.u32 %v7386, 4294901760
        %7388 = vmatprep.subr.mxu0 %v7387
        %v7389 = vand.u32 %v7300, 4294901760
        %v7390 = vsub.f32 %v7300, %v7389
        %v7391 = vand.u32 %v7390, 4294901760
        %v7392 = vsub.f32 %v7390, %v7391
        %v7393 = vand.u32 %v7392, 4294901760
        %7394 = vmatpush1.msra.mxu0 %v7393
        %7395 = vmatprep.subr.mxu0 0.0
        %7396 = vmatpush1.msra.mxu0 0.0
        %7397 = vmatprep.subr.mxu0 0.0
        %7398 = vmatpush1.msra.mxu0 0.0
        %7399 = vmatprep.subr.mxu0 0.0
        %7400 = vmatpush1.msra.mxu0 0.0
        %7401 = vmatprep.subr.mxu0 0.0
        %7402 = vmatpush1.msra.mxu0 0.0
        %7403 = vmatprep.subr.mxu0 0.0
        %7404 = vmatpush1.msra.mxu0 0.0
        %7405 = vmatprep.subr.mxu0 0.0
        %7406 = vmatpush1.msra.mxu0 0.0
        %7407 = vmatprep.subr.mxu0 0.0
        %7408 = vmatpush1.msra.mxu0 0.0
        %7409 = vmatprep.subr.mxu0 0.0
        %7410 = vmatpush1.msra.mxu0 0.0
        %7411 = vmatprep.subr.mxu0 0.0
        %7412 = vmatpush1.msra.mxu0 0.0
        %7413 = vmatprep.subr.mxu0 0.0
        %7414 = vmatpush1.msra.mxu0 0.0
        %7415 = vmatprep.subr.mxu0 0.0
        %7416 = vmatpush1.msra.mxu0 0.0
        %7417 = vmatprep.subr.mxu0 0.0
        %7418 = vmatpush1.msra.mxu0 0.0
        %7419 = vmatprep.subr.mxu0 0.0
        %7420 = vmatpush1.msra.mxu0 0.0
        %7421 = vmatprep.subr.mxu0 0.0
        %7422 = vmatpush1.msra.mxu0 0.0
        %7423 = vmatprep.subr.mxu0 0.0
        %7424 = vmatpush1.msra.mxu0 0.0
        %7425 = vmatprep.subr.mxu0 0.0
        %7426 = vmatpush1.msra.mxu0 0.0
        %7427 = vmatprep.subr.mxu0 0.0
        %7428 = vmatpush1.msra.mxu0 0.0
        %7429 = vmatprep.subr.mxu0 0.0
        %7430 = vmatpush1.msra.mxu0 0.0
        %7431 = vmatprep.subr.mxu0 0.0
        %7432 = vmatpush1.msra.mxu0 0.0
        %7433 = vmatprep.subr.mxu0 0.0
        %7434 = vmatpush1.msra.mxu0 0.0
        %7435 = vmatprep.subr.mxu0 0.0
        %7436 = vmatpush1.msra.mxu0 0.0
        %7437 = vmatprep.subr.mxu0 0.0
        %7438 = vmatpush1.msra.mxu0 0.0
        %7439 = vmatprep.subr.mxu0 0.0
        %7440 = vmatpush1.msra.mxu0 0.0
        %7441 = vmatprep.subr.mxu0 0.0
        %7442 = vmatpush1.msra.mxu0 0.0
        %7443 = vmatprep.subr.mxu0 0.0
        %7444 = vmatpush1.msra.mxu0 0.0
        %7445 = vmatprep.subr.mxu0 0.0
        %7446 = vmatpush1.msra.mxu0 0.0
        %7447 = vmatprep.subr.mxu0 0.0
        %7448 = vmatpush1.msra.mxu0 0.0
        %7449 = vmatprep.subr.mxu0 0.0
        %7450 = vmatpush1.msra.mxu0 0.0
        %7451 = vmatprep.subr.mxu0 0.0
        %7452 = vmatpush1.msra.mxu0 0.0
        %7453 = vmatprep.subr.mxu0 0.0
        %7454 = vmatpush1.msra.mxu0 0.0
        %7455 = vmatprep.subr.mxu0 0.0
        %7456 = vmatpush1.msra.mxu0 0.0
        %7457 = vmatprep.mubr.f32.mxu0 0.0
        %v7458 = vand.u32 %v7297, 4294901760
        %7459 = vmatmul.mubr.f32.gmra.mrb[0].mxu0 %v7458
        %v7460 = vpop.f32.mrb[0].mxu0
        %v7461 = vadd.f32 %v7379, %v7460
        %v7462 = vpop.f32.mrb[0].mxu0
        %v7463 = vadd.f32 %v7381, %v7462
        %7464 = vdwg.mxu0
        %v7465 = vand.u32 %v7303, 4294901760
        %v7466 = vsub.f32 %v7303, %v7465
        %7467 = vmatprep.subr.mxu0 %v7466
        %v7468 = vand.u32 %v7300, 4294901760
        %v7469 = vsub.f32 %v7300, %v7468
        %7470 = vmatpush1.msra.mxu0 %v7469
        %7471 = vmatprep.subr.mxu0 0.0
        %7472 = vmatpush1.msra.mxu0 0.0
        %7473 = vmatprep.subr.mxu0 0.0
        %7474 = vmatpush1.msra.mxu0 0.0
        %7475 = vmatprep.subr.mxu0 0.0
        %7476 = vmatpush1.msra.mxu0 0.0
        %7477 = vmatprep.subr.mxu0 0.0
        %7478 = vmatpush1.msra.mxu0 0.0
        %7479 = vmatprep.subr.mxu0 0.0
        %7480 = vmatpush1.msra.mxu0 0.0
        %7481 = vmatprep.subr.mxu0 0.0
        %7482 = vmatpush1.msra.mxu0 0.0
        %7483 = vmatprep.subr.mxu0 0.0
        %7484 = vmatpush1.msra.mxu0 0.0
        %7485 = vmatprep.subr.mxu0 0.0
        %7486 = vmatpush1.msra.mxu0 0.0
        %7487 = vmatprep.subr.mxu0 0.0
        %7488 = vmatpush1.msra.mxu0 0.0
        %7489 = vmatprep.subr.mxu0 0.0
        %7490 = vmatpush1.msra.mxu0 0.0
        %7491 = vmatprep.subr.mxu0 0.0
        %7492 = vmatpush1.msra.mxu0 0.0
        %7493 = vmatprep.subr.mxu0 0.0
        %7494 = vmatpush1.msra.mxu0 0.0
        %7495 = vmatprep.subr.mxu0 0.0
        %7496 = vmatpush1.msra.mxu0 0.0
        %7497 = vmatprep.subr.mxu0 0.0
        %7498 = vmatpush1.msra.mxu0 0.0
        %7499 = vmatprep.subr.mxu0 0.0
        %7500 = vmatpush1.msra.mxu0 0.0
        %7501 = vmatprep.subr.mxu0 0.0
        %7502 = vmatpush1.msra.mxu0 0.0
        %7503 = vmatprep.subr.mxu0 0.0
        %7504 = vmatpush1.msra.mxu0 0.0
        %7505 = vmatprep.subr.mxu0 0.0
        %7506 = vmatpush1.msra.mxu0 0.0
        %7507 = vmatprep.subr.mxu0 0.0
        %7508 = vmatpush1.msra.mxu0 0.0
        %7509 = vmatprep.subr.mxu0 0.0
        %7510 = vmatpush1.msra.mxu0 0.0
        %7511 = vmatprep.subr.mxu0 0.0
        %7512 = vmatpush1.msra.mxu0 0.0
        %7513 = vmatprep.subr.mxu0 0.0
        %7514 = vmatpush1.msra.mxu0 0.0
        %7515 = vmatprep.subr.mxu0 0.0
        %7516 = vmatpush1.msra.mxu0 0.0
        %7517 = vmatprep.subr.mxu0 0.0
        %7518 = vmatpush1.msra.mxu0 0.0
        %7519 = vmatprep.subr.mxu0 0.0
        %7520 = vmatpush1.msra.mxu0 0.0
        %7521 = vmatprep.subr.mxu0 0.0
        %7522 = vmatpush1.msra.mxu0 0.0
        %7523 = vmatprep.subr.mxu0 0.0
        %7524 = vmatpush1.msra.mxu0 0.0
        %7525 = vmatprep.subr.mxu0 0.0
        %7526 = vmatpush1.msra.mxu0 0.0
        %7527 = vmatprep.subr.mxu0 0.0
        %7528 = vmatpush1.msra.mxu0 0.0
        %7529 = vmatprep.subr.mxu0 0.0
        %7530 = vmatpush1.msra.mxu0 0.0
        %7531 = vmatprep.subr.mxu0 0.0
        %7532 = vmatpush1.msra.mxu0 0.0
        %7533 = vmatprep.mubr.f32.mxu0 0.0
        %v7534 = vand.u32 %v7297, 4294901760
        %v7535 = vsub.f32 %v7297, %v7534
        %7536 = vmatmul.mubr.f32.gmra.mrb[0].mxu0 %v7535
        %v7537 = vpop.f32.mrb[0].mxu0
        %v7538 = vadd.f32 %v7461, %v7537
        %v7539 = vpop.f32.mrb[0].mxu0
        %v7540 = vadd.f32 %v7463, %v7539
        %7541 = vdwg.mxu0
        %v7542 = vand.u32 %v7303, 4294901760
        %7543 = vmatprep.subr.mxu0 %v7542
        %v7544 = vand.u32 %v7300, 4294901760
        %7545 = vmatpush1.msra.mxu0 %v7544
        %7546 = vmatprep.subr.mxu0 0.0
        %7547 = vmatpush1.msra.mxu0 0.0
        %7548 = vmatprep.subr.mxu0 0.0
        %7549 = vmatpush1.msra.mxu0 0.0
        %7550 = vmatprep.subr.mxu0 0.0
        %7551 = vmatpush1.msra.mxu0 0.0
        %7552 = vmatprep.subr.mxu0 0.0
        %7553 = vmatpush1.msra.mxu0 0.0
        %7554 = vmatprep.subr.mxu0 0.0
        %7555 = vmatpush1.msra.mxu0 0.0
        %7556 = vmatprep.subr.mxu0 0.0
        %7557 = vmatpush1.msra.mxu0 0.0
        %7558 = vmatprep.subr.mxu0 0.0
        %7559 = vmatpush1.msra.mxu0 0.0
        %7560 = vmatprep.subr.mxu0 0.0
        %7561 = vmatpush1.msra.mxu0 0.0
        %7562 = vmatprep.subr.mxu0 0.0
        %7563 = vmatpush1.msra.mxu0 0.0
        %7564 = vmatprep.subr.mxu0 0.0
        %7565 = vmatpush1.msra.mxu0 0.0
        %7566 = vmatprep.subr.mxu0 0.0
        %7567 = vmatpush1.msra.mxu0 0.0
        %7568 = vmatprep.subr.mxu0 0.0
        %7569 = vmatpush1.msra.mxu0 0.0
        %7570 = vmatprep.subr.mxu0 0.0
        %7571 = vmatpush1.msra.mxu0 0.0
        %7572 = vmatprep.subr.mxu0 0.0
        %7573 = vmatpush1.msra.mxu0 0.0
        %7574 = vmatprep.subr.mxu0 0.0
        %7575 = vmatpush1.msra.mxu0 0.0
        %7576 = vmatprep.subr.mxu0 0.0
        %7577 = vmatpush1.msra.mxu0 0.0
        %7578 = vmatprep.subr.mxu0 0.0
        %7579 = vmatpush1.msra.mxu0 0.0
        %7580 = vmatprep.subr.mxu0 0.0
        %7581 = vmatpush1.msra.mxu0 0.0
        %7582 = vmatprep.subr.mxu0 0.0
        %7583 = vmatpush1.msra.mxu0 0.0
        %7584 = vmatprep.subr.mxu0 0.0
        %7585 = vmatpush1.msra.mxu0 0.0
        %7586 = vmatprep.subr.mxu0 0.0
        %7587 = vmatpush1.msra.mxu0 0.0
        %7588 = vmatprep.subr.mxu0 0.0
        %7589 = vmatpush1.msra.mxu0 0.0
        %7590 = vmatprep.subr.mxu0 0.0
        %7591 = vmatpush1.msra.mxu0 0.0
        %7592 = vmatprep.subr.mxu0 0.0
        %7593 = vmatpush1.msra.mxu0 0.0
        %7594 = vmatprep.subr.mxu0 0.0
        %7595 = vmatpush1.msra.mxu0 0.0
        %7596 = vmatprep.subr.mxu0 0.0
        %7597 = vmatpush1.msra.mxu0 0.0
        %7598 = vmatprep.subr.mxu0 0.0
        %7599 = vmatpush1.msra.mxu0 0.0
        %7600 = vmatprep.subr.mxu0 0.0
        %7601 = vmatpush1.msra.mxu0 0.0
        %7602 = vmatprep.subr.mxu0 0.0
        %7603 = vmatpush1.msra.mxu0 0.0
        %7604 = vmatprep.subr.mxu0 0.0
        %7605 = vmatpush1.msra.mxu0 0.0
        %7606 = vmatprep.subr.mxu0 0.0
        %7607 = vmatpush1.msra.mxu0 0.0
        %7608 = vmatprep.mubr.f32.mxu0 0.0
        %v7609 = vand.u32 %v7297, 4294901760
        %v7610 = vsub.f32 %v7297, %v7609
        %v7611 = vand.u32 %v7610, 4294901760
        %7612 = vmatmul.mubr.f32.gmra.mrb[0].mxu0 %v7611
        %v7613 = vpop.f32.mrb[0].mxu0
        %v7614 = vadd.f32 %v7538, %v7613
        %v7615 = vpop.f32.mrb[0].mxu0
        %v7616 = vadd.f32 %v7540, %v7615
        %7617 = vdwg.mxu0
        %v7618 = vand.u32 %v7303, 4294901760
        %v7619 = vsub.f32 %v7303, %v7618
        %v7620 = vand.u32 %v7619, 4294901760
        %7621 = vmatprep.subr.mxu0 %v7620
        %v7622 = vand.u32 %v7300, 4294901760
        %v7623 = vsub.f32 %v7300, %v7622
        %v7624 = vand.u32 %v7623, 4294901760
        %7625 = vmatpush1.msra.mxu0 %v7624
        %7626 = vmatprep.subr.mxu0 0.0
        %7627 = vmatpush1.msra.mxu0 0.0
        %7628 = vmatprep.subr.mxu0 0.0
        %7629 = vmatpush1.msra.mxu0 0.0
        %7630 = vmatprep.subr.mxu0 0.0
        %7631 = vmatpush1.msra.mxu0 0.0
        %7632 = vmatprep.subr.mxu0 0.0
        %7633 = vmatpush1.msra.mxu0 0.0
        %7634 = vmatprep.subr.mxu0 0.0
        %7635 = vmatpush1.msra.mxu0 0.0
        %7636 = vmatprep.subr.mxu0 0.0
        %7637 = vmatpush1.msra.mxu0 0.0
        %7638 = vmatprep.subr.mxu0 0.0
        %7639 = vmatpush1.msra.mxu0 0.0
        %7640 = vmatprep.subr.mxu0 0.0
        %7641 = vmatpush1.msra.mxu0 0.0
        %7642 = vmatprep.subr.mxu0 0.0
        %7643 = vmatpush1.msra.mxu0 0.0
        %7644 = vmatprep.subr.mxu0 0.0
        %7645 = vmatpush1.msra.mxu0 0.0
        %7646 = vmatprep.subr.mxu0 0.0
        %7647 = vmatpush1.msra.mxu0 0.0
        %7648 = vmatprep.subr.mxu0 0.0
        %7649 = vmatpush1.msra.mxu0 0.0
        %7650 = vmatprep.subr.mxu0 0.0
        %7651 = vmatpush1.msra.mxu0 0.0
        %7652 = vmatprep.subr.mxu0 0.0
        %7653 = vmatpush1.msra.mxu0 0.0
        %7654 = vmatprep.subr.mxu0 0.0
        %7655 = vmatpush1.msra.mxu0 0.0
        %7656 = vmatprep.subr.mxu0 0.0
        %7657 = vmatpush1.msra.mxu0 0.0
        %7658 = vmatprep.subr.mxu0 0.0
        %7659 = vmatpush1.msra.mxu0 0.0
        %7660 = vmatprep.subr.mxu0 0.0
        %7661 = vmatpush1.msra.mxu0 0.0
        %7662 = vmatprep.subr.mxu0 0.0
        %7663 = vmatpush1.msra.mxu0 0.0
        %7664 = vmatprep.subr.mxu0 0.0
        %7665 = vmatpush1.msra.mxu0 0.0
        %7666 = vmatprep.subr.mxu0 0.0
        %7667 = vmatpush1.msra.mxu0 0.0
        %7668 = vmatprep.subr.mxu0 0.0
        %7669 = vmatpush1.msra.mxu0 0.0
        %7670 = vmatprep.subr.mxu0 0.0
        %7671 = vmatpush1.msra.mxu0 0.0
        %7672 = vmatprep.subr.mxu0 0.0
        %7673 = vmatpush1.msra.mxu0 0.0
        %7674 = vmatprep.subr.mxu0 0.0
        %7675 = vmatpush1.msra.mxu0 0.0
        %7676 = vmatprep.subr.mxu0 0.0
        %7677 = vmatpush1.msra.mxu0 0.0
        %7678 = vmatprep.subr.mxu0 0.0
        %7679 = vmatpush1.msra.mxu0 0.0
        %7680 = vmatprep.subr.mxu0 0.0
        %7681 = vmatpush1.msra.mxu0 0.0
        %7682 = vmatprep.subr.mxu0 0.0
        %7683 = vmatpush1.msra.mxu0 0.0
        %7684 = vmatprep.subr.mxu0 0.0
        %7685 = vmatpush1.msra.mxu0 0.0
        %7686 = vmatprep.subr.mxu0 0.0
        %7687 = vmatpush1.msra.mxu0 0.0
        %7688 = vmatprep.mubr.f32.mxu0 0.0
        %v7689 = vand.u32 %v7297, 4294901760
        %7690 = vmatmul.mubr.f32.gmra.mrb[0].mxu0 %v7689
        %v7691 = vpop.f32.mrb[0].mxu0
        %v7692 = vadd.f32 %v7614, %v7691
        %v7693 = vpop.f32.mrb[0].mxu0
        %v7694 = vadd.f32 %v7616, %v7693
        %7695 = vdwg.mxu0
        %v7696 = vand.u32 %v7303, 4294901760
        %7697 = vmatprep.subr.mxu0 %v7696
        %v7698 = vand.u32 %v7300, 4294901760
        %7699 = vmatpush1.msra.mxu0 %v7698
        %7700 = vmatprep.subr.mxu0 0.0
        %7701 = vmatpush1.msra.mxu0 0.0
        %7702 = vmatprep.subr.mxu0 0.0
        %7703 = vmatpush1.msra.mxu0 0.0
        %7704 = vmatprep.subr.mxu0 0.0
        %7705 = vmatpush1.msra.mxu0 0.0
        %7706 = vmatprep.subr.mxu0 0.0
        %7707 = vmatpush1.msra.mxu0 0.0
        %7708 = vmatprep.subr.mxu0 0.0
        %7709 = vmatpush1.msra.mxu0 0.0
        %7710 = vmatprep.subr.mxu0 0.0
        %7711 = vmatpush1.msra.mxu0 0.0
        %7712 = vmatprep.subr.mxu0 0.0
        %7713 = vmatpush1.msra.mxu0 0.0
        %7714 = vmatprep.subr.mxu0 0.0
        %7715 = vmatpush1.msra.mxu0 0.0
        %7716 = vmatprep.subr.mxu0 0.0
        %7717 = vmatpush1.msra.mxu0 0.0
        %7718 = vmatprep.subr.mxu0 0.0
        %7719 = vmatpush1.msra.mxu0 0.0
        %7720 = vmatprep.subr.mxu0 0.0
        %7721 = vmatpush1.msra.mxu0 0.0
        %7722 = vmatprep.subr.mxu0 0.0
        %7723 = vmatpush1.msra.mxu0 0.0
        %7724 = vmatprep.subr.mxu0 0.0
        %7725 = vmatpush1.msra.mxu0 0.0
        %7726 = vmatprep.subr.mxu0 0.0
        %7727 = vmatpush1.msra.mxu0 0.0
        %7728 = vmatprep.subr.mxu0 0.0
        %7729 = vmatpush1.msra.mxu0 0.0
        %7730 = vmatprep.subr.mxu0 0.0
        %7731 = vmatpush1.msra.mxu0 0.0
        %7732 = vmatprep.subr.mxu0 0.0
        %7733 = vmatpush1.msra.mxu0 0.0
        %7734 = vmatprep.subr.mxu0 0.0
        %7735 = vmatpush1.msra.mxu0 0.0
        %7736 = vmatprep.subr.mxu0 0.0
        %7737 = vmatpush1.msra.mxu0 0.0
        %7738 = vmatprep.subr.mxu0 0.0
        %7739 = vmatpush1.msra.mxu0 0.0
        %7740 = vmatprep.subr.mxu0 0.0
        %7741 = vmatpush1.msra.mxu0 0.0
        %7742 = vmatprep.subr.mxu0 0.0
        %7743 = vmatpush1.msra.mxu0 0.0
        %7744 = vmatprep.subr.mxu0 0.0
        %7745 = vmatpush1.msra.mxu0 0.0
        %7746 = vmatprep.subr.mxu0 0.0
        %7747 = vmatpush1.msra.mxu0 0.0
        %7748 = vmatprep.subr.mxu0 0.0
        %7749 = vmatpush1.msra.mxu0 0.0
        %7750 = vmatprep.subr.mxu0 0.0
        %7751 = vmatpush1.msra.mxu0 0.0
        %7752 = vmatprep.subr.mxu0 0.0
        %7753 = vmatpush1.msra.mxu0 0.0
        %7754 = vmatprep.subr.mxu0 0.0
        %7755 = vmatpush1.msra.mxu0 0.0
        %7756 = vmatprep.subr.mxu0 0.0
        %7757 = vmatpush1.msra.mxu0 0.0
        %7758 = vmatprep.subr.mxu0 0.0
        %7759 = vmatpush1.msra.mxu0 0.0
        %7760 = vmatprep.subr.mxu0 0.0
        %7761 = vmatpush1.msra.mxu0 0.0
        %7762 = vmatprep.mubr.f32.mxu0 0.0
        %v7763 = vand.u32 %v7297, 4294901760
        %7764 = vmatmul.mubr.f32.gmra.mrb[0].mxu0 %v7763
        %v7765 = vpop.f32.mrb[0].mxu0
        %v7766 = vadd.f32 %v7692, %v7765
        %v7767 = vpop.f32.mrb[0].mxu0
        %v7768 = vadd.f32 %v7694, %v7767
        %7769 = vdwg.mxu0
        %v7770 = vadd.f32 %v7284, %v7766
        %v7771 = vadd.f32 %v7285, %v7768
        %7772 = vrot.lane.b32.xlu0 %v5353, 126
        %v7773 = vpop.permute.xlu0 %7772
        %7774 = vrot.lane.b32.xlu0 %v5354, 126
        %v7775 = vpop.permute.xlu0 %7774
        %v7776 = vsel %vm3359, %v7773, %v7775
        %v7777 = vsel %vm3359, %v7775, %v7773
        %v7778 = vmul.f32 %v7776, %v3368
        %v7779 = vmul.f32 %v7777, %v3372
        %s7780 = scalar_lea.vmem %s4, 20
        %v7781 = vld [vmem:[%s7780] sm:$0xf]
        %v7783 = vsel %vm905, %v7781, 0
        %v7786 = vsel %vm909, %v7778, 0
        %v7789 = vsel %vm909, %v7779, 0
        %v7791 = vand.u32 %v7789, 4294901760
        %7792 = vmatprep.subr.mxu0 %v7791
        %v7793 = vand.u32 %v7786, 4294901760
        %7794 = vmatpush1.msra.mxu0 %v7793
        %7795 = vmatprep.subr.mxu0 0.0
        %7796 = vmatpush1.msra.mxu0 0.0
        %7797 = vmatprep.subr.mxu0 0.0
        %7798 = vmatpush1.msra.mxu0 0.0
        %7799 = vmatprep.subr.mxu0 0.0
        %7800 = vmatpush1.msra.mxu0 0.0
        %7801 = vmatprep.subr.mxu0 0.0
        %7802 = vmatpush1.msra.mxu0 0.0
        %7803 = vmatprep.subr.mxu0 0.0
        %7804 = vmatpush1.msra.mxu0 0.0
        %7805 = vmatprep.subr.mxu0 0.0
        %7806 = vmatpush1.msra.mxu0 0.0
        %7807 = vmatprep.subr.mxu0 0.0
        %7808 = vmatpush1.msra.mxu0 0.0
        %7809 = vmatprep.subr.mxu0 0.0
        %7810 = vmatpush1.msra.mxu0 0.0
        %7811 = vmatprep.subr.mxu0 0.0
        %7812 = vmatpush1.msra.mxu0 0.0
        %7813 = vmatprep.subr.mxu0 0.0
        %7814 = vmatpush1.msra.mxu0 0.0
        %7815 = vmatprep.subr.mxu0 0.0
        %7816 = vmatpush1.msra.mxu0 0.0
        %7817 = vmatprep.subr.mxu0 0.0
        %7818 = vmatpush1.msra.mxu0 0.0
        %7819 = vmatprep.subr.mxu0 0.0
        %7820 = vmatpush1.msra.mxu0 0.0
        %7821 = vmatprep.subr.mxu0 0.0
        %7822 = vmatpush1.msra.mxu0 0.0
        %7823 = vmatprep.subr.mxu0 0.0
        %7824 = vmatpush1.msra.mxu0 0.0
        %7825 = vmatprep.subr.mxu0 0.0
        %7826 = vmatpush1.msra.mxu0 0.0
        %7827 = vmatprep.subr.mxu0 0.0
        %7828 = vmatpush1.msra.mxu0 0.0
        %7829 = vmatprep.subr.mxu0 0.0
        %7830 = vmatpush1.msra.mxu0 0.0
        %7831 = vmatprep.subr.mxu0 0.0
        %7832 = vmatpush1.msra.mxu0 0.0
        %7833 = vmatprep.subr.mxu0 0.0
        %7834 = vmatpush1.msra.mxu0 0.0
        %7835 = vmatprep.subr.mxu0 0.0
        %7836 = vmatpush1.msra.mxu0 0.0
        %7837 = vmatprep.subr.mxu0 0.0
        %7838 = vmatpush1.msra.mxu0 0.0
        %7839 = vmatprep.subr.mxu0 0.0
        %7840 = vmatpush1.msra.mxu0 0.0
        %7841 = vmatprep.subr.mxu0 0.0
        %7842 = vmatpush1.msra.mxu0 0.0
        %7843 = vmatprep.subr.mxu0 0.0
        %7844 = vmatpush1.msra.mxu0 0.0
        %7845 = vmatprep.subr.mxu0 0.0
        %7846 = vmatpush1.msra.mxu0 0.0
        %7847 = vmatprep.subr.mxu0 0.0
        %7848 = vmatpush1.msra.mxu0 0.0
        %7849 = vmatprep.subr.mxu0 0.0
        %7850 = vmatpush1.msra.mxu0 0.0
        %7851 = vmatprep.subr.mxu0 0.0
        %7852 = vmatpush1.msra.mxu0 0.0
        %7853 = vmatprep.subr.mxu0 0.0
        %7854 = vmatpush1.msra.mxu0 0.0
        %7855 = vmatprep.subr.mxu0 0.0
        %7856 = vmatpush1.msra.mxu0 0.0
        %7857 = vmatprep.mubr.f32.mxu0 0.0
        %v7858 = vand.u32 %v7783, 4294901760
        %v7859 = vsub.f32 %v7783, %v7858
        %v7860 = vand.u32 %v7859, 4294901760
        %v7861 = vsub.f32 %v7859, %v7860
        %v7862 = vand.u32 %v7861, 4294901760
        %7863 = vmatmul.mubr.f32.gmra.mrb[0].mxu0 %v7862
        %v7864 = vpop.f32.mrb[0].mxu0
        %v7865 = vadd.f32 0.0, %v7864
        %v7866 = vpop.f32.mrb[0].mxu0
        %v7867 = vadd.f32 0.0, %v7866
        %7868 = vdwg.mxu0
        %v7869 = vand.u32 %v7789, 4294901760
        %v7870 = vsub.f32 %v7789, %v7869
        %v7871 = vand.u32 %v7870, 4294901760
        %v7872 = vsub.f32 %v7870, %v7871
        %v7873 = vand.u32 %v7872, 4294901760
        %7874 = vmatprep.subr.mxu0 %v7873
        %v7875 = vand.u32 %v7786, 4294901760
        %v7876 = vsub.f32 %v7786, %v7875
        %v7877 = vand.u32 %v7876, 4294901760
        %v7878 = vsub.f32 %v7876, %v7877
        %v7879 = vand.u32 %v7878, 4294901760
        %7880 = vmatpush1.msra.mxu0 %v7879
        %7881 = vmatprep.subr.mxu0 0.0
        %7882 = vmatpush1.msra.mxu0 0.0
        %7883 = vmatprep.subr.mxu0 0.0
        %7884 = vmatpush1.msra.mxu0 0.0
        %7885 = vmatprep.subr.mxu0 0.0
        %7886 = vmatpush1.msra.mxu0 0.0
        %7887 = vmatprep.subr.mxu0 0.0
        %7888 = vmatpush1.msra.mxu0 0.0
        %7889 = vmatprep.subr.mxu0 0.0
        %7890 = vmatpush1.msra.mxu0 0.0
        %7891 = vmatprep.subr.mxu0 0.0
        %7892 = vmatpush1.msra.mxu0 0.0
        %7893 = vmatprep.subr.mxu0 0.0
        %7894 = vmatpush1.msra.mxu0 0.0
        %7895 = vmatprep.subr.mxu0 0.0
        %7896 = vmatpush1.msra.mxu0 0.0
        %7897 = vmatprep.subr.mxu0 0.0
        %7898 = vmatpush1.msra.mxu0 0.0
        %7899 = vmatprep.subr.mxu0 0.0
        %7900 = vmatpush1.msra.mxu0 0.0
        %7901 = vmatprep.subr.mxu0 0.0
        %7902 = vmatpush1.msra.mxu0 0.0
        %7903 = vmatprep.subr.mxu0 0.0
        %7904 = vmatpush1.msra.mxu0 0.0
        %7905 = vmatprep.subr.mxu0 0.0
        %7906 = vmatpush1.msra.mxu0 0.0
        %7907 = vmatprep.subr.mxu0 0.0
        %7908 = vmatpush1.msra.mxu0 0.0
        %7909 = vmatprep.subr.mxu0 0.0
        %7910 = vmatpush1.msra.mxu0 0.0
        %7911 = vmatprep.subr.mxu0 0.0
        %7912 = vmatpush1.msra.mxu0 0.0
        %7913 = vmatprep.subr.mxu0 0.0
        %7914 = vmatpush1.msra.mxu0 0.0
        %7915 = vmatprep.subr.mxu0 0.0
        %7916 = vmatpush1.msra.mxu0 0.0
        %7917 = vmatprep.subr.mxu0 0.0
        %7918 = vmatpush1.msra.mxu0 0.0
        %7919 = vmatprep.subr.mxu0 0.0
        %7920 = vmatpush1.msra.mxu0 0.0
        %7921 = vmatprep.subr.mxu0 0.0
        %7922 = vmatpush1.msra.mxu0 0.0
        %7923 = vmatprep.subr.mxu0 0.0
        %7924 = vmatpush1.msra.mxu0 0.0
        %7925 = vmatprep.subr.mxu0 0.0
        %7926 = vmatpush1.msra.mxu0 0.0
        %7927 = vmatprep.subr.mxu0 0.0
        %7928 = vmatpush1.msra.mxu0 0.0
        %7929 = vmatprep.subr.mxu0 0.0
        %7930 = vmatpush1.msra.mxu0 0.0
        %7931 = vmatprep.subr.mxu0 0.0
        %7932 = vmatpush1.msra.mxu0 0.0
        %7933 = vmatprep.subr.mxu0 0.0
        %7934 = vmatpush1.msra.mxu0 0.0
        %7935 = vmatprep.subr.mxu0 0.0
        %7936 = vmatpush1.msra.mxu0 0.0
        %7937 = vmatprep.subr.mxu0 0.0
        %7938 = vmatpush1.msra.mxu0 0.0
        %7939 = vmatprep.subr.mxu0 0.0
        %7940 = vmatpush1.msra.mxu0 0.0
        %7941 = vmatprep.subr.mxu0 0.0
        %7942 = vmatpush1.msra.mxu0 0.0
        %7943 = vmatprep.mubr.f32.mxu0 0.0
        %v7944 = vand.u32 %v7783, 4294901760
        %7945 = vmatmul.mubr.f32.gmra.mrb[0].mxu0 %v7944
        %v7946 = vpop.f32.mrb[0].mxu0
        %v7947 = vadd.f32 %v7865, %v7946
        %v7948 = vpop.f32.mrb[0].mxu0
        %v7949 = vadd.f32 %v7867, %v7948
        %7950 = vdwg.mxu0
        %v7951 = vand.u32 %v7789, 4294901760
        %v7952 = vsub.f32 %v7789, %v7951
        %7953 = vmatprep.subr.mxu0 %v7952
        %v7954 = vand.u32 %v7786, 4294901760
        %v7955 = vsub.f32 %v7786, %v7954
        %7956 = vmatpush1.msra.mxu0 %v7955
        %7957 = vmatprep.subr.mxu0 0.0
        %7958 = vmatpush1.msra.mxu0 0.0
        %7959 = vmatprep.subr.mxu0 0.0
        %7960 = vmatpush1.msra.mxu0 0.0
        %7961 = vmatprep.subr.mxu0 0.0
        %7962 = vmatpush1.msra.mxu0 0.0
        %7963 = vmatprep.subr.mxu0 0.0
        %7964 = vmatpush1.msra.mxu0 0.0
        %7965 = vmatprep.subr.mxu0 0.0
        %7966 = vmatpush1.msra.mxu0 0.0
        %7967 = vmatprep.subr.mxu0 0.0
        %7968 = vmatpush1.msra.mxu0 0.0
        %7969 = vmatprep.subr.mxu0 0.0
        %7970 = vmatpush1.msra.mxu0 0.0
        %7971 = vmatprep.subr.mxu0 0.0
        %7972 = vmatpush1.msra.mxu0 0.0
        %7973 = vmatprep.subr.mxu0 0.0
        %7974 = vmatpush1.msra.mxu0 0.0
        %7975 = vmatprep.subr.mxu0 0.0
        %7976 = vmatpush1.msra.mxu0 0.0
        %7977 = vmatprep.subr.mxu0 0.0
        %7978 = vmatpush1.msra.mxu0 0.0
        %7979 = vmatprep.subr.mxu0 0.0
        %7980 = vmatpush1.msra.mxu0 0.0
        %7981 = vmatprep.subr.mxu0 0.0
        %7982 = vmatpush1.msra.mxu0 0.0
        %7983 = vmatprep.subr.mxu0 0.0
        %7984 = vmatpush1.msra.mxu0 0.0
        %7985 = vmatprep.subr.mxu0 0.0
        %7986 = vmatpush1.msra.mxu0 0.0
        %7987 = vmatprep.subr.mxu0 0.0
        %7988 = vmatpush1.msra.mxu0 0.0
        %7989 = vmatprep.subr.mxu0 0.0
        %7990 = vmatpush1.msra.mxu0 0.0
        %7991 = vmatprep.subr.mxu0 0.0
        %7992 = vmatpush1.msra.mxu0 0.0
        %7993 = vmatprep.subr.mxu0 0.0
        %7994 = vmatpush1.msra.mxu0 0.0
        %7995 = vmatprep.subr.mxu0 0.0
        %7996 = vmatpush1.msra.mxu0 0.0
        %7997 = vmatprep.subr.mxu0 0.0
        %7998 = vmatpush1.msra.mxu0 0.0
        %7999 = vmatprep.subr.mxu0 0.0
        %8000 = vmatpush1.msra.mxu0 0.0
        %8001 = vmatprep.subr.mxu0 0.0
        %8002 = vmatpush1.msra.mxu0 0.0
        %8003 = vmatprep.subr.mxu0 0.0
        %8004 = vmatpush1.msra.mxu0 0.0
        %8005 = vmatprep.subr.mxu0 0.0
        %8006 = vmatpush1.msra.mxu0 0.0
        %8007 = vmatprep.subr.mxu0 0.0
        %8008 = vmatpush1.msra.mxu0 0.0
        %8009 = vmatprep.subr.mxu0 0.0
        %8010 = vmatpush1.msra.mxu0 0.0
        %8011 = vmatprep.subr.mxu0 0.0
        %8012 = vmatpush1.msra.mxu0 0.0
        %8013 = vmatprep.subr.mxu0 0.0
        %8014 = vmatpush1.msra.mxu0 0.0
        %8015 = vmatprep.subr.mxu0 0.0
        %8016 = vmatpush1.msra.mxu0 0.0
        %8017 = vmatprep.subr.mxu0 0.0
        %8018 = vmatpush1.msra.mxu0 0.0
        %8019 = vmatprep.mubr.f32.mxu0 0.0
        %v8020 = vand.u32 %v7783, 4294901760
        %v8021 = vsub.f32 %v7783, %v8020
        %8022 = vmatmul.mubr.f32.gmra.mrb[0].mxu0 %v8021
        %v8023 = vpop.f32.mrb[0].mxu0
        %v8024 = vadd.f32 %v7947, %v8023
        %v8025 = vpop.f32.mrb[0].mxu0
        %v8026 = vadd.f32 %v7949, %v8025
        %8027 = vdwg.mxu0
        %v8028 = vand.u32 %v7789, 4294901760
        %8029 = vmatprep.subr.mxu0 %v8028
        %v8030 = vand.u32 %v7786, 4294901760
        %8031 = vmatpush1.msra.mxu0 %v8030
        %8032 = vmatprep.subr.mxu0 0.0
        %8033 = vmatpush1.msra.mxu0 0.0
        %8034 = vmatprep.subr.mxu0 0.0
        %8035 = vmatpush1.msra.mxu0 0.0
        %8036 = vmatprep.subr.mxu0 0.0
        %8037 = vmatpush1.msra.mxu0 0.0
        %8038 = vmatprep.subr.mxu0 0.0
        %8039 = vmatpush1.msra.mxu0 0.0
        %8040 = vmatprep.subr.mxu0 0.0
        %8041 = vmatpush1.msra.mxu0 0.0
        %8042 = vmatprep.subr.mxu0 0.0
        %8043 = vmatpush1.msra.mxu0 0.0
        %8044 = vmatprep.subr.mxu0 0.0
        %8045 = vmatpush1.msra.mxu0 0.0
        %8046 = vmatprep.subr.mxu0 0.0
        %8047 = vmatpush1.msra.mxu0 0.0
        %8048 = vmatprep.subr.mxu0 0.0
        %8049 = vmatpush1.msra.mxu0 0.0
        %8050 = vmatprep.subr.mxu0 0.0
        %8051 = vmatpush1.msra.mxu0 0.0
        %8052 = vmatprep.subr.mxu0 0.0
        %8053 = vmatpush1.msra.mxu0 0.0
        %8054 = vmatprep.subr.mxu0 0.0
        %8055 = vmatpush1.msra.mxu0 0.0
        %8056 = vmatprep.subr.mxu0 0.0
        %8057 = vmatpush1.msra.mxu0 0.0
        %8058 = vmatprep.subr.mxu0 0.0
        %8059 = vmatpush1.msra.mxu0 0.0
        %8060 = vmatprep.subr.mxu0 0.0
        %8061 = vmatpush1.msra.mxu0 0.0
        %8062 = vmatprep.subr.mxu0 0.0
        %8063 = vmatpush1.msra.mxu0 0.0
        %8064 = vmatprep.subr.mxu0 0.0
        %8065 = vmatpush1.msra.mxu0 0.0
        %8066 = vmatprep.subr.mxu0 0.0
        %8067 = vmatpush1.msra.mxu0 0.0
        %8068 = vmatprep.subr.mxu0 0.0
        %8069 = vmatpush1.msra.mxu0 0.0
        %8070 = vmatprep.subr.mxu0 0.0
        %8071 = vmatpush1.msra.mxu0 0.0
        %8072 = vmatprep.subr.mxu0 0.0
        %8073 = vmatpush1.msra.mxu0 0.0
        %8074 = vmatprep.subr.mxu0 0.0
        %8075 = vmatpush1.msra.mxu0 0.0
        %8076 = vmatprep.subr.mxu0 0.0
        %8077 = vmatpush1.msra.mxu0 0.0
        %8078 = vmatprep.subr.mxu0 0.0
        %8079 = vmatpush1.msra.mxu0 0.0
        %8080 = vmatprep.subr.mxu0 0.0
        %8081 = vmatpush1.msra.mxu0 0.0
        %8082 = vmatprep.subr.mxu0 0.0
        %8083 = vmatpush1.msra.mxu0 0.0
        %8084 = vmatprep.subr.mxu0 0.0
        %8085 = vmatpush1.msra.mxu0 0.0
        %8086 = vmatprep.subr.mxu0 0.0
        %8087 = vmatpush1.msra.mxu0 0.0
        %8088 = vmatprep.subr.mxu0 0.0
        %8089 = vmatpush1.msra.mxu0 0.0
        %8090 = vmatprep.subr.mxu0 0.0
        %8091 = vmatpush1.msra.mxu0 0.0
        %8092 = vmatprep.subr.mxu0 0.0
        %8093 = vmatpush1.msra.mxu0 0.0
        %8094 = vmatprep.mubr.f32.mxu0 0.0
        %v8095 = vand.u32 %v7783, 4294901760
        %v8096 = vsub.f32 %v7783, %v8095
        %v8097 = vand.u32 %v8096, 4294901760
        %8098 = vmatmul.mubr.f32.gmra.mrb[0].mxu0 %v8097
        %v8099 = vpop.f32.mrb[0].mxu0
        %v8100 = vadd.f32 %v8024, %v8099
        %v8101 = vpop.f32.mrb[0].mxu0
        %v8102 = vadd.f32 %v8026, %v8101
        %8103 = vdwg.mxu0
        %v8104 = vand.u32 %v7789, 4294901760
        %v8105 = vsub.f32 %v7789, %v8104
        %v8106 = vand.u32 %v8105, 4294901760
        %8107 = vmatprep.subr.mxu0 %v8106
        %v8108 = vand.u32 %v7786, 4294901760
        %v8109 = vsub.f32 %v7786, %v8108
        %v8110 = vand.u32 %v8109, 4294901760
        %8111 = vmatpush1.msra.mxu0 %v8110
        %8112 = vmatprep.subr.mxu0 0.0
        %8113 = vmatpush1.msra.mxu0 0.0
        %8114 = vmatprep.subr.mxu0 0.0
        %8115 = vmatpush1.msra.mxu0 0.0
        %8116 = vmatprep.subr.mxu0 0.0
        %8117 = vmatpush1.msra.mxu0 0.0
        %8118 = vmatprep.subr.mxu0 0.0
        %8119 = vmatpush1.msra.mxu0 0.0
        %8120 = vmatprep.subr.mxu0 0.0
        %8121 = vmatpush1.msra.mxu0 0.0
        %8122 = vmatprep.subr.mxu0 0.0
        %8123 = vmatpush1.msra.mxu0 0.0
        %8124 = vmatprep.subr.mxu0 0.0
        %8125 = vmatpush1.msra.mxu0 0.0
        %8126 = vmatprep.subr.mxu0 0.0
        %8127 = vmatpush1.msra.mxu0 0.0
        %8128 = vmatprep.subr.mxu0 0.0
        %8129 = vmatpush1.msra.mxu0 0.0
        %8130 = vmatprep.subr.mxu0 0.0
        %8131 = vmatpush1.msra.mxu0 0.0
        %8132 = vmatprep.subr.mxu0 0.0
        %8133 = vmatpush1.msra.mxu0 0.0
        %8134 = vmatprep.subr.mxu0 0.0
        %8135 = vmatpush1.msra.mxu0 0.0
        %8136 = vmatprep.subr.mxu0 0.0
        %8137 = vmatpush1.msra.mxu0 0.0
        %8138 = vmatprep.subr.mxu0 0.0
        %8139 = vmatpush1.msra.mxu0 0.0
        %8140 = vmatprep.subr.mxu0 0.0
        %8141 = vmatpush1.msra.mxu0 0.0
        %8142 = vmatprep.subr.mxu0 0.0
        %8143 = vmatpush1.msra.mxu0 0.0
        %8144 = vmatprep.subr.mxu0 0.0
        %8145 = vmatpush1.msra.mxu0 0.0
        %8146 = vmatprep.subr.mxu0 0.0
        %8147 = vmatpush1.msra.mxu0 0.0
        %8148 = vmatprep.subr.mxu0 0.0
        %8149 = vmatpush1.msra.mxu0 0.0
        %8150 = vmatprep.subr.mxu0 0.0
        %8151 = vmatpush1.msra.mxu0 0.0
        %8152 = vmatprep.subr.mxu0 0.0
        %8153 = vmatpush1.msra.mxu0 0.0
        %8154 = vmatprep.subr.mxu0 0.0
        %8155 = vmatpush1.msra.mxu0 0.0
        %8156 = vmatprep.subr.mxu0 0.0
        %8157 = vmatpush1.msra.mxu0 0.0
        %8158 = vmatprep.subr.mxu0 0.0
        %8159 = vmatpush1.msra.mxu0 0.0
        %8160 = vmatprep.subr.mxu0 0.0
        %8161 = vmatpush1.msra.mxu0 0.0
        %8162 = vmatprep.subr.mxu0 0.0
        %8163 = vmatpush1.msra.mxu0 0.0
        %8164 = vmatprep.subr.mxu0 0.0
        %8165 = vmatpush1.msra.mxu0 0.0
        %8166 = vmatprep.subr.mxu0 0.0
        %8167 = vmatpush1.msra.mxu0 0.0
        %8168 = vmatprep.subr.mxu0 0.0
        %8169 = vmatpush1.msra.mxu0 0.0
        %8170 = vmatprep.subr.mxu0 0.0
        %8171 = vmatpush1.msra.mxu0 0.0
        %8172 = vmatprep.subr.mxu0 0.0
        %8173 = vmatpush1.msra.mxu0 0.0
        %8174 = vmatprep.mubr.f32.mxu0 0.0
        %v8175 = vand.u32 %v7783, 4294901760
        %8176 = vmatmul.mubr.f32.gmra.mrb[0].mxu0 %v8175
        %v8177 = vpop.f32.mrb[0].mxu0
        %v8178 = vadd.f32 %v8100, %v8177
        %v8179 = vpop.f32.mrb[0].mxu0
        %v8180 = vadd.f32 %v8102, %v8179
        %8181 = vdwg.mxu0
        %v8182 = vand.u32 %v7789, 4294901760
        %8183 = vmatprep.subr.mxu0 %v8182
        %v8184 = vand.u32 %v7786, 4294901760
        %8185 = vmatpush1.msra.mxu0 %v8184
        %8186 = vmatprep.subr.mxu0 0.0
        %8187 = vmatpush1.msra.mxu0 0.0
        %8188 = vmatprep.subr.mxu0 0.0
        %8189 = vmatpush1.msra.mxu0 0.0
        %8190 = vmatprep.subr.mxu0 0.0
        %8191 = vmatpush1.msra.mxu0 0.0
        %8192 = vmatprep.subr.mxu0 0.0
        %8193 = vmatpush1.msra.mxu0 0.0
        %8194 = vmatprep.subr.mxu0 0.0
        %8195 = vmatpush1.msra.mxu0 0.0
        %8196 = vmatprep.subr.mxu0 0.0
        %8197 = vmatpush1.msra.mxu0 0.0
        %8198 = vmatprep.subr.mxu0 0.0
        %8199 = vmatpush1.msra.mxu0 0.0
        %8200 = vmatprep.subr.mxu0 0.0
        %8201 = vmatpush1.msra.mxu0 0.0
        %8202 = vmatprep.subr.mxu0 0.0
        %8203 = vmatpush1.msra.mxu0 0.0
        %8204 = vmatprep.subr.mxu0 0.0
        %8205 = vmatpush1.msra.mxu0 0.0
        %8206 = vmatprep.subr.mxu0 0.0
        %8207 = vmatpush1.msra.mxu0 0.0
        %8208 = vmatprep.subr.mxu0 0.0
        %8209 = vmatpush1.msra.mxu0 0.0
        %8210 = vmatprep.subr.mxu0 0.0
        %8211 = vmatpush1.msra.mxu0 0.0
        %8212 = vmatprep.subr.mxu0 0.0
        %8213 = vmatpush1.msra.mxu0 0.0
        %8214 = vmatprep.subr.mxu0 0.0
        %8215 = vmatpush1.msra.mxu0 0.0
        %8216 = vmatprep.subr.mxu0 0.0
        %8217 = vmatpush1.msra.mxu0 0.0
        %8218 = vmatprep.subr.mxu0 0.0
        %8219 = vmatpush1.msra.mxu0 0.0
        %8220 = vmatprep.subr.mxu0 0.0
        %8221 = vmatpush1.msra.mxu0 0.0
        %8222 = vmatprep.subr.mxu0 0.0
        %8223 = vmatpush1.msra.mxu0 0.0
        %8224 = vmatprep.subr.mxu0 0.0
        %8225 = vmatpush1.msra.mxu0 0.0
        %8226 = vmatprep.subr.mxu0 0.0
        %8227 = vmatpush1.msra.mxu0 0.0
        %8228 = vmatprep.subr.mxu0 0.0
        %8229 = vmatpush1.msra.mxu0 0.0
        %8230 = vmatprep.subr.mxu0 0.0
        %8231 = vmatpush1.msra.mxu0 0.0
        %8232 = vmatprep.subr.mxu0 0.0
        %8233 = vmatpush1.msra.mxu0 0.0
        %8234 = vmatprep.subr.mxu0 0.0
        %8235 = vmatpush1.msra.mxu0 0.0
        %8236 = vmatprep.subr.mxu0 0.0
        %8237 = vmatpush1.msra.mxu0 0.0
        %8238 = vmatprep.subr.mxu0 0.0
        %8239 = vmatpush1.msra.mxu0 0.0
        %8240 = vmatprep.subr.mxu0 0.0
        %8241 = vmatpush1.msra.mxu0 0.0
        %8242 = vmatprep.subr.mxu0 0.0
        %8243 = vmatpush1.msra.mxu0 0.0
        %8244 = vmatprep.subr.mxu0 0.0
        %8245 = vmatpush1.msra.mxu0 0.0
        %8246 = vmatprep.subr.mxu0 0.0
        %8247 = vmatpush1.msra.mxu0 0.0
        %8248 = vmatprep.mubr.f32.mxu0 0.0
        %v8249 = vand.u32 %v7783, 4294901760
        %8250 = vmatmul.mubr.f32.gmra.mrb[0].mxu0 %v8249
        %v8251 = vpop.f32.mrb[0].mxu0
        %v8252 = vadd.f32 %v8178, %v8251
        %v8253 = vpop.f32.mrb[0].mxu0
        %v8254 = vadd.f32 %v8180, %v8253
        %8255 = vdwg.mxu0
        %v8256 = vadd.f32 %v7770, %v8252
        %v8257 = vadd.f32 %v7771, %v8254
        %8258 = vrot.lane.b32.xlu0 %v5353, 98
        %v8259 = vpop.permute.xlu0 %8258
        %8260 = vrot.lane.b32.xlu0 %v5354, 98
        %v8261 = vpop.permute.xlu0 %8260
        %v8262 = vsel %vm3859, %v8259, %v8261
        %v8263 = vsel %vm3859, %v8261, %v8259
        %v8264 = vmul.f32 %v8262, %v3868
        %v8265 = vmul.f32 %v8263, %v3872
        %s8266 = scalar_lea.vmem %s4, 24
        %v8267 = vld [vmem:[%s8266] sm:$0xf]
        %v8269 = vsel %vm905, %v8267, 0
        %v8272 = vsel %vm909, %v8264, 0
        %v8275 = vsel %vm909, %v8265, 0
        %v8277 = vand.u32 %v8275, 4294901760
        %8278 = vmatprep.subr.mxu0 %v8277
        %v8279 = vand.u32 %v8272, 4294901760
        %8280 = vmatpush1.msra.mxu0 %v8279
        %8281 = vmatprep.subr.mxu0 0.0
        %8282 = vmatpush1.msra.mxu0 0.0
        %8283 = vmatprep.subr.mxu0 0.0
        %8284 = vmatpush1.msra.mxu0 0.0
        %8285 = vmatprep.subr.mxu0 0.0
        %8286 = vmatpush1.msra.mxu0 0.0
        %8287 = vmatprep.subr.mxu0 0.0
        %8288 = vmatpush1.msra.mxu0 0.0
        %8289 = vmatprep.subr.mxu0 0.0
        %8290 = vmatpush1.msra.mxu0 0.0
        %8291 = vmatprep.subr.mxu0 0.0
        %8292 = vmatpush1.msra.mxu0 0.0
        %8293 = vmatprep.subr.mxu0 0.0
        %8294 = vmatpush1.msra.mxu0 0.0
        %8295 = vmatprep.subr.mxu0 0.0
        %8296 = vmatpush1.msra.mxu0 0.0
        %8297 = vmatprep.subr.mxu0 0.0
        %8298 = vmatpush1.msra.mxu0 0.0
        %8299 = vmatprep.subr.mxu0 0.0
        %8300 = vmatpush1.msra.mxu0 0.0
        %8301 = vmatprep.subr.mxu0 0.0
        %8302 = vmatpush1.msra.mxu0 0.0
        %8303 = vmatprep.subr.mxu0 0.0
        %8304 = vmatpush1.msra.mxu0 0.0
        %8305 = vmatprep.subr.mxu0 0.0
        %8306 = vmatpush1.msra.mxu0 0.0
        %8307 = vmatprep.subr.mxu0 0.0
        %8308 = vmatpush1.msra.mxu0 0.0
        %8309 = vmatprep.subr.mxu0 0.0
        %8310 = vmatpush1.msra.mxu0 0.0
        %8311 = vmatprep.subr.mxu0 0.0
        %8312 = vmatpush1.msra.mxu0 0.0
        %8313 = vmatprep.subr.mxu0 0.0
        %8314 = vmatpush1.msra.mxu0 0.0
        %8315 = vmatprep.subr.mxu0 0.0
        %8316 = vmatpush1.msra.mxu0 0.0
        %8317 = vmatprep.subr.mxu0 0.0
        %8318 = vmatpush1.msra.mxu0 0.0
        %8319 = vmatprep.subr.mxu0 0.0
        %8320 = vmatpush1.msra.mxu0 0.0
        %8321 = vmatprep.subr.mxu0 0.0
        %8322 = vmatpush1.msra.mxu0 0.0
        %8323 = vmatprep.subr.mxu0 0.0
        %8324 = vmatpush1.msra.mxu0 0.0
        %8325 = vmatprep.subr.mxu0 0.0
        %8326 = vmatpush1.msra.mxu0 0.0
        %8327 = vmatprep.subr.mxu0 0.0
        %8328 = vmatpush1.msra.mxu0 0.0
        %8329 = vmatprep.subr.mxu0 0.0
        %8330 = vmatpush1.msra.mxu0 0.0
        %8331 = vmatprep.subr.mxu0 0.0
        %8332 = vmatpush1.msra.mxu0 0.0
        %8333 = vmatprep.subr.mxu0 0.0
        %8334 = vmatpush1.msra.mxu0 0.0
        %8335 = vmatprep.subr.mxu0 0.0
        %8336 = vmatpush1.msra.mxu0 0.0
        %8337 = vmatprep.subr.mxu0 0.0
        %8338 = vmatpush1.msra.mxu0 0.0
        %8339 = vmatprep.subr.mxu0 0.0
        %8340 = vmatpush1.msra.mxu0 0.0
        %8341 = vmatprep.subr.mxu0 0.0
        %8342 = vmatpush1.msra.mxu0 0.0
        %8343 = vmatprep.mubr.f32.mxu0 0.0
        %v8344 = vand.u32 %v8269, 4294901760
        %v8345 = vsub.f32 %v8269, %v8344
        %v8346 = vand.u32 %v8345, 4294901760
        %v8347 = vsub.f32 %v8345, %v8346
        %v8348 = vand.u32 %v8347, 4294901760
        %8349 = vmatmul.mubr.f32.gmra.mrb[0].mxu0 %v8348
        %v8350 = vpop.f32.mrb[0].mxu0
        %v8351 = vadd.f32 0.0, %v8350
        %v8352 = vpop.f32.mrb[0].mxu0
        %v8353 = vadd.f32 0.0, %v8352
        %8354 = vdwg.mxu0
        %v8355 = vand.u32 %v8275, 4294901760
        %v8356 = vsub.f32 %v8275, %v8355
        %v8357 = vand.u32 %v8356, 4294901760
        %v8358 = vsub.f32 %v8356, %v8357
        %v8359 = vand.u32 %v8358, 4294901760
        %8360 = vmatprep.subr.mxu0 %v8359
        %v8361 = vand.u32 %v8272, 4294901760
        %v8362 = vsub.f32 %v8272, %v8361
        %v8363 = vand.u32 %v8362, 4294901760
        %v8364 = vsub.f32 %v8362, %v8363
        %v8365 = vand.u32 %v8364, 4294901760
        %8366 = vmatpush1.msra.mxu0 %v8365
        %8367 = vmatprep.subr.mxu0 0.0
        %8368 = vmatpush1.msra.mxu0 0.0
        %8369 = vmatprep.subr.mxu0 0.0
        %8370 = vmatpush1.msra.mxu0 0.0
        %8371 = vmatprep.subr.mxu0 0.0
        %8372 = vmatpush1.msra.mxu0 0.0
        %8373 = vmatprep.subr.mxu0 0.0
        %8374 = vmatpush1.msra.mxu0 0.0
        %8375 = vmatprep.subr.mxu0 0.0
        %8376 = vmatpush1.msra.mxu0 0.0
        %8377 = vmatprep.subr.mxu0 0.0
        %8378 = vmatpush1.msra.mxu0 0.0
        %8379 = vmatprep.subr.mxu0 0.0
        %8380 = vmatpush1.msra.mxu0 0.0
        %8381 = vmatprep.subr.mxu0 0.0
        %8382 = vmatpush1.msra.mxu0 0.0
        %8383 = vmatprep.subr.mxu0 0.0
        %8384 = vmatpush1.msra.mxu0 0.0
        %8385 = vmatprep.subr.mxu0 0.0
        %8386 = vmatpush1.msra.mxu0 0.0
        %8387 = vmatprep.subr.mxu0 0.0
        %8388 = vmatpush1.msra.mxu0 0.0
        %8389 = vmatprep.subr.mxu0 0.0
        %8390 = vmatpush1.msra.mxu0 0.0
        %8391 = vmatprep.subr.mxu0 0.0
        %8392 = vmatpush1.msra.mxu0 0.0
        %8393 = vmatprep.subr.mxu0 0.0
        %8394 = vmatpush1.msra.mxu0 0.0
        %8395 = vmatprep.subr.mxu0 0.0
        %8396 = vmatpush1.msra.mxu0 0.0
        %8397 = vmatprep.subr.mxu0 0.0
        %8398 = vmatpush1.msra.mxu0 0.0
        %8399 = vmatprep.subr.mxu0 0.0
        %8400 = vmatpush1.msra.mxu0 0.0
        %8401 = vmatprep.subr.mxu0 0.0
        %8402 = vmatpush1.msra.mxu0 0.0
        %8403 = vmatprep.subr.mxu0 0.0
        %8404 = vmatpush1.msra.mxu0 0.0
        %8405 = vmatprep.subr.mxu0 0.0
        %8406 = vmatpush1.msra.mxu0 0.0
        %8407 = vmatprep.subr.mxu0 0.0
        %8408 = vmatpush1.msra.mxu0 0.0
        %8409 = vmatprep.subr.mxu0 0.0
        %8410 = vmatpush1.msra.mxu0 0.0
        %8411 = vmatprep.subr.mxu0 0.0
        %8412 = vmatpush1.msra.mxu0 0.0
        %8413 = vmatprep.subr.mxu0 0.0
        %8414 = vmatpush1.msra.mxu0 0.0
        %8415 = vmatprep.subr.mxu0 0.0
        %8416 = vmatpush1.msra.mxu0 0.0
        %8417 = vmatprep.subr.mxu0 0.0
        %8418 = vmatpush1.msra.mxu0 0.0
        %8419 = vmatprep.subr.mxu0 0.0
        %8420 = vmatpush1.msra.mxu0 0.0
        %8421 = vmatprep.subr.mxu0 0.0
        %8422 = vmatpush1.msra.mxu0 0.0
        %8423 = vmatprep.subr.mxu0 0.0
        %8424 = vmatpush1.msra.mxu0 0.0
        %8425 = vmatprep.subr.mxu0 0.0
        %8426 = vmatpush1.msra.mxu0 0.0
        %8427 = vmatprep.subr.mxu0 0.0
        %8428 = vmatpush1.msra.mxu0 0.0
        %8429 = vmatprep.mubr.f32.mxu0 0.0
        %v8430 = vand.u32 %v8269, 4294901760
        %8431 = vmatmul.mubr.f32.gmra.mrb[0].mxu0 %v8430
        %v8432 = vpop.f32.mrb[0].mxu0
        %v8433 = vadd.f32 %v8351, %v8432
        %v8434 = vpop.f32.mrb[0].mxu0
        %v8435 = vadd.f32 %v8353, %v8434
        %8436 = vdwg.mxu0
        %v8437 = vand.u32 %v8275, 4294901760
        %v8438 = vsub.f32 %v8275, %v8437
        %8439 = vmatprep.subr.mxu0 %v8438
        %v8440 = vand.u32 %v8272, 4294901760
        %v8441 = vsub.f32 %v8272, %v8440
        %8442 = vmatpush1.msra.mxu0 %v8441
        %8443 = vmatprep.subr.mxu0 0.0
        %8444 = vmatpush1.msra.mxu0 0.0
        %8445 = vmatprep.subr.mxu0 0.0
        %8446 = vmatpush1.msra.mxu0 0.0
        %8447 = vmatprep.subr.mxu0 0.0
        %8448 = vmatpush1.msra.mxu0 0.0
        %8449 = vmatprep.subr.mxu0 0.0
        %8450 = vmatpush1.msra.mxu0 0.0
        %8451 = vmatprep.subr.mxu0 0.0
        %8452 = vmatpush1.msra.mxu0 0.0
        %8453 = vmatprep.subr.mxu0 0.0
        %8454 = vmatpush1.msra.mxu0 0.0
        %8455 = vmatprep.subr.mxu0 0.0
        %8456 = vmatpush1.msra.mxu0 0.0
        %8457 = vmatprep.subr.mxu0 0.0
        %8458 = vmatpush1.msra.mxu0 0.0
        %8459 = vmatprep.subr.mxu0 0.0
        %8460 = vmatpush1.msra.mxu0 0.0
        %8461 = vmatprep.subr.mxu0 0.0
        %8462 = vmatpush1.msra.mxu0 0.0
        %8463 = vmatprep.subr.mxu0 0.0
        %8464 = vmatpush1.msra.mxu0 0.0
        %8465 = vmatprep.subr.mxu0 0.0
        %8466 = vmatpush1.msra.mxu0 0.0
        %8467 = vmatprep.subr.mxu0 0.0
        %8468 = vmatpush1.msra.mxu0 0.0
        %8469 = vmatprep.subr.mxu0 0.0
        %8470 = vmatpush1.msra.mxu0 0.0
        %8471 = vmatprep.subr.mxu0 0.0
        %8472 = vmatpush1.msra.mxu0 0.0
        %8473 = vmatprep.subr.mxu0 0.0
        %8474 = vmatpush1.msra.mxu0 0.0
        %8475 = vmatprep.subr.mxu0 0.0
        %8476 = vmatpush1.msra.mxu0 0.0
        %8477 = vmatprep.subr.mxu0 0.0
        %8478 = vmatpush1.msra.mxu0 0.0
        %8479 = vmatprep.subr.mxu0 0.0
        %8480 = vmatpush1.msra.mxu0 0.0
        %8481 = vmatprep.subr.mxu0 0.0
        %8482 = vmatpush1.msra.mxu0 0.0
        %8483 = vmatprep.subr.mxu0 0.0
        %8484 = vmatpush1.msra.mxu0 0.0
        %8485 = vmatprep.subr.mxu0 0.0
        %8486 = vmatpush1.msra.mxu0 0.0
        %8487 = vmatprep.subr.mxu0 0.0
        %8488 = vmatpush1.msra.mxu0 0.0
        %8489 = vmatprep.subr.mxu0 0.0
        %8490 = vmatpush1.msra.mxu0 0.0
        %8491 = vmatprep.subr.mxu0 0.0
        %8492 = vmatpush1.msra.mxu0 0.0
        %8493 = vmatprep.subr.mxu0 0.0
        %8494 = vmatpush1.msra.mxu0 0.0
        %8495 = vmatprep.subr.mxu0 0.0
        %8496 = vmatpush1.msra.mxu0 0.0
        %8497 = vmatprep.subr.mxu0 0.0
        %8498 = vmatpush1.msra.mxu0 0.0
        %8499 = vmatprep.subr.mxu0 0.0
        %8500 = vmatpush1.msra.mxu0 0.0
        %8501 = vmatprep.subr.mxu0 0.0
        %8502 = vmatpush1.msra.mxu0 0.0
        %8503 = vmatprep.subr.mxu0 0.0
        %8504 = vmatpush1.msra.mxu0 0.0
        %8505 = vmatprep.mubr.f32.mxu0 0.0
        %v8506 = vand.u32 %v8269, 4294901760
        %v8507 = vsub.f32 %v8269, %v8506
        %8508 = vmatmul.mubr.f32.gmra.mrb[0].mxu0 %v8507
        %v8509 = vpop.f32.mrb[0].mxu0
        %v8510 = vadd.f32 %v8433, %v8509
        %v8511 = vpop.f32.mrb[0].mxu0
        %v8512 = vadd.f32 %v8435, %v8511
        %8513 = vdwg.mxu0
        %v8514 = vand.u32 %v8275, 4294901760
        %8515 = vmatprep.subr.mxu0 %v8514
        %v8516 = vand.u32 %v8272, 4294901760
        %8517 = vmatpush1.msra.mxu0 %v8516
        %8518 = vmatprep.subr.mxu0 0.0
        %8519 = vmatpush1.msra.mxu0 0.0
        %8520 = vmatprep.subr.mxu0 0.0
        %8521 = vmatpush1.msra.mxu0 0.0
        %8522 = vmatprep.subr.mxu0 0.0
        %8523 = vmatpush1.msra.mxu0 0.0
        %8524 = vmatprep.subr.mxu0 0.0
        %8525 = vmatpush1.msra.mxu0 0.0
        %8526 = vmatprep.subr.mxu0 0.0
        %8527 = vmatpush1.msra.mxu0 0.0
        %8528 = vmatprep.subr.mxu0 0.0
        %8529 = vmatpush1.msra.mxu0 0.0
        %8530 = vmatprep.subr.mxu0 0.0
        %8531 = vmatpush1.msra.mxu0 0.0
        %8532 = vmatprep.subr.mxu0 0.0
        %8533 = vmatpush1.msra.mxu0 0.0
        %8534 = vmatprep.subr.mxu0 0.0
        %8535 = vmatpush1.msra.mxu0 0.0
        %8536 = vmatprep.subr.mxu0 0.0
        %8537 = vmatpush1.msra.mxu0 0.0
        %8538 = vmatprep.subr.mxu0 0.0
        %8539 = vmatpush1.msra.mxu0 0.0
        %8540 = vmatprep.subr.mxu0 0.0
        %8541 = vmatpush1.msra.mxu0 0.0
        %8542 = vmatprep.subr.mxu0 0.0
        %8543 = vmatpush1.msra.mxu0 0.0
        %8544 = vmatprep.subr.mxu0 0.0
        %8545 = vmatpush1.msra.mxu0 0.0
        %8546 = vmatprep.subr.mxu0 0.0
        %8547 = vmatpush1.msra.mxu0 0.0
        %8548 = vmatprep.subr.mxu0 0.0
        %8549 = vmatpush1.msra.mxu0 0.0
        %8550 = vmatprep.subr.mxu0 0.0
        %8551 = vmatpush1.msra.mxu0 0.0
        %8552 = vmatprep.subr.mxu0 0.0
        %8553 = vmatpush1.msra.mxu0 0.0
        %8554 = vmatprep.subr.mxu0 0.0
        %8555 = vmatpush1.msra.mxu0 0.0
        %8556 = vmatprep.subr.mxu0 0.0
        %8557 = vmatpush1.msra.mxu0 0.0
        %8558 = vmatprep.subr.mxu0 0.0
        %8559 = vmatpush1.msra.mxu0 0.0
        %8560 = vmatprep.subr.mxu0 0.0
        %8561 = vmatpush1.msra.mxu0 0.0
        %8562 = vmatprep.subr.mxu0 0.0
        %8563 = vmatpush1.msra.mxu0 0.0
        %8564 = vmatprep.subr.mxu0 0.0
        %8565 = vmatpush1.msra.mxu0 0.0
        %8566 = vmatprep.subr.mxu0 0.0
        %8567 = vmatpush1.msra.mxu0 0.0
        %8568 = vmatprep.subr.mxu0 0.0
        %8569 = vmatpush1.msra.mxu0 0.0
        %8570 = vmatprep.subr.mxu0 0.0
        %8571 = vmatpush1.msra.mxu0 0.0
        %8572 = vmatprep.subr.mxu0 0.0
        %8573 = vmatpush1.msra.mxu0 0.0
        %8574 = vmatprep.subr.mxu0 0.0
        %8575 = vmatpush1.msra.mxu0 0.0
        %8576 = vmatprep.subr.mxu0 0.0
        %8577 = vmatpush1.msra.mxu0 0.0
        %8578 = vmatprep.subr.mxu0 0.0
        %8579 = vmatpush1.msra.mxu0 0.0
        %8580 = vmatprep.mubr.f32.mxu0 0.0
        %v8581 = vand.u32 %v8269, 4294901760
        %v8582 = vsub.f32 %v8269, %v8581
        %v8583 = vand.u32 %v8582, 4294901760
        %8584 = vmatmul.mubr.f32.gmra.mrb[0].mxu0 %v8583
        %v8585 = vpop.f32.mrb[0].mxu0
        %v8586 = vadd.f32 %v8510, %v8585
        %v8587 = vpop.f32.mrb[0].mxu0
        %v8588 = vadd.f32 %v8512, %v8587
        %8589 = vdwg.mxu0
        %v8590 = vand.u32 %v8275, 4294901760
        %v8591 = vsub.f32 %v8275, %v8590
        %v8592 = vand.u32 %v8591, 4294901760
        %8593 = vmatprep.subr.mxu0 %v8592
        %v8594 = vand.u32 %v8272, 4294901760
        %v8595 = vsub.f32 %v8272, %v8594
        %v8596 = vand.u32 %v8595, 4294901760
        %8597 = vmatpush1.msra.mxu0 %v8596
        %8598 = vmatprep.subr.mxu0 0.0
        %8599 = vmatpush1.msra.mxu0 0.0
        %8600 = vmatprep.subr.mxu0 0.0
        %8601 = vmatpush1.msra.mxu0 0.0
        %8602 = vmatprep.subr.mxu0 0.0
        %8603 = vmatpush1.msra.mxu0 0.0
        %8604 = vmatprep.subr.mxu0 0.0
        %8605 = vmatpush1.msra.mxu0 0.0
        %8606 = vmatprep.subr.mxu0 0.0
        %8607 = vmatpush1.msra.mxu0 0.0
        %8608 = vmatprep.subr.mxu0 0.0
        %8609 = vmatpush1.msra.mxu0 0.0
        %8610 = vmatprep.subr.mxu0 0.0
        %8611 = vmatpush1.msra.mxu0 0.0
        %8612 = vmatprep.subr.mxu0 0.0
        %8613 = vmatpush1.msra.mxu0 0.0
        %8614 = vmatprep.subr.mxu0 0.0
        %8615 = vmatpush1.msra.mxu0 0.0
        %8616 = vmatprep.subr.mxu0 0.0
        %8617 = vmatpush1.msra.mxu0 0.0
        %8618 = vmatprep.subr.mxu0 0.0
        %8619 = vmatpush1.msra.mxu0 0.0
        %8620 = vmatprep.subr.mxu0 0.0
        %8621 = vmatpush1.msra.mxu0 0.0
        %8622 = vmatprep.subr.mxu0 0.0
        %8623 = vmatpush1.msra.mxu0 0.0
        %8624 = vmatprep.subr.mxu0 0.0
        %8625 = vmatpush1.msra.mxu0 0.0
        %8626 = vmatprep.subr.mxu0 0.0
        %8627 = vmatpush1.msra.mxu0 0.0
        %8628 = vmatprep.subr.mxu0 0.0
        %8629 = vmatpush1.msra.mxu0 0.0
        %8630 = vmatprep.subr.mxu0 0.0
        %8631 = vmatpush1.msra.mxu0 0.0
        %8632 = vmatprep.subr.mxu0 0.0
        %8633 = vmatpush1.msra.mxu0 0.0
        %8634 = vmatprep.subr.mxu0 0.0
        %8635 = vmatpush1.msra.mxu0 0.0
        %8636 = vmatprep.subr.mxu0 0.0
        %8637 = vmatpush1.msra.mxu0 0.0
        %8638 = vmatprep.subr.mxu0 0.0
        %8639 = vmatpush1.msra.mxu0 0.0
        %8640 = vmatprep.subr.mxu0 0.0
        %8641 = vmatpush1.msra.mxu0 0.0
        %8642 = vmatprep.subr.mxu0 0.0
        %8643 = vmatpush1.msra.mxu0 0.0
        %8644 = vmatprep.subr.mxu0 0.0
        %8645 = vmatpush1.msra.mxu0 0.0
        %8646 = vmatprep.subr.mxu0 0.0
        %8647 = vmatpush1.msra.mxu0 0.0
        %8648 = vmatprep.subr.mxu0 0.0
        %8649 = vmatpush1.msra.mxu0 0.0
        %8650 = vmatprep.subr.mxu0 0.0
        %8651 = vmatpush1.msra.mxu0 0.0
        %8652 = vmatprep.subr.mxu0 0.0
        %8653 = vmatpush1.msra.mxu0 0.0
        %8654 = vmatprep.subr.mxu0 0.0
        %8655 = vmatpush1.msra.mxu0 0.0
        %8656 = vmatprep.subr.mxu0 0.0
        %8657 = vmatpush1.msra.mxu0 0.0
        %8658 = vmatprep.subr.mxu0 0.0
        %8659 = vmatpush1.msra.mxu0 0.0
        %8660 = vmatprep.mubr.f32.mxu0 0.0
        %v8661 = vand.u32 %v8269, 4294901760
        %8662 = vmatmul.mubr.f32.gmra.mrb[0].mxu0 %v8661
        %v8663 = vpop.f32.mrb[0].mxu0
        %v8664 = vadd.f32 %v8586, %v8663
        %v8665 = vpop.f32.mrb[0].mxu0
        %v8666 = vadd.f32 %v8588, %v8665
        %8667 = vdwg.mxu0
        %v8668 = vand.u32 %v8275, 4294901760
        %8669 = vmatprep.subr.mxu0 %v8668
        %v8670 = vand.u32 %v8272, 4294901760
        %8671 = vmatpush1.msra.mxu0 %v8670
        %8672 = vmatprep.subr.mxu0 0.0
        %8673 = vmatpush1.msra.mxu0 0.0
        %8674 = vmatprep.subr.mxu0 0.0
        %8675 = vmatpush1.msra.mxu0 0.0
        %8676 = vmatprep.subr.mxu0 0.0
        %8677 = vmatpush1.msra.mxu0 0.0
        %8678 = vmatprep.subr.mxu0 0.0
        %8679 = vmatpush1.msra.mxu0 0.0
        %8680 = vmatprep.subr.mxu0 0.0
        %8681 = vmatpush1.msra.mxu0 0.0
        %8682 = vmatprep.subr.mxu0 0.0
        %8683 = vmatpush1.msra.mxu0 0.0
        %8684 = vmatprep.subr.mxu0 0.0
        %8685 = vmatpush1.msra.mxu0 0.0
        %8686 = vmatprep.subr.mxu0 0.0
        %8687 = vmatpush1.msra.mxu0 0.0
        %8688 = vmatprep.subr.mxu0 0.0
        %8689 = vmatpush1.msra.mxu0 0.0
        %8690 = vmatprep.subr.mxu0 0.0
        %8691 = vmatpush1.msra.mxu0 0.0
        %8692 = vmatprep.subr.mxu0 0.0
        %8693 = vmatpush1.msra.mxu0 0.0
        %8694 = vmatprep.subr.mxu0 0.0
        %8695 = vmatpush1.msra.mxu0 0.0
        %8696 = vmatprep.subr.mxu0 0.0
        %8697 = vmatpush1.msra.mxu0 0.0
        %8698 = vmatprep.subr.mxu0 0.0
        %8699 = vmatpush1.msra.mxu0 0.0
        %8700 = vmatprep.subr.mxu0 0.0
        %8701 = vmatpush1.msra.mxu0 0.0
        %8702 = vmatprep.subr.mxu0 0.0
        %8703 = vmatpush1.msra.mxu0 0.0
        %8704 = vmatprep.subr.mxu0 0.0
        %8705 = vmatpush1.msra.mxu0 0.0
        %8706 = vmatprep.subr.mxu0 0.0
        %8707 = vmatpush1.msra.mxu0 0.0
        %8708 = vmatprep.subr.mxu0 0.0
        %8709 = vmatpush1.msra.mxu0 0.0
        %8710 = vmatprep.subr.mxu0 0.0
        %8711 = vmatpush1.msra.mxu0 0.0
        %8712 = vmatprep.subr.mxu0 0.0
        %8713 = vmatpush1.msra.mxu0 0.0
        %8714 = vmatprep.subr.mxu0 0.0
        %8715 = vmatpush1.msra.mxu0 0.0
        %8716 = vmatprep.subr.mxu0 0.0
        %8717 = vmatpush1.msra.mxu0 0.0
        %8718 = vmatprep.subr.mxu0 0.0
        %8719 = vmatpush1.msra.mxu0 0.0
        %8720 = vmatprep.subr.mxu0 0.0
        %8721 = vmatpush1.msra.mxu0 0.0
        %8722 = vmatprep.subr.mxu0 0.0
        %8723 = vmatpush1.msra.mxu0 0.0
        %8724 = vmatprep.subr.mxu0 0.0
        %8725 = vmatpush1.msra.mxu0 0.0
        %8726 = vmatprep.subr.mxu0 0.0
        %8727 = vmatpush1.msra.mxu0 0.0
        %8728 = vmatprep.subr.mxu0 0.0
        %8729 = vmatpush1.msra.mxu0 0.0
        %8730 = vmatprep.subr.mxu0 0.0
        %8731 = vmatpush1.msra.mxu0 0.0
        %8732 = vmatprep.subr.mxu0 0.0
        %8733 = vmatpush1.msra.mxu0 0.0
        %8734 = vmatprep.mubr.f32.mxu0 0.0
        %v8735 = vand.u32 %v8269, 4294901760
        %8736 = vmatmul.mubr.f32.gmra.mrb[0].mxu0 %v8735
        %v8737 = vpop.f32.mrb[0].mxu0
        %v8738 = vadd.f32 %v8664, %v8737
        %v8739 = vpop.f32.mrb[0].mxu0
        %v8740 = vadd.f32 %v8666, %v8739
        %8741 = vdwg.mxu0
        %v8742 = vadd.f32 %v8256, %v8738
        %v8743 = vadd.f32 %v8257, %v8740
        %8744 = vrot.lane.b32.xlu0 %v5353, 96
        %v8745 = vpop.permute.xlu0 %8744
        %8746 = vrot.lane.b32.xlu0 %v5354, 96
        %v8747 = vpop.permute.xlu0 %8746
        %v8748 = vsel %vm4359, %v8745, %v8747
        %v8749 = vsel %vm4359, %v8747, %v8745
        %v8750 = vmul.f32 %v8748, %v4368
        %v8751 = vmul.f32 %v8749, %v4372
        %s8752 = scalar_lea.vmem %s4, 28
        %v8753 = vld [vmem:[%s8752] sm:$0xf]
        %v8755 = vsel %vm905, %v8753, 0
        %v8758 = vsel %vm909, %v8750, 0
        %v8761 = vsel %vm909, %v8751, 0
        %v8763 = vand.u32 %v8761, 4294901760
        %8764 = vmatprep.subr.mxu0 %v8763
        %v8765 = vand.u32 %v8758, 4294901760
        %8766 = vmatpush1.msra.mxu0 %v8765
        %8767 = vmatprep.subr.mxu0 0.0
        %8768 = vmatpush1.msra.mxu0 0.0
        %8769 = vmatprep.subr.mxu0 0.0
        %8770 = vmatpush1.msra.mxu0 0.0
        %8771 = vmatprep.subr.mxu0 0.0
        %8772 = vmatpush1.msra.mxu0 0.0
        %8773 = vmatprep.subr.mxu0 0.0
        %8774 = vmatpush1.msra.mxu0 0.0
        %8775 = vmatprep.subr.mxu0 0.0
        %8776 = vmatpush1.msra.mxu0 0.0
        %8777 = vmatprep.subr.mxu0 0.0
        %8778 = vmatpush1.msra.mxu0 0.0
        %8779 = vmatprep.subr.mxu0 0.0
        %8780 = vmatpush1.msra.mxu0 0.0
        %8781 = vmatprep.subr.mxu0 0.0
        %8782 = vmatpush1.msra.mxu0 0.0
        %8783 = vmatprep.subr.mxu0 0.0
        %8784 = vmatpush1.msra.mxu0 0.0
        %8785 = vmatprep.subr.mxu0 0.0
        %8786 = vmatpush1.msra.mxu0 0.0
        %8787 = vmatprep.subr.mxu0 0.0
        %8788 = vmatpush1.msra.mxu0 0.0
        %8789 = vmatprep.subr.mxu0 0.0
        %8790 = vmatpush1.msra.mxu0 0.0
        %8791 = vmatprep.subr.mxu0 0.0
        %8792 = vmatpush1.msra.mxu0 0.0
        %8793 = vmatprep.subr.mxu0 0.0
        %8794 = vmatpush1.msra.mxu0 0.0
        %8795 = vmatprep.subr.mxu0 0.0
        %8796 = vmatpush1.msra.mxu0 0.0
        %8797 = vmatprep.subr.mxu0 0.0
        %8798 = vmatpush1.msra.mxu0 0.0
        %8799 = vmatprep.subr.mxu0 0.0
        %8800 = vmatpush1.msra.mxu0 0.0
        %8801 = vmatprep.subr.mxu0 0.0
        %8802 = vmatpush1.msra.mxu0 0.0
        %8803 = vmatprep.subr.mxu0 0.0
        %8804 = vmatpush1.msra.mxu0 0.0
        %8805 = vmatprep.subr.mxu0 0.0
        %8806 = vmatpush1.msra.mxu0 0.0
        %8807 = vmatprep.subr.mxu0 0.0
        %8808 = vmatpush1.msra.mxu0 0.0
        %8809 = vmatprep.subr.mxu0 0.0
        %8810 = vmatpush1.msra.mxu0 0.0
        %8811 = vmatprep.subr.mxu0 0.0
        %8812 = vmatpush1.msra.mxu0 0.0
        %8813 = vmatprep.subr.mxu0 0.0
        %8814 = vmatpush1.msra.mxu0 0.0
        %8815 = vmatprep.subr.mxu0 0.0
        %8816 = vmatpush1.msra.mxu0 0.0
        %8817 = vmatprep.subr.mxu0 0.0
        %8818 = vmatpush1.msra.mxu0 0.0
        %8819 = vmatprep.subr.mxu0 0.0
        %8820 = vmatpush1.msra.mxu0 0.0
        %8821 = vmatprep.subr.mxu0 0.0
        %8822 = vmatpush1.msra.mxu0 0.0
        %8823 = vmatprep.subr.mxu0 0.0
        %8824 = vmatpush1.msra.mxu0 0.0
        %8825 = vmatprep.subr.mxu0 0.0
        %8826 = vmatpush1.msra.mxu0 0.0
        %8827 = vmatprep.subr.mxu0 0.0
        %8828 = vmatpush1.msra.mxu0 0.0
        %8829 = vmatprep.mubr.f32.mxu0 0.0
        %v8830 = vand.u32 %v8755, 4294901760
        %v8831 = vsub.f32 %v8755, %v8830
        %v8832 = vand.u32 %v8831, 4294901760
        %v8833 = vsub.f32 %v8831, %v8832
        %v8834 = vand.u32 %v8833, 4294901760
        %8835 = vmatmul.mubr.f32.gmra.mrb[0].mxu0 %v8834
        %v8836 = vpop.f32.mrb[0].mxu0
        %v8837 = vadd.f32 0.0, %v8836
        %v8838 = vpop.f32.mrb[0].mxu0
        %v8839 = vadd.f32 0.0, %v8838
        %8840 = vdwg.mxu0
        %v8841 = vand.u32 %v8761, 4294901760
        %v8842 = vsub.f32 %v8761, %v8841
        %v8843 = vand.u32 %v8842, 4294901760
        %v8844 = vsub.f32 %v8842, %v8843
        %v8845 = vand.u32 %v8844, 4294901760
        %8846 = vmatprep.subr.mxu0 %v8845
        %v8847 = vand.u32 %v8758, 4294901760
        %v8848 = vsub.f32 %v8758, %v8847
        %v8849 = vand.u32 %v8848, 4294901760
        %v8850 = vsub.f32 %v8848, %v8849
        %v8851 = vand.u32 %v8850, 4294901760
        %8852 = vmatpush1.msra.mxu0 %v8851
        %8853 = vmatprep.subr.mxu0 0.0
        %8854 = vmatpush1.msra.mxu0 0.0
        %8855 = vmatprep.subr.mxu0 0.0
        %8856 = vmatpush1.msra.mxu0 0.0
        %8857 = vmatprep.subr.mxu0 0.0
        %8858 = vmatpush1.msra.mxu0 0.0
        %8859 = vmatprep.subr.mxu0 0.0
        %8860 = vmatpush1.msra.mxu0 0.0
        %8861 = vmatprep.subr.mxu0 0.0
        %8862 = vmatpush1.msra.mxu0 0.0
        %8863 = vmatprep.subr.mxu0 0.0
        %8864 = vmatpush1.msra.mxu0 0.0
        %8865 = vmatprep.subr.mxu0 0.0
        %8866 = vmatpush1.msra.mxu0 0.0
        %8867 = vmatprep.subr.mxu0 0.0
        %8868 = vmatpush1.msra.mxu0 0.0
        %8869 = vmatprep.subr.mxu0 0.0
        %8870 = vmatpush1.msra.mxu0 0.0
        %8871 = vmatprep.subr.mxu0 0.0
        %8872 = vmatpush1.msra.mxu0 0.0
        %8873 = vmatprep.subr.mxu0 0.0
        %8874 = vmatpush1.msra.mxu0 0.0
        %8875 = vmatprep.subr.mxu0 0.0
        %8876 = vmatpush1.msra.mxu0 0.0
        %8877 = vmatprep.subr.mxu0 0.0
        %8878 = vmatpush1.msra.mxu0 0.0
        %8879 = vmatprep.subr.mxu0 0.0
        %8880 = vmatpush1.msra.mxu0 0.0
        %8881 = vmatprep.subr.mxu0 0.0
        %8882 = vmatpush1.msra.mxu0 0.0
        %8883 = vmatprep.subr.mxu0 0.0
        %8884 = vmatpush1.msra.mxu0 0.0
        %8885 = vmatprep.subr.mxu0 0.0
        %8886 = vmatpush1.msra.mxu0 0.0
        %8887 = vmatprep.subr.mxu0 0.0
        %8888 = vmatpush1.msra.mxu0 0.0
        %8889 = vmatprep.subr.mxu0 0.0
        %8890 = vmatpush1.msra.mxu0 0.0
        %8891 = vmatprep.subr.mxu0 0.0
        %8892 = vmatpush1.msra.mxu0 0.0
        %8893 = vmatprep.subr.mxu0 0.0
        %8894 = vmatpush1.msra.mxu0 0.0
        %8895 = vmatprep.subr.mxu0 0.0
        %8896 = vmatpush1.msra.mxu0 0.0
        %8897 = vmatprep.subr.mxu0 0.0
        %8898 = vmatpush1.msra.mxu0 0.0
        %8899 = vmatprep.subr.mxu0 0.0
        %8900 = vmatpush1.msra.mxu0 0.0
        %8901 = vmatprep.subr.mxu0 0.0
        %8902 = vmatpush1.msra.mxu0 0.0
        %8903 = vmatprep.subr.mxu0 0.0
        %8904 = vmatpush1.msra.mxu0 0.0
        %8905 = vmatprep.subr.mxu0 0.0
        %8906 = vmatpush1.msra.mxu0 0.0
        %8907 = vmatprep.subr.mxu0 0.0
        %8908 = vmatpush1.msra.mxu0 0.0
        %8909 = vmatprep.subr.mxu0 0.0
        %8910 = vmatpush1.msra.mxu0 0.0
        %8911 = vmatprep.subr.mxu0 0.0
        %8912 = vmatpush1.msra.mxu0 0.0
        %8913 = vmatprep.subr.mxu0 0.0
        %8914 = vmatpush1.msra.mxu0 0.0
        %8915 = vmatprep.mubr.f32.mxu0 0.0
        %v8916 = vand.u32 %v8755, 4294901760
        %8917 = vmatmul.mubr.f32.gmra.mrb[0].mxu0 %v8916
        %v8918 = vpop.f32.mrb[0].mxu0
        %v8919 = vadd.f32 %v8837, %v8918
        %v8920 = vpop.f32.mrb[0].mxu0
        %v8921 = vadd.f32 %v8839, %v8920
        %8922 = vdwg.mxu0
        %v8923 = vand.u32 %v8761, 4294901760
        %v8924 = vsub.f32 %v8761, %v8923
        %8925 = vmatprep.subr.mxu0 %v8924
        %v8926 = vand.u32 %v8758, 4294901760
        %v8927 = vsub.f32 %v8758, %v8926
        %8928 = vmatpush1.msra.mxu0 %v8927
        %8929 = vmatprep.subr.mxu0 0.0
        %8930 = vmatpush1.msra.mxu0 0.0
        %8931 = vmatprep.subr.mxu0 0.0
        %8932 = vmatpush1.msra.mxu0 0.0
        %8933 = vmatprep.subr.mxu0 0.0
        %8934 = vmatpush1.msra.mxu0 0.0
        %8935 = vmatprep.subr.mxu0 0.0
        %8936 = vmatpush1.msra.mxu0 0.0
        %8937 = vmatprep.subr.mxu0 0.0
        %8938 = vmatpush1.msra.mxu0 0.0
        %8939 = vmatprep.subr.mxu0 0.0
        %8940 = vmatpush1.msra.mxu0 0.0
        %8941 = vmatprep.subr.mxu0 0.0
        %8942 = vmatpush1.msra.mxu0 0.0
        %8943 = vmatprep.subr.mxu0 0.0
        %8944 = vmatpush1.msra.mxu0 0.0
        %8945 = vmatprep.subr.mxu0 0.0
        %8946 = vmatpush1.msra.mxu0 0.0
        %8947 = vmatprep.subr.mxu0 0.0
        %8948 = vmatpush1.msra.mxu0 0.0
        %8949 = vmatprep.subr.mxu0 0.0
        %8950 = vmatpush1.msra.mxu0 0.0
        %8951 = vmatprep.subr.mxu0 0.0
        %8952 = vmatpush1.msra.mxu0 0.0
        %8953 = vmatprep.subr.mxu0 0.0
        %8954 = vmatpush1.msra.mxu0 0.0
        %8955 = vmatprep.subr.mxu0 0.0
        %8956 = vmatpush1.msra.mxu0 0.0
        %8957 = vmatprep.subr.mxu0 0.0
        %8958 = vmatpush1.msra.mxu0 0.0
        %8959 = vmatprep.subr.mxu0 0.0
        %8960 = vmatpush1.msra.mxu0 0.0
        %8961 = vmatprep.subr.mxu0 0.0
        %8962 = vmatpush1.msra.mxu0 0.0
        %8963 = vmatprep.subr.mxu0 0.0
        %8964 = vmatpush1.msra.mxu0 0.0
        %8965 = vmatprep.subr.mxu0 0.0
        %8966 = vmatpush1.msra.mxu0 0.0
        %8967 = vmatprep.subr.mxu0 0.0
        %8968 = vmatpush1.msra.mxu0 0.0
        %8969 = vmatprep.subr.mxu0 0.0
        %8970 = vmatpush1.msra.mxu0 0.0
        %8971 = vmatprep.subr.mxu0 0.0
        %8972 = vmatpush1.msra.mxu0 0.0
        %8973 = vmatprep.subr.mxu0 0.0
        %8974 = vmatpush1.msra.mxu0 0.0
        %8975 = vmatprep.subr.mxu0 0.0
        %8976 = vmatpush1.msra.mxu0 0.0
        %8977 = vmatprep.subr.mxu0 0.0
        %8978 = vmatpush1.msra.mxu0 0.0
        %8979 = vmatprep.subr.mxu0 0.0
        %8980 = vmatpush1.msra.mxu0 0.0
        %8981 = vmatprep.subr.mxu0 0.0
        %8982 = vmatpush1.msra.mxu0 0.0
        %8983 = vmatprep.subr.mxu0 0.0
        %8984 = vmatpush1.msra.mxu0 0.0
        %8985 = vmatprep.subr.mxu0 0.0
        %8986 = vmatpush1.msra.mxu0 0.0
        %8987 = vmatprep.subr.mxu0 0.0
        %8988 = vmatpush1.msra.mxu0 0.0
        %8989 = vmatprep.subr.mxu0 0.0
        %8990 = vmatpush1.msra.mxu0 0.0
        %8991 = vmatprep.mubr.f32.mxu0 0.0
        %v8992 = vand.u32 %v8755, 4294901760
        %v8993 = vsub.f32 %v8755, %v8992
        %8994 = vmatmul.mubr.f32.gmra.mrb[0].mxu0 %v8993
        %v8995 = vpop.f32.mrb[0].mxu0
        %v8996 = vadd.f32 %v8919, %v8995
        %v8997 = vpop.f32.mrb[0].mxu0
        %v8998 = vadd.f32 %v8921, %v8997
        %8999 = vdwg.mxu0
        %v9000 = vand.u32 %v8761, 4294901760
        %9001 = vmatprep.subr.mxu0 %v9000
        %v9002 = vand.u32 %v8758, 4294901760
        %9003 = vmatpush1.msra.mxu0 %v9002
        %9004 = vmatprep.subr.mxu0 0.0
        %9005 = vmatpush1.msra.mxu0 0.0
        %9006 = vmatprep.subr.mxu0 0.0
        %9007 = vmatpush1.msra.mxu0 0.0
        %9008 = vmatprep.subr.mxu0 0.0
        %9009 = vmatpush1.msra.mxu0 0.0
        %9010 = vmatprep.subr.mxu0 0.0
        %9011 = vmatpush1.msra.mxu0 0.0
        %9012 = vmatprep.subr.mxu0 0.0
        %9013 = vmatpush1.msra.mxu0 0.0
        %9014 = vmatprep.subr.mxu0 0.0
        %9015 = vmatpush1.msra.mxu0 0.0
        %9016 = vmatprep.subr.mxu0 0.0
        %9017 = vmatpush1.msra.mxu0 0.0
        %9018 = vmatprep.subr.mxu0 0.0
        %9019 = vmatpush1.msra.mxu0 0.0
        %9020 = vmatprep.subr.mxu0 0.0
        %9021 = vmatpush1.msra.mxu0 0.0
        %9022 = vmatprep.subr.mxu0 0.0
        %9023 = vmatpush1.msra.mxu0 0.0
        %9024 = vmatprep.subr.mxu0 0.0
        %9025 = vmatpush1.msra.mxu0 0.0
        %9026 = vmatprep.subr.mxu0 0.0
        %9027 = vmatpush1.msra.mxu0 0.0
        %9028 = vmatprep.subr.mxu0 0.0
        %9029 = vmatpush1.msra.mxu0 0.0
        %9030 = vmatprep.subr.mxu0 0.0
        %9031 = vmatpush1.msra.mxu0 0.0
        %9032 = vmatprep.subr.mxu0 0.0
        %9033 = vmatpush1.msra.mxu0 0.0
        %9034 = vmatprep.subr.mxu0 0.0
        %9035 = vmatpush1.msra.mxu0 0.0
        %9036 = vmatprep.subr.mxu0 0.0
        %9037 = vmatpush1.msra.mxu0 0.0
        %9038 = vmatprep.subr.mxu0 0.0
        %9039 = vmatpush1.msra.mxu0 0.0
        %9040 = vmatprep.subr.mxu0 0.0
        %9041 = vmatpush1.msra.mxu0 0.0
        %9042 = vmatprep.subr.mxu0 0.0
        %9043 = vmatpush1.msra.mxu0 0.0
        %9044 = vmatprep.subr.mxu0 0.0
        %9045 = vmatpush1.msra.mxu0 0.0
        %9046 = vmatprep.subr.mxu0 0.0
        %9047 = vmatpush1.msra.mxu0 0.0
        %9048 = vmatprep.subr.mxu0 0.0
        %9049 = vmatpush1.msra.mxu0 0.0
        %9050 = vmatprep.subr.mxu0 0.0
        %9051 = vmatpush1.msra.mxu0 0.0
        %9052 = vmatprep.subr.mxu0 0.0
        %9053 = vmatpush1.msra.mxu0 0.0
        %9054 = vmatprep.subr.mxu0 0.0
        %9055 = vmatpush1.msra.mxu0 0.0
        %9056 = vmatprep.subr.mxu0 0.0
        %9057 = vmatpush1.msra.mxu0 0.0
        %9058 = vmatprep.subr.mxu0 0.0
        %9059 = vmatpush1.msra.mxu0 0.0
        %9060 = vmatprep.subr.mxu0 0.0
        %9061 = vmatpush1.msra.mxu0 0.0
        %9062 = vmatprep.subr.mxu0 0.0
        %9063 = vmatpush1.msra.mxu0 0.0
        %9064 = vmatprep.subr.mxu0 0.0
        %9065 = vmatpush1.msra.mxu0 0.0
        %9066 = vmatprep.mubr.f32.mxu0 0.0
        %v9067 = vand.u32 %v8755, 4294901760
        %v9068 = vsub.f32 %v8755, %v9067
        %v9069 = vand.u32 %v9068, 4294901760
        %9070 = vmatmul.mubr.f32.gmra.mrb[0].mxu0 %v9069
        %v9071 = vpop.f32.mrb[0].mxu0
        %v9072 = vadd.f32 %v8996, %v9071
        %v9073 = vpop.f32.mrb[0].mxu0
        %v9074 = vadd.f32 %v8998, %v9073
        %9075 = vdwg.mxu0
        %v9076 = vand.u32 %v8761, 4294901760
        %v9077 = vsub.f32 %v8761, %v9076
        %v9078 = vand.u32 %v9077, 4294901760
        %9079 = vmatprep.subr.mxu0 %v9078
        %v9080 = vand.u32 %v8758, 4294901760
        %v9081 = vsub.f32 %v8758, %v9080
        %v9082 = vand.u32 %v9081, 4294901760
        %9083 = vmatpush1.msra.mxu0 %v9082
        %9084 = vmatprep.subr.mxu0 0.0
        %9085 = vmatpush1.msra.mxu0 0.0
        %9086 = vmatprep.subr.mxu0 0.0
        %9087 = vmatpush1.msra.mxu0 0.0
        %9088 = vmatprep.subr.mxu0 0.0
        %9089 = vmatpush1.msra.mxu0 0.0
        %9090 = vmatprep.subr.mxu0 0.0
        %9091 = vmatpush1.msra.mxu0 0.0
        %9092 = vmatprep.subr.mxu0 0.0
        %9093 = vmatpush1.msra.mxu0 0.0
        %9094 = vmatprep.subr.mxu0 0.0
        %9095 = vmatpush1.msra.mxu0 0.0
        %9096 = vmatprep.subr.mxu0 0.0
        %9097 = vmatpush1.msra.mxu0 0.0
        %9098 = vmatprep.subr.mxu0 0.0
        %9099 = vmatpush1.msra.mxu0 0.0
        %9100 = vmatprep.subr.mxu0 0.0
        %9101 = vmatpush1.msra.mxu0 0.0
        %9102 = vmatprep.subr.mxu0 0.0
        %9103 = vmatpush1.msra.mxu0 0.0
        %9104 = vmatprep.subr.mxu0 0.0
        %9105 = vmatpush1.msra.mxu0 0.0
        %9106 = vmatprep.subr.mxu0 0.0
        %9107 = vmatpush1.msra.mxu0 0.0
        %9108 = vmatprep.subr.mxu0 0.0
        %9109 = vmatpush1.msra.mxu0 0.0
        %9110 = vmatprep.subr.mxu0 0.0
        %9111 = vmatpush1.msra.mxu0 0.0
        %9112 = vmatprep.subr.mxu0 0.0
        %9113 = vmatpush1.msra.mxu0 0.0
        %9114 = vmatprep.subr.mxu0 0.0
        %9115 = vmatpush1.msra.mxu0 0.0
        %9116 = vmatprep.subr.mxu0 0.0
        %9117 = vmatpush1.msra.mxu0 0.0
        %9118 = vmatprep.subr.mxu0 0.0
        %9119 = vmatpush1.msra.mxu0 0.0
        %9120 = vmatprep.subr.mxu0 0.0
        %9121 = vmatpush1.msra.mxu0 0.0
        %9122 = vmatprep.subr.mxu0 0.0
        %9123 = vmatpush1.msra.mxu0 0.0
        %9124 = vmatprep.subr.mxu0 0.0
        %9125 = vmatpush1.msra.mxu0 0.0
        %9126 = vmatprep.subr.mxu0 0.0
        %9127 = vmatpush1.msra.mxu0 0.0
        %9128 = vmatprep.subr.mxu0 0.0
        %9129 = vmatpush1.msra.mxu0 0.0
        %9130 = vmatprep.subr.mxu0 0.0
        %9131 = vmatpush1.msra.mxu0 0.0
        %9132 = vmatprep.subr.mxu0 0.0
        %9133 = vmatpush1.msra.mxu0 0.0
        %9134 = vmatprep.subr.mxu0 0.0
        %9135 = vmatpush1.msra.mxu0 0.0
        %9136 = vmatprep.subr.mxu0 0.0
        %9137 = vmatpush1.msra.mxu0 0.0
        %9138 = vmatprep.subr.mxu0 0.0
        %9139 = vmatpush1.msra.mxu0 0.0
        %9140 = vmatprep.subr.mxu0 0.0
        %9141 = vmatpush1.msra.mxu0 0.0
        %9142 = vmatprep.subr.mxu0 0.0
        %9143 = vmatpush1.msra.mxu0 0.0
        %9144 = vmatprep.subr.mxu0 0.0
        %9145 = vmatpush1.msra.mxu0 0.0
        %9146 = vmatprep.mubr.f32.mxu0 0.0
        %v9147 = vand.u32 %v8755, 4294901760
        %9148 = vmatmul.mubr.f32.gmra.mrb[0].mxu0 %v9147
        %v9149 = vpop.f32.mrb[0].mxu0
        %v9150 = vadd.f32 %v9072, %v9149
        %v9151 = vpop.f32.mrb[0].mxu0
        %v9152 = vadd.f32 %v9074, %v9151
        %9153 = vdwg.mxu0
        %v9154 = vand.u32 %v8761, 4294901760
        %9155 = vmatprep.subr.mxu0 %v9154
        %v9156 = vand.u32 %v8758, 4294901760
        %9157 = vmatpush1.msra.mxu0 %v9156
        %9158 = vmatprep.subr.mxu0 0.0
        %9159 = vmatpush1.msra.mxu0 0.0
        %9160 = vmatprep.subr.mxu0 0.0
        %9161 = vmatpush1.msra.mxu0 0.0
        %9162 = vmatprep.subr.mxu0 0.0
        %9163 = vmatpush1.msra.mxu0 0.0
        %9164 = vmatprep.subr.mxu0 0.0
        %9165 = vmatpush1.msra.mxu0 0.0
        %9166 = vmatprep.subr.mxu0 0.0
        %9167 = vmatpush1.msra.mxu0 0.0
        %9168 = vmatprep.subr.mxu0 0.0
        %9169 = vmatpush1.msra.mxu0 0.0
        %9170 = vmatprep.subr.mxu0 0.0
        %9171 = vmatpush1.msra.mxu0 0.0
        %9172 = vmatprep.subr.mxu0 0.0
        %9173 = vmatpush1.msra.mxu0 0.0
        %9174 = vmatprep.subr.mxu0 0.0
        %9175 = vmatpush1.msra.mxu0 0.0
        %9176 = vmatprep.subr.mxu0 0.0
        %9177 = vmatpush1.msra.mxu0 0.0
        %9178 = vmatprep.subr.mxu0 0.0
        %9179 = vmatpush1.msra.mxu0 0.0
        %9180 = vmatprep.subr.mxu0 0.0
        %9181 = vmatpush1.msra.mxu0 0.0
        %9182 = vmatprep.subr.mxu0 0.0
        %9183 = vmatpush1.msra.mxu0 0.0
        %9184 = vmatprep.subr.mxu0 0.0
        %9185 = vmatpush1.msra.mxu0 0.0
        %9186 = vmatprep.subr.mxu0 0.0
        %9187 = vmatpush1.msra.mxu0 0.0
        %9188 = vmatprep.subr.mxu0 0.0
        %9189 = vmatpush1.msra.mxu0 0.0
        %9190 = vmatprep.subr.mxu0 0.0
        %9191 = vmatpush1.msra.mxu0 0.0
        %9192 = vmatprep.subr.mxu0 0.0
        %9193 = vmatpush1.msra.mxu0 0.0
        %9194 = vmatprep.subr.mxu0 0.0
        %9195 = vmatpush1.msra.mxu0 0.0
        %9196 = vmatprep.subr.mxu0 0.0
        %9197 = vmatpush1.msra.mxu0 0.0
        %9198 = vmatprep.subr.mxu0 0.0
        %9199 = vmatpush1.msra.mxu0 0.0
        %9200 = vmatprep.subr.mxu0 0.0
        %9201 = vmatpush1.msra.mxu0 0.0
        %9202 = vmatprep.subr.mxu0 0.0
        %9203 = vmatpush1.msra.mxu0 0.0
        %9204 = vmatprep.subr.mxu0 0.0
        %9205 = vmatpush1.msra.mxu0 0.0
        %9206 = vmatprep.subr.mxu0 0.0
        %9207 = vmatpush1.msra.mxu0 0.0
        %9208 = vmatprep.subr.mxu0 0.0
        %9209 = vmatpush1.msra.mxu0 0.0
        %9210 = vmatprep.subr.mxu0 0.0
        %9211 = vmatpush1.msra.mxu0 0.0
        %9212 = vmatprep.subr.mxu0 0.0
        %9213 = vmatpush1.msra.mxu0 0.0
        %9214 = vmatprep.subr.mxu0 0.0
        %9215 = vmatpush1.msra.mxu0 0.0
        %9216 = vmatprep.subr.mxu0 0.0
        %9217 = vmatpush1.msra.mxu0 0.0
        %9218 = vmatprep.subr.mxu0 0.0
        %9219 = vmatpush1.msra.mxu0 0.0
        %9220 = vmatprep.mubr.f32.mxu0 0.0
        %v9221 = vand.u32 %v8755, 4294901760
        %9222 = vmatmul.mubr.f32.gmra.mrb[0].mxu0 %v9221
        %v9223 = vpop.f32.mrb[0].mxu0
        %v9224 = vadd.f32 %v9150, %v9223
        %v9225 = vpop.f32.mrb[0].mxu0
        %v9226 = vadd.f32 %v9152, %v9225
        %9227 = vdwg.mxu0
        %v9228 = vadd.f32 %v8742, %v9224
        %v9229 = vadd.f32 %v8743, %v9226
        %9230 = vrot.lane.b32.xlu0 %v5353, 94
        %v9231 = vpop.permute.xlu0 %9230
        %9232 = vrot.lane.b32.xlu0 %v5354, 94
        %v9233 = vpop.permute.xlu0 %9232
        %v9234 = vsel %vm4859, %v9231, %v9233
        %v9235 = vsel %vm4859, %v9233, %v9231
        %v9236 = vmul.f32 %v9234, %v4868
        %v9237 = vmul.f32 %v9235, %v4872
        %s9238 = scalar_lea.vmem %s4, 32
        %v9239 = vld [vmem:[%s9238] sm:$0xf]
        %v9241 = vsel %vm905, %v9239, 0
        %v9244 = vsel %vm909, %v9236, 0
        %v9247 = vsel %vm909, %v9237, 0
        %v9249 = vand.u32 %v9247, 4294901760
        %9250 = vmatprep.subr.mxu0 %v9249
        %v9251 = vand.u32 %v9244, 4294901760
        %9252 = vmatpush1.msra.mxu0 %v9251
        %9253 = vmatprep.subr.mxu0 0.0
        %9254 = vmatpush1.msra.mxu0 0.0
        %9255 = vmatprep.subr.mxu0 0.0
        %9256 = vmatpush1.msra.mxu0 0.0
        %9257 = vmatprep.subr.mxu0 0.0
        %9258 = vmatpush1.msra.mxu0 0.0
        %9259 = vmatprep.subr.mxu0 0.0
        %9260 = vmatpush1.msra.mxu0 0.0
        %9261 = vmatprep.subr.mxu0 0.0
        %9262 = vmatpush1.msra.mxu0 0.0
        %9263 = vmatprep.subr.mxu0 0.0
        %9264 = vmatpush1.msra.mxu0 0.0
        %9265 = vmatprep.subr.mxu0 0.0
        %9266 = vmatpush1.msra.mxu0 0.0
        %9267 = vmatprep.subr.mxu0 0.0
        %9268 = vmatpush1.msra.mxu0 0.0
        %9269 = vmatprep.subr.mxu0 0.0
        %9270 = vmatpush1.msra.mxu0 0.0
        %9271 = vmatprep.subr.mxu0 0.0
        %9272 = vmatpush1.msra.mxu0 0.0
        %9273 = vmatprep.subr.mxu0 0.0
        %9274 = vmatpush1.msra.mxu0 0.0
        %9275 = vmatprep.subr.mxu0 0.0
        %9276 = vmatpush1.msra.mxu0 0.0
        %9277 = vmatprep.subr.mxu0 0.0
        %9278 = vmatpush1.msra.mxu0 0.0
        %9279 = vmatprep.subr.mxu0 0.0
        %9280 = vmatpush1.msra.mxu0 0.0
        %9281 = vmatprep.subr.mxu0 0.0
        %9282 = vmatpush1.msra.mxu0 0.0
        %9283 = vmatprep.subr.mxu0 0.0
        %9284 = vmatpush1.msra.mxu0 0.0
        %9285 = vmatprep.subr.mxu0 0.0
        %9286 = vmatpush1.msra.mxu0 0.0
        %9287 = vmatprep.subr.mxu0 0.0
        %9288 = vmatpush1.msra.mxu0 0.0
        %9289 = vmatprep.subr.mxu0 0.0
        %9290 = vmatpush1.msra.mxu0 0.0
        %9291 = vmatprep.subr.mxu0 0.0
        %9292 = vmatpush1.msra.mxu0 0.0
        %9293 = vmatprep.subr.mxu0 0.0
        %9294 = vmatpush1.msra.mxu0 0.0
        %9295 = vmatprep.subr.mxu0 0.0
        %9296 = vmatpush1.msra.mxu0 0.0
        %9297 = vmatprep.subr.mxu0 0.0
        %9298 = vmatpush1.msra.mxu0 0.0
        %9299 = vmatprep.subr.mxu0 0.0
        %9300 = vmatpush1.msra.mxu0 0.0
        %9301 = vmatprep.subr.mxu0 0.0
        %9302 = vmatpush1.msra.mxu0 0.0
        %9303 = vmatprep.subr.mxu0 0.0
        %9304 = vmatpush1.msra.mxu0 0.0
        %9305 = vmatprep.subr.mxu0 0.0
        %9306 = vmatpush1.msra.mxu0 0.0
        %9307 = vmatprep.subr.mxu0 0.0
        %9308 = vmatpush1.msra.mxu0 0.0
        %9309 = vmatprep.subr.mxu0 0.0
        %9310 = vmatpush1.msra.mxu0 0.0
        %9311 = vmatprep.subr.mxu0 0.0
        %9312 = vmatpush1.msra.mxu0 0.0
        %9313 = vmatprep.subr.mxu0 0.0
        %9314 = vmatpush1.msra.mxu0 0.0
        %9315 = vmatprep.mubr.f32.mxu0 0.0
        %v9316 = vand.u32 %v9241, 4294901760
        %v9317 = vsub.f32 %v9241, %v9316
        %v9318 = vand.u32 %v9317, 4294901760
        %v9319 = vsub.f32 %v9317, %v9318
        %v9320 = vand.u32 %v9319, 4294901760
        %9321 = vmatmul.mubr.f32.gmra.mrb[0].mxu0 %v9320
        %v9322 = vpop.f32.mrb[0].mxu0
        %v9323 = vadd.f32 0.0, %v9322
        %v9324 = vpop.f32.mrb[0].mxu0
        %v9325 = vadd.f32 0.0, %v9324
        %9326 = vdwg.mxu0
        %v9327 = vand.u32 %v9247, 4294901760
        %v9328 = vsub.f32 %v9247, %v9327
        %v9329 = vand.u32 %v9328, 4294901760
        %v9330 = vsub.f32 %v9328, %v9329
        %v9331 = vand.u32 %v9330, 4294901760
        %9332 = vmatprep.subr.mxu0 %v9331
        %v9333 = vand.u32 %v9244, 4294901760
        %v9334 = vsub.f32 %v9244, %v9333
        %v9335 = vand.u32 %v9334, 4294901760
        %v9336 = vsub.f32 %v9334, %v9335
        %v9337 = vand.u32 %v9336, 4294901760
        %9338 = vmatpush1.msra.mxu0 %v9337
        %9339 = vmatprep.subr.mxu0 0.0
        %9340 = vmatpush1.msra.mxu0 0.0
        %9341 = vmatprep.subr.mxu0 0.0
        %9342 = vmatpush1.msra.mxu0 0.0
        %9343 = vmatprep.subr.mxu0 0.0
        %9344 = vmatpush1.msra.mxu0 0.0
        %9345 = vmatprep.subr.mxu0 0.0
        %9346 = vmatpush1.msra.mxu0 0.0
        %9347 = vmatprep.subr.mxu0 0.0
        %9348 = vmatpush1.msra.mxu0 0.0
        %9349 = vmatprep.subr.mxu0 0.0
        %9350 = vmatpush1.msra.mxu0 0.0
        %9351 = vmatprep.subr.mxu0 0.0
        %9352 = vmatpush1.msra.mxu0 0.0
        %9353 = vmatprep.subr.mxu0 0.0
        %9354 = vmatpush1.msra.mxu0 0.0
        %9355 = vmatprep.subr.mxu0 0.0
        %9356 = vmatpush1.msra.mxu0 0.0
        %9357 = vmatprep.subr.mxu0 0.0
        %9358 = vmatpush1.msra.mxu0 0.0
        %9359 = vmatprep.subr.mxu0 0.0
        %9360 = vmatpush1.msra.mxu0 0.0
        %9361 = vmatprep.subr.mxu0 0.0
        %9362 = vmatpush1.msra.mxu0 0.0
        %9363 = vmatprep.subr.mxu0 0.0
        %9364 = vmatpush1.msra.mxu0 0.0
        %9365 = vmatprep.subr.mxu0 0.0
        %9366 = vmatpush1.msra.mxu0 0.0
        %9367 = vmatprep.subr.mxu0 0.0
        %9368 = vmatpush1.msra.mxu0 0.0
        %9369 = vmatprep.subr.mxu0 0.0
        %9370 = vmatpush1.msra.mxu0 0.0
        %9371 = vmatprep.subr.mxu0 0.0
        %9372 = vmatpush1.msra.mxu0 0.0
        %9373 = vmatprep.subr.mxu0 0.0
        %9374 = vmatpush1.msra.mxu0 0.0
        %9375 = vmatprep.subr.mxu0 0.0
        %9376 = vmatpush1.msra.mxu0 0.0
        %9377 = vmatprep.subr.mxu0 0.0
        %9378 = vmatpush1.msra.mxu0 0.0
        %9379 = vmatprep.subr.mxu0 0.0
        %9380 = vmatpush1.msra.mxu0 0.0
        %9381 = vmatprep.subr.mxu0 0.0
        %9382 = vmatpush1.msra.mxu0 0.0
        %9383 = vmatprep.subr.mxu0 0.0
        %9384 = vmatpush1.msra.mxu0 0.0
        %9385 = vmatprep.subr.mxu0 0.0
        %9386 = vmatpush1.msra.mxu0 0.0
        %9387 = vmatprep.subr.mxu0 0.0
        %9388 = vmatpush1.msra.mxu0 0.0
        %9389 = vmatprep.subr.mxu0 0.0
        %9390 = vmatpush1.msra.mxu0 0.0
        %9391 = vmatprep.subr.mxu0 0.0
        %9392 = vmatpush1.msra.mxu0 0.0
        %9393 = vmatprep.subr.mxu0 0.0
        %9394 = vmatpush1.msra.mxu0 0.0
        %9395 = vmatprep.subr.mxu0 0.0
        %9396 = vmatpush1.msra.mxu0 0.0
        %9397 = vmatprep.subr.mxu0 0.0
        %9398 = vmatpush1.msra.mxu0 0.0
        %9399 = vmatprep.subr.mxu0 0.0
        %9400 = vmatpush1.msra.mxu0 0.0
        %9401 = vmatprep.mubr.f32.mxu0 0.0
        %v9402 = vand.u32 %v9241, 4294901760
        %9403 = vmatmul.mubr.f32.gmra.mrb[0].mxu0 %v9402
        %v9404 = vpop.f32.mrb[0].mxu0
        %v9405 = vadd.f32 %v9323, %v9404
        %v9406 = vpop.f32.mrb[0].mxu0
        %v9407 = vadd.f32 %v9325, %v9406
        %9408 = vdwg.mxu0
        %v9409 = vand.u32 %v9247, 4294901760
        %v9410 = vsub.f32 %v9247, %v9409
        %9411 = vmatprep.subr.mxu0 %v9410
        %v9412 = vand.u32 %v9244, 4294901760
        %v9413 = vsub.f32 %v9244, %v9412
        %9414 = vmatpush1.msra.mxu0 %v9413
        %9415 = vmatprep.subr.mxu0 0.0
        %9416 = vmatpush1.msra.mxu0 0.0
        %9417 = vmatprep.subr.mxu0 0.0
        %9418 = vmatpush1.msra.mxu0 0.0
        %9419 = vmatprep.subr.mxu0 0.0
        %9420 = vmatpush1.msra.mxu0 0.0
        %9421 = vmatprep.subr.mxu0 0.0
        %9422 = vmatpush1.msra.mxu0 0.0
        %9423 = vmatprep.subr.mxu0 0.0
        %9424 = vmatpush1.msra.mxu0 0.0
        %9425 = vmatprep.subr.mxu0 0.0
        %9426 = vmatpush1.msra.mxu0 0.0
        %9427 = vmatprep.subr.mxu0 0.0
        %9428 = vmatpush1.msra.mxu0 0.0
        %9429 = vmatprep.subr.mxu0 0.0
        %9430 = vmatpush1.msra.mxu0 0.0
        %9431 = vmatprep.subr.mxu0 0.0
        %9432 = vmatpush1.msra.mxu0 0.0
        %9433 = vmatprep.subr.mxu0 0.0
        %9434 = vmatpush1.msra.mxu0 0.0
        %9435 = vmatprep.subr.mxu0 0.0
        %9436 = vmatpush1.msra.mxu0 0.0
        %9437 = vmatprep.subr.mxu0 0.0
        %9438 = vmatpush1.msra.mxu0 0.0
        %9439 = vmatprep.subr.mxu0 0.0
        %9440 = vmatpush1.msra.mxu0 0.0
        %9441 = vmatprep.subr.mxu0 0.0
        %9442 = vmatpush1.msra.mxu0 0.0
        %9443 = vmatprep.subr.mxu0 0.0
        %9444 = vmatpush1.msra.mxu0 0.0
        %9445 = vmatprep.subr.mxu0 0.0
        %9446 = vmatpush1.msra.mxu0 0.0
        %9447 = vmatprep.subr.mxu0 0.0
        %9448 = vmatpush1.msra.mxu0 0.0
        %9449 = vmatprep.subr.mxu0 0.0
        %9450 = vmatpush1.msra.mxu0 0.0
        %9451 = vmatprep.subr.mxu0 0.0
        %9452 = vmatpush1.msra.mxu0 0.0
        %9453 = vmatprep.subr.mxu0 0.0
        %9454 = vmatpush1.msra.mxu0 0.0
        %9455 = vmatprep.subr.mxu0 0.0
        %9456 = vmatpush1.msra.mxu0 0.0
        %9457 = vmatprep.subr.mxu0 0.0
        %9458 = vmatpush1.msra.mxu0 0.0
        %9459 = vmatprep.subr.mxu0 0.0
        %9460 = vmatpush1.msra.mxu0 0.0
        %9461 = vmatprep.subr.mxu0 0.0
        %9462 = vmatpush1.msra.mxu0 0.0
        %9463 = vmatprep.subr.mxu0 0.0
        %9464 = vmatpush1.msra.mxu0 0.0
        %9465 = vmatprep.subr.mxu0 0.0
        %9466 = vmatpush1.msra.mxu0 0.0
        %9467 = vmatprep.subr.mxu0 0.0
        %9468 = vmatpush1.msra.mxu0 0.0
        %9469 = vmatprep.subr.mxu0 0.0
        %9470 = vmatpush1.msra.mxu0 0.0
        %9471 = vmatprep.subr.mxu0 0.0
        %9472 = vmatpush1.msra.mxu0 0.0
        %9473 = vmatprep.subr.mxu0 0.0
        %9474 = vmatpush1.msra.mxu0 0.0
        %9475 = vmatprep.subr.mxu0 0.0
        %9476 = vmatpush1.msra.mxu0 0.0
        %9477 = vmatprep.mubr.f32.mxu0 0.0
        %v9478 = vand.u32 %v9241, 4294901760
        %v9479 = vsub.f32 %v9241, %v9478
        %9480 = vmatmul.mubr.f32.gmra.mrb[0].mxu0 %v9479
        %v9481 = vpop.f32.mrb[0].mxu0
        %v9482 = vadd.f32 %v9405, %v9481
        %v9483 = vpop.f32.mrb[0].mxu0
        %v9484 = vadd.f32 %v9407, %v9483
        %9485 = vdwg.mxu0
        %v9486 = vand.u32 %v9247, 4294901760
        %9487 = vmatprep.subr.mxu0 %v9486
        %v9488 = vand.u32 %v9244, 4294901760
        %9489 = vmatpush1.msra.mxu0 %v9488
        %9490 = vmatprep.subr.mxu0 0.0
        %9491 = vmatpush1.msra.mxu0 0.0
        %9492 = vmatprep.subr.mxu0 0.0
        %9493 = vmatpush1.msra.mxu0 0.0
        %9494 = vmatprep.subr.mxu0 0.0
        %9495 = vmatpush1.msra.mxu0 0.0
        %9496 = vmatprep.subr.mxu0 0.0
        %9497 = vmatpush1.msra.mxu0 0.0
        %9498 = vmatprep.subr.mxu0 0.0
        %9499 = vmatpush1.msra.mxu0 0.0
        %9500 = vmatprep.subr.mxu0 0.0
        %9501 = vmatpush1.msra.mxu0 0.0
        %9502 = vmatprep.subr.mxu0 0.0
        %9503 = vmatpush1.msra.mxu0 0.0
        %9504 = vmatprep.subr.mxu0 0.0
        %9505 = vmatpush1.msra.mxu0 0.0
        %9506 = vmatprep.subr.mxu0 0.0
        %9507 = vmatpush1.msra.mxu0 0.0
        %9508 = vmatprep.subr.mxu0 0.0
        %9509 = vmatpush1.msra.mxu0 0.0
        %9510 = vmatprep.subr.mxu0 0.0
        %9511 = vmatpush1.msra.mxu0 0.0
        %9512 = vmatprep.subr.mxu0 0.0
        %9513 = vmatpush1.msra.mxu0 0.0
        %9514 = vmatprep.subr.mxu0 0.0
        %9515 = vmatpush1.msra.mxu0 0.0
        %9516 = vmatprep.subr.mxu0 0.0
        %9517 = vmatpush1.msra.mxu0 0.0
        %9518 = vmatprep.subr.mxu0 0.0
        %9519 = vmatpush1.msra.mxu0 0.0
        %9520 = vmatprep.subr.mxu0 0.0
        %9521 = vmatpush1.msra.mxu0 0.0
        %9522 = vmatprep.subr.mxu0 0.0
        %9523 = vmatpush1.msra.mxu0 0.0
        %9524 = vmatprep.subr.mxu0 0.0
        %9525 = vmatpush1.msra.mxu0 0.0
        %9526 = vmatprep.subr.mxu0 0.0
        %9527 = vmatpush1.msra.mxu0 0.0
        %9528 = vmatprep.subr.mxu0 0.0
        %9529 = vmatpush1.msra.mxu0 0.0
        %9530 = vmatprep.subr.mxu0 0.0
        %9531 = vmatpush1.msra.mxu0 0.0
        %9532 = vmatprep.subr.mxu0 0.0
        %9533 = vmatpush1.msra.mxu0 0.0
        %9534 = vmatprep.subr.mxu0 0.0
        %9535 = vmatpush1.msra.mxu0 0.0
        %9536 = vmatprep.subr.mxu0 0.0
        %9537 = vmatpush1.msra.mxu0 0.0
        %9538 = vmatprep.subr.mxu0 0.0
        %9539 = vmatpush1.msra.mxu0 0.0
        %9540 = vmatprep.subr.mxu0 0.0
        %9541 = vmatpush1.msra.mxu0 0.0
        %9542 = vmatprep.subr.mxu0 0.0
        %9543 = vmatpush1.msra.mxu0 0.0
        %9544 = vmatprep.subr.mxu0 0.0
        %9545 = vmatpush1.msra.mxu0 0.0
        %9546 = vmatprep.subr.mxu0 0.0
        %9547 = vmatpush1.msra.mxu0 0.0
        %9548 = vmatprep.subr.mxu0 0.0
        %9549 = vmatpush1.msra.mxu0 0.0
        %9550 = vmatprep.subr.mxu0 0.0
        %9551 = vmatpush1.msra.mxu0 0.0
        %9552 = vmatprep.mubr.f32.mxu0 0.0
        %v9553 = vand.u32 %v9241, 4294901760
        %v9554 = vsub.f32 %v9241, %v9553
        %v9555 = vand.u32 %v9554, 4294901760
        %9556 = vmatmul.mubr.f32.gmra.mrb[0].mxu0 %v9555
        %v9557 = vpop.f32.mrb[0].mxu0
        %v9558 = vadd.f32 %v9482, %v9557
        %v9559 = vpop.f32.mrb[0].mxu0
        %v9560 = vadd.f32 %v9484, %v9559
        %9561 = vdwg.mxu0
        %v9562 = vand.u32 %v9247, 4294901760
        %v9563 = vsub.f32 %v9247, %v9562
        %v9564 = vand.u32 %v9563, 4294901760
        %9565 = vmatprep.subr.mxu0 %v9564
        %v9566 = vand.u32 %v9244, 4294901760
        %v9567 = vsub.f32 %v9244, %v9566
        %v9568 = vand.u32 %v9567, 4294901760
        %9569 = vmatpush1.msra.mxu0 %v9568
        %9570 = vmatprep.subr.mxu0 0.0
        %9571 = vmatpush1.msra.mxu0 0.0
        %9572 = vmatprep.subr.mxu0 0.0
        %9573 = vmatpush1.msra.mxu0 0.0
        %9574 = vmatprep.subr.mxu0 0.0
        %9575 = vmatpush1.msra.mxu0 0.0
        %9576 = vmatprep.subr.mxu0 0.0
        %9577 = vmatpush1.msra.mxu0 0.0
        %9578 = vmatprep.subr.mxu0 0.0
        %9579 = vmatpush1.msra.mxu0 0.0
        %9580 = vmatprep.subr.mxu0 0.0
        %9581 = vmatpush1.msra.mxu0 0.0
        %9582 = vmatprep.subr.mxu0 0.0
        %9583 = vmatpush1.msra.mxu0 0.0
        %9584 = vmatprep.subr.mxu0 0.0
        %9585 = vmatpush1.msra.mxu0 0.0
        %9586 = vmatprep.subr.mxu0 0.0
        %9587 = vmatpush1.msra.mxu0 0.0
        %9588 = vmatprep.subr.mxu0 0.0
        %9589 = vmatpush1.msra.mxu0 0.0
        %9590 = vmatprep.subr.mxu0 0.0
        %9591 = vmatpush1.msra.mxu0 0.0
        %9592 = vmatprep.subr.mxu0 0.0
        %9593 = vmatpush1.msra.mxu0 0.0
        %9594 = vmatprep.subr.mxu0 0.0
        %9595 = vmatpush1.msra.mxu0 0.0
        %9596 = vmatprep.subr.mxu0 0.0
        %9597 = vmatpush1.msra.mxu0 0.0
        %9598 = vmatprep.subr.mxu0 0.0
        %9599 = vmatpush1.msra.mxu0 0.0
        %9600 = vmatprep.subr.mxu0 0.0
        %9601 = vmatpush1.msra.mxu0 0.0
        %9602 = vmatprep.subr.mxu0 0.0
        %9603 = vmatpush1.msra.mxu0 0.0
        %9604 = vmatprep.subr.mxu0 0.0
        %9605 = vmatpush1.msra.mxu0 0.0
        %9606 = vmatprep.subr.mxu0 0.0
        %9607 = vmatpush1.msra.mxu0 0.0
        %9608 = vmatprep.subr.mxu0 0.0
        %9609 = vmatpush1.msra.mxu0 0.0
        %9610 = vmatprep.subr.mxu0 0.0
        %9611 = vmatpush1.msra.mxu0 0.0
        %9612 = vmatprep.subr.mxu0 0.0
        %9613 = vmatpush1.msra.mxu0 0.0
        %9614 = vmatprep.subr.mxu0 0.0
        %9615 = vmatpush1.msra.mxu0 0.0
        %9616 = vmatprep.subr.mxu0 0.0
        %9617 = vmatpush1.msra.mxu0 0.0
        %9618 = vmatprep.subr.mxu0 0.0
        %9619 = vmatpush1.msra.mxu0 0.0
        %9620 = vmatprep.subr.mxu0 0.0
        %9621 = vmatpush1.msra.mxu0 0.0
        %9622 = vmatprep.subr.mxu0 0.0
        %9623 = vmatpush1.msra.mxu0 0.0
        %9624 = vmatprep.subr.mxu0 0.0
        %9625 = vmatpush1.msra.mxu0 0.0
        %9626 = vmatprep.subr.mxu0 0.0
        %9627 = vmatpush1.msra.mxu0 0.0
        %9628 = vmatprep.subr.mxu0 0.0
        %9629 = vmatpush1.msra.mxu0 0.0
        %9630 = vmatprep.subr.mxu0 0.0
        %9631 = vmatpush1.msra.mxu0 0.0
        %9632 = vmatprep.mubr.f32.mxu0 0.0
        %v9633 = vand.u32 %v9241, 4294901760
        %9634 = vmatmul.mubr.f32.gmra.mrb[0].mxu0 %v9633
        %v9635 = vpop.f32.mrb[0].mxu0
        %v9636 = vadd.f32 %v9558, %v9635
        %v9637 = vpop.f32.mrb[0].mxu0
        %v9638 = vadd.f32 %v9560, %v9637
        %9639 = vdwg.mxu0
        %v9640 = vand.u32 %v9247, 4294901760
        %9641 = vmatprep.subr.mxu0 %v9640
        %v9642 = vand.u32 %v9244, 4294901760
        %9643 = vmatpush1.msra.mxu0 %v9642
        %9644 = vmatprep.subr.mxu0 0.0
        %9645 = vmatpush1.msra.mxu0 0.0
        %9646 = vmatprep.subr.mxu0 0.0
        %9647 = vmatpush1.msra.mxu0 0.0
        %9648 = vmatprep.subr.mxu0 0.0
        %9649 = vmatpush1.msra.mxu0 0.0
        %9650 = vmatprep.subr.mxu0 0.0
        %9651 = vmatpush1.msra.mxu0 0.0
        %9652 = vmatprep.subr.mxu0 0.0
        %9653 = vmatpush1.msra.mxu0 0.0
        %9654 = vmatprep.subr.mxu0 0.0
        %9655 = vmatpush1.msra.mxu0 0.0
        %9656 = vmatprep.subr.mxu0 0.0
        %9657 = vmatpush1.msra.mxu0 0.0
        %9658 = vmatprep.subr.mxu0 0.0
        %9659 = vmatpush1.msra.mxu0 0.0
        %9660 = vmatprep.subr.mxu0 0.0
        %9661 = vmatpush1.msra.mxu0 0.0
        %9662 = vmatprep.subr.mxu0 0.0
        %9663 = vmatpush1.msra.mxu0 0.0
        %9664 = vmatprep.subr.mxu0 0.0
        %9665 = vmatpush1.msra.mxu0 0.0
        %9666 = vmatprep.subr.mxu0 0.0
        %9667 = vmatpush1.msra.mxu0 0.0
        %9668 = vmatprep.subr.mxu0 0.0
        %9669 = vmatpush1.msra.mxu0 0.0
        %9670 = vmatprep.subr.mxu0 0.0
        %9671 = vmatpush1.msra.mxu0 0.0
        %9672 = vmatprep.subr.mxu0 0.0
        %9673 = vmatpush1.msra.mxu0 0.0
        %9674 = vmatprep.subr.mxu0 0.0
        %9675 = vmatpush1.msra.mxu0 0.0
        %9676 = vmatprep.subr.mxu0 0.0
        %9677 = vmatpush1.msra.mxu0 0.0
        %9678 = vmatprep.subr.mxu0 0.0
        %9679 = vmatpush1.msra.mxu0 0.0
        %9680 = vmatprep.subr.mxu0 0.0
        %9681 = vmatpush1.msra.mxu0 0.0
        %9682 = vmatprep.subr.mxu0 0.0
        %9683 = vmatpush1.msra.mxu0 0.0
        %9684 = vmatprep.subr.mxu0 0.0
        %9685 = vmatpush1.msra.mxu0 0.0
        %9686 = vmatprep.subr.mxu0 0.0
        %9687 = vmatpush1.msra.mxu0 0.0
        %9688 = vmatprep.subr.mxu0 0.0
        %9689 = vmatpush1.msra.mxu0 0.0
        %9690 = vmatprep.subr.mxu0 0.0
        %9691 = vmatpush1.msra.mxu0 0.0
        %9692 = vmatprep.subr.mxu0 0.0
        %9693 = vmatpush1.msra.mxu0 0.0
        %9694 = vmatprep.subr.mxu0 0.0
        %9695 = vmatpush1.msra.mxu0 0.0
        %9696 = vmatprep.subr.mxu0 0.0
        %9697 = vmatpush1.msra.mxu0 0.0
        %9698 = vmatprep.subr.mxu0 0.0
        %9699 = vmatpush1.msra.mxu0 0.0
        %9700 = vmatprep.subr.mxu0 0.0
        %9701 = vmatpush1.msra.mxu0 0.0
        %9702 = vmatprep.subr.mxu0 0.0
        %9703 = vmatpush1.msra.mxu0 0.0
        %9704 = vmatprep.subr.mxu0 0.0
        %9705 = vmatpush1.msra.mxu0 0.0
        %9706 = vmatprep.mubr.f32.mxu0 0.0
        %v9707 = vand.u32 %v9241, 4294901760
        %9708 = vmatmul.mubr.f32.gmra.mrb[0].mxu0 %v9707
        %v9709 = vpop.f32.mrb[0].mxu0
        %v9710 = vadd.f32 %v9636, %v9709
        %v9711 = vpop.f32.mrb[0].mxu0
        %v9712 = vadd.f32 %v9638, %v9711
        %9713 = vdwg.mxu0
        %v9714 = vadd.f32 %v9228, %v9710
        %v9715 = vadd.f32 %v9229, %v9712
        %v9716 = vld [vmem:[%s6] sm:$0xff]
        %v9717 = vld [vmem:[%s6 + $0x8] sm:$0xff]
        %v9718 = vld [vmem:[%s7] sm:$0xff]
        %v9719 = vld [vmem:[%s7 + $0x8] sm:$0xff]
        %9721 = vset.pattern.permute.xlu0 0
        %9722 = vperm.xlu0 %9721, %v9718
        %v9723 = vpop.permute.xlu0 %9722
        %9726 = vset.pattern.permute.xlu0 0
        %9727 = vperm.xlu0 %9726, %v9719
        %v9728 = vpop.permute.xlu0 %9727
        %v9731 = vsel %vm905, %v9716, 0
        %v9734 = vsel %vm905, %v9717, 0
        %v9737 = vsel %vm909, %v9714, 0
        %v9740 = vsel %vm909, %v9715, 0
        %v9742 = vand.u32 %v9740, 4294901760
        %9743 = vmatprep.subr.mxu0 %v9742
        %v9744 = vand.u32 %v9737, 4294901760
        %9745 = vmatpush1.msra.mxu0 %v9744
        %9746 = vmatprep.subr.mxu0 0.0
        %9747 = vmatpush1.msra.mxu0 0.0
        %9748 = vmatprep.subr.mxu0 0.0
        %9749 = vmatpush1.msra.mxu0 0.0
        %9750 = vmatprep.subr.mxu0 0.0
        %9751 = vmatpush1.msra.mxu0 0.0
        %9752 = vmatprep.subr.mxu0 0.0
        %9753 = vmatpush1.msra.mxu0 0.0
        %9754 = vmatprep.subr.mxu0 0.0
        %9755 = vmatpush1.msra.mxu0 0.0
        %9756 = vmatprep.subr.mxu0 0.0
        %9757 = vmatpush1.msra.mxu0 0.0
        %9758 = vmatprep.subr.mxu0 0.0
        %9759 = vmatpush1.msra.mxu0 0.0
        %9760 = vmatprep.subr.mxu0 0.0
        %9761 = vmatpush1.msra.mxu0 0.0
        %9762 = vmatprep.subr.mxu0 0.0
        %9763 = vmatpush1.msra.mxu0 0.0
        %9764 = vmatprep.subr.mxu0 0.0
        %9765 = vmatpush1.msra.mxu0 0.0
        %9766 = vmatprep.subr.mxu0 0.0
        %9767 = vmatpush1.msra.mxu0 0.0
        %9768 = vmatprep.subr.mxu0 0.0
        %9769 = vmatpush1.msra.mxu0 0.0
        %9770 = vmatprep.subr.mxu0 0.0
        %9771 = vmatpush1.msra.mxu0 0.0
        %9772 = vmatprep.subr.mxu0 0.0
        %9773 = vmatpush1.msra.mxu0 0.0
        %9774 = vmatprep.subr.mxu0 0.0
        %9775 = vmatpush1.msra.mxu0 0.0
        %9776 = vmatprep.subr.mxu0 0.0
        %9777 = vmatpush1.msra.mxu0 0.0
        %9778 = vmatprep.subr.mxu0 0.0
        %9779 = vmatpush1.msra.mxu0 0.0
        %9780 = vmatprep.subr.mxu0 0.0
        %9781 = vmatpush1.msra.mxu0 0.0
        %9782 = vmatprep.subr.mxu0 0.0
        %9783 = vmatpush1.msra.mxu0 0.0
        %9784 = vmatprep.subr.mxu0 0.0
        %9785 = vmatpush1.msra.mxu0 0.0
        %9786 = vmatprep.subr.mxu0 0.0
        %9787 = vmatpush1.msra.mxu0 0.0
        %9788 = vmatprep.subr.mxu0 0.0
        %9789 = vmatpush1.msra.mxu0 0.0
        %9790 = vmatprep.subr.mxu0 0.0
        %9791 = vmatpush1.msra.mxu0 0.0
        %9792 = vmatprep.subr.mxu0 0.0
        %9793 = vmatpush1.msra.mxu0 0.0
        %9794 = vmatprep.subr.mxu0 0.0
        %9795 = vmatpush1.msra.mxu0 0.0
        %9796 = vmatprep.subr.mxu0 0.0
        %9797 = vmatpush1.msra.mxu0 0.0
        %9798 = vmatprep.subr.mxu0 0.0
        %9799 = vmatpush1.msra.mxu0 0.0
        %9800 = vmatprep.subr.mxu0 0.0
        %9801 = vmatpush1.msra.mxu0 0.0
        %9802 = vmatprep.subr.mxu0 0.0
        %9803 = vmatpush1.msra.mxu0 0.0
        %9804 = vmatprep.subr.mxu0 0.0
        %9805 = vmatpush1.msra.mxu0 0.0
        %9806 = vmatprep.subr.mxu0 0.0
        %9807 = vmatpush1.msra.mxu0 0.0
        %9808 = vmatprep.mubr.f32.mxu0 0.0
        %v9809 = vand.u32 %v9731, 4294901760
        %v9810 = vsub.f32 %v9731, %v9809
        %v9811 = vand.u32 %v9810, 4294901760
        %v9812 = vsub.f32 %v9810, %v9811
        %v9813 = vand.u32 %v9812, 4294901760
        %9814 = vmatmul.mubr.f32.gmra.mrb[0].mxu0 %v9813
        %v9815 = vpop.f32.mrb[0].mxu0
        %v9816 = vadd.f32 %v9723, %v9815
        %v9817 = vpop.f32.mrb[0].mxu0
        %v9818 = vadd.f32 %v9723, %v9817
        %9819 = vmatprep.mubr.f32.mxu0 0.0
        %v9820 = vand.u32 %v9734, 4294901760
        %v9821 = vsub.f32 %v9734, %v9820
        %v9822 = vand.u32 %v9821, 4294901760
        %v9823 = vsub.f32 %v9821, %v9822
        %v9824 = vand.u32 %v9823, 4294901760
        %9825 = vmatmul.mubr.f32.gmra.mrb[0].mxu0 %v9824
        %v9826 = vpop.f32.mrb[0].mxu0
        %v9827 = vadd.f32 %v9728, %v9826
        %v9828 = vpop.f32.mrb[0].mxu0
        %v9829 = vadd.f32 %v9728, %v9828
        %9830 = vdwg.mxu0
        %v9831 = vand.u32 %v9740, 4294901760
        %v9832 = vsub.f32 %v9740, %v9831
        %v9833 = vand.u32 %v9832, 4294901760
        %v9834 = vsub.f32 %v9832, %v9833
        %v9835 = vand.u32 %v9834, 4294901760
        %9836 = vmatprep.subr.mxu0 %v9835
        %v9837 = vand.u32 %v9737, 4294901760
        %v9838 = vsub.f32 %v9737, %v9837
        %v9839 = vand.u32 %v9838, 4294901760
        %v9840 = vsub.f32 %v9838, %v9839
        %v9841 = vand.u32 %v9840, 4294901760
        %9842 = vmatpush1.msra.mxu0 %v9841
        %9843 = vmatprep.subr.mxu0 0.0
        %9844 = vmatpush1.msra.mxu0 0.0
        %9845 = vmatprep.subr.mxu0 0.0
        %9846 = vmatpush1.msra.mxu0 0.0
        %9847 = vmatprep.subr.mxu0 0.0
        %9848 = vmatpush1.msra.mxu0 0.0
        %9849 = vmatprep.subr.mxu0 0.0
        %9850 = vmatpush1.msra.mxu0 0.0
        %9851 = vmatprep.subr.mxu0 0.0
        %9852 = vmatpush1.msra.mxu0 0.0
        %9853 = vmatprep.subr.mxu0 0.0
        %9854 = vmatpush1.msra.mxu0 0.0
        %9855 = vmatprep.subr.mxu0 0.0
        %9856 = vmatpush1.msra.mxu0 0.0
        %9857 = vmatprep.subr.mxu0 0.0
        %9858 = vmatpush1.msra.mxu0 0.0
        %9859 = vmatprep.subr.mxu0 0.0
        %9860 = vmatpush1.msra.mxu0 0.0
        %9861 = vmatprep.subr.mxu0 0.0
        %9862 = vmatpush1.msra.mxu0 0.0
        %9863 = vmatprep.subr.mxu0 0.0
        %9864 = vmatpush1.msra.mxu0 0.0
        %9865 = vmatprep.subr.mxu0 0.0
        %9866 = vmatpush1.msra.mxu0 0.0
        %9867 = vmatprep.subr.mxu0 0.0
        %9868 = vmatpush1.msra.mxu0 0.0
        %9869 = vmatprep.subr.mxu0 0.0
        %9870 = vmatpush1.msra.mxu0 0.0
        %9871 = vmatprep.subr.mxu0 0.0
        %9872 = vmatpush1.msra.mxu0 0.0
        %9873 = vmatprep.subr.mxu0 0.0
        %9874 = vmatpush1.msra.mxu0 0.0
        %9875 = vmatprep.subr.mxu0 0.0
        %9876 = vmatpush1.msra.mxu0 0.0
        %9877 = vmatprep.subr.mxu0 0.0
        %9878 = vmatpush1.msra.mxu0 0.0
        %9879 = vmatprep.subr.mxu0 0.0
        %9880 = vmatpush1.msra.mxu0 0.0
        %9881 = vmatprep.subr.mxu0 0.0
        %9882 = vmatpush1.msra.mxu0 0.0
        %9883 = vmatprep.subr.mxu0 0.0
        %9884 = vmatpush1.msra.mxu0 0.0
        %9885 = vmatprep.subr.mxu0 0.0
        %9886 = vmatpush1.msra.mxu0 0.0
        %9887 = vmatprep.subr.mxu0 0.0
        %9888 = vmatpush1.msra.mxu0 0.0
        %9889 = vmatprep.subr.mxu0 0.0
        %9890 = vmatpush1.msra.mxu0 0.0
        %9891 = vmatprep.subr.mxu0 0.0
        %9892 = vmatpush1.msra.mxu0 0.0
        %9893 = vmatprep.subr.mxu0 0.0
        %9894 = vmatpush1.msra.mxu0 0.0
        %9895 = vmatprep.subr.mxu0 0.0
        %9896 = vmatpush1.msra.mxu0 0.0
        %9897 = vmatprep.subr.mxu0 0.0
        %9898 = vmatpush1.msra.mxu0 0.0
        %9899 = vmatprep.subr.mxu0 0.0
        %9900 = vmatpush1.msra.mxu0 0.0
        %9901 = vmatprep.subr.mxu0 0.0
        %9902 = vmatpush1.msra.mxu0 0.0
        %9903 = vmatprep.subr.mxu0 0.0
        %9904 = vmatpush1.msra.mxu0 0.0
        %9905 = vmatprep.mubr.f32.mxu0 0.0
        %v9906 = vand.u32 %v9731, 4294901760
        %9907 = vmatmul.mubr.f32.gmra.mrb[0].mxu0 %v9906
        %v9908 = vpop.f32.mrb[0].mxu0
        %v9909 = vadd.f32 %v9816, %v9908
        %v9910 = vpop.f32.mrb[0].mxu0
        %v9911 = vadd.f32 %v9818, %v9910
        %9912 = vmatprep.mubr.f32.mxu0 0.0
        %v9913 = vand.u32 %v9734, 4294901760
        %9914 = vmatmul.mubr.f32.gmra.mrb[0].mxu0 %v9913
        %v9915 = vpop.f32.mrb[0].mxu0
        %v9916 = vadd.f32 %v9827, %v9915
        %v9917 = vpop.f32.mrb[0].mxu0
        %v9918 = vadd.f32 %v9829, %v9917
        %9919 = vdwg.mxu0
        %v9920 = vand.u32 %v9740, 4294901760
        %v9921 = vsub.f32 %v9740, %v9920
        %9922 = vmatprep.subr.mxu0 %v9921
        %v9923 = vand.u32 %v9737, 4294901760
        %v9924 = vsub.f32 %v9737, %v9923
        %9925 = vmatpush1.msra.mxu0 %v9924
        %9926 = vmatprep.subr.mxu0 0.0
        %9927 = vmatpush1.msra.mxu0 0.0
        %9928 = vmatprep.subr.mxu0 0.0
        %9929 = vmatpush1.msra.mxu0 0.0
        %9930 = vmatprep.subr.mxu0 0.0
        %9931 = vmatpush1.msra.mxu0 0.0
        %9932 = vmatprep.subr.mxu0 0.0
        %9933 = vmatpush1.msra.mxu0 0.0
        %9934 = vmatprep.subr.mxu0 0.0
        %9935 = vmatpush1.msra.mxu0 0.0
        %9936 = vmatprep.subr.mxu0 0.0
        %9937 = vmatpush1.msra.mxu0 0.0
        %9938 = vmatprep.subr.mxu0 0.0
        %9939 = vmatpush1.msra.mxu0 0.0
        %9940 = vmatprep.subr.mxu0 0.0
        %9941 = vmatpush1.msra.mxu0 0.0
        %9942 = vmatprep.subr.mxu0 0.0
        %9943 = vmatpush1.msra.mxu0 0.0
        %9944 = vmatprep.subr.mxu0 0.0
        %9945 = vmatpush1.msra.mxu0 0.0
        %9946 = vmatprep.subr.mxu0 0.0
        %9947 = vmatpush1.msra.mxu0 0.0
        %9948 = vmatprep.subr.mxu0 0.0
        %9949 = vmatpush1.msra.mxu0 0.0
        %9950 = vmatprep.subr.mxu0 0.0
        %9951 = vmatpush1.msra.mxu0 0.0
        %9952 = vmatprep.subr.mxu0 0.0
        %9953 = vmatpush1.msra.mxu0 0.0
        %9954 = vmatprep.subr.mxu0 0.0
        %9955 = vmatpush1.msra.mxu0 0.0
        %9956 = vmatprep.subr.mxu0 0.0
        %9957 = vmatpush1.msra.mxu0 0.0
        %9958 = vmatprep.subr.mxu0 0.0
        %9959 = vmatpush1.msra.mxu0 0.0
        %9960 = vmatprep.subr.mxu0 0.0
        %9961 = vmatpush1.msra.mxu0 0.0
        %9962 = vmatprep.subr.mxu0 0.0
        %9963 = vmatpush1.msra.mxu0 0.0
        %9964 = vmatprep.subr.mxu0 0.0
        %9965 = vmatpush1.msra.mxu0 0.0
        %9966 = vmatprep.subr.mxu0 0.0
        %9967 = vmatpush1.msra.mxu0 0.0
        %9968 = vmatprep.subr.mxu0 0.0
        %9969 = vmatpush1.msra.mxu0 0.0
        %9970 = vmatprep.subr.mxu0 0.0
        %9971 = vmatpush1.msra.mxu0 0.0
        %9972 = vmatprep.subr.mxu0 0.0
        %9973 = vmatpush1.msra.mxu0 0.0
        %9974 = vmatprep.subr.mxu0 0.0
        %9975 = vmatpush1.msra.mxu0 0.0
        %9976 = vmatprep.subr.mxu0 0.0
        %9977 = vmatpush1.msra.mxu0 0.0
        %9978 = vmatprep.subr.mxu0 0.0
        %9979 = vmatpush1.msra.mxu0 0.0
        %9980 = vmatprep.subr.mxu0 0.0
        %9981 = vmatpush1.msra.mxu0 0.0
        %9982 = vmatprep.subr.mxu0 0.0
        %9983 = vmatpush1.msra.mxu0 0.0
        %9984 = vmatprep.subr.mxu0 0.0
        %9985 = vmatpush1.msra.mxu0 0.0
        %9986 = vmatprep.subr.mxu0 0.0
        %9987 = vmatpush1.msra.mxu0 0.0
        %9988 = vmatprep.mubr.f32.mxu0 0.0
        %v9989 = vand.u32 %v9731, 4294901760
        %v9990 = vsub.f32 %v9731, %v9989
        %9991 = vmatmul.mubr.f32.gmra.mrb[0].mxu0 %v9990
        %v9992 = vpop.f32.mrb[0].mxu0
        %v9993 = vadd.f32 %v9909, %v9992
        %v9994 = vpop.f32.mrb[0].mxu0
        %v9995 = vadd.f32 %v9911, %v9994
        %9996 = vmatprep.mubr.f32.mxu0 0.0
        %v9997 = vand.u32 %v9734, 4294901760
        %v9998 = vsub.f32 %v9734, %v9997
        %9999 = vmatmul.mubr.f32.gmra.mrb[0].mxu0 %v9998
        %v10000 = vpop.f32.mrb[0].mxu0
        %v10001 = vadd.f32 %v9916, %v10000
        %v10002 = vpop.f32.mrb[0].mxu0
        %v10003 = vadd.f32 %v9918, %v10002
        %10004 = vdwg.mxu0
        %v10005 = vand.u32 %v9740, 4294901760
        %10006 = vmatprep.subr.mxu0 %v10005
        %v10007 = vand.u32 %v9737, 4294901760
        %10008 = vmatpush1.msra.mxu0 %v10007
        %10009 = vmatprep.subr.mxu0 0.0
        %10010 = vmatpush1.msra.mxu0 0.0
        %10011 = vmatprep.subr.mxu0 0.0
        %10012 = vmatpush1.msra.mxu0 0.0
        %10013 = vmatprep.subr.mxu0 0.0
        %10014 = vmatpush1.msra.mxu0 0.0
        %10015 = vmatprep.subr.mxu0 0.0
        %10016 = vmatpush1.msra.mxu0 0.0
        %10017 = vmatprep.subr.mxu0 0.0
        %10018 = vmatpush1.msra.mxu0 0.0
        %10019 = vmatprep.subr.mxu0 0.0
        %10020 = vmatpush1.msra.mxu0 0.0
        %10021 = vmatprep.subr.mxu0 0.0
        %10022 = vmatpush1.msra.mxu0 0.0
        %10023 = vmatprep.subr.mxu0 0.0
        %10024 = vmatpush1.msra.mxu0 0.0
        %10025 = vmatprep.subr.mxu0 0.0
        %10026 = vmatpush1.msra.mxu0 0.0
        %10027 = vmatprep.subr.mxu0 0.0
        %10028 = vmatpush1.msra.mxu0 0.0
        %10029 = vmatprep.subr.mxu0 0.0
        %10030 = vmatpush1.msra.mxu0 0.0
        %10031 = vmatprep.subr.mxu0 0.0
        %10032 = vmatpush1.msra.mxu0 0.0
        %10033 = vmatprep.subr.mxu0 0.0
        %10034 = vmatpush1.msra.mxu0 0.0
        %10035 = vmatprep.subr.mxu0 0.0
        %10036 = vmatpush1.msra.mxu0 0.0
        %10037 = vmatprep.subr.mxu0 0.0
        %10038 = vmatpush1.msra.mxu0 0.0
        %10039 = vmatprep.subr.mxu0 0.0
        %10040 = vmatpush1.msra.mxu0 0.0
        %10041 = vmatprep.subr.mxu0 0.0
        %10042 = vmatpush1.msra.mxu0 0.0
        %10043 = vmatprep.subr.mxu0 0.0
        %10044 = vmatpush1.msra.mxu0 0.0
        %10045 = vmatprep.subr.mxu0 0.0
        %10046 = vmatpush1.msra.mxu0 0.0
        %10047 = vmatprep.subr.mxu0 0.0
        %10048 = vmatpush1.msra.mxu0 0.0
        %10049 = vmatprep.subr.mxu0 0.0
        %10050 = vmatpush1.msra.mxu0 0.0
        %10051 = vmatprep.subr.mxu0 0.0
        %10052 = vmatpush1.msra.mxu0 0.0
        %10053 = vmatprep.subr.mxu0 0.0
        %10054 = vmatpush1.msra.mxu0 0.0
        %10055 = vmatprep.subr.mxu0 0.0
        %10056 = vmatpush1.msra.mxu0 0.0
        %10057 = vmatprep.subr.mxu0 0.0
        %10058 = vmatpush1.msra.mxu0 0.0
        %10059 = vmatprep.subr.mxu0 0.0
        %10060 = vmatpush1.msra.mxu0 0.0
        %10061 = vmatprep.subr.mxu0 0.0
        %10062 = vmatpush1.msra.mxu0 0.0
        %10063 = vmatprep.subr.mxu0 0.0
        %10064 = vmatpush1.msra.mxu0 0.0
        %10065 = vmatprep.subr.mxu0 0.0
        %10066 = vmatpush1.msra.mxu0 0.0
        %10067 = vmatprep.subr.mxu0 0.0
        %10068 = vmatpush1.msra.mxu0 0.0
        %10069 = vmatprep.subr.mxu0 0.0
        %10070 = vmatpush1.msra.mxu0 0.0
        %10071 = vmatprep.mubr.f32.mxu0 0.0
        %v10072 = vand.u32 %v9731, 4294901760
        %v10073 = vsub.f32 %v9731, %v10072
        %v10074 = vand.u32 %v10073, 4294901760
        %10075 = vmatmul.mubr.f32.gmra.mrb[0].mxu0 %v10074
        %v10076 = vpop.f32.mrb[0].mxu0
        %v10077 = vadd.f32 %v9993, %v10076
        %v10078 = vpop.f32.mrb[0].mxu0
        %v10079 = vadd.f32 %v9995, %v10078
        %10080 = vmatprep.mubr.f32.mxu0 0.0
        %v10081 = vand.u32 %v9734, 4294901760
        %v10082 = vsub.f32 %v9734, %v10081
        %v10083 = vand.u32 %v10082, 4294901760
        %10084 = vmatmul.mubr.f32.gmra.mrb[0].mxu0 %v10083
        %v10085 = vpop.f32.mrb[0].mxu0
        %v10086 = vadd.f32 %v10001, %v10085
        %v10087 = vpop.f32.mrb[0].mxu0
        %v10088 = vadd.f32 %v10003, %v10087
        %10089 = vdwg.mxu0
        %v10090 = vand.u32 %v9740, 4294901760
        %v10091 = vsub.f32 %v9740, %v10090
        %v10092 = vand.u32 %v10091, 4294901760
        %10093 = vmatprep.subr.mxu0 %v10092
        %v10094 = vand.u32 %v9737, 4294901760
        %v10095 = vsub.f32 %v9737, %v10094
        %v10096 = vand.u32 %v10095, 4294901760
        %10097 = vmatpush1.msra.mxu0 %v10096
        %10098 = vmatprep.subr.mxu0 0.0
        %10099 = vmatpush1.msra.mxu0 0.0
        %10100 = vmatprep.subr.mxu0 0.0
        %10101 = vmatpush1.msra.mxu0 0.0
        %10102 = vmatprep.subr.mxu0 0.0
        %10103 = vmatpush1.msra.mxu0 0.0
        %10104 = vmatprep.subr.mxu0 0.0
        %10105 = vmatpush1.msra.mxu0 0.0
        %10106 = vmatprep.subr.mxu0 0.0
        %10107 = vmatpush1.msra.mxu0 0.0
        %10108 = vmatprep.subr.mxu0 0.0
        %10109 = vmatpush1.msra.mxu0 0.0
        %10110 = vmatprep.subr.mxu0 0.0
        %10111 = vmatpush1.msra.mxu0 0.0
        %10112 = vmatprep.subr.mxu0 0.0
        %10113 = vmatpush1.msra.mxu0 0.0
        %10114 = vmatprep.subr.mxu0 0.0
        %10115 = vmatpush1.msra.mxu0 0.0
        %10116 = vmatprep.subr.mxu0 0.0
        %10117 = vmatpush1.msra.mxu0 0.0
        %10118 = vmatprep.subr.mxu0 0.0
        %10119 = vmatpush1.msra.mxu0 0.0
        %10120 = vmatprep.subr.mxu0 0.0
        %10121 = vmatpush1.msra.mxu0 0.0
        %10122 = vmatprep.subr.mxu0 0.0
        %10123 = vmatpush1.msra.mxu0 0.0
        %10124 = vmatprep.subr.mxu0 0.0
        %10125 = vmatpush1.msra.mxu0 0.0
        %10126 = vmatprep.subr.mxu0 0.0
        %10127 = vmatpush1.msra.mxu0 0.0
        %10128 = vmatprep.subr.mxu0 0.0
        %10129 = vmatpush1.msra.mxu0 0.0
        %10130 = vmatprep.subr.mxu0 0.0
        %10131 = vmatpush1.msra.mxu0 0.0
        %10132 = vmatprep.subr.mxu0 0.0
        %10133 = vmatpush1.msra.mxu0 0.0
        %10134 = vmatprep.subr.mxu0 0.0
        %10135 = vmatpush1.msra.mxu0 0.0
        %10136 = vmatprep.subr.mxu0 0.0
        %10137 = vmatpush1.msra.mxu0 0.0
        %10138 = vmatprep.subr.mxu0 0.0
        %10139 = vmatpush1.msra.mxu0 0.0
        %10140 = vmatprep.subr.mxu0 0.0
        %10141 = vmatpush1.msra.mxu0 0.0
        %10142 = vmatprep.subr.mxu0 0.0
        %10143 = vmatpush1.msra.mxu0 0.0
        %10144 = vmatprep.subr.mxu0 0.0
        %10145 = vmatpush1.msra.mxu0 0.0
        %10146 = vmatprep.subr.mxu0 0.0
        %10147 = vmatpush1.msra.mxu0 0.0
        %10148 = vmatprep.subr.mxu0 0.0
        %10149 = vmatpush1.msra.mxu0 0.0
        %10150 = vmatprep.subr.mxu0 0.0
        %10151 = vmatpush1.msra.mxu0 0.0
        %10152 = vmatprep.subr.mxu0 0.0
        %10153 = vmatpush1.msra.mxu0 0.0
        %10154 = vmatprep.subr.mxu0 0.0
        %10155 = vmatpush1.msra.mxu0 0.0
        %10156 = vmatprep.subr.mxu0 0.0
        %10157 = vmatpush1.msra.mxu0 0.0
        %10158 = vmatprep.subr.mxu0 0.0
        %10159 = vmatpush1.msra.mxu0 0.0
        %10160 = vmatprep.mubr.f32.mxu0 0.0
        %v10161 = vand.u32 %v9731, 4294901760
        %10162 = vmatmul.mubr.f32.gmra.mrb[0].mxu0 %v10161
        %v10163 = vpop.f32.mrb[0].mxu0
        %v10164 = vadd.f32 %v10077, %v10163
        %v10165 = vpop.f32.mrb[0].mxu0
        %v10166 = vadd.f32 %v10079, %v10165
        %10167 = vmatprep.mubr.f32.mxu0 0.0
        %v10168 = vand.u32 %v9734, 4294901760
        %10169 = vmatmul.mubr.f32.gmra.mrb[0].mxu0 %v10168
        %v10170 = vpop.f32.mrb[0].mxu0
        %v10171 = vadd.f32 %v10086, %v10170
        %v10172 = vpop.f32.mrb[0].mxu0
        %v10173 = vadd.f32 %v10088, %v10172
        %10174 = vdwg.mxu0
        %v10175 = vand.u32 %v9740, 4294901760
        %10176 = vmatprep.subr.mxu0 %v10175
        %v10177 = vand.u32 %v9737, 4294901760
        %10178 = vmatpush1.msra.mxu0 %v10177
        %10179 = vmatprep.subr.mxu0 0.0
        %10180 = vmatpush1.msra.mxu0 0.0
        %10181 = vmatprep.subr.mxu0 0.0
        %10182 = vmatpush1.msra.mxu0 0.0
        %10183 = vmatprep.subr.mxu0 0.0
        %10184 = vmatpush1.msra.mxu0 0.0
        %10185 = vmatprep.subr.mxu0 0.0
        %10186 = vmatpush1.msra.mxu0 0.0
        %10187 = vmatprep.subr.mxu0 0.0
        %10188 = vmatpush1.msra.mxu0 0.0
        %10189 = vmatprep.subr.mxu0 0.0
        %10190 = vmatpush1.msra.mxu0 0.0
        %10191 = vmatprep.subr.mxu0 0.0
        %10192 = vmatpush1.msra.mxu0 0.0
        %10193 = vmatprep.subr.mxu0 0.0
        %10194 = vmatpush1.msra.mxu0 0.0
        %10195 = vmatprep.subr.mxu0 0.0
        %10196 = vmatpush1.msra.mxu0 0.0
        %10197 = vmatprep.subr.mxu0 0.0
        %10198 = vmatpush1.msra.mxu0 0.0
        %10199 = vmatprep.subr.mxu0 0.0
        %10200 = vmatpush1.msra.mxu0 0.0
        %10201 = vmatprep.subr.mxu0 0.0
        %10202 = vmatpush1.msra.mxu0 0.0
        %10203 = vmatprep.subr.mxu0 0.0
        %10204 = vmatpush1.msra.mxu0 0.0
        %10205 = vmatprep.subr.mxu0 0.0
        %10206 = vmatpush1.msra.mxu0 0.0
        %10207 = vmatprep.subr.mxu0 0.0
        %10208 = vmatpush1.msra.mxu0 0.0
        %10209 = vmatprep.subr.mxu0 0.0
        %10210 = vmatpush1.msra.mxu0 0.0
        %10211 = vmatprep.subr.mxu0 0.0
        %10212 = vmatpush1.msra.mxu0 0.0
        %10213 = vmatprep.subr.mxu0 0.0
        %10214 = vmatpush1.msra.mxu0 0.0
        %10215 = vmatprep.subr.mxu0 0.0
        %10216 = vmatpush1.msra.mxu0 0.0
        %10217 = vmatprep.subr.mxu0 0.0
        %10218 = vmatpush1.msra.mxu0 0.0
        %10219 = vmatprep.subr.mxu0 0.0
        %10220 = vmatpush1.msra.mxu0 0.0
        %10221 = vmatprep.subr.mxu0 0.0
        %10222 = vmatpush1.msra.mxu0 0.0
        %10223 = vmatprep.subr.mxu0 0.0
        %10224 = vmatpush1.msra.mxu0 0.0
        %10225 = vmatprep.subr.mxu0 0.0
        %10226 = vmatpush1.msra.mxu0 0.0
        %10227 = vmatprep.subr.mxu0 0.0
        %10228 = vmatpush1.msra.mxu0 0.0
        %10229 = vmatprep.subr.mxu0 0.0
        %10230 = vmatpush1.msra.mxu0 0.0
        %10231 = vmatprep.subr.mxu0 0.0
        %10232 = vmatpush1.msra.mxu0 0.0
        %10233 = vmatprep.subr.mxu0 0.0
        %10234 = vmatpush1.msra.mxu0 0.0
        %10235 = vmatprep.subr.mxu0 0.0
        %10236 = vmatpush1.msra.mxu0 0.0
        %10237 = vmatprep.subr.mxu0 0.0
        %10238 = vmatpush1.msra.mxu0 0.0
        %10239 = vmatprep.subr.mxu0 0.0
        %10240 = vmatpush1.msra.mxu0 0.0
        %10241 = vmatprep.mubr.f32.mxu0 0.0
        %v10242 = vand.u32 %v9731, 4294901760
        %10243 = vmatmul.mubr.f32.gmra.mrb[0].mxu0 %v10242
        %v10244 = vpop.f32.mrb[0].mxu0
        %v10245 = vadd.f32 %v10164, %v10244
        %v10246 = vpop.f32.mrb[0].mxu0
        %v10247 = vadd.f32 %v10166, %v10246
        %10248 = vmatprep.mubr.f32.mxu0 0.0
        %v10249 = vand.u32 %v9734, 4294901760
        %10250 = vmatmul.mubr.f32.gmra.mrb[0].mxu0 %v10249
        %v10251 = vpop.f32.mrb[0].mxu0
        %v10252 = vadd.f32 %v10171, %v10251
        %v10253 = vpop.f32.mrb[0].mxu0
        %v10254 = vadd.f32 %v10173, %v10253
        %10255 = vdwg.mxu0
        %v10256 = vmax.f32 %v10245, 0.0
        %v10257 = vmax.f32 %v10247, 0.0
        %v10258 = vmax.f32 %v10252, 0.0
        %v10259 = vmax.f32 %v10254, 0.0
        %10260 = vst [vmem:[%s311] sm:$0xff] %v10256
        %10261 = vst [vmem:[%s311 + $0x8] sm:$0xff] %v10257
        %10262 = vst [vmem:[%s311 + $0x10] sm:$0xff] %v10258
        %10263 = vst [vmem:[%s311 + $0x18] sm:$0xff] %v10259
        %s10264 = sand.u32 %s204, 1
        %s10265 = scalar_lea.sflag [#allocation4], %s10264
        %s10266 = sand.u32 %s204, 1
        %s10267 = smul.addr %s10266, 32
        %s10268 = scalar_lea.vmem [#allocation5], %s10267
        // Predicated region
        $region57: #{tpu_custom_call.1} parent=51 // pred_check
          %p10269 = pneg %p214
        $region58: #{tpu_custom_call.1} parent=51 // pred_check_branch
          %10271 = sbr.rel (%p10269) target = $region60
        $region59: #{tpu_custom_call.1} parent=51 // pred_region
          %s10273 = ssub.s32 512, 512
          %10274 = vsyncadd %s10265, %s10273
          %s10275 = smul.addr %s23, 4
          %s10276 = smul.addr %s10275, 128
          %s10277 = scalar_lea.hbm %s8, %s10276
          %s10278 = sshll.u32 %s10268, 4
          %s10279 = int_to_ptr.vmem [resolvable:$true] %s10278
          %10284 = dma.vmem_to_hbm [thread:$0]  %s10279, 512, %s10277, %s10265, 256, 256, 16
        $region60: #{tpu_custom_call.1} parent=51 // pred_fallthru
          _
      $region52: #{tpu_custom_call.1} parent=5 // pred_fallthru
        _
      %p10285 = scmp.le.s32.totalorder 2, %s18
      // Predicated region
      $region61: #{tpu_custom_call.1} parent=5 // pred_check
        %p10286 = pneg %p10285
      $region62: #{tpu_custom_call.1} parent=5 // pred_check_branch
        %10288 = sbr.rel (%p10286) target = $region64
      $region63: #{tpu_custom_call.1} parent=5 // pred_region
        %s10289 = ssub.s32 %s18, 2
        // Predicated region
        $region65: #{tpu_custom_call.1} parent=63 // pred_check
          %p10290 = pneg %p220
        $region66: #{tpu_custom_call.1} parent=63 // pred_check_branch
          %10292 = sbr.rel (%p10290) target = $region68
        $region67: #{tpu_custom_call.1} parent=63 // pred_region
          %s10293 = sand.u32 %s205, 1
          %s10294 = scalar_lea.sflag [#allocation4], %s10293
          %s10295 = sand.u32 %s205, 1
          %s10296 = smul.addr %s10295, 32
          %s10297 = scalar_lea.vmem [#allocation5], %s10296
          %10298 = dma.done %s10294, 512
        $region68: #{tpu_custom_call.1} parent=63 // pred_fallthru
          _
      $region64: #{tpu_custom_call.1} parent=5 // pred_fallthru
        _
    $region6: #{tpu_custom_call.1} parent=1 // loop_footer
      %s22 = sadd.s32 1, %s18
    $region7: #{tpu_custom_call.1} parent=1 // loop_footer_branch
      %17 = sbr.rel target = $region3
    $region8: #{tpu_custom_call.1} parent=1 // loop_exit
      _
    %10299 = vsyncpa [#allocation3], 1
    %s10300 = scalar_lea.sflag [#allocation3], 1
    %10301 = vsyncpa %s10300, 1
    %10302 = vsyncpa [#allocation4], 1
    %s10303 = scalar_lea.sflag [#allocation4], 1
    %10304 = vsyncpa %s10303, 1

</llo_original>
